<compile_context>
chip_gen: v7x
topology: tpu7x:2x2x1
jax: 0.10.0
libtpu: 0.0.40
codegen_flags: <defaults>
</compile_context>

<pallas_src>
import numpy as np
import jax
import jax.numpy as jnp
from jax.experimental import pallas as pl
from jax.experimental.pallas import tpu as pltpu

# ----- small, module-consistent hyper-parameters -----
BSZ = 2          # batch
SL = 16          # configs.sl (sequence length)
D = 32           # n_embd == d_out (STU requires them equal)
K = 8            # num_eigh
KU = 3           # auto_reg_k_u
KY = 2           # auto_reg_k_y
NLAYERS = 2      # configs.n_layers
SCALE = 3        # FFN scale
HDIM = SCALE * D * 2 // 3   # SwiGLU hidden dim = 64
LN_EPS = 1e-5
NFILT = K + KU   # spectral filters + AR shift "filters" folded together


def _ln(x, gamma, beta, eps=LN_EPS):
    # two-pass layer norm (centered variance; safer than E[x^2]-E[x]^2).
    m = jnp.mean(x, axis=-1, keepdims=True)
    c = x - m
    var = jnp.mean(c * c, axis=-1, keepdims=True)
    return c * jax.lax.rsqrt(var + eps) * gamma + beta


def _tree_sum(terms):
    # pairwise reduction tree: log-depth instead of a serial += chain.
    while len(terms) > 1:
        nxt = [terms[i] + terms[i + 1] for i in range(0, len(terms) - 1, 2)]
        if len(terms) % 2:
            nxt.append(terms[-1])
        terms = nxt
    return terms[0]


# ============================ fused Pallas kernel ===========================

def sssm_kernel(x_ref, wet_ref, be_ref, pos_ref,
                g2_ref, sy2_ref, w_ref, c_ref, ln_ref,
                w13t_ref, w2t_ref, lnf_ref, wht_ref, o_ref):
    rows, d = x_ref.shape               # rows = BSZ*SL (banks are batch-blockdiag)
    nlayers, nfilt = w_ref.shape[0], w_ref.shape[1]
    nlag = c_ref.shape[1]               # SL-1 companion lags (lag 0 == identity)
    hdim = w2t_ref.shape[1]

    # ---- embedding: x = emb(inputs) + pos_emb   (dropout p=0 -> identity) ----
    x = jnp.dot(x_ref[...], wet_ref[...], preferred_element_type=jnp.float32)
    x = x + be_ref[...] + pos_ref[...]

    g2 = g2_ref[...]                    # (NFILT*B*SL, B*SL) spectral+AR bank
    sy2 = sy2_ref[...]                  # ((SL-1)*B*SL, B*SL) shift bank

    for li in range(nlayers):
        ln = ln_ref[li]                 # (8, D) gammas/betas

        # ---- STUBlock: x = x + stu(ln_1(x));  stu(h) = h + y(h) ----
        h = _ln(x, ln[0:1, :], ln[1:2, :])          # block ln_1
        inp = _ln(h, ln[4:5, :], ln[5:6, :])        # STU's own ln_1

        # spectral causal conv (lam^0.25 folded into G) + AR preds, merged:
        #   delta_pre = sum_f  G_f @ inp @ W_f   (bank matmul + parallel W_f)
        xbig = jnp.dot(g2, inp, preferred_element_type=jnp.float32)
        delta_pre = _tree_sum([
            jnp.dot(xbig[f * rows:(f + 1) * rows, :], w_ref[li, f],
                    preferred_element_type=jnp.float32)
            for f in range(nfilt)])
        delta = _ln(delta_pre, ln[6:7, :], ln[7:8, :])   # STU ln_2

        # compute_y_t in closed form with precomputed companion powers:
        #   y = delta + sum_{j=1..SL-1}  S_j @ delta @ C_j
        # -> one bank matmul + (SL-1) independent matmuls + add tree.
        ybig = jnp.dot(sy2, delta, preferred_element_type=jnp.float32)
        y = _tree_sum([delta] + [
            jnp.dot(ybig[j * rows:(j + 1) * rows, :], c_ref[li, j],
                    preferred_element_type=jnp.float32)
            for j in range(nlag)])

        x = x + h + y                   # STU internal residual + block residual

        # ---- STUBlock: x = x + ffn(ln_2(x))   (SwiGLU, bias=False) ----
        h2 = _ln(x, ln[2:3, :], ln[3:4, :])         # block ln_2
        u = jnp.dot(h2, w13t_ref[li], preferred_element_type=jnp.float32)
        a = u[:, :hdim]
        g = u[:, hdim:]
        x = x + jnp.dot((a * jax.nn.sigmoid(a)) * g, w2t_ref[li],
                        preferred_element_type=jnp.float32)

    # ---- head: preds = task_head(ln_f(x))   (task_head bias=False) ----
    xh = _ln(x, lnf_ref[0:1, :], lnf_ref[1:2, :])
    o_ref[...] = jnp.dot(xh, wht_ref[...], preferred_element_type=jnp.float32)


# ============================ pallas_call wrapper ===========================

def _full_spec(a):
    n = a.ndim
    return pl.BlockSpec(a.shape, lambda i, _n=n: (0,) * _n)


def sssm_forward(inputs, params, targets=None):
    bsz, sl, d = inputs.shape
    x2d = inputs.reshape(bsz * sl, d)           # free relayout in HBM
    ops = (params["emb_wt"], params["emb_b"], params["pos"],
           params["G2"], params["SY2"], params["W"], params["C"], params["LN"],
           params["W13T"], params["W2T"], params["lnf"], params["head_wt"])

    preds2d = pl.pallas_call(
        sssm_kernel,
        out_shape=jax.ShapeDtypeStruct((bsz * sl, d), jnp.float32),
        grid=(1,),
        in_specs=[_full_spec(x2d)] + [_full_spec(o) for o in ops],
        out_specs=pl.BlockSpec((bsz * sl, d), lambda i: (0, 0)),
        compiler_params=pltpu.CompilerParams(
            dimension_semantics=("arbitrary",)),
    )(x2d, *ops)

    preds = preds2d.reshape(bsz, sl, d)
    # controls['task'] == 'mujoco-v3' branch: loss only when targets is given.
    # TODO(synk): configs.loss_fn is an external callable; targets=None path only.
    loss = None
    return preds, (loss,)


# ============================ parameter setup (glue) ========================

def init_params(key):
    std = D ** -0.5               # SSSM._init_weights std
    m_x = float(D) ** -0.5        # uniform bound for m_u

    # Hankel spectral decomposition (STU.get_top_hankel_eigh), float64 numpy.
    idx = np.arange(1, SL + 1, dtype=np.float64)
    s = idx[:, None] + idx[None, :]
    Z = 2.0 / (s ** 3 - s)
    evals, evecs = np.linalg.eigh(Z)
    eig_vals = np.maximum(evals[-K:], 0.0)    # clamp tiny negative eigenvalues
    eig_vecs = evecs[:, -K:]                  # (SL, K)
    lam4 = eig_vals ** 0.25

    # per-filter causal operators on one sequence:
    #   f < K      : lam4[f] * T_f,  T_f[t, s] = eig_vecs[t - s, f]  (t >= s)
    #   f = K + i  : S_i, shift-down-by-i matrix (AR taps, lag 0 = identity)
    diff = np.arange(SL)[:, None] - np.arange(SL)[None, :]
    tri = diff >= 0
    G = np.zeros((NFILT, SL, SL), dtype=np.float64)
    for f in range(K):
        G[f] = np.where(tri, eig_vecs[np.clip(diff, 0, SL - 1), f], 0.0) * lam4[f]
    for i in range(KU):
        G[K + i] = np.eye(SL, k=-i)

    # batch-block-diagonal banks: one bank matmul covers the whole batch.
    def blockdiag_bank(ops_):                      # ops_: (n, SL, SL)
        n = ops_.shape[0]
        bank = np.zeros((n, BSZ * SL, BSZ * SL), dtype=np.float64)
        for f in range(n):
            for b in range(BSZ):
                bank[f, b * SL:(b + 1) * SL, b * SL:(b + 1) * SL] = ops_[f]
        return jnp.asarray(bank.reshape(n * BSZ * SL, BSZ * SL), jnp.float32)

    G2 = blockdiag_bank(G)                                        # (NFILT*B*SL, B*SL)
    shifts = np.stack([np.eye(SL, k=-j) for j in range(1, SL)])   # lags 1..SL-1
    SY2 = blockdiag_bank(shifts)                                  # ((SL-1)*B*SL, B*SL)

    keys = jax.random.split(key, 4 + NLAYERS)
    emb_w = jax.random.normal(keys[0], (D, D), jnp.float32) * std
    emb_b = jnp.zeros((1, D), jnp.float32)                        # zero-init bias
    wpe = jax.random.normal(keys[1], (SL, D), jnp.float32) * std
    head_w = jax.random.normal(keys[2], (D, D), jnp.float32) * std  # bias=False
    lnf = jnp.stack([jnp.ones(D, jnp.float32), jnp.zeros(D, jnp.float32)])

    W_l, C_l, LN_l, W13T_l, W2T_l = [], [], [], [], []
    for li in range(NLAYERS):
        ks = jax.random.split(keys[4 + li], 6)
        m_u = jax.random.uniform(ks[0], (D, D, KU), jnp.float32, -m_x, m_x)
        m_phi = jax.random.normal(ks[1], (K * D, D), jnp.float32) * float(
            np.sqrt(2.0 / (K * D + D)))                           # xavier_normal
        m_y = jax.random.normal(ks[2], (D, KY, D), jnp.float32) * float(
            np.sqrt(2.0 / (KY * D + D * D)))                      # xavier_normal
        w1 = jax.random.normal(ks[3], (HDIM, D), jnp.float32) * std
        w3 = jax.random.normal(ks[4], (HDIM, D), jnp.float32) * std
        w2 = jax.random.normal(ks[5], (D, HDIM), jnp.float32) * std

        # filter-bank weight stack matching G: m_phi D-blocks, then m_u taps
        w_phi = m_phi.reshape(K, D, D)               # block f = m_phi[f*D:(f+1)*D]
        w_ar = jnp.transpose(m_u, (2, 1, 0))         # [i] = m_u[:, :, i].T
        W_l.append(jnp.concatenate([w_phi, w_ar], axis=0))        # (NFILT, D, D)

        # companion powers of the m_y taps:  C_0 = I,
        #   C_j = sum_i C_{j-1-i} @ M_i,   M_i = m_y[:, i, :].T
        # so that y_t = sum_{j<=t} delta_{t-j} @ C_j  (exact compute_y_t solution).
        Ms = [jnp.transpose(m_y[:, i, :]) for i in range(KY)]
        Cs = [jnp.eye(D, dtype=jnp.float32)]
        for j in range(1, SL):
            Cj = jnp.zeros((D, D), jnp.float32)
            for i in range(KY):
                if j - 1 - i >= 0:
                    Cj = Cj + Cs[j - 1 - i] @ Ms[i]
            Cs.append(Cj)
        C_l.append(jnp.stack(Cs[1:]))                 # (SL-1, D, D); C_0 in-kernel

        # LayerNorm params (gamma=1, beta=0 since bias=False): rows =
        # [blk_ln1 g,b, blk_ln2 g,b, stu_ln1 g,b, stu_ln2 g,b]
        LN_l.append(jnp.tile(jnp.stack([jnp.ones(D, jnp.float32),
                                        jnp.zeros(D, jnp.float32)]), (4, 1)))
        W13T_l.append(jnp.concatenate([w1.T, w3.T], axis=1))      # (D, 2*HDIM)
        W2T_l.append(w2.T)

    return dict(
        emb_wt=emb_w.T, emb_b=emb_b, pos=jnp.tile(wpe, (BSZ, 1)),
        G2=G2,                          # (NFILT*B*SL, B*SL) shared, scale folded
        SY2=SY2,                        # ((SL-1)*B*SL, B*SL) shared shift bank
        W=jnp.stack(W_l),               # (NLAYERS, NFILT, D, D)
        C=jnp.stack(C_l),               # (NLAYERS, SL-1, D, D) companion powers
        LN=jnp.stack(LN_l),             # (NLAYERS, 8, D)
        W13T=jnp.stack(W13T_l),         # (NLAYERS, D, 2*HDIM)
        W2T=jnp.stack(W2T_l),           # (NLAYERS, HDIM, D)
        lnf=lnf, head_wt=head_w.T)


# ================================= main =====================================

if __name__ == "__main__":
    key = jax.random.PRNGKey(0)
    k_in, k_par = jax.random.split(key)
    params = init_params(k_par)
    inputs = jax.random.normal(k_in, (BSZ, SL, D), jnp.float32)

    preds, (loss,) = sssm_forward(inputs, params, targets=None)
    preds = jax.block_until_ready(preds)

    assert preds.shape == (BSZ, SL, D)
    assert bool(jnp.all(jnp.isfinite(preds)))
    print("KERNEL_OK")
</pallas_src>

<mosaic_0001>
module attributes {stable_mosaic.version = 11 : i64} {
  func.func @sssm_kernel(%arg0: i32, %arg1: memref<32x32xf32, #tpu.memory_space<vmem>>, %arg2: memref<32x32xf32, #tpu.memory_space<vmem>>, %arg3: memref<1x32xf32, #tpu.memory_space<vmem>>, %arg4: memref<32x32xf32, #tpu.memory_space<vmem>>, %arg5: memref<352x32xf32, #tpu.memory_space<vmem>>, %arg6: memref<480x32xf32, #tpu.memory_space<vmem>>, %arg7: memref<2x11x32x32xf32, #tpu.memory_space<vmem>>, %arg8: memref<2x15x32x32xf32, #tpu.memory_space<vmem>>, %arg9: memref<2x8x32xf32, #tpu.memory_space<vmem>>, %arg10: memref<2x32x128xf32, #tpu.memory_space<vmem>>, %arg11: memref<2x64x32xf32, #tpu.memory_space<vmem>>, %arg12: memref<2x32xf32, #tpu.memory_space<vmem>>, %arg13: memref<32x32xf32, #tpu.memory_space<vmem>>, %arg14: memref<32x32xf32, #tpu.memory_space<vmem>>) attributes {dimension_semantics = [#tpu.dimension_semantics<arbitrary>], iteration_bounds = array<i64: 1>, scalar_prefetch = 0 : i64, scratch_operands = 0 : i64, tpu.core_type = #tpu.core_type<tc>, window_params = [{pipeline_mode = #tpu.pipeline_mode<synchronous>, transform_indices = @transform_0, window_bounds = array<i64: 32, 32>}, {pipeline_mode = #tpu.pipeline_mode<synchronous>, transform_indices = @transform_1, window_bounds = array<i64: 32, 32>}, {pipeline_mode = #tpu.pipeline_mode<synchronous>, transform_indices = @transform_2, window_bounds = array<i64: 1, 32>}, {pipeline_mode = #tpu.pipeline_mode<synchronous>, transform_indices = @transform_3, window_bounds = array<i64: 32, 32>}, {pipeline_mode = #tpu.pipeline_mode<synchronous>, transform_indices = @transform_4, window_bounds = array<i64: 352, 32>}, {pipeline_mode = #tpu.pipeline_mode<synchronous>, transform_indices = @transform_5, window_bounds = array<i64: 480, 32>}, {pipeline_mode = #tpu.pipeline_mode<synchronous>, transform_indices = @transform_6, window_bounds = array<i64: 2, 11, 32, 32>}, {pipeline_mode = #tpu.pipeline_mode<synchronous>, transform_indices = @transform_7, window_bounds = array<i64: 2, 15, 32, 32>}, {pipeline_mode = #tpu.pipeline_mode<synchronous>, transform_indices = @transform_8, window_bounds = array<i64: 2, 8, 32>}, {pipeline_mode = #tpu.pipeline_mode<synchronous>, transform_indices = @transform_9, window_bounds = array<i64: 2, 32, 128>}, {pipeline_mode = #tpu.pipeline_mode<synchronous>, transform_indices = @transform_10, window_bounds = array<i64: 2, 64, 32>}, {pipeline_mode = #tpu.pipeline_mode<synchronous>, transform_indices = @transform_11, window_bounds = array<i64: 2, 32>}, {pipeline_mode = #tpu.pipeline_mode<synchronous>, transform_indices = @transform_12, window_bounds = array<i64: 32, 32>}, {pipeline_mode = #tpu.pipeline_mode<synchronous>, transform_indices = @transform_13, window_bounds = array<i64: 32, 32>}]} {
    %c0 = arith.constant 0 : index
    %c0_0 = arith.constant 0 : index
    %0 = vector.load %arg1[%c0, %c0_0] : memref<32x32xf32, #tpu.memory_space<vmem>>, vector<32x32xf32>
    %c0_1 = arith.constant 0 : index
    %c0_2 = arith.constant 0 : index
    %1 = vector.load %arg2[%c0_1, %c0_2] : memref<32x32xf32, #tpu.memory_space<vmem>>, vector<32x32xf32>
    %cst = arith.constant dense<0.000000e+00> : vector<32x32xf32>
    %2 = tpu.matmul %0, %1, %cst {dimension_numbers = #tpu.dot_dimension_numbers<[1], [0], [0], [1], [0, 0, 1, 1], [], []>} : vector<32x32xf32>, vector<32x32xf32>, vector<32x32xf32> -> vector<32x32xf32>
    %c0_3 = arith.constant 0 : index
    %c0_4 = arith.constant 0 : index
    %3 = vector.load %arg3[%c0_3, %c0_4] : memref<1x32xf32, #tpu.memory_space<vmem>>, vector<1x32xf32>
    %4 = vector.broadcast %3 : vector<1x32xf32> to vector<32x32xf32>
    %5 = arith.addf %2, %4 : vector<32x32xf32>
    %c0_5 = arith.constant 0 : index
    %c0_6 = arith.constant 0 : index
    %6 = vector.load %arg4[%c0_5, %c0_6] : memref<32x32xf32, #tpu.memory_space<vmem>>, vector<32x32xf32>
    %7 = arith.addf %5, %6 : vector<32x32xf32>
    %c0_7 = arith.constant 0 : index
    %c0_8 = arith.constant 0 : index
    %8 = vector.load %arg5[%c0_7, %c0_8] : memref<352x32xf32, #tpu.memory_space<vmem>>, vector<352x32xf32>
    %c0_9 = arith.constant 0 : index
    %c0_10 = arith.constant 0 : index
    %9 = vector.load %arg6[%c0_9, %c0_10] : memref<480x32xf32, #tpu.memory_space<vmem>>, vector<480x32xf32>
    %c0_11 = arith.constant 0 : index
    %c0_12 = arith.constant 0 : index
    %c0_13 = arith.constant 0 : index
    %10 = vector.load %arg9[%c0_11, %c0_12, %c0_13] : memref<2x8x32xf32, #tpu.memory_space<vmem>>, vector<1x8x32xf32>
    %11 = vector.shape_cast %10 : vector<1x8x32xf32> to vector<8x32xf32>
    %12 = vector.extract_strided_slice %11 {offsets = [0, 0], sizes = [1, 32], strides = [1, 1]} : vector<8x32xf32> to vector<1x32xf32>
    %13 = vector.extract_strided_slice %11 {offsets = [1, 0], sizes = [1, 32], strides = [1, 1]} : vector<8x32xf32> to vector<1x32xf32>
    %cst_14 = arith.constant dense<0.000000e+00> : vector<32xf32>
    %14 = vector.multi_reduction <add>, %7, %cst_14 [1] : vector<32x32xf32> to vector<32xf32>
    %15 = vector.shape_cast %14 : vector<32xf32> to vector<32x1xf32>
    %cst_15 = arith.constant 3.200000e+01 : f32
    %16 = vector.broadcast %cst_15 : f32 to vector<32x1xf32>
    %17 = arith.divf %15, %16 : vector<32x1xf32>
    %18 = vector.broadcast %17 : vector<32x1xf32> to vector<32x32xf32>
    %19 = arith.subf %7, %18 : vector<32x32xf32>
    %20 = arith.mulf %19, %19 : vector<32x32xf32>
    %cst_16 = arith.constant dense<0.000000e+00> : vector<32xf32>
    %21 = vector.multi_reduction <add>, %20, %cst_16 [1] : vector<32x32xf32> to vector<32xf32>
    %22 = vector.shape_cast %21 : vector<32xf32> to vector<32x1xf32>
    %cst_17 = arith.constant 3.200000e+01 : f32
    %23 = vector.broadcast %cst_17 : f32 to vector<32x1xf32>
    %24 = arith.divf %22, %23 : vector<32x1xf32>
    %cst_18 = arith.constant 9.99999974E-6 : f32
    %25 = vector.broadcast %cst_18 : f32 to vector<32x1xf32>
    %26 = arith.addf %24, %25 : vector<32x1xf32>
    %27 = math.rsqrt %26 : vector<32x1xf32>
    %28 = vector.broadcast %27 : vector<32x1xf32> to vector<32x32xf32>
    %29 = arith.mulf %19, %28 : vector<32x32xf32>
    %30 = vector.broadcast %12 : vector<1x32xf32> to vector<32x32xf32>
    %31 = arith.mulf %29, %30 : vector<32x32xf32>
    %32 = vector.broadcast %13 : vector<1x32xf32> to vector<32x32xf32>
    %33 = arith.addf %31, %32 : vector<32x32xf32>
    %34 = vector.extract_strided_slice %11 {offsets = [4, 0], sizes = [1, 32], strides = [1, 1]} : vector<8x32xf32> to vector<1x32xf32>
    %35 = vector.extract_strided_slice %11 {offsets = [5, 0], sizes = [1, 32], strides = [1, 1]} : vector<8x32xf32> to vector<1x32xf32>
    %cst_19 = arith.constant dense<0.000000e+00> : vector<32xf32>
    %36 = vector.multi_reduction <add>, %33, %cst_19 [1] : vector<32x32xf32> to vector<32xf32>
    %37 = vector.shape_cast %36 : vector<32xf32> to vector<32x1xf32>
    %cst_20 = arith.constant 3.200000e+01 : f32
    %38 = vector.broadcast %cst_20 : f32 to vector<32x1xf32>
    %39 = arith.divf %37, %38 : vector<32x1xf32>
    %40 = vector.broadcast %39 : vector<32x1xf32> to vector<32x32xf32>
    %41 = arith.subf %33, %40 : vector<32x32xf32>
    %42 = arith.mulf %41, %41 : vector<32x32xf32>
    %cst_21 = arith.constant dense<0.000000e+00> : vector<32xf32>
    %43 = vector.multi_reduction <add>, %42, %cst_21 [1] : vector<32x32xf32> to vector<32xf32>
    %44 = vector.shape_cast %43 : vector<32xf32> to vector<32x1xf32>
    %cst_22 = arith.constant 3.200000e+01 : f32
    %45 = vector.broadcast %cst_22 : f32 to vector<32x1xf32>
    %46 = arith.divf %44, %45 : vector<32x1xf32>
    %cst_23 = arith.constant 9.99999974E-6 : f32
    %47 = vector.broadcast %cst_23 : f32 to vector<32x1xf32>
    %48 = arith.addf %46, %47 : vector<32x1xf32>
    %49 = math.rsqrt %48 : vector<32x1xf32>
    %50 = vector.broadcast %49 : vector<32x1xf32> to vector<32x32xf32>
    %51 = arith.mulf %41, %50 : vector<32x32xf32>
    %52 = vector.broadcast %34 : vector<1x32xf32> to vector<32x32xf32>
    %53 = arith.mulf %51, %52 : vector<32x32xf32>
    %54 = vector.broadcast %35 : vector<1x32xf32> to vector<32x32xf32>
    %55 = arith.addf %53, %54 : vector<32x32xf32>
    %cst_24 = arith.constant dense<0.000000e+00> : vector<352x32xf32>
    %56 = tpu.matmul %8, %55, %cst_24 {dimension_numbers = #tpu.dot_dimension_numbers<[1], [0], [0], [1], [0, 0, 1, 1], [], []>} : vector<352x32xf32>, vector<32x32xf32>, vector<352x32xf32> -> vector<352x32xf32>
    %57 = vector.extract_strided_slice %56 {offsets = [0, 0], sizes = [32, 32], strides = [1, 1]} : vector<352x32xf32> to vector<32x32xf32>
    %c0_25 = arith.constant 0 : index
    %c0_26 = arith.constant 0 : index
    %c0_27 = arith.constant 0 : index
    %c0_28 = arith.constant 0 : index
    %58 = vector.load %arg7[%c0_25, %c0_26, %c0_27, %c0_28] : memref<2x11x32x32xf32, #tpu.memory_space<vmem>>, vector<1x1x32x32xf32>
    %59 = vector.shape_cast %58 : vector<1x1x32x32xf32> to vector<32x32xf32>
    %cst_29 = arith.constant dense<0.000000e+00> : vector<32x32xf32>
    %60 = tpu.matmul %57, %59, %cst_29 {dimension_numbers = #tpu.dot_dimension_numbers<[1], [0], [0], [1], [0, 0, 1, 1], [], []>} : vector<32x32xf32>, vector<32x32xf32>, vector<32x32xf32> -> vector<32x32xf32>
    %61 = vector.extract_strided_slice %56 {offsets = [32, 0], sizes = [32, 32], strides = [1, 1]} : vector<352x32xf32> to vector<32x32xf32>
    %c0_30 = arith.constant 0 : index
    %c1 = arith.constant 1 : index
    %c0_31 = arith.constant 0 : index
    %c0_32 = arith.constant 0 : index
    %62 = vector.load %arg7[%c0_30, %c1, %c0_31, %c0_32] : memref<2x11x32x32xf32, #tpu.memory_space<vmem>>, vector<1x1x32x32xf32>
    %63 = vector.shape_cast %62 : vector<1x1x32x32xf32> to vector<32x32xf32>
    %cst_33 = arith.constant dense<0.000000e+00> : vector<32x32xf32>
    %64 = tpu.matmul %61, %63, %cst_33 {dimension_numbers = #tpu.dot_dimension_numbers<[1], [0], [0], [1], [0, 0, 1, 1], [], []>} : vector<32x32xf32>, vector<32x32xf32>, vector<32x32xf32> -> vector<32x32xf32>
    %65 = vector.extract_strided_slice %56 {offsets = [64, 0], sizes = [32, 32], strides = [1, 1]} : vector<352x32xf32> to vector<32x32xf32>
    %c0_34 = arith.constant 0 : index
    %c2 = arith.constant 2 : index
    %c0_35 = arith.constant 0 : index
    %c0_36 = arith.constant 0 : index
    %66 = vector.load %arg7[%c0_34, %c2, %c0_35, %c0_36] : memref<2x11x32x32xf32, #tpu.memory_space<vmem>>, vector<1x1x32x32xf32>
    %67 = vector.shape_cast %66 : vector<1x1x32x32xf32> to vector<32x32xf32>
    %cst_37 = arith.constant dense<0.000000e+00> : vector<32x32xf32>
    %68 = tpu.matmul %65, %67, %cst_37 {dimension_numbers = #tpu.dot_dimension_numbers<[1], [0], [0], [1], [0, 0, 1, 1], [], []>} : vector<32x32xf32>, vector<32x32xf32>, vector<32x32xf32> -> vector<32x32xf32>
    %69 = vector.extract_strided_slice %56 {offsets = [96, 0], sizes = [32, 32], strides = [1, 1]} : vector<352x32xf32> to vector<32x32xf32>
    %c0_38 = arith.constant 0 : index
    %c3 = arith.constant 3 : index
    %c0_39 = arith.constant 0 : index
    %c0_40 = arith.constant 0 : index
    %70 = vector.load %arg7[%c0_38, %c3, %c0_39, %c0_40] : memref<2x11x32x32xf32, #tpu.memory_space<vmem>>, vector<1x1x32x32xf32>
    %71 = vector.shape_cast %70 : vector<1x1x32x32xf32> to vector<32x32xf32>
    %cst_41 = arith.constant dense<0.000000e+00> : vector<32x32xf32>
    %72 = tpu.matmul %69, %71, %cst_41 {dimension_numbers = #tpu.dot_dimension_numbers<[1], [0], [0], [1], [0, 0, 1, 1], [], []>} : vector<32x32xf32>, vector<32x32xf32>, vector<32x32xf32> -> vector<32x32xf32>
    %73 = vector.extract_strided_slice %56 {offsets = [128, 0], sizes = [32, 32], strides = [1, 1]} : vector<352x32xf32> to vector<32x32xf32>
    %c0_42 = arith.constant 0 : index
    %c4 = arith.constant 4 : index
    %c0_43 = arith.constant 0 : index
    %c0_44 = arith.constant 0 : index
    %74 = vector.load %arg7[%c0_42, %c4, %c0_43, %c0_44] : memref<2x11x32x32xf32, #tpu.memory_space<vmem>>, vector<1x1x32x32xf32>
    %75 = vector.shape_cast %74 : vector<1x1x32x32xf32> to vector<32x32xf32>
    %cst_45 = arith.constant dense<0.000000e+00> : vector<32x32xf32>
    %76 = tpu.matmul %73, %75, %cst_45 {dimension_numbers = #tpu.dot_dimension_numbers<[1], [0], [0], [1], [0, 0, 1, 1], [], []>} : vector<32x32xf32>, vector<32x32xf32>, vector<32x32xf32> -> vector<32x32xf32>
    %77 = vector.extract_strided_slice %56 {offsets = [160, 0], sizes = [32, 32], strides = [1, 1]} : vector<352x32xf32> to vector<32x32xf32>
    %c0_46 = arith.constant 0 : index
    %c5 = arith.constant 5 : index
    %c0_47 = arith.constant 0 : index
    %c0_48 = arith.constant 0 : index
    %78 = vector.load %arg7[%c0_46, %c5, %c0_47, %c0_48] : memref<2x11x32x32xf32, #tpu.memory_space<vmem>>, vector<1x1x32x32xf32>
    %79 = vector.shape_cast %78 : vector<1x1x32x32xf32> to vector<32x32xf32>
    %cst_49 = arith.constant dense<0.000000e+00> : vector<32x32xf32>
    %80 = tpu.matmul %77, %79, %cst_49 {dimension_numbers = #tpu.dot_dimension_numbers<[1], [0], [0], [1], [0, 0, 1, 1], [], []>} : vector<32x32xf32>, vector<32x32xf32>, vector<32x32xf32> -> vector<32x32xf32>
    %81 = vector.extract_strided_slice %56 {offsets = [192, 0], sizes = [32, 32], strides = [1, 1]} : vector<352x32xf32> to vector<32x32xf32>
    %c0_50 = arith.constant 0 : index
    %c6 = arith.constant 6 : index
    %c0_51 = arith.constant 0 : index
    %c0_52 = arith.constant 0 : index
    %82 = vector.load %arg7[%c0_50, %c6, %c0_51, %c0_52] : memref<2x11x32x32xf32, #tpu.memory_space<vmem>>, vector<1x1x32x32xf32>
    %83 = vector.shape_cast %82 : vector<1x1x32x32xf32> to vector<32x32xf32>
    %cst_53 = arith.constant dense<0.000000e+00> : vector<32x32xf32>
    %84 = tpu.matmul %81, %83, %cst_53 {dimension_numbers = #tpu.dot_dimension_numbers<[1], [0], [0], [1], [0, 0, 1, 1], [], []>} : vector<32x32xf32>, vector<32x32xf32>, vector<32x32xf32> -> vector<32x32xf32>
    %85 = vector.extract_strided_slice %56 {offsets = [224, 0], sizes = [32, 32], strides = [1, 1]} : vector<352x32xf32> to vector<32x32xf32>
    %c0_54 = arith.constant 0 : index
    %c7 = arith.constant 7 : index
    %c0_55 = arith.constant 0 : index
    %c0_56 = arith.constant 0 : index
    %86 = vector.load %arg7[%c0_54, %c7, %c0_55, %c0_56] : memref<2x11x32x32xf32, #tpu.memory_space<vmem>>, vector<1x1x32x32xf32>
    %87 = vector.shape_cast %86 : vector<1x1x32x32xf32> to vector<32x32xf32>
    %cst_57 = arith.constant dense<0.000000e+00> : vector<32x32xf32>
    %88 = tpu.matmul %85, %87, %cst_57 {dimension_numbers = #tpu.dot_dimension_numbers<[1], [0], [0], [1], [0, 0, 1, 1], [], []>} : vector<32x32xf32>, vector<32x32xf32>, vector<32x32xf32> -> vector<32x32xf32>
    %89 = vector.extract_strided_slice %56 {offsets = [256, 0], sizes = [32, 32], strides = [1, 1]} : vector<352x32xf32> to vector<32x32xf32>
    %c0_58 = arith.constant 0 : index
    %c8 = arith.constant 8 : index
    %c0_59 = arith.constant 0 : index
    %c0_60 = arith.constant 0 : index
    %90 = vector.load %arg7[%c0_58, %c8, %c0_59, %c0_60] : memref<2x11x32x32xf32, #tpu.memory_space<vmem>>, vector<1x1x32x32xf32>
    %91 = vector.shape_cast %90 : vector<1x1x32x32xf32> to vector<32x32xf32>
    %cst_61 = arith.constant dense<0.000000e+00> : vector<32x32xf32>
    %92 = tpu.matmul %89, %91, %cst_61 {dimension_numbers = #tpu.dot_dimension_numbers<[1], [0], [0], [1], [0, 0, 1, 1], [], []>} : vector<32x32xf32>, vector<32x32xf32>, vector<32x32xf32> -> vector<32x32xf32>
    %93 = vector.extract_strided_slice %56 {offsets = [288, 0], sizes = [32, 32], strides = [1, 1]} : vector<352x32xf32> to vector<32x32xf32>
    %c0_62 = arith.constant 0 : index
    %c9 = arith.constant 9 : index
    %c0_63 = arith.constant 0 : index
    %c0_64 = arith.constant 0 : index
    %94 = vector.load %arg7[%c0_62, %c9, %c0_63, %c0_64] : memref<2x11x32x32xf32, #tpu.memory_space<vmem>>, vector<1x1x32x32xf32>
    %95 = vector.shape_cast %94 : vector<1x1x32x32xf32> to vector<32x32xf32>
    %cst_65 = arith.constant dense<0.000000e+00> : vector<32x32xf32>
    %96 = tpu.matmul %93, %95, %cst_65 {dimension_numbers = #tpu.dot_dimension_numbers<[1], [0], [0], [1], [0, 0, 1, 1], [], []>} : vector<32x32xf32>, vector<32x32xf32>, vector<32x32xf32> -> vector<32x32xf32>
    %97 = vector.extract_strided_slice %56 {offsets = [320, 0], sizes = [32, 32], strides = [1, 1]} : vector<352x32xf32> to vector<32x32xf32>
    %c0_66 = arith.constant 0 : index
    %c10 = arith.constant 10 : index
    %c0_67 = arith.constant 0 : index
    %c0_68 = arith.constant 0 : index
    %98 = vector.load %arg7[%c0_66, %c10, %c0_67, %c0_68] : memref<2x11x32x32xf32, #tpu.memory_space<vmem>>, vector<1x1x32x32xf32>
    %99 = vector.shape_cast %98 : vector<1x1x32x32xf32> to vector<32x32xf32>
    %cst_69 = arith.constant dense<0.000000e+00> : vector<32x32xf32>
    %100 = tpu.matmul %97, %99, %cst_69 {dimension_numbers = #tpu.dot_dimension_numbers<[1], [0], [0], [1], [0, 0, 1, 1], [], []>} : vector<32x32xf32>, vector<32x32xf32>, vector<32x32xf32> -> vector<32x32xf32>
    %101 = arith.addf %60, %64 : vector<32x32xf32>
    %102 = arith.addf %68, %72 : vector<32x32xf32>
    %103 = arith.addf %76, %80 : vector<32x32xf32>
    %104 = arith.addf %84, %88 : vector<32x32xf32>
    %105 = arith.addf %92, %96 : vector<32x32xf32>
    %106 = arith.addf %101, %102 : vector<32x32xf32>
    %107 = arith.addf %103, %104 : vector<32x32xf32>
    %108 = arith.addf %105, %100 : vector<32x32xf32>
    %109 = arith.addf %106, %107 : vector<32x32xf32>
    %110 = arith.addf %109, %108 : vector<32x32xf32>
    %111 = vector.extract_strided_slice %11 {offsets = [6, 0], sizes = [1, 32], strides = [1, 1]} : vector<8x32xf32> to vector<1x32xf32>
    %112 = vector.extract_strided_slice %11 {offsets = [7, 0], sizes = [1, 32], strides = [1, 1]} : vector<8x32xf32> to vector<1x32xf32>
    %cst_70 = arith.constant dense<0.000000e+00> : vector<32xf32>
    %113 = vector.multi_reduction <add>, %110, %cst_70 [1] : vector<32x32xf32> to vector<32xf32>
    %114 = vector.shape_cast %113 : vector<32xf32> to vector<32x1xf32>
    %cst_71 = arith.constant 3.200000e+01 : f32
    %115 = vector.broadcast %cst_71 : f32 to vector<32x1xf32>
    %116 = arith.divf %114, %115 : vector<32x1xf32>
    %117 = vector.broadcast %116 : vector<32x1xf32> to vector<32x32xf32>
    %118 = arith.subf %110, %117 : vector<32x32xf32>
    %119 = arith.mulf %118, %118 : vector<32x32xf32>
    %cst_72 = arith.constant dense<0.000000e+00> : vector<32xf32>
    %120 = vector.multi_reduction <add>, %119, %cst_72 [1] : vector<32x32xf32> to vector<32xf32>
    %121 = vector.shape_cast %120 : vector<32xf32> to vector<32x1xf32>
    %cst_73 = arith.constant 3.200000e+01 : f32
    %122 = vector.broadcast %cst_73 : f32 to vector<32x1xf32>
    %123 = arith.divf %121, %122 : vector<32x1xf32>
    %cst_74 = arith.constant 9.99999974E-6 : f32
    %124 = vector.broadcast %cst_74 : f32 to vector<32x1xf32>
    %125 = arith.addf %123, %124 : vector<32x1xf32>
    %126 = math.rsqrt %125 : vector<32x1xf32>
    %127 = vector.broadcast %126 : vector<32x1xf32> to vector<32x32xf32>
    %128 = arith.mulf %118, %127 : vector<32x32xf32>
    %129 = vector.broadcast %111 : vector<1x32xf32> to vector<32x32xf32>
    %130 = arith.mulf %128, %129 : vector<32x32xf32>
    %131 = vector.broadcast %112 : vector<1x32xf32> to vector<32x32xf32>
    %132 = arith.addf %130, %131 : vector<32x32xf32>
    %cst_75 = arith.constant dense<0.000000e+00> : vector<480x32xf32>
    %133 = tpu.matmul %9, %132, %cst_75 {dimension_numbers = #tpu.dot_dimension_numbers<[1], [0], [0], [1], [0, 0, 1, 1], [], []>} : vector<480x32xf32>, vector<32x32xf32>, vector<480x32xf32> -> vector<480x32xf32>
    %134 = vector.extract_strided_slice %133 {offsets = [0, 0], sizes = [32, 32], strides = [1, 1]} : vector<480x32xf32> to vector<32x32xf32>
    %c0_76 = arith.constant 0 : index
    %c0_77 = arith.constant 0 : index
    %c0_78 = arith.constant 0 : index
    %c0_79 = arith.constant 0 : index
    %135 = vector.load %arg8[%c0_76, %c0_77, %c0_78, %c0_79] : memref<2x15x32x32xf32, #tpu.memory_space<vmem>>, vector<1x1x32x32xf32>
    %136 = vector.shape_cast %135 : vector<1x1x32x32xf32> to vector<32x32xf32>
    %cst_80 = arith.constant dense<0.000000e+00> : vector<32x32xf32>
    %137 = tpu.matmul %134, %136, %cst_80 {dimension_numbers = #tpu.dot_dimension_numbers<[1], [0], [0], [1], [0, 0, 1, 1], [], []>} : vector<32x32xf32>, vector<32x32xf32>, vector<32x32xf32> -> vector<32x32xf32>
    %138 = vector.extract_strided_slice %133 {offsets = [32, 0], sizes = [32, 32], strides = [1, 1]} : vector<480x32xf32> to vector<32x32xf32>
    %c0_81 = arith.constant 0 : index
    %c1_82 = arith.constant 1 : index
    %c0_83 = arith.constant 0 : index
    %c0_84 = arith.constant 0 : index
    %139 = vector.load %arg8[%c0_81, %c1_82, %c0_83, %c0_84] : memref<2x15x32x32xf32, #tpu.memory_space<vmem>>, vector<1x1x32x32xf32>
    %140 = vector.shape_cast %139 : vector<1x1x32x32xf32> to vector<32x32xf32>
    %cst_85 = arith.constant dense<0.000000e+00> : vector<32x32xf32>
    %141 = tpu.matmul %138, %140, %cst_85 {dimension_numbers = #tpu.dot_dimension_numbers<[1], [0], [0], [1], [0, 0, 1, 1], [], []>} : vector<32x32xf32>, vector<32x32xf32>, vector<32x32xf32> -> vector<32x32xf32>
    %142 = vector.extract_strided_slice %133 {offsets = [64, 0], sizes = [32, 32], strides = [1, 1]} : vector<480x32xf32> to vector<32x32xf32>
    %c0_86 = arith.constant 0 : index
    %c2_87 = arith.constant 2 : index
    %c0_88 = arith.constant 0 : index
    %c0_89 = arith.constant 0 : index
    %143 = vector.load %arg8[%c0_86, %c2_87, %c0_88, %c0_89] : memref<2x15x32x32xf32, #tpu.memory_space<vmem>>, vector<1x1x32x32xf32>
    %144 = vector.shape_cast %143 : vector<1x1x32x32xf32> to vector<32x32xf32>
    %cst_90 = arith.constant dense<0.000000e+00> : vector<32x32xf32>
    %145 = tpu.matmul %142, %144, %cst_90 {dimension_numbers = #tpu.dot_dimension_numbers<[1], [0], [0], [1], [0, 0, 1, 1], [], []>} : vector<32x32xf32>, vector<32x32xf32>, vector<32x32xf32> -> vector<32x32xf32>
    %146 = vector.extract_strided_slice %133 {offsets = [96, 0], sizes = [32, 32], strides = [1, 1]} : vector<480x32xf32> to vector<32x32xf32>
    %c0_91 = arith.constant 0 : index
    %c3_92 = arith.constant 3 : index
    %c0_93 = arith.constant 0 : index
    %c0_94 = arith.constant 0 : index
    %147 = vector.load %arg8[%c0_91, %c3_92, %c0_93, %c0_94] : memref<2x15x32x32xf32, #tpu.memory_space<vmem>>, vector<1x1x32x32xf32>
    %148 = vector.shape_cast %147 : vector<1x1x32x32xf32> to vector<32x32xf32>
    %cst_95 = arith.constant dense<0.000000e+00> : vector<32x32xf32>
    %149 = tpu.matmul %146, %148, %cst_95 {dimension_numbers = #tpu.dot_dimension_numbers<[1], [0], [0], [1], [0, 0, 1, 1], [], []>} : vector<32x32xf32>, vector<32x32xf32>, vector<32x32xf32> -> vector<32x32xf32>
    %150 = vector.extract_strided_slice %133 {offsets = [128, 0], sizes = [32, 32], strides = [1, 1]} : vector<480x32xf32> to vector<32x32xf32>
    %c0_96 = arith.constant 0 : index
    %c4_97 = arith.constant 4 : index
    %c0_98 = arith.constant 0 : index
    %c0_99 = arith.constant 0 : index
    %151 = vector.load %arg8[%c0_96, %c4_97, %c0_98, %c0_99] : memref<2x15x32x32xf32, #tpu.memory_space<vmem>>, vector<1x1x32x32xf32>
    %152 = vector.shape_cast %151 : vector<1x1x32x32xf32> to vector<32x32xf32>
    %cst_100 = arith.constant dense<0.000000e+00> : vector<32x32xf32>
    %153 = tpu.matmul %150, %152, %cst_100 {dimension_numbers = #tpu.dot_dimension_numbers<[1], [0], [0], [1], [0, 0, 1, 1], [], []>} : vector<32x32xf32>, vector<32x32xf32>, vector<32x32xf32> -> vector<32x32xf32>
    %154 = vector.extract_strided_slice %133 {offsets = [160, 0], sizes = [32, 32], strides = [1, 1]} : vector<480x32xf32> to vector<32x32xf32>
    %c0_101 = arith.constant 0 : index
    %c5_102 = arith.constant 5 : index
    %c0_103 = arith.constant 0 : index
    %c0_104 = arith.constant 0 : index
    %155 = vector.load %arg8[%c0_101, %c5_102, %c0_103, %c0_104] : memref<2x15x32x32xf32, #tpu.memory_space<vmem>>, vector<1x1x32x32xf32>
    %156 = vector.shape_cast %155 : vector<1x1x32x32xf32> to vector<32x32xf32>
    %cst_105 = arith.constant dense<0.000000e+00> : vector<32x32xf32>
    %157 = tpu.matmul %154, %156, %cst_105 {dimension_numbers = #tpu.dot_dimension_numbers<[1], [0], [0], [1], [0, 0, 1, 1], [], []>} : vector<32x32xf32>, vector<32x32xf32>, vector<32x32xf32> -> vector<32x32xf32>
    %158 = vector.extract_strided_slice %133 {offsets = [192, 0], sizes = [32, 32], strides = [1, 1]} : vector<480x32xf32> to vector<32x32xf32>
    %c0_106 = arith.constant 0 : index
    %c6_107 = arith.constant 6 : index
    %c0_108 = arith.constant 0 : index
    %c0_109 = arith.constant 0 : index
    %159 = vector.load %arg8[%c0_106, %c6_107, %c0_108, %c0_109] : memref<2x15x32x32xf32, #tpu.memory_space<vmem>>, vector<1x1x32x32xf32>
    %160 = vector.shape_cast %159 : vector<1x1x32x32xf32> to vector<32x32xf32>
    %cst_110 = arith.constant dense<0.000000e+00> : vector<32x32xf32>
    %161 = tpu.matmul %158, %160, %cst_110 {dimension_numbers = #tpu.dot_dimension_numbers<[1], [0], [0], [1], [0, 0, 1, 1], [], []>} : vector<32x32xf32>, vector<32x32xf32>, vector<32x32xf32> -> vector<32x32xf32>
    %162 = vector.extract_strided_slice %133 {offsets = [224, 0], sizes = [32, 32], strides = [1, 1]} : vector<480x32xf32> to vector<32x32xf32>
    %c0_111 = arith.constant 0 : index
    %c7_112 = arith.constant 7 : index
    %c0_113 = arith.constant 0 : index
    %c0_114 = arith.constant 0 : index
    %163 = vector.load %arg8[%c0_111, %c7_112, %c0_113, %c0_114] : memref<2x15x32x32xf32, #tpu.memory_space<vmem>>, vector<1x1x32x32xf32>
    %164 = vector.shape_cast %163 : vector<1x1x32x32xf32> to vector<32x32xf32>
    %cst_115 = arith.constant dense<0.000000e+00> : vector<32x32xf32>
    %165 = tpu.matmul %162, %164, %cst_115 {dimension_numbers = #tpu.dot_dimension_numbers<[1], [0], [0], [1], [0, 0, 1, 1], [], []>} : vector<32x32xf32>, vector<32x32xf32>, vector<32x32xf32> -> vector<32x32xf32>
    %166 = vector.extract_strided_slice %133 {offsets = [256, 0], sizes = [32, 32], strides = [1, 1]} : vector<480x32xf32> to vector<32x32xf32>
    %c0_116 = arith.constant 0 : index
    %c8_117 = arith.constant 8 : index
    %c0_118 = arith.constant 0 : index
    %c0_119 = arith.constant 0 : index
    %167 = vector.load %arg8[%c0_116, %c8_117, %c0_118, %c0_119] : memref<2x15x32x32xf32, #tpu.memory_space<vmem>>, vector<1x1x32x32xf32>
    %168 = vector.shape_cast %167 : vector<1x1x32x32xf32> to vector<32x32xf32>
    %cst_120 = arith.constant dense<0.000000e+00> : vector<32x32xf32>
    %169 = tpu.matmul %166, %168, %cst_120 {dimension_numbers = #tpu.dot_dimension_numbers<[1], [0], [0], [1], [0, 0, 1, 1], [], []>} : vector<32x32xf32>, vector<32x32xf32>, vector<32x32xf32> -> vector<32x32xf32>
    %170 = vector.extract_strided_slice %133 {offsets = [288, 0], sizes = [32, 32], strides = [1, 1]} : vector<480x32xf32> to vector<32x32xf32>
    %c0_121 = arith.constant 0 : index
    %c9_122 = arith.constant 9 : index
    %c0_123 = arith.constant 0 : index
    %c0_124 = arith.constant 0 : index
    %171 = vector.load %arg8[%c0_121, %c9_122, %c0_123, %c0_124] : memref<2x15x32x32xf32, #tpu.memory_space<vmem>>, vector<1x1x32x32xf32>
    %172 = vector.shape_cast %171 : vector<1x1x32x32xf32> to vector<32x32xf32>
    %cst_125 = arith.constant dense<0.000000e+00> : vector<32x32xf32>
    %173 = tpu.matmul %170, %172, %cst_125 {dimension_numbers = #tpu.dot_dimension_numbers<[1], [0], [0], [1], [0, 0, 1, 1], [], []>} : vector<32x32xf32>, vector<32x32xf32>, vector<32x32xf32> -> vector<32x32xf32>
    %174 = vector.extract_strided_slice %133 {offsets = [320, 0], sizes = [32, 32], strides = [1, 1]} : vector<480x32xf32> to vector<32x32xf32>
    %c0_126 = arith.constant 0 : index
    %c10_127 = arith.constant 10 : index
    %c0_128 = arith.constant 0 : index
    %c0_129 = arith.constant 0 : index
    %175 = vector.load %arg8[%c0_126, %c10_127, %c0_128, %c0_129] : memref<2x15x32x32xf32, #tpu.memory_space<vmem>>, vector<1x1x32x32xf32>
    %176 = vector.shape_cast %175 : vector<1x1x32x32xf32> to vector<32x32xf32>
    %cst_130 = arith.constant dense<0.000000e+00> : vector<32x32xf32>
    %177 = tpu.matmul %174, %176, %cst_130 {dimension_numbers = #tpu.dot_dimension_numbers<[1], [0], [0], [1], [0, 0, 1, 1], [], []>} : vector<32x32xf32>, vector<32x32xf32>, vector<32x32xf32> -> vector<32x32xf32>
    %178 = vector.extract_strided_slice %133 {offsets = [352, 0], sizes = [32, 32], strides = [1, 1]} : vector<480x32xf32> to vector<32x32xf32>
    %c0_131 = arith.constant 0 : index
    %c11 = arith.constant 11 : index
    %c0_132 = arith.constant 0 : index
    %c0_133 = arith.constant 0 : index
    %179 = vector.load %arg8[%c0_131, %c11, %c0_132, %c0_133] : memref<2x15x32x32xf32, #tpu.memory_space<vmem>>, vector<1x1x32x32xf32>
    %180 = vector.shape_cast %179 : vector<1x1x32x32xf32> to vector<32x32xf32>
    %cst_134 = arith.constant dense<0.000000e+00> : vector<32x32xf32>
    %181 = tpu.matmul %178, %180, %cst_134 {dimension_numbers = #tpu.dot_dimension_numbers<[1], [0], [0], [1], [0, 0, 1, 1], [], []>} : vector<32x32xf32>, vector<32x32xf32>, vector<32x32xf32> -> vector<32x32xf32>
    %182 = vector.extract_strided_slice %133 {offsets = [384, 0], sizes = [32, 32], strides = [1, 1]} : vector<480x32xf32> to vector<32x32xf32>
    %c0_135 = arith.constant 0 : index
    %c12 = arith.constant 12 : index
    %c0_136 = arith.constant 0 : index
    %c0_137 = arith.constant 0 : index
    %183 = vector.load %arg8[%c0_135, %c12, %c0_136, %c0_137] : memref<2x15x32x32xf32, #tpu.memory_space<vmem>>, vector<1x1x32x32xf32>
    %184 = vector.shape_cast %183 : vector<1x1x32x32xf32> to vector<32x32xf32>
    %cst_138 = arith.constant dense<0.000000e+00> : vector<32x32xf32>
    %185 = tpu.matmul %182, %184, %cst_138 {dimension_numbers = #tpu.dot_dimension_numbers<[1], [0], [0], [1], [0, 0, 1, 1], [], []>} : vector<32x32xf32>, vector<32x32xf32>, vector<32x32xf32> -> vector<32x32xf32>
    %186 = vector.extract_strided_slice %133 {offsets = [416, 0], sizes = [32, 32], strides = [1, 1]} : vector<480x32xf32> to vector<32x32xf32>
    %c0_139 = arith.constant 0 : index
    %c13 = arith.constant 13 : index
    %c0_140 = arith.constant 0 : index
    %c0_141 = arith.constant 0 : index
    %187 = vector.load %arg8[%c0_139, %c13, %c0_140, %c0_141] : memref<2x15x32x32xf32, #tpu.memory_space<vmem>>, vector<1x1x32x32xf32>
    %188 = vector.shape_cast %187 : vector<1x1x32x32xf32> to vector<32x32xf32>
    %cst_142 = arith.constant dense<0.000000e+00> : vector<32x32xf32>
    %189 = tpu.matmul %186, %188, %cst_142 {dimension_numbers = #tpu.dot_dimension_numbers<[1], [0], [0], [1], [0, 0, 1, 1], [], []>} : vector<32x32xf32>, vector<32x32xf32>, vector<32x32xf32> -> vector<32x32xf32>
    %190 = vector.extract_strided_slice %133 {offsets = [448, 0], sizes = [32, 32], strides = [1, 1]} : vector<480x32xf32> to vector<32x32xf32>
    %c0_143 = arith.constant 0 : index
    %c14 = arith.constant 14 : index
    %c0_144 = arith.constant 0 : index
    %c0_145 = arith.constant 0 : index
    %191 = vector.load %arg8[%c0_143, %c14, %c0_144, %c0_145] : memref<2x15x32x32xf32, #tpu.memory_space<vmem>>, vector<1x1x32x32xf32>
    %192 = vector.shape_cast %191 : vector<1x1x32x32xf32> to vector<32x32xf32>
    %cst_146 = arith.constant dense<0.000000e+00> : vector<32x32xf32>
    %193 = tpu.matmul %190, %192, %cst_146 {dimension_numbers = #tpu.dot_dimension_numbers<[1], [0], [0], [1], [0, 0, 1, 1], [], []>} : vector<32x32xf32>, vector<32x32xf32>, vector<32x32xf32> -> vector<32x32xf32>
    %194 = arith.addf %132, %137 : vector<32x32xf32>
    %195 = arith.addf %141, %145 : vector<32x32xf32>
    %196 = arith.addf %149, %153 : vector<32x32xf32>
    %197 = arith.addf %157, %161 : vector<32x32xf32>
    %198 = arith.addf %165, %169 : vector<32x32xf32>
    %199 = arith.addf %173, %177 : vector<32x32xf32>
    %200 = arith.addf %181, %185 : vector<32x32xf32>
    %201 = arith.addf %189, %193 : vector<32x32xf32>
    %202 = arith.addf %194, %195 : vector<32x32xf32>
    %203 = arith.addf %196, %197 : vector<32x32xf32>
    %204 = arith.addf %198, %199 : vector<32x32xf32>
    %205 = arith.addf %200, %201 : vector<32x32xf32>
    %206 = arith.addf %202, %203 : vector<32x32xf32>
    %207 = arith.addf %204, %205 : vector<32x32xf32>
    %208 = arith.addf %206, %207 : vector<32x32xf32>
    %209 = arith.addf %7, %33 : vector<32x32xf32>
    %210 = arith.addf %209, %208 : vector<32x32xf32>
    %211 = vector.extract_strided_slice %11 {offsets = [2, 0], sizes = [1, 32], strides = [1, 1]} : vector<8x32xf32> to vector<1x32xf32>
    %212 = vector.extract_strided_slice %11 {offsets = [3, 0], sizes = [1, 32], strides = [1, 1]} : vector<8x32xf32> to vector<1x32xf32>
    %cst_147 = arith.constant dense<0.000000e+00> : vector<32xf32>
    %213 = vector.multi_reduction <add>, %210, %cst_147 [1] : vector<32x32xf32> to vector<32xf32>
    %214 = vector.shape_cast %213 : vector<32xf32> to vector<32x1xf32>
    %cst_148 = arith.constant 3.200000e+01 : f32
    %215 = vector.broadcast %cst_148 : f32 to vector<32x1xf32>
    %216 = arith.divf %214, %215 : vector<32x1xf32>
    %217 = vector.broadcast %216 : vector<32x1xf32> to vector<32x32xf32>
    %218 = arith.subf %210, %217 : vector<32x32xf32>
    %219 = arith.mulf %218, %218 : vector<32x32xf32>
    %cst_149 = arith.constant dense<0.000000e+00> : vector<32xf32>
    %220 = vector.multi_reduction <add>, %219, %cst_149 [1] : vector<32x32xf32> to vector<32xf32>
    %221 = vector.shape_cast %220 : vector<32xf32> to vector<32x1xf32>
    %cst_150 = arith.constant 3.200000e+01 : f32
    %222 = vector.broadcast %cst_150 : f32 to vector<32x1xf32>
    %223 = arith.divf %221, %222 : vector<32x1xf32>
    %cst_151 = arith.constant 9.99999974E-6 : f32
    %224 = vector.broadcast %cst_151 : f32 to vector<32x1xf32>
    %225 = arith.addf %223, %224 : vector<32x1xf32>
    %226 = math.rsqrt %225 : vector<32x1xf32>
    %227 = vector.broadcast %226 : vector<32x1xf32> to vector<32x32xf32>
    %228 = arith.mulf %218, %227 : vector<32x32xf32>
    %229 = vector.broadcast %211 : vector<1x32xf32> to vector<32x32xf32>
    %230 = arith.mulf %228, %229 : vector<32x32xf32>
    %231 = vector.broadcast %212 : vector<1x32xf32> to vector<32x32xf32>
    %232 = arith.addf %230, %231 : vector<32x32xf32>
    %c0_152 = arith.constant 0 : index
    %c0_153 = arith.constant 0 : index
    %c0_154 = arith.constant 0 : index
    %233 = vector.load %arg10[%c0_152, %c0_153, %c0_154] : memref<2x32x128xf32, #tpu.memory_space<vmem>>, vector<1x32x128xf32>
    %234 = vector.shape_cast %233 : vector<1x32x128xf32> to vector<32x128xf32>
    %cst_155 = arith.constant dense<0.000000e+00> : vector<32x128xf32>
    %235 = tpu.matmul %232, %234, %cst_155 {dimension_numbers = #tpu.dot_dimension_numbers<[1], [0], [0], [1], [0, 0, 1, 1], [], []>} : vector<32x32xf32>, vector<32x128xf32>, vector<32x128xf32> -> vector<32x128xf32>
    %236 = vector.extract_strided_slice %235 {offsets = [0, 0], sizes = [32, 64], strides = [1, 1]} : vector<32x128xf32> to vector<32x64xf32>
    %237 = vector.extract_strided_slice %235 {offsets = [0, 64], sizes = [32, 64], strides = [1, 1]} : vector<32x128xf32> to vector<32x64xf32>
    %238 = arith.negf %236 : vector<32x64xf32>
    %239 = math.exp %238 : vector<32x64xf32>
    %cst_156 = arith.constant 1.000000e+00 : f32
    %240 = vector.broadcast %cst_156 : f32 to vector<32x64xf32>
    %241 = arith.addf %240, %239 : vector<32x64xf32>
    %242 = arith.divf %240, %241 : vector<32x64xf32>
    %243 = arith.mulf %236, %242 : vector<32x64xf32>
    %244 = arith.mulf %243, %237 : vector<32x64xf32>
    %c0_157 = arith.constant 0 : index
    %c0_158 = arith.constant 0 : index
    %c0_159 = arith.constant 0 : index
    %245 = vector.load %arg11[%c0_157, %c0_158, %c0_159] : memref<2x64x32xf32, #tpu.memory_space<vmem>>, vector<1x64x32xf32>
    %246 = vector.shape_cast %245 : vector<1x64x32xf32> to vector<64x32xf32>
    %cst_160 = arith.constant dense<0.000000e+00> : vector<32x32xf32>
    %247 = tpu.matmul %244, %246, %cst_160 {dimension_numbers = #tpu.dot_dimension_numbers<[1], [0], [0], [1], [0, 0, 1, 1], [], []>} : vector<32x64xf32>, vector<64x32xf32>, vector<32x32xf32> -> vector<32x32xf32>
    %248 = arith.addf %210, %247 : vector<32x32xf32>
    %c1_161 = arith.constant 1 : index
    %c0_162 = arith.constant 0 : index
    %c0_163 = arith.constant 0 : index
    %249 = vector.load %arg9[%c1_161, %c0_162, %c0_163] : memref<2x8x32xf32, #tpu.memory_space<vmem>>, vector<1x8x32xf32>
    %250 = vector.shape_cast %249 : vector<1x8x32xf32> to vector<8x32xf32>
    %251 = vector.extract_strided_slice %250 {offsets = [0, 0], sizes = [1, 32], strides = [1, 1]} : vector<8x32xf32> to vector<1x32xf32>
    %252 = vector.extract_strided_slice %250 {offsets = [1, 0], sizes = [1, 32], strides = [1, 1]} : vector<8x32xf32> to vector<1x32xf32>
    %cst_164 = arith.constant dense<0.000000e+00> : vector<32xf32>
    %253 = vector.multi_reduction <add>, %248, %cst_164 [1] : vector<32x32xf32> to vector<32xf32>
    %254 = vector.shape_cast %253 : vector<32xf32> to vector<32x1xf32>
    %cst_165 = arith.constant 3.200000e+01 : f32
    %255 = vector.broadcast %cst_165 : f32 to vector<32x1xf32>
    %256 = arith.divf %254, %255 : vector<32x1xf32>
    %257 = vector.broadcast %256 : vector<32x1xf32> to vector<32x32xf32>
    %258 = arith.subf %248, %257 : vector<32x32xf32>
    %259 = arith.mulf %258, %258 : vector<32x32xf32>
    %cst_166 = arith.constant dense<0.000000e+00> : vector<32xf32>
    %260 = vector.multi_reduction <add>, %259, %cst_166 [1] : vector<32x32xf32> to vector<32xf32>
    %261 = vector.shape_cast %260 : vector<32xf32> to vector<32x1xf32>
    %cst_167 = arith.constant 3.200000e+01 : f32
    %262 = vector.broadcast %cst_167 : f32 to vector<32x1xf32>
    %263 = arith.divf %261, %262 : vector<32x1xf32>
    %cst_168 = arith.constant 9.99999974E-6 : f32
    %264 = vector.broadcast %cst_168 : f32 to vector<32x1xf32>
    %265 = arith.addf %263, %264 : vector<32x1xf32>
    %266 = math.rsqrt %265 : vector<32x1xf32>
    %267 = vector.broadcast %266 : vector<32x1xf32> to vector<32x32xf32>
    %268 = arith.mulf %258, %267 : vector<32x32xf32>
    %269 = vector.broadcast %251 : vector<1x32xf32> to vector<32x32xf32>
    %270 = arith.mulf %268, %269 : vector<32x32xf32>
    %271 = vector.broadcast %252 : vector<1x32xf32> to vector<32x32xf32>
    %272 = arith.addf %270, %271 : vector<32x32xf32>
    %273 = vector.extract_strided_slice %250 {offsets = [4, 0], sizes = [1, 32], strides = [1, 1]} : vector<8x32xf32> to vector<1x32xf32>
    %274 = vector.extract_strided_slice %250 {offsets = [5, 0], sizes = [1, 32], strides = [1, 1]} : vector<8x32xf32> to vector<1x32xf32>
    %cst_169 = arith.constant dense<0.000000e+00> : vector<32xf32>
    %275 = vector.multi_reduction <add>, %272, %cst_169 [1] : vector<32x32xf32> to vector<32xf32>
    %276 = vector.shape_cast %275 : vector<32xf32> to vector<32x1xf32>
    %cst_170 = arith.constant 3.200000e+01 : f32
    %277 = vector.broadcast %cst_170 : f32 to vector<32x1xf32>
    %278 = arith.divf %276, %277 : vector<32x1xf32>
    %279 = vector.broadcast %278 : vector<32x1xf32> to vector<32x32xf32>
    %280 = arith.subf %272, %279 : vector<32x32xf32>
    %281 = arith.mulf %280, %280 : vector<32x32xf32>
    %cst_171 = arith.constant dense<0.000000e+00> : vector<32xf32>
    %282 = vector.multi_reduction <add>, %281, %cst_171 [1] : vector<32x32xf32> to vector<32xf32>
    %283 = vector.shape_cast %282 : vector<32xf32> to vector<32x1xf32>
    %cst_172 = arith.constant 3.200000e+01 : f32
    %284 = vector.broadcast %cst_172 : f32 to vector<32x1xf32>
    %285 = arith.divf %283, %284 : vector<32x1xf32>
    %cst_173 = arith.constant 9.99999974E-6 : f32
    %286 = vector.broadcast %cst_173 : f32 to vector<32x1xf32>
    %287 = arith.addf %285, %286 : vector<32x1xf32>
    %288 = math.rsqrt %287 : vector<32x1xf32>
    %289 = vector.broadcast %288 : vector<32x1xf32> to vector<32x32xf32>
    %290 = arith.mulf %280, %289 : vector<32x32xf32>
    %291 = vector.broadcast %273 : vector<1x32xf32> to vector<32x32xf32>
    %292 = arith.mulf %290, %291 : vector<32x32xf32>
    %293 = vector.broadcast %274 : vector<1x32xf32> to vector<32x32xf32>
    %294 = arith.addf %292, %293 : vector<32x32xf32>
    %cst_174 = arith.constant dense<0.000000e+00> : vector<352x32xf32>
    %295 = tpu.matmul %8, %294, %cst_174 {dimension_numbers = #tpu.dot_dimension_numbers<[1], [0], [0], [1], [0, 0, 1, 1], [], []>} : vector<352x32xf32>, vector<32x32xf32>, vector<352x32xf32> -> vector<352x32xf32>
    %296 = vector.extract_strided_slice %295 {offsets = [0, 0], sizes = [32, 32], strides = [1, 1]} : vector<352x32xf32> to vector<32x32xf32>
    %c1_175 = arith.constant 1 : index
    %c0_176 = arith.constant 0 : index
    %c0_177 = arith.constant 0 : index
    %c0_178 = arith.constant 0 : index
    %297 = vector.load %arg7[%c1_175, %c0_176, %c0_177, %c0_178] : memref<2x11x32x32xf32, #tpu.memory_space<vmem>>, vector<1x1x32x32xf32>
    %298 = vector.shape_cast %297 : vector<1x1x32x32xf32> to vector<32x32xf32>
    %cst_179 = arith.constant dense<0.000000e+00> : vector<32x32xf32>
    %299 = tpu.matmul %296, %298, %cst_179 {dimension_numbers = #tpu.dot_dimension_numbers<[1], [0], [0], [1], [0, 0, 1, 1], [], []>} : vector<32x32xf32>, vector<32x32xf32>, vector<32x32xf32> -> vector<32x32xf32>
    %300 = vector.extract_strided_slice %295 {offsets = [32, 0], sizes = [32, 32], strides = [1, 1]} : vector<352x32xf32> to vector<32x32xf32>
    %c1_180 = arith.constant 1 : index
    %c1_181 = arith.constant 1 : index
    %c0_182 = arith.constant 0 : index
    %c0_183 = arith.constant 0 : index
    %301 = vector.load %arg7[%c1_180, %c1_181, %c0_182, %c0_183] : memref<2x11x32x32xf32, #tpu.memory_space<vmem>>, vector<1x1x32x32xf32>
    %302 = vector.shape_cast %301 : vector<1x1x32x32xf32> to vector<32x32xf32>
    %cst_184 = arith.constant dense<0.000000e+00> : vector<32x32xf32>
    %303 = tpu.matmul %300, %302, %cst_184 {dimension_numbers = #tpu.dot_dimension_numbers<[1], [0], [0], [1], [0, 0, 1, 1], [], []>} : vector<32x32xf32>, vector<32x32xf32>, vector<32x32xf32> -> vector<32x32xf32>
    %304 = vector.extract_strided_slice %295 {offsets = [64, 0], sizes = [32, 32], strides = [1, 1]} : vector<352x32xf32> to vector<32x32xf32>
    %c1_185 = arith.constant 1 : index
    %c2_186 = arith.constant 2 : index
    %c0_187 = arith.constant 0 : index
    %c0_188 = arith.constant 0 : index
    %305 = vector.load %arg7[%c1_185, %c2_186, %c0_187, %c0_188] : memref<2x11x32x32xf32, #tpu.memory_space<vmem>>, vector<1x1x32x32xf32>
    %306 = vector.shape_cast %305 : vector<1x1x32x32xf32> to vector<32x32xf32>
    %cst_189 = arith.constant dense<0.000000e+00> : vector<32x32xf32>
    %307 = tpu.matmul %304, %306, %cst_189 {dimension_numbers = #tpu.dot_dimension_numbers<[1], [0], [0], [1], [0, 0, 1, 1], [], []>} : vector<32x32xf32>, vector<32x32xf32>, vector<32x32xf32> -> vector<32x32xf32>
    %308 = vector.extract_strided_slice %295 {offsets = [96, 0], sizes = [32, 32], strides = [1, 1]} : vector<352x32xf32> to vector<32x32xf32>
    %c1_190 = arith.constant 1 : index
    %c3_191 = arith.constant 3 : index
    %c0_192 = arith.constant 0 : index
    %c0_193 = arith.constant 0 : index
    %309 = vector.load %arg7[%c1_190, %c3_191, %c0_192, %c0_193] : memref<2x11x32x32xf32, #tpu.memory_space<vmem>>, vector<1x1x32x32xf32>
    %310 = vector.shape_cast %309 : vector<1x1x32x32xf32> to vector<32x32xf32>
    %cst_194 = arith.constant dense<0.000000e+00> : vector<32x32xf32>
    %311 = tpu.matmul %308, %310, %cst_194 {dimension_numbers = #tpu.dot_dimension_numbers<[1], [0], [0], [1], [0, 0, 1, 1], [], []>} : vector<32x32xf32>, vector<32x32xf32>, vector<32x32xf32> -> vector<32x32xf32>
    %312 = vector.extract_strided_slice %295 {offsets = [128, 0], sizes = [32, 32], strides = [1, 1]} : vector<352x32xf32> to vector<32x32xf32>
    %c1_195 = arith.constant 1 : index
    %c4_196 = arith.constant 4 : index
    %c0_197 = arith.constant 0 : index
    %c0_198 = arith.constant 0 : index
    %313 = vector.load %arg7[%c1_195, %c4_196, %c0_197, %c0_198] : memref<2x11x32x32xf32, #tpu.memory_space<vmem>>, vector<1x1x32x32xf32>
    %314 = vector.shape_cast %313 : vector<1x1x32x32xf32> to vector<32x32xf32>
    %cst_199 = arith.constant dense<0.000000e+00> : vector<32x32xf32>
    %315 = tpu.matmul %312, %314, %cst_199 {dimension_numbers = #tpu.dot_dimension_numbers<[1], [0], [0], [1], [0, 0, 1, 1], [], []>} : vector<32x32xf32>, vector<32x32xf32>, vector<32x32xf32> -> vector<32x32xf32>
    %316 = vector.extract_strided_slice %295 {offsets = [160, 0], sizes = [32, 32], strides = [1, 1]} : vector<352x32xf32> to vector<32x32xf32>
    %c1_200 = arith.constant 1 : index
    %c5_201 = arith.constant 5 : index
    %c0_202 = arith.constant 0 : index
    %c0_203 = arith.constant 0 : index
    %317 = vector.load %arg7[%c1_200, %c5_201, %c0_202, %c0_203] : memref<2x11x32x32xf32, #tpu.memory_space<vmem>>, vector<1x1x32x32xf32>
    %318 = vector.shape_cast %317 : vector<1x1x32x32xf32> to vector<32x32xf32>
    %cst_204 = arith.constant dense<0.000000e+00> : vector<32x32xf32>
    %319 = tpu.matmul %316, %318, %cst_204 {dimension_numbers = #tpu.dot_dimension_numbers<[1], [0], [0], [1], [0, 0, 1, 1], [], []>} : vector<32x32xf32>, vector<32x32xf32>, vector<32x32xf32> -> vector<32x32xf32>
    %320 = vector.extract_strided_slice %295 {offsets = [192, 0], sizes = [32, 32], strides = [1, 1]} : vector<352x32xf32> to vector<32x32xf32>
    %c1_205 = arith.constant 1 : index
    %c6_206 = arith.constant 6 : index
    %c0_207 = arith.constant 0 : index
    %c0_208 = arith.constant 0 : index
    %321 = vector.load %arg7[%c1_205, %c6_206, %c0_207, %c0_208] : memref<2x11x32x32xf32, #tpu.memory_space<vmem>>, vector<1x1x32x32xf32>
    %322 = vector.shape_cast %321 : vector<1x1x32x32xf32> to vector<32x32xf32>
    %cst_209 = arith.constant dense<0.000000e+00> : vector<32x32xf32>
    %323 = tpu.matmul %320, %322, %cst_209 {dimension_numbers = #tpu.dot_dimension_numbers<[1], [0], [0], [1], [0, 0, 1, 1], [], []>} : vector<32x32xf32>, vector<32x32xf32>, vector<32x32xf32> -> vector<32x32xf32>
    %324 = vector.extract_strided_slice %295 {offsets = [224, 0], sizes = [32, 32], strides = [1, 1]} : vector<352x32xf32> to vector<32x32xf32>
    %c1_210 = arith.constant 1 : index
    %c7_211 = arith.constant 7 : index
    %c0_212 = arith.constant 0 : index
    %c0_213 = arith.constant 0 : index
    %325 = vector.load %arg7[%c1_210, %c7_211, %c0_212, %c0_213] : memref<2x11x32x32xf32, #tpu.memory_space<vmem>>, vector<1x1x32x32xf32>
    %326 = vector.shape_cast %325 : vector<1x1x32x32xf32> to vector<32x32xf32>
    %cst_214 = arith.constant dense<0.000000e+00> : vector<32x32xf32>
    %327 = tpu.matmul %324, %326, %cst_214 {dimension_numbers = #tpu.dot_dimension_numbers<[1], [0], [0], [1], [0, 0, 1, 1], [], []>} : vector<32x32xf32>, vector<32x32xf32>, vector<32x32xf32> -> vector<32x32xf32>
    %328 = vector.extract_strided_slice %295 {offsets = [256, 0], sizes = [32, 32], strides = [1, 1]} : vector<352x32xf32> to vector<32x32xf32>
    %c1_215 = arith.constant 1 : index
    %c8_216 = arith.constant 8 : index
    %c0_217 = arith.constant 0 : index
    %c0_218 = arith.constant 0 : index
    %329 = vector.load %arg7[%c1_215, %c8_216, %c0_217, %c0_218] : memref<2x11x32x32xf32, #tpu.memory_space<vmem>>, vector<1x1x32x32xf32>
    %330 = vector.shape_cast %329 : vector<1x1x32x32xf32> to vector<32x32xf32>
    %cst_219 = arith.constant dense<0.000000e+00> : vector<32x32xf32>
    %331 = tpu.matmul %328, %330, %cst_219 {dimension_numbers = #tpu.dot_dimension_numbers<[1], [0], [0], [1], [0, 0, 1, 1], [], []>} : vector<32x32xf32>, vector<32x32xf32>, vector<32x32xf32> -> vector<32x32xf32>
    %332 = vector.extract_strided_slice %295 {offsets = [288, 0], sizes = [32, 32], strides = [1, 1]} : vector<352x32xf32> to vector<32x32xf32>
    %c1_220 = arith.constant 1 : index
    %c9_221 = arith.constant 9 : index
    %c0_222 = arith.constant 0 : index
    %c0_223 = arith.constant 0 : index
    %333 = vector.load %arg7[%c1_220, %c9_221, %c0_222, %c0_223] : memref<2x11x32x32xf32, #tpu.memory_space<vmem>>, vector<1x1x32x32xf32>
    %334 = vector.shape_cast %333 : vector<1x1x32x32xf32> to vector<32x32xf32>
    %cst_224 = arith.constant dense<0.000000e+00> : vector<32x32xf32>
    %335 = tpu.matmul %332, %334, %cst_224 {dimension_numbers = #tpu.dot_dimension_numbers<[1], [0], [0], [1], [0, 0, 1, 1], [], []>} : vector<32x32xf32>, vector<32x32xf32>, vector<32x32xf32> -> vector<32x32xf32>
    %336 = vector.extract_strided_slice %295 {offsets = [320, 0], sizes = [32, 32], strides = [1, 1]} : vector<352x32xf32> to vector<32x32xf32>
    %c1_225 = arith.constant 1 : index
    %c10_226 = arith.constant 10 : index
    %c0_227 = arith.constant 0 : index
    %c0_228 = arith.constant 0 : index
    %337 = vector.load %arg7[%c1_225, %c10_226, %c0_227, %c0_228] : memref<2x11x32x32xf32, #tpu.memory_space<vmem>>, vector<1x1x32x32xf32>
    %338 = vector.shape_cast %337 : vector<1x1x32x32xf32> to vector<32x32xf32>
    %cst_229 = arith.constant dense<0.000000e+00> : vector<32x32xf32>
    %339 = tpu.matmul %336, %338, %cst_229 {dimension_numbers = #tpu.dot_dimension_numbers<[1], [0], [0], [1], [0, 0, 1, 1], [], []>} : vector<32x32xf32>, vector<32x32xf32>, vector<32x32xf32> -> vector<32x32xf32>
    %340 = arith.addf %299, %303 : vector<32x32xf32>
    %341 = arith.addf %307, %311 : vector<32x32xf32>
    %342 = arith.addf %315, %319 : vector<32x32xf32>
    %343 = arith.addf %323, %327 : vector<32x32xf32>
    %344 = arith.addf %331, %335 : vector<32x32xf32>
    %345 = arith.addf %340, %341 : vector<32x32xf32>
    %346 = arith.addf %342, %343 : vector<32x32xf32>
    %347 = arith.addf %344, %339 : vector<32x32xf32>
    %348 = arith.addf %345, %346 : vector<32x32xf32>
    %349 = arith.addf %348, %347 : vector<32x32xf32>
    %350 = vector.extract_strided_slice %250 {offsets = [6, 0], sizes = [1, 32], strides = [1, 1]} : vector<8x32xf32> to vector<1x32xf32>
    %351 = vector.extract_strided_slice %250 {offsets = [7, 0], sizes = [1, 32], strides = [1, 1]} : vector<8x32xf32> to vector<1x32xf32>
    %cst_230 = arith.constant dense<0.000000e+00> : vector<32xf32>
    %352 = vector.multi_reduction <add>, %349, %cst_230 [1] : vector<32x32xf32> to vector<32xf32>
    %353 = vector.shape_cast %352 : vector<32xf32> to vector<32x1xf32>
    %cst_231 = arith.constant 3.200000e+01 : f32
    %354 = vector.broadcast %cst_231 : f32 to vector<32x1xf32>
    %355 = arith.divf %353, %354 : vector<32x1xf32>
    %356 = vector.broadcast %355 : vector<32x1xf32> to vector<32x32xf32>
    %357 = arith.subf %349, %356 : vector<32x32xf32>
    %358 = arith.mulf %357, %357 : vector<32x32xf32>
    %cst_232 = arith.constant dense<0.000000e+00> : vector<32xf32>
    %359 = vector.multi_reduction <add>, %358, %cst_232 [1] : vector<32x32xf32> to vector<32xf32>
    %360 = vector.shape_cast %359 : vector<32xf32> to vector<32x1xf32>
    %cst_233 = arith.constant 3.200000e+01 : f32
    %361 = vector.broadcast %cst_233 : f32 to vector<32x1xf32>
    %362 = arith.divf %360, %361 : vector<32x1xf32>
    %cst_234 = arith.constant 9.99999974E-6 : f32
    %363 = vector.broadcast %cst_234 : f32 to vector<32x1xf32>
    %364 = arith.addf %362, %363 : vector<32x1xf32>
    %365 = math.rsqrt %364 : vector<32x1xf32>
    %366 = vector.broadcast %365 : vector<32x1xf32> to vector<32x32xf32>
    %367 = arith.mulf %357, %366 : vector<32x32xf32>
    %368 = vector.broadcast %350 : vector<1x32xf32> to vector<32x32xf32>
    %369 = arith.mulf %367, %368 : vector<32x32xf32>
    %370 = vector.broadcast %351 : vector<1x32xf32> to vector<32x32xf32>
    %371 = arith.addf %369, %370 : vector<32x32xf32>
    %cst_235 = arith.constant dense<0.000000e+00> : vector<480x32xf32>
    %372 = tpu.matmul %9, %371, %cst_235 {dimension_numbers = #tpu.dot_dimension_numbers<[1], [0], [0], [1], [0, 0, 1, 1], [], []>} : vector<480x32xf32>, vector<32x32xf32>, vector<480x32xf32> -> vector<480x32xf32>
    %373 = vector.extract_strided_slice %372 {offsets = [0, 0], sizes = [32, 32], strides = [1, 1]} : vector<480x32xf32> to vector<32x32xf32>
    %c1_236 = arith.constant 1 : index
    %c0_237 = arith.constant 0 : index
    %c0_238 = arith.constant 0 : index
    %c0_239 = arith.constant 0 : index
    %374 = vector.load %arg8[%c1_236, %c0_237, %c0_238, %c0_239] : memref<2x15x32x32xf32, #tpu.memory_space<vmem>>, vector<1x1x32x32xf32>
    %375 = vector.shape_cast %374 : vector<1x1x32x32xf32> to vector<32x32xf32>
    %cst_240 = arith.constant dense<0.000000e+00> : vector<32x32xf32>
    %376 = tpu.matmul %373, %375, %cst_240 {dimension_numbers = #tpu.dot_dimension_numbers<[1], [0], [0], [1], [0, 0, 1, 1], [], []>} : vector<32x32xf32>, vector<32x32xf32>, vector<32x32xf32> -> vector<32x32xf32>
    %377 = vector.extract_strided_slice %372 {offsets = [32, 0], sizes = [32, 32], strides = [1, 1]} : vector<480x32xf32> to vector<32x32xf32>
    %c1_241 = arith.constant 1 : index
    %c1_242 = arith.constant 1 : index
    %c0_243 = arith.constant 0 : index
    %c0_244 = arith.constant 0 : index
    %378 = vector.load %arg8[%c1_241, %c1_242, %c0_243, %c0_244] : memref<2x15x32x32xf32, #tpu.memory_space<vmem>>, vector<1x1x32x32xf32>
    %379 = vector.shape_cast %378 : vector<1x1x32x32xf32> to vector<32x32xf32>
    %cst_245 = arith.constant dense<0.000000e+00> : vector<32x32xf32>
    %380 = tpu.matmul %377, %379, %cst_245 {dimension_numbers = #tpu.dot_dimension_numbers<[1], [0], [0], [1], [0, 0, 1, 1], [], []>} : vector<32x32xf32>, vector<32x32xf32>, vector<32x32xf32> -> vector<32x32xf32>
    %381 = vector.extract_strided_slice %372 {offsets = [64, 0], sizes = [32, 32], strides = [1, 1]} : vector<480x32xf32> to vector<32x32xf32>
    %c1_246 = arith.constant 1 : index
    %c2_247 = arith.constant 2 : index
    %c0_248 = arith.constant 0 : index
    %c0_249 = arith.constant 0 : index
    %382 = vector.load %arg8[%c1_246, %c2_247, %c0_248, %c0_249] : memref<2x15x32x32xf32, #tpu.memory_space<vmem>>, vector<1x1x32x32xf32>
    %383 = vector.shape_cast %382 : vector<1x1x32x32xf32> to vector<32x32xf32>
    %cst_250 = arith.constant dense<0.000000e+00> : vector<32x32xf32>
    %384 = tpu.matmul %381, %383, %cst_250 {dimension_numbers = #tpu.dot_dimension_numbers<[1], [0], [0], [1], [0, 0, 1, 1], [], []>} : vector<32x32xf32>, vector<32x32xf32>, vector<32x32xf32> -> vector<32x32xf32>
    %385 = vector.extract_strided_slice %372 {offsets = [96, 0], sizes = [32, 32], strides = [1, 1]} : vector<480x32xf32> to vector<32x32xf32>
    %c1_251 = arith.constant 1 : index
    %c3_252 = arith.constant 3 : index
    %c0_253 = arith.constant 0 : index
    %c0_254 = arith.constant 0 : index
    %386 = vector.load %arg8[%c1_251, %c3_252, %c0_253, %c0_254] : memref<2x15x32x32xf32, #tpu.memory_space<vmem>>, vector<1x1x32x32xf32>
    %387 = vector.shape_cast %386 : vector<1x1x32x32xf32> to vector<32x32xf32>
    %cst_255 = arith.constant dense<0.000000e+00> : vector<32x32xf32>
    %388 = tpu.matmul %385, %387, %cst_255 {dimension_numbers = #tpu.dot_dimension_numbers<[1], [0], [0], [1], [0, 0, 1, 1], [], []>} : vector<32x32xf32>, vector<32x32xf32>, vector<32x32xf32> -> vector<32x32xf32>
    %389 = vector.extract_strided_slice %372 {offsets = [128, 0], sizes = [32, 32], strides = [1, 1]} : vector<480x32xf32> to vector<32x32xf32>
    %c1_256 = arith.constant 1 : index
    %c4_257 = arith.constant 4 : index
    %c0_258 = arith.constant 0 : index
    %c0_259 = arith.constant 0 : index
    %390 = vector.load %arg8[%c1_256, %c4_257, %c0_258, %c0_259] : memref<2x15x32x32xf32, #tpu.memory_space<vmem>>, vector<1x1x32x32xf32>
    %391 = vector.shape_cast %390 : vector<1x1x32x32xf32> to vector<32x32xf32>
    %cst_260 = arith.constant dense<0.000000e+00> : vector<32x32xf32>
    %392 = tpu.matmul %389, %391, %cst_260 {dimension_numbers = #tpu.dot_dimension_numbers<[1], [0], [0], [1], [0, 0, 1, 1], [], []>} : vector<32x32xf32>, vector<32x32xf32>, vector<32x32xf32> -> vector<32x32xf32>
    %393 = vector.extract_strided_slice %372 {offsets = [160, 0], sizes = [32, 32], strides = [1, 1]} : vector<480x32xf32> to vector<32x32xf32>
    %c1_261 = arith.constant 1 : index
    %c5_262 = arith.constant 5 : index
    %c0_263 = arith.constant 0 : index
    %c0_264 = arith.constant 0 : index
    %394 = vector.load %arg8[%c1_261, %c5_262, %c0_263, %c0_264] : memref<2x15x32x32xf32, #tpu.memory_space<vmem>>, vector<1x1x32x32xf32>
    %395 = vector.shape_cast %394 : vector<1x1x32x32xf32> to vector<32x32xf32>
    %cst_265 = arith.constant dense<0.000000e+00> : vector<32x32xf32>
    %396 = tpu.matmul %393, %395, %cst_265 {dimension_numbers = #tpu.dot_dimension_numbers<[1], [0], [0], [1], [0, 0, 1, 1], [], []>} : vector<32x32xf32>, vector<32x32xf32>, vector<32x32xf32> -> vector<32x32xf32>
    %397 = vector.extract_strided_slice %372 {offsets = [192, 0], sizes = [32, 32], strides = [1, 1]} : vector<480x32xf32> to vector<32x32xf32>
    %c1_266 = arith.constant 1 : index
    %c6_267 = arith.constant 6 : index
    %c0_268 = arith.constant 0 : index
    %c0_269 = arith.constant 0 : index
    %398 = vector.load %arg8[%c1_266, %c6_267, %c0_268, %c0_269] : memref<2x15x32x32xf32, #tpu.memory_space<vmem>>, vector<1x1x32x32xf32>
    %399 = vector.shape_cast %398 : vector<1x1x32x32xf32> to vector<32x32xf32>
    %cst_270 = arith.constant dense<0.000000e+00> : vector<32x32xf32>
    %400 = tpu.matmul %397, %399, %cst_270 {dimension_numbers = #tpu.dot_dimension_numbers<[1], [0], [0], [1], [0, 0, 1, 1], [], []>} : vector<32x32xf32>, vector<32x32xf32>, vector<32x32xf32> -> vector<32x32xf32>
    %401 = vector.extract_strided_slice %372 {offsets = [224, 0], sizes = [32, 32], strides = [1, 1]} : vector<480x32xf32> to vector<32x32xf32>
    %c1_271 = arith.constant 1 : index
    %c7_272 = arith.constant 7 : index
    %c0_273 = arith.constant 0 : index
    %c0_274 = arith.constant 0 : index
    %402 = vector.load %arg8[%c1_271, %c7_272, %c0_273, %c0_274] : memref<2x15x32x32xf32, #tpu.memory_space<vmem>>, vector<1x1x32x32xf32>
    %403 = vector.shape_cast %402 : vector<1x1x32x32xf32> to vector<32x32xf32>
    %cst_275 = arith.constant dense<0.000000e+00> : vector<32x32xf32>
    %404 = tpu.matmul %401, %403, %cst_275 {dimension_numbers = #tpu.dot_dimension_numbers<[1], [0], [0], [1], [0, 0, 1, 1], [], []>} : vector<32x32xf32>, vector<32x32xf32>, vector<32x32xf32> -> vector<32x32xf32>
    %405 = vector.extract_strided_slice %372 {offsets = [256, 0], sizes = [32, 32], strides = [1, 1]} : vector<480x32xf32> to vector<32x32xf32>
    %c1_276 = arith.constant 1 : index
    %c8_277 = arith.constant 8 : index
    %c0_278 = arith.constant 0 : index
    %c0_279 = arith.constant 0 : index
    %406 = vector.load %arg8[%c1_276, %c8_277, %c0_278, %c0_279] : memref<2x15x32x32xf32, #tpu.memory_space<vmem>>, vector<1x1x32x32xf32>
    %407 = vector.shape_cast %406 : vector<1x1x32x32xf32> to vector<32x32xf32>
    %cst_280 = arith.constant dense<0.000000e+00> : vector<32x32xf32>
    %408 = tpu.matmul %405, %407, %cst_280 {dimension_numbers = #tpu.dot_dimension_numbers<[1], [0], [0], [1], [0, 0, 1, 1], [], []>} : vector<32x32xf32>, vector<32x32xf32>, vector<32x32xf32> -> vector<32x32xf32>
    %409 = vector.extract_strided_slice %372 {offsets = [288, 0], sizes = [32, 32], strides = [1, 1]} : vector<480x32xf32> to vector<32x32xf32>
    %c1_281 = arith.constant 1 : index
    %c9_282 = arith.constant 9 : index
    %c0_283 = arith.constant 0 : index
    %c0_284 = arith.constant 0 : index
    %410 = vector.load %arg8[%c1_281, %c9_282, %c0_283, %c0_284] : memref<2x15x32x32xf32, #tpu.memory_space<vmem>>, vector<1x1x32x32xf32>
    %411 = vector.shape_cast %410 : vector<1x1x32x32xf32> to vector<32x32xf32>
    %cst_285 = arith.constant dense<0.000000e+00> : vector<32x32xf32>
    %412 = tpu.matmul %409, %411, %cst_285 {dimension_numbers = #tpu.dot_dimension_numbers<[1], [0], [0], [1], [0, 0, 1, 1], [], []>} : vector<32x32xf32>, vector<32x32xf32>, vector<32x32xf32> -> vector<32x32xf32>
    %413 = vector.extract_strided_slice %372 {offsets = [320, 0], sizes = [32, 32], strides = [1, 1]} : vector<480x32xf32> to vector<32x32xf32>
    %c1_286 = arith.constant 1 : index
    %c10_287 = arith.constant 10 : index
    %c0_288 = arith.constant 0 : index
    %c0_289 = arith.constant 0 : index
    %414 = vector.load %arg8[%c1_286, %c10_287, %c0_288, %c0_289] : memref<2x15x32x32xf32, #tpu.memory_space<vmem>>, vector<1x1x32x32xf32>
    %415 = vector.shape_cast %414 : vector<1x1x32x32xf32> to vector<32x32xf32>
    %cst_290 = arith.constant dense<0.000000e+00> : vector<32x32xf32>
    %416 = tpu.matmul %413, %415, %cst_290 {dimension_numbers = #tpu.dot_dimension_numbers<[1], [0], [0], [1], [0, 0, 1, 1], [], []>} : vector<32x32xf32>, vector<32x32xf32>, vector<32x32xf32> -> vector<32x32xf32>
    %417 = vector.extract_strided_slice %372 {offsets = [352, 0], sizes = [32, 32], strides = [1, 1]} : vector<480x32xf32> to vector<32x32xf32>
    %c1_291 = arith.constant 1 : index
    %c11_292 = arith.constant 11 : index
    %c0_293 = arith.constant 0 : index
    %c0_294 = arith.constant 0 : index
    %418 = vector.load %arg8[%c1_291, %c11_292, %c0_293, %c0_294] : memref<2x15x32x32xf32, #tpu.memory_space<vmem>>, vector<1x1x32x32xf32>
    %419 = vector.shape_cast %418 : vector<1x1x32x32xf32> to vector<32x32xf32>
    %cst_295 = arith.constant dense<0.000000e+00> : vector<32x32xf32>
    %420 = tpu.matmul %417, %419, %cst_295 {dimension_numbers = #tpu.dot_dimension_numbers<[1], [0], [0], [1], [0, 0, 1, 1], [], []>} : vector<32x32xf32>, vector<32x32xf32>, vector<32x32xf32> -> vector<32x32xf32>
    %421 = vector.extract_strided_slice %372 {offsets = [384, 0], sizes = [32, 32], strides = [1, 1]} : vector<480x32xf32> to vector<32x32xf32>
    %c1_296 = arith.constant 1 : index
    %c12_297 = arith.constant 12 : index
    %c0_298 = arith.constant 0 : index
    %c0_299 = arith.constant 0 : index
    %422 = vector.load %arg8[%c1_296, %c12_297, %c0_298, %c0_299] : memref<2x15x32x32xf32, #tpu.memory_space<vmem>>, vector<1x1x32x32xf32>
    %423 = vector.shape_cast %422 : vector<1x1x32x32xf32> to vector<32x32xf32>
    %cst_300 = arith.constant dense<0.000000e+00> : vector<32x32xf32>
    %424 = tpu.matmul %421, %423, %cst_300 {dimension_numbers = #tpu.dot_dimension_numbers<[1], [0], [0], [1], [0, 0, 1, 1], [], []>} : vector<32x32xf32>, vector<32x32xf32>, vector<32x32xf32> -> vector<32x32xf32>
    %425 = vector.extract_strided_slice %372 {offsets = [416, 0], sizes = [32, 32], strides = [1, 1]} : vector<480x32xf32> to vector<32x32xf32>
    %c1_301 = arith.constant 1 : index
    %c13_302 = arith.constant 13 : index
    %c0_303 = arith.constant 0 : index
    %c0_304 = arith.constant 0 : index
    %426 = vector.load %arg8[%c1_301, %c13_302, %c0_303, %c0_304] : memref<2x15x32x32xf32, #tpu.memory_space<vmem>>, vector<1x1x32x32xf32>
    %427 = vector.shape_cast %426 : vector<1x1x32x32xf32> to vector<32x32xf32>
    %cst_305 = arith.constant dense<0.000000e+00> : vector<32x32xf32>
    %428 = tpu.matmul %425, %427, %cst_305 {dimension_numbers = #tpu.dot_dimension_numbers<[1], [0], [0], [1], [0, 0, 1, 1], [], []>} : vector<32x32xf32>, vector<32x32xf32>, vector<32x32xf32> -> vector<32x32xf32>
    %429 = vector.extract_strided_slice %372 {offsets = [448, 0], sizes = [32, 32], strides = [1, 1]} : vector<480x32xf32> to vector<32x32xf32>
    %c1_306 = arith.constant 1 : index
    %c14_307 = arith.constant 14 : index
    %c0_308 = arith.constant 0 : index
    %c0_309 = arith.constant 0 : index
    %430 = vector.load %arg8[%c1_306, %c14_307, %c0_308, %c0_309] : memref<2x15x32x32xf32, #tpu.memory_space<vmem>>, vector<1x1x32x32xf32>
    %431 = vector.shape_cast %430 : vector<1x1x32x32xf32> to vector<32x32xf32>
    %cst_310 = arith.constant dense<0.000000e+00> : vector<32x32xf32>
    %432 = tpu.matmul %429, %431, %cst_310 {dimension_numbers = #tpu.dot_dimension_numbers<[1], [0], [0], [1], [0, 0, 1, 1], [], []>} : vector<32x32xf32>, vector<32x32xf32>, vector<32x32xf32> -> vector<32x32xf32>
    %433 = arith.addf %371, %376 : vector<32x32xf32>
    %434 = arith.addf %380, %384 : vector<32x32xf32>
    %435 = arith.addf %388, %392 : vector<32x32xf32>
    %436 = arith.addf %396, %400 : vector<32x32xf32>
    %437 = arith.addf %404, %408 : vector<32x32xf32>
    %438 = arith.addf %412, %416 : vector<32x32xf32>
    %439 = arith.addf %420, %424 : vector<32x32xf32>
    %440 = arith.addf %428, %432 : vector<32x32xf32>
    %441 = arith.addf %433, %434 : vector<32x32xf32>
    %442 = arith.addf %435, %436 : vector<32x32xf32>
    %443 = arith.addf %437, %438 : vector<32x32xf32>
    %444 = arith.addf %439, %440 : vector<32x32xf32>
    %445 = arith.addf %441, %442 : vector<32x32xf32>
    %446 = arith.addf %443, %444 : vector<32x32xf32>
    %447 = arith.addf %445, %446 : vector<32x32xf32>
    %448 = arith.addf %248, %272 : vector<32x32xf32>
    %449 = arith.addf %448, %447 : vector<32x32xf32>
    %450 = vector.extract_strided_slice %250 {offsets = [2, 0], sizes = [1, 32], strides = [1, 1]} : vector<8x32xf32> to vector<1x32xf32>
    %451 = vector.extract_strided_slice %250 {offsets = [3, 0], sizes = [1, 32], strides = [1, 1]} : vector<8x32xf32> to vector<1x32xf32>
    %cst_311 = arith.constant dense<0.000000e+00> : vector<32xf32>
    %452 = vector.multi_reduction <add>, %449, %cst_311 [1] : vector<32x32xf32> to vector<32xf32>
    %453 = vector.shape_cast %452 : vector<32xf32> to vector<32x1xf32>
    %cst_312 = arith.constant 3.200000e+01 : f32
    %454 = vector.broadcast %cst_312 : f32 to vector<32x1xf32>
    %455 = arith.divf %453, %454 : vector<32x1xf32>
    %456 = vector.broadcast %455 : vector<32x1xf32> to vector<32x32xf32>
    %457 = arith.subf %449, %456 : vector<32x32xf32>
    %458 = arith.mulf %457, %457 : vector<32x32xf32>
    %cst_313 = arith.constant dense<0.000000e+00> : vector<32xf32>
    %459 = vector.multi_reduction <add>, %458, %cst_313 [1] : vector<32x32xf32> to vector<32xf32>
    %460 = vector.shape_cast %459 : vector<32xf32> to vector<32x1xf32>
    %cst_314 = arith.constant 3.200000e+01 : f32
    %461 = vector.broadcast %cst_314 : f32 to vector<32x1xf32>
    %462 = arith.divf %460, %461 : vector<32x1xf32>
    %cst_315 = arith.constant 9.99999974E-6 : f32
    %463 = vector.broadcast %cst_315 : f32 to vector<32x1xf32>
    %464 = arith.addf %462, %463 : vector<32x1xf32>
    %465 = math.rsqrt %464 : vector<32x1xf32>
    %466 = vector.broadcast %465 : vector<32x1xf32> to vector<32x32xf32>
    %467 = arith.mulf %457, %466 : vector<32x32xf32>
    %468 = vector.broadcast %450 : vector<1x32xf32> to vector<32x32xf32>
    %469 = arith.mulf %467, %468 : vector<32x32xf32>
    %470 = vector.broadcast %451 : vector<1x32xf32> to vector<32x32xf32>
    %471 = arith.addf %469, %470 : vector<32x32xf32>
    %c1_316 = arith.constant 1 : index
    %c0_317 = arith.constant 0 : index
    %c0_318 = arith.constant 0 : index
    %472 = vector.load %arg10[%c1_316, %c0_317, %c0_318] : memref<2x32x128xf32, #tpu.memory_space<vmem>>, vector<1x32x128xf32>
    %473 = vector.shape_cast %472 : vector<1x32x128xf32> to vector<32x128xf32>
    %cst_319 = arith.constant dense<0.000000e+00> : vector<32x128xf32>
    %474 = tpu.matmul %471, %473, %cst_319 {dimension_numbers = #tpu.dot_dimension_numbers<[1], [0], [0], [1], [0, 0, 1, 1], [], []>} : vector<32x32xf32>, vector<32x128xf32>, vector<32x128xf32> -> vector<32x128xf32>
    %475 = vector.extract_strided_slice %474 {offsets = [0, 0], sizes = [32, 64], strides = [1, 1]} : vector<32x128xf32> to vector<32x64xf32>
    %476 = vector.extract_strided_slice %474 {offsets = [0, 64], sizes = [32, 64], strides = [1, 1]} : vector<32x128xf32> to vector<32x64xf32>
    %477 = arith.negf %475 : vector<32x64xf32>
    %478 = math.exp %477 : vector<32x64xf32>
    %cst_320 = arith.constant 1.000000e+00 : f32
    %479 = vector.broadcast %cst_320 : f32 to vector<32x64xf32>
    %480 = arith.addf %479, %478 : vector<32x64xf32>
    %481 = arith.divf %479, %480 : vector<32x64xf32>
    %482 = arith.mulf %475, %481 : vector<32x64xf32>
    %483 = arith.mulf %482, %476 : vector<32x64xf32>
    %c1_321 = arith.constant 1 : index
    %c0_322 = arith.constant 0 : index
    %c0_323 = arith.constant 0 : index
    %484 = vector.load %arg11[%c1_321, %c0_322, %c0_323] : memref<2x64x32xf32, #tpu.memory_space<vmem>>, vector<1x64x32xf32>
    %485 = vector.shape_cast %484 : vector<1x64x32xf32> to vector<64x32xf32>
    %cst_324 = arith.constant dense<0.000000e+00> : vector<32x32xf32>
    %486 = tpu.matmul %483, %485, %cst_324 {dimension_numbers = #tpu.dot_dimension_numbers<[1], [0], [0], [1], [0, 0, 1, 1], [], []>} : vector<32x64xf32>, vector<64x32xf32>, vector<32x32xf32> -> vector<32x32xf32>
    %487 = arith.addf %449, %486 : vector<32x32xf32>
    %c0_325 = arith.constant 0 : index
    %c0_326 = arith.constant 0 : index
    %488 = vector.load %arg12[%c0_325, %c0_326] : memref<2x32xf32, #tpu.memory_space<vmem>>, vector<1x32xf32>
    %c1_327 = arith.constant 1 : index
    %c0_328 = arith.constant 0 : index
    %489 = vector.load %arg12[%c1_327, %c0_328] : memref<2x32xf32, #tpu.memory_space<vmem>>, vector<1x32xf32>
    %cst_329 = arith.constant dense<0.000000e+00> : vector<32xf32>
    %490 = vector.multi_reduction <add>, %487, %cst_329 [1] : vector<32x32xf32> to vector<32xf32>
    %491 = vector.shape_cast %490 : vector<32xf32> to vector<32x1xf32>
    %cst_330 = arith.constant 3.200000e+01 : f32
    %492 = vector.broadcast %cst_330 : f32 to vector<32x1xf32>
    %493 = arith.divf %491, %492 : vector<32x1xf32>
    %494 = vector.broadcast %493 : vector<32x1xf32> to vector<32x32xf32>
    %495 = arith.subf %487, %494 : vector<32x32xf32>
    %496 = arith.mulf %495, %495 : vector<32x32xf32>
    %cst_331 = arith.constant dense<0.000000e+00> : vector<32xf32>
    %497 = vector.multi_reduction <add>, %496, %cst_331 [1] : vector<32x32xf32> to vector<32xf32>
    %498 = vector.shape_cast %497 : vector<32xf32> to vector<32x1xf32>
    %cst_332 = arith.constant 3.200000e+01 : f32
    %499 = vector.broadcast %cst_332 : f32 to vector<32x1xf32>
    %500 = arith.divf %498, %499 : vector<32x1xf32>
    %cst_333 = arith.constant 9.99999974E-6 : f32
    %501 = vector.broadcast %cst_333 : f32 to vector<32x1xf32>
    %502 = arith.addf %500, %501 : vector<32x1xf32>
    %503 = math.rsqrt %502 : vector<32x1xf32>
    %504 = vector.broadcast %503 : vector<32x1xf32> to vector<32x32xf32>
    %505 = arith.mulf %495, %504 : vector<32x32xf32>
    %506 = vector.broadcast %488 : vector<1x32xf32> to vector<32x32xf32>
    %507 = arith.mulf %505, %506 : vector<32x32xf32>
    %508 = vector.broadcast %489 : vector<1x32xf32> to vector<32x32xf32>
    %509 = arith.addf %507, %508 : vector<32x32xf32>
    %c0_334 = arith.constant 0 : index
    %c0_335 = arith.constant 0 : index
    %510 = vector.load %arg13[%c0_334, %c0_335] : memref<32x32xf32, #tpu.memory_space<vmem>>, vector<32x32xf32>
    %cst_336 = arith.constant dense<0.000000e+00> : vector<32x32xf32>
    %511 = tpu.matmul %509, %510, %cst_336 {dimension_numbers = #tpu.dot_dimension_numbers<[1], [0], [0], [1], [0, 0, 1, 1], [], []>} : vector<32x32xf32>, vector<32x32xf32>, vector<32x32xf32> -> vector<32x32xf32>
    %c0_337 = arith.constant 0 : index
    %c0_338 = arith.constant 0 : index
    %512 = vector.load %arg14[%c0_337, %c0_338] : memref<32x32xf32, #tpu.memory_space<vmem>>, vector<32x32xf32>
    tpu.vector_store %arg14[%c0_337, %c0_338], %511 {strides = array<i32>} : memref<32x32xf32, #tpu.memory_space<vmem>>, vector<32x32xf32>,
    return
  }
  func.func @transform_0(%arg0: i32) -> (i32, i32) {
    %c0_i32 = arith.constant 0 : i32
    %c0_i32_0 = arith.constant 0 : i32
    %c0_i32_1 = arith.constant 0 : i32
    return %c0_i32, %c0_i32_0 : i32, i32
  }
  func.func @transform_1(%arg0: i32) -> (i32, i32) {
    %c0_i32 = arith.constant 0 : i32
    %c0_i32_0 = arith.constant 0 : i32
    %c0_i32_1 = arith.constant 0 : i32
    return %c0_i32, %c0_i32_0 : i32, i32
  }
  func.func @transform_2(%arg0: i32) -> (i32, i32) {
    %c0_i32 = arith.constant 0 : i32
    %c0_i32_0 = arith.constant 0 : i32
    %c0_i32_1 = arith.constant 0 : i32
    return %c0_i32, %c0_i32_0 : i32, i32
  }
  func.func @transform_3(%arg0: i32) -> (i32, i32) {
    %c0_i32 = arith.constant 0 : i32
    %c0_i32_0 = arith.constant 0 : i32
    %c0_i32_1 = arith.constant 0 : i32
    return %c0_i32, %c0_i32_0 : i32, i32
  }
  func.func @transform_4(%arg0: i32) -> (i32, i32) {
    %c0_i32 = arith.constant 0 : i32
    %c0_i32_0 = arith.constant 0 : i32
    %c0_i32_1 = arith.constant 0 : i32
    return %c0_i32, %c0_i32_0 : i32, i32
  }
  func.func @transform_5(%arg0: i32) -> (i32, i32) {
    %c0_i32 = arith.constant 0 : i32
    %c0_i32_0 = arith.constant 0 : i32
    %c0_i32_1 = arith.constant 0 : i32
    return %c0_i32, %c0_i32_0 : i32, i32
  }
  func.func @transform_6(%arg0: i32) -> (i32, i32, i32, i32) {
    %c0_i32 = arith.constant 0 : i32
    %c0_i32_0 = arith.constant 0 : i32
    %c0_i32_1 = arith.constant 0 : i32
    %c0_i32_2 = arith.constant 0 : i32
    %c0_i32_3 = arith.constant 0 : i32
    return %c0_i32, %c0_i32_0, %c0_i32_1, %c0_i32_2 : i32, i32, i32, i32
  }
  func.func @transform_7(%arg0: i32) -> (i32, i32, i32, i32) {
    %c0_i32 = arith.constant 0 : i32
    %c0_i32_0 = arith.constant 0 : i32
    %c0_i32_1 = arith.constant 0 : i32
    %c0_i32_2 = arith.constant 0 : i32
    %c0_i32_3 = arith.constant 0 : i32
    return %c0_i32, %c0_i32_0, %c0_i32_1, %c0_i32_2 : i32, i32, i32, i32
  }
  func.func @transform_8(%arg0: i32) -> (i32, i32, i32) {
    %c0_i32 = arith.constant 0 : i32
    %c0_i32_0 = arith.constant 0 : i32
    %c0_i32_1 = arith.constant 0 : i32
    %c0_i32_2 = arith.constant 0 : i32
    return %c0_i32, %c0_i32_0, %c0_i32_1 : i32, i32, i32
  }
  func.func @transform_9(%arg0: i32) -> (i32, i32, i32) {
    %c0_i32 = arith.constant 0 : i32
    %c0_i32_0 = arith.constant 0 : i32
    %c0_i32_1 = arith.constant 0 : i32
    %c0_i32_2 = arith.constant 0 : i32
    return %c0_i32, %c0_i32_0, %c0_i32_1 : i32, i32, i32
  }
  func.func @transform_10(%arg0: i32) -> (i32, i32, i32) {
    %c0_i32 = arith.constant 0 : i32
    %c0_i32_0 = arith.constant 0 : i32
    %c0_i32_1 = arith.constant 0 : i32
    %c0_i32_2 = arith.constant 0 : i32
    return %c0_i32, %c0_i32_0, %c0_i32_1 : i32, i32, i32
  }
  func.func @transform_11(%arg0: i32) -> (i32, i32) {
    %c0_i32 = arith.constant 0 : i32
    %c0_i32_0 = arith.constant 0 : i32
    %c0_i32_1 = arith.constant 0 : i32
    return %c0_i32, %c0_i32_0 : i32, i32
  }
  func.func @transform_12(%arg0: i32) -> (i32, i32) {
    %c0_i32 = arith.constant 0 : i32
    %c0_i32_0 = arith.constant 0 : i32
    %c0_i32_1 = arith.constant 0 : i32
    return %c0_i32, %c0_i32_0 : i32, i32
  }
  func.func @transform_13(%arg0: i32) -> (i32, i32) {
    %c0_i32 = arith.constant 0 : i32
    %c0_i32_0 = arith.constant 0 : i32
    %c0_i32_1 = arith.constant 0 : i32
    return %c0_i32, %c0_i32_0 : i32, i32
  }
}

</mosaic_0001>

<llo_original>
// kernel: tpu_custom_call.1
$region0: #{tpu_custom_call.1}
  #allocation0 [shape = 'u32[]', space=smem, size = 0x4, offset = 0x4, fixed_abs, tag = 'smem constant byte address 0x4 - core index']
  #allocation1 [shape = 'u32[144,128]{1,0:T(1,128)}', space=vmem, size = 0x12000, scoped, tag = 'internal scratch']
  %s0 = inlined_call_operand.vmem [shape: f32[32,32], index: 0, kind: input, shape index: {}]
  %s1 = inlined_call_operand.vmem [shape: f32[32,32], index: 1, kind: input, shape index: {}]
  %s2 = inlined_call_operand.vmem [shape: f32[1,32], index: 2, kind: input, shape index: {}]
  %s3 = inlined_call_operand.vmem [shape: f32[32,32], index: 3, kind: input, shape index: {}]
  %s4 = inlined_call_operand.vmem [shape: f32[352,32], index: 4, kind: input, shape index: {}]
  %s5 = inlined_call_operand.vmem [shape: f32[480,32], index: 5, kind: input, shape index: {}]
  %s6 = inlined_call_operand.hbm [shape: f32[2,11,32,32], index: 6, kind: input, shape index: {}]
  %s7 = inlined_call_operand.vmem [shape: f32[2,15,32,32], index: 7, kind: input, shape index: {}]
  %s8 = inlined_call_operand.vmem [shape: f32[2,8,32], index: 8, kind: input, shape index: {}]
  %s9 = inlined_call_operand.vmem [shape: f32[2,32,128], index: 9, kind: input, shape index: {}]
  %s10 = inlined_call_operand.vmem [shape: f32[2,64,32], index: 10, kind: input, shape index: {}]
  %s11 = inlined_call_operand.vmem [shape: f32[2,32], index: 11, kind: input, shape index: {}]
  %s12 = inlined_call_operand.vmem [shape: f32[32,32], index: 12, kind: input, shape index: {}]
  %s13 = inlined_call_operand.hbm [shape: f32[32,32], index: 13, kind: output, shape index: {}]
  %s14 = sld [smem:[#allocation0]]
  $region66: #{tpu_custom_call.1} parent=0
    _
  %s16 = ssub.s32 1, %s14
  %s17 = scalar_select 0, %s16, %s14
  $region1: #{tpu_custom_call.1} parent=0
    #allocation2 [shape = 'u8[360448]{0}', space=vmem, size = 0x58000, scoped, tag = 'input window, operand 6, single buffered']
    #allocation3 [shape = 's32[1]{0}', space=sflag, size = 0x4, scoped, tag = 'scoped memory for tpu_custom_call.1']
    #allocation4 [shape = 's32[1]{0}', space=sflag, size = 0x4, scoped, tag = 'scoped memory for tpu_custom_call.1']
    #allocation5 [shape = 'u8[16384]{0}', space=vmem, size = 0x4000, scoped, tag = 'output window, operand 0, single buffered']
    %18 = vsyncpa [#allocation3], 0
    %19 = vsyncpa [#allocation4], 0
    // Predicated region
    $region2: #{tpu_custom_call.1} parent=1 // pred_check
      _
    $region3: #{tpu_custom_call.1} parent=1 // pred_check_branch
      %21 = sbr.rel (0) target = $region5
    $region4: #{tpu_custom_call.1} parent=1 // pred_region
      _
    $region5: #{tpu_custom_call.1} parent=1 // pred_fallthru
      _
    // Predicated region
    $region6: #{tpu_custom_call.1} parent=1 // pred_check
      _
    $region7: #{tpu_custom_call.1} parent=1 // pred_check_branch
      %23 = sbr.rel (0) target = $region9
    $region8: #{tpu_custom_call.1} parent=1 // pred_region
      _
    $region9: #{tpu_custom_call.1} parent=1 // pred_fallthru
      _
    // Predicated region
    $region10: #{tpu_custom_call.1} parent=1 // pred_check
      _
    $region11: #{tpu_custom_call.1} parent=1 // pred_check_branch
      %25 = sbr.rel (0) target = $region13
    $region12: #{tpu_custom_call.1} parent=1 // pred_region
      _
    $region13: #{tpu_custom_call.1} parent=1 // pred_fallthru
      _
    // Predicated region
    $region14: #{tpu_custom_call.1} parent=1 // pred_check
      _
    $region15: #{tpu_custom_call.1} parent=1 // pred_check_branch
      %27 = sbr.rel (0) target = $region17
    $region16: #{tpu_custom_call.1} parent=1 // pred_region
      _
    $region17: #{tpu_custom_call.1} parent=1 // pred_fallthru
      _
    // Predicated region
    $region18: #{tpu_custom_call.1} parent=1 // pred_check
      _
    $region19: #{tpu_custom_call.1} parent=1 // pred_check_branch
      %29 = sbr.rel (0) target = $region21
    $region20: #{tpu_custom_call.1} parent=1 // pred_region
      _
    $region21: #{tpu_custom_call.1} parent=1 // pred_fallthru
      _
    // Predicated region
    $region22: #{tpu_custom_call.1} parent=1 // pred_check
      _
    $region23: #{tpu_custom_call.1} parent=1 // pred_check_branch
      %31 = sbr.rel (0) target = $region25
    $region24: #{tpu_custom_call.1} parent=1 // pred_region
      _
    $region25: #{tpu_custom_call.1} parent=1 // pred_fallthru
      _
    // Predicated region
    $region26: #{tpu_custom_call.1} parent=1 // pred_check
      _
    $region27: #{tpu_custom_call.1} parent=1 // pred_check_branch
      %33 = sbr.rel (0) target = $region29
    $region28: #{tpu_custom_call.1} parent=1 // pred_region
      %s35 = ssub.s32 11264, 11264
      %36 = vsyncadd [#allocation3], %s35
      %s37 = sshll.u32 [#allocation2], 4
      %s38 = int_to_ptr.vmem [resolvable:$true] %s37
      %43 = dma.hbm_to_vmem [thread:$0]  %s6, 11264, %s38, [#allocation3], 128, 128, 8
    $region29: #{tpu_custom_call.1} parent=1 // pred_fallthru
      _
    // Predicated region
    $region30: #{tpu_custom_call.1} parent=1 // pred_check
      _
    $region31: #{tpu_custom_call.1} parent=1 // pred_check_branch
      %45 = sbr.rel (0) target = $region33
    $region32: #{tpu_custom_call.1} parent=1 // pred_region
      _
    $region33: #{tpu_custom_call.1} parent=1 // pred_fallthru
      _
    // Predicated region
    $region34: #{tpu_custom_call.1} parent=1 // pred_check
      _
    $region35: #{tpu_custom_call.1} parent=1 // pred_check_branch
      %47 = sbr.rel (0) target = $region37
    $region36: #{tpu_custom_call.1} parent=1 // pred_region
      _
    $region37: #{tpu_custom_call.1} parent=1 // pred_fallthru
      _
    // Predicated region
    $region38: #{tpu_custom_call.1} parent=1 // pred_check
      _
    $region39: #{tpu_custom_call.1} parent=1 // pred_check_branch
      %49 = sbr.rel (0) target = $region41
    $region40: #{tpu_custom_call.1} parent=1 // pred_region
      _
    $region41: #{tpu_custom_call.1} parent=1 // pred_fallthru
      _
    // Predicated region
    $region42: #{tpu_custom_call.1} parent=1 // pred_check
      _
    $region43: #{tpu_custom_call.1} parent=1 // pred_check_branch
      %51 = sbr.rel (0) target = $region45
    $region44: #{tpu_custom_call.1} parent=1 // pred_region
      _
    $region45: #{tpu_custom_call.1} parent=1 // pred_fallthru
      _
    // Predicated region
    $region46: #{tpu_custom_call.1} parent=1 // pred_check
      _
    $region47: #{tpu_custom_call.1} parent=1 // pred_check_branch
      %53 = sbr.rel (0) target = $region49
    $region48: #{tpu_custom_call.1} parent=1 // pred_region
      _
    $region49: #{tpu_custom_call.1} parent=1 // pred_fallthru
      _
    // Predicated region
    $region50: #{tpu_custom_call.1} parent=1 // pred_check
      _
    $region51: #{tpu_custom_call.1} parent=1 // pred_check_branch
      %55 = sbr.rel (0) target = $region53
    $region52: #{tpu_custom_call.1} parent=1 // pred_region
      _
    $region53: #{tpu_custom_call.1} parent=1 // pred_fallthru
      _
    // Predicated region
    $region54: #{tpu_custom_call.1} parent=1 // pred_check
      _
    $region55: #{tpu_custom_call.1} parent=1 // pred_check_branch
      %57 = sbr.rel (0) target = $region57
    $region56: #{tpu_custom_call.1} parent=1 // pred_region
      %58 = dma.done [#allocation3], 11264
    $region57: #{tpu_custom_call.1} parent=1 // pred_fallthru
      _
    %v59 = vld [vmem:[%s0] sm:$0xff]
    %v60 = vld [vmem:[%s0 + $0x8] sm:$0xff]
    %v61 = vld [vmem:[%s0 + $0x10] sm:$0xff]
    %v62 = vld [vmem:[%s0 + $0x18] sm:$0xff]
    %v63 = vld [vmem:[%s1] sm:$0xff]
    %v64 = vld [vmem:[%s1 + $0x8] sm:$0xff]
    %v65 = vld [vmem:[%s1 + $0x10] sm:$0xff]
    %v66 = vld [vmem:[%s1 + $0x18] sm:$0xff]
    %v67 = vld [vmem:[%s2] sm:$0x1]
    %v69 = vlaneseq
    %v70 = vshrl.u32 %v69, 7
    %v71 = vsub.s32 0, %v70
    %v72 = vrot.slane %v67, %v71
    %vm74 = vcmask 261120
    %v76 = vsel %vm74, %v59, 0
    %v79 = vsel %vm74, %v60, 0
    %v82 = vsel %vm74, %v61, 0
    %v85 = vsel %vm74, %v62, 0
    %87 = vmatprep.subr.mxu0 0.0
    %88 = vmatpush1.msra.mxu0 %v63
    %89 = vmatprep.subr.mxu0 0.0
    %90 = vmatpush1.msra.mxu0 %v64
    %91 = vmatprep.subr.mxu0 0.0
    %92 = vmatpush1.msra.mxu0 %v65
    %93 = vmatprep.subr.mxu0 0.0
    %94 = vmatpush1.msra.mxu0 %v66
    %95 = vmatprep.subr.mxu0 0.0
    %96 = vmatpush1.msra.mxu0 0.0
    %97 = vmatprep.subr.mxu0 0.0
    %98 = vmatpush1.msra.mxu0 0.0
    %99 = vmatprep.subr.mxu0 0.0
    %100 = vmatpush1.msra.mxu0 0.0
    %101 = vmatprep.subr.mxu0 0.0
    %102 = vmatpush1.msra.mxu0 0.0
    %103 = vmatprep.subr.mxu0 0.0
    %104 = vmatpush1.msra.mxu0 0.0
    %105 = vmatprep.subr.mxu0 0.0
    %106 = vmatpush1.msra.mxu0 0.0
    %107 = vmatprep.subr.mxu0 0.0
    %108 = vmatpush1.msra.mxu0 0.0
    %109 = vmatprep.subr.mxu0 0.0
    %110 = vmatpush1.msra.mxu0 0.0
    %111 = vmatprep.subr.mxu0 0.0
    %112 = vmatpush1.msra.mxu0 0.0
    %113 = vmatprep.subr.mxu0 0.0
    %114 = vmatpush1.msra.mxu0 0.0
    %115 = vmatprep.subr.mxu0 0.0
    %116 = vmatpush1.msra.mxu0 0.0
    %117 = vmatprep.subr.mxu0 0.0
    %118 = vmatpush1.msra.mxu0 0.0
    %119 = vmatprep.subr.mxu0 0.0
    %120 = vmatpush1.msra.mxu0 0.0
    %121 = vmatprep.subr.mxu0 0.0
    %122 = vmatpush1.msra.mxu0 0.0
    %123 = vmatprep.subr.mxu0 0.0
    %124 = vmatpush1.msra.mxu0 0.0
    %125 = vmatprep.subr.mxu0 0.0
    %126 = vmatpush1.msra.mxu0 0.0
    %127 = vmatprep.subr.mxu0 0.0
    %128 = vmatpush1.msra.mxu0 0.0
    %129 = vmatprep.subr.mxu0 0.0
    %130 = vmatpush1.msra.mxu0 0.0
    %131 = vmatprep.subr.mxu0 0.0
    %132 = vmatpush1.msra.mxu0 0.0
    %133 = vmatprep.subr.mxu0 0.0
    %134 = vmatpush1.msra.mxu0 0.0
    %135 = vmatprep.subr.mxu0 0.0
    %136 = vmatpush1.msra.mxu0 0.0
    %137 = vmatprep.subr.mxu0 0.0
    %138 = vmatpush1.msra.mxu0 0.0
    %139 = vmatprep.subr.mxu0 0.0
    %140 = vmatpush1.msra.mxu0 0.0
    %141 = vmatprep.subr.mxu0 0.0
    %142 = vmatpush1.msra.mxu0 0.0
    %143 = vmatprep.subr.mxu0 0.0
    %144 = vmatpush1.msra.mxu0 0.0
    %145 = vmatprep.subr.mxu0 0.0
    %146 = vmatpush1.msra.mxu0 0.0
    %147 = vmatprep.subr.mxu0 0.0
    %148 = vmatpush1.msra.mxu0 0.0
    %149 = vmatprep.subr.mxu0 0.0
    %150 = vmatpush1.msra.mxu0 0.0
    %151 = vmatprep.mubr.f32.mxu0 0.0
    %152 = vmatmul.mubr.f32.gmra.mrb[0].mxu0 %v76
    %v153 = vpop.f32.mrb[0].mxu0
    %v154 = vadd.f32 %v72, %v153
    %v155 = vpop.f32.mrb[0].mxu0
    %156 = vmatprep.mubr.f32.mxu0 0.0
    %157 = vmatmul.mubr.f32.gmra.mrb[0].mxu0 %v79
    %v158 = vpop.f32.mrb[0].mxu0
    %v159 = vadd.f32 %v72, %v158
    %v160 = vpop.f32.mrb[0].mxu0
    %161 = vmatprep.mubr.f32.mxu0 0.0
    %162 = vmatmul.mubr.f32.gmra.mrb[0].mxu0 %v82
    %v163 = vpop.f32.mrb[0].mxu0
    %v164 = vadd.f32 %v72, %v163
    %v165 = vpop.f32.mrb[0].mxu0
    %166 = vmatprep.mubr.f32.mxu0 0.0
    %167 = vmatmul.mubr.f32.gmra.mrb[0].mxu0 %v85
    %v168 = vpop.f32.mrb[0].mxu0
    %v169 = vadd.f32 %v72, %v168
    %v170 = vpop.f32.mrb[0].mxu0
    %171 = vdwg.mxu0
    %v172 = vld [vmem:[%s3] sm:$0xff]
    %v173 = vld [vmem:[%s3 + $0x8] sm:$0xff]
    %v174 = vld [vmem:[%s3 + $0x10] sm:$0xff]
    %v175 = vld [vmem:[%s3 + $0x18] sm:$0xff]
    %v176 = vadd.f32 %v154, %v172
    %v177 = vadd.f32 %v159, %v173
    %v178 = vadd.f32 %v164, %v174
    %v179 = vadd.f32 %v169, %v175
    %v180 = vld [vmem:[%s4] sm:$0xff]
    %v181 = vld [vmem:[%s4 + $0x8] sm:$0xff]
    %v182 = vld [vmem:[%s4 + $0x10] sm:$0xff]
    %v183 = vld [vmem:[%s4 + $0x18] sm:$0xff]
    %v184 = vld [vmem:[%s4 + $0x20] sm:$0xff]
    %v185 = vld [vmem:[%s4 + $0x28] sm:$0xff]
    %v186 = vld [vmem:[%s4 + $0x30] sm:$0xff]
    %v187 = vld [vmem:[%s4 + $0x38] sm:$0xff]
    %v188 = vld [vmem:[%s4 + $0x40] sm:$0xff]
    %v189 = vld [vmem:[%s4 + $0x48] sm:$0xff]
    %v190 = vld [vmem:[%s4 + $0x50] sm:$0xff]
    %v191 = vld [vmem:[%s4 + $0x58] sm:$0xff]
    %v192 = vld [vmem:[%s4 + $0x60] sm:$0xff]
    %v193 = vld [vmem:[%s4 + $0x68] sm:$0xff]
    %v194 = vld [vmem:[%s4 + $0x70] sm:$0xff]
    %v195 = vld [vmem:[%s4 + $0x78] sm:$0xff]
    %v196 = vld [vmem:[%s4 + $0x80] sm:$0xff]
    %v197 = vld [vmem:[%s4 + $0x88] sm:$0xff]
    %v198 = vld [vmem:[%s4 + $0x90] sm:$0xff]
    %v199 = vld [vmem:[%s4 + $0x98] sm:$0xff]
    %v200 = vld [vmem:[%s4 + $0xa0] sm:$0xff]
    %v201 = vld [vmem:[%s4 + $0xa8] sm:$0xff]
    %v202 = vld [vmem:[%s4 + $0xb0] sm:$0xff]
    %v203 = vld [vmem:[%s4 + $0xb8] sm:$0xff]
    %v204 = vld [vmem:[%s4 + $0xc0] sm:$0xff]
    %v205 = vld [vmem:[%s4 + $0xc8] sm:$0xff]
    %v206 = vld [vmem:[%s4 + $0xd0] sm:$0xff]
    %v207 = vld [vmem:[%s4 + $0xd8] sm:$0xff]
    %v208 = vld [vmem:[%s4 + $0xe0] sm:$0xff]
    %v209 = vld [vmem:[%s4 + $0xe8] sm:$0xff]
    %v210 = vld [vmem:[%s4 + $0xf0] sm:$0xff]
    %v211 = vld [vmem:[%s4 + $0xf8] sm:$0xff]
    %v212 = vld [vmem:[%s4 + $0x100] sm:$0xff]
    %v213 = vld [vmem:[%s4 + $0x108] sm:$0xff]
    %v214 = vld [vmem:[%s4 + $0x110] sm:$0xff]
    %v215 = vld [vmem:[%s4 + $0x118] sm:$0xff]
    %v216 = vld [vmem:[%s4 + $0x120] sm:$0xff]
    %v217 = vld [vmem:[%s4 + $0x128] sm:$0xff]
    %v218 = vld [vmem:[%s4 + $0x130] sm:$0xff]
    %v219 = vld [vmem:[%s4 + $0x138] sm:$0xff]
    %v220 = vld [vmem:[%s4 + $0x140] sm:$0xff]
    %v221 = vld [vmem:[%s4 + $0x148] sm:$0xff]
    %v222 = vld [vmem:[%s4 + $0x150] sm:$0xff]
    %v223 = vld [vmem:[%s4 + $0x158] sm:$0xff]
    %v224 = vld [vmem:[%s5] sm:$0xff]
    %v225 = vld [vmem:[%s5 + $0x8] sm:$0xff]
    %v226 = vld [vmem:[%s5 + $0x10] sm:$0xff]
    %v227 = vld [vmem:[%s5 + $0x18] sm:$0xff]
    %v228 = vld [vmem:[%s5 + $0x20] sm:$0xff]
    %v229 = vld [vmem:[%s5 + $0x28] sm:$0xff]
    %v230 = vld [vmem:[%s5 + $0x30] sm:$0xff]
    %v231 = vld [vmem:[%s5 + $0x38] sm:$0xff]
    %v232 = vld [vmem:[%s5 + $0x40] sm:$0xff]
    %v233 = vld [vmem:[%s5 + $0x48] sm:$0xff]
    %v234 = vld [vmem:[%s5 + $0x50] sm:$0xff]
    %v235 = vld [vmem:[%s5 + $0x58] sm:$0xff]
    %v236 = vld [vmem:[%s5 + $0x60] sm:$0xff]
    %v237 = vld [vmem:[%s5 + $0x68] sm:$0xff]
    %v238 = vld [vmem:[%s5 + $0x70] sm:$0xff]
    %v239 = vld [vmem:[%s5 + $0x78] sm:$0xff]
    %v240 = vld [vmem:[%s5 + $0x80] sm:$0xff]
    %v241 = vld [vmem:[%s5 + $0x88] sm:$0xff]
    %v242 = vld [vmem:[%s5 + $0x90] sm:$0xff]
    %v243 = vld [vmem:[%s5 + $0x98] sm:$0xff]
    %v244 = vld [vmem:[%s5 + $0xa0] sm:$0xff]
    %v245 = vld [vmem:[%s5 + $0xa8] sm:$0xff]
    %v246 = vld [vmem:[%s5 + $0xb0] sm:$0xff]
    %v247 = vld [vmem:[%s5 + $0xb8] sm:$0xff]
    %v248 = vld [vmem:[%s5 + $0xc0] sm:$0xff]
    %v249 = vld [vmem:[%s5 + $0xc8] sm:$0xff]
    %v250 = vld [vmem:[%s5 + $0xd0] sm:$0xff]
    %v251 = vld [vmem:[%s5 + $0xd8] sm:$0xff]
    %v252 = vld [vmem:[%s5 + $0xe0] sm:$0xff]
    %v253 = vld [vmem:[%s5 + $0xe8] sm:$0xff]
    %v254 = vld [vmem:[%s5 + $0xf0] sm:$0xff]
    %v255 = vld [vmem:[%s5 + $0xf8] sm:$0xff]
    %v256 = vld [vmem:[%s5 + $0x100] sm:$0xff]
    %v257 = vld [vmem:[%s5 + $0x108] sm:$0xff]
    %v258 = vld [vmem:[%s5 + $0x110] sm:$0xff]
    %v259 = vld [vmem:[%s5 + $0x118] sm:$0xff]
    %v260 = vld [vmem:[%s5 + $0x120] sm:$0xff]
    %v261 = vld [vmem:[%s5 + $0x128] sm:$0xff]
    %v262 = vld [vmem:[%s5 + $0x130] sm:$0xff]
    %v263 = vld [vmem:[%s5 + $0x138] sm:$0xff]
    %v264 = vld [vmem:[%s5 + $0x140] sm:$0xff]
    %v265 = vld [vmem:[%s5 + $0x148] sm:$0xff]
    %v266 = vld [vmem:[%s5 + $0x150] sm:$0xff]
    %v267 = vld [vmem:[%s5 + $0x158] sm:$0xff]
    %v268 = vld [vmem:[%s5 + $0x160] sm:$0xff]
    %v269 = vld [vmem:[%s5 + $0x168] sm:$0xff]
    %v270 = vld [vmem:[%s5 + $0x170] sm:$0xff]
    %v271 = vld [vmem:[%s5 + $0x178] sm:$0xff]
    %v272 = vld [vmem:[%s5 + $0x180] sm:$0xff]
    %v273 = vld [vmem:[%s5 + $0x188] sm:$0xff]
    %v274 = vld [vmem:[%s5 + $0x190] sm:$0xff]
    %v275 = vld [vmem:[%s5 + $0x198] sm:$0xff]
    %v276 = vld [vmem:[%s5 + $0x1a0] sm:$0xff]
    %v277 = vld [vmem:[%s5 + $0x1a8] sm:$0xff]
    %v278 = vld [vmem:[%s5 + $0x1b0] sm:$0xff]
    %v279 = vld [vmem:[%s5 + $0x1b8] sm:$0xff]
    %v280 = vld [vmem:[%s5 + $0x1c0] sm:$0xff]
    %v281 = vld [vmem:[%s5 + $0x1c8] sm:$0xff]
    %v282 = vld [vmem:[%s5 + $0x1d0] sm:$0xff]
    %v283 = vld [vmem:[%s5 + $0x1d8] sm:$0xff]
    %v284 = vld [vmem:[%s8] sm:$0xff]
    %v285 = vsel %vm74, %v176, 0.0
    %286 = vadd.xlane.f32.xlu0 %v285
    %v287 = vpop.xlane.xlu0 %286
    %v288 = vsel %vm74, %v177, 0.0
    %289 = vadd.xlane.f32.xlu0 %v288
    %v290 = vpop.xlane.xlu0 %289
    %v291 = vsel %vm74, %v178, 0.0
    %292 = vadd.xlane.f32.xlu0 %v291
    %v293 = vpop.xlane.xlu0 %292
    %v294 = vsel %vm74, %v179, 0.0
    %295 = vadd.xlane.f32.xlu0 %v294
    %v296 = vpop.xlane.xlu0 %295
    %v297 = vrcp.pop 32.0
    %v298 = vmul.f32 %v287, %v297
    %v299 = vmul.f32 %v290, %v297
    %v300 = vmul.f32 %v293, %v297
    %v301 = vmul.f32 %v296, %v297
    %v302 = vsub.f32 %v176, %v298
    %v303 = vsub.f32 %v177, %v299
    %v304 = vsub.f32 %v178, %v300
    %v305 = vsub.f32 %v179, %v301
    %v306 = vmul.f32 %v302, %v302
    %v307 = vmul.f32 %v303, %v303
    %v308 = vmul.f32 %v304, %v304
    %v309 = vmul.f32 %v305, %v305
    %v310 = vsel %vm74, %v306, 0.0
    %311 = vadd.xlane.f32.xlu0 %v310
    %v312 = vpop.xlane.xlu0 %311
    %v313 = vsel %vm74, %v307, 0.0
    %314 = vadd.xlane.f32.xlu0 %v313
    %v315 = vpop.xlane.xlu0 %314
    %v316 = vsel %vm74, %v308, 0.0
    %317 = vadd.xlane.f32.xlu0 %v316
    %v318 = vpop.xlane.xlu0 %317
    %v319 = vsel %vm74, %v309, 0.0
    %320 = vadd.xlane.f32.xlu0 %v319
    %v321 = vpop.xlane.xlu0 %320
    %v322 = vmul.f32 %v312, %v297
    %v323 = vmul.f32 %v315, %v297
    %v324 = vmul.f32 %v318, %v297
    %v325 = vmul.f32 %v321, %v297
    %v326 = vadd.f32 %v322, 1e-05
    %v327 = vadd.f32 %v323, 1e-05
    %v328 = vadd.f32 %v324, 1e-05
    %v329 = vadd.f32 %v325, 1e-05
    %v330 = vrsqrt.pop %v326
    %v331 = vrsqrt.pop %v327
    %v332 = vrsqrt.pop %v328
    %v333 = vrsqrt.pop %v329
    %v334 = vmul.f32 %v302, %v330
    %v335 = vmul.f32 %v303, %v331
    %v336 = vmul.f32 %v304, %v332
    %v337 = vmul.f32 %v305, %v333
    %v338 = vlaneseq
    %v339 = vshrl.u32 %v338, 7
    %v340 = vsub.s32 0, %v339
    %v341 = vrot.slane %v284, %v340
    %v342 = vmul.f32 %v334, %v341
    %v343 = vmul.f32 %v335, %v341
    %v344 = vmul.f32 %v336, %v341
    %v345 = vmul.f32 %v337, %v341
    %v346 = vlaneseq
    %v347 = vshrl.u32 %v346, 7
    %v348 = vsub.s32 1, %v347
    %v349 = vrot.slane %v284, %v348
    %v350 = vadd.f32 %v342, %v349
    %v351 = vadd.f32 %v343, %v349
    %v352 = vadd.f32 %v344, %v349
    %v353 = vadd.f32 %v345, %v349
    %v354 = vsel %vm74, %v350, 0.0
    %355 = vadd.xlane.f32.xlu0 %v354
    %v356 = vpop.xlane.xlu0 %355
    %v357 = vsel %vm74, %v351, 0.0
    %358 = vadd.xlane.f32.xlu0 %v357
    %v359 = vpop.xlane.xlu0 %358
    %v360 = vsel %vm74, %v352, 0.0
    %361 = vadd.xlane.f32.xlu0 %v360
    %v362 = vpop.xlane.xlu0 %361
    %v363 = vsel %vm74, %v353, 0.0
    %364 = vadd.xlane.f32.xlu0 %v363
    %v365 = vpop.xlane.xlu0 %364
    %v366 = vmul.f32 %v356, %v297
    %v367 = vmul.f32 %v359, %v297
    %v368 = vmul.f32 %v362, %v297
    %v369 = vmul.f32 %v365, %v297
    %v370 = vsub.f32 %v350, %v366
    %v371 = vsub.f32 %v351, %v367
    %v372 = vsub.f32 %v352, %v368
    %v373 = vsub.f32 %v353, %v369
    %v374 = vmul.f32 %v370, %v370
    %v375 = vmul.f32 %v371, %v371
    %v376 = vmul.f32 %v372, %v372
    %v377 = vmul.f32 %v373, %v373
    %v378 = vsel %vm74, %v374, 0.0
    %379 = vadd.xlane.f32.xlu0 %v378
    %v380 = vpop.xlane.xlu0 %379
    %v381 = vsel %vm74, %v375, 0.0
    %382 = vadd.xlane.f32.xlu0 %v381
    %v383 = vpop.xlane.xlu0 %382
    %v384 = vsel %vm74, %v376, 0.0
    %385 = vadd.xlane.f32.xlu0 %v384
    %v386 = vpop.xlane.xlu0 %385
    %v387 = vsel %vm74, %v377, 0.0
    %388 = vadd.xlane.f32.xlu0 %v387
    %v389 = vpop.xlane.xlu0 %388
    %v390 = vmul.f32 %v380, %v297
    %v391 = vmul.f32 %v383, %v297
    %v392 = vmul.f32 %v386, %v297
    %v393 = vmul.f32 %v389, %v297
    %v394 = vadd.f32 %v390, 1e-05
    %v395 = vadd.f32 %v391, 1e-05
    %v396 = vadd.f32 %v392, 1e-05
    %v397 = vadd.f32 %v393, 1e-05
    %v398 = vrsqrt.pop %v394
    %v399 = vrsqrt.pop %v395
    %v400 = vrsqrt.pop %v396
    %v401 = vrsqrt.pop %v397
    %v402 = vmul.f32 %v370, %v398
    %v403 = vmul.f32 %v371, %v399
    %v404 = vmul.f32 %v372, %v400
    %v405 = vmul.f32 %v373, %v401
    %v406 = vlaneseq
    %v407 = vshrl.u32 %v406, 7
    %v408 = vsub.s32 4, %v407
    %v409 = vrot.slane %v284, %v408
    %v410 = vmul.f32 %v402, %v409
    %v411 = vmul.f32 %v403, %v409
    %v412 = vmul.f32 %v404, %v409
    %v413 = vmul.f32 %v405, %v409
    %v414 = vlaneseq
    %v415 = vshrl.u32 %v414, 7
    %v416 = vsub.s32 5, %v415
    %v417 = vrot.slane %v284, %v416
    %v418 = vadd.f32 %v410, %v417
    %v419 = vadd.f32 %v411, %v417
    %v420 = vadd.f32 %v412, %v417
    %v421 = vadd.f32 %v413, %v417
    %v423 = vsel %vm74, %v180, 0
    %v426 = vsel %vm74, %v181, 0
    %v429 = vsel %vm74, %v182, 0
    %v432 = vsel %vm74, %v183, 0
    %v435 = vsel %vm74, %v184, 0
    %v438 = vsel %vm74, %v185, 0
    %v441 = vsel %vm74, %v186, 0
    %v444 = vsel %vm74, %v187, 0
    %v447 = vsel %vm74, %v188, 0
    %v450 = vsel %vm74, %v189, 0
    %v453 = vsel %vm74, %v190, 0
    %v456 = vsel %vm74, %v191, 0
    %v459 = vsel %vm74, %v192, 0
    %v462 = vsel %vm74, %v193, 0
    %v465 = vsel %vm74, %v194, 0
    %v468 = vsel %vm74, %v195, 0
    %v471 = vsel %vm74, %v196, 0
    %v474 = vsel %vm74, %v197, 0
    %v477 = vsel %vm74, %v198, 0
    %v480 = vsel %vm74, %v199, 0
    %v483 = vsel %vm74, %v200, 0
    %v486 = vsel %vm74, %v201, 0
    %v489 = vsel %vm74, %v202, 0
    %v492 = vsel %vm74, %v203, 0
    %v495 = vsel %vm74, %v204, 0
    %v498 = vsel %vm74, %v205, 0
    %v501 = vsel %vm74, %v206, 0
    %v504 = vsel %vm74, %v207, 0
    %v507 = vsel %vm74, %v208, 0
    %v510 = vsel %vm74, %v209, 0
    %v513 = vsel %vm74, %v210, 0
    %v516 = vsel %vm74, %v211, 0
    %v519 = vsel %vm74, %v212, 0
    %v522 = vsel %vm74, %v213, 0
    %v525 = vsel %vm74, %v214, 0
    %v528 = vsel %vm74, %v215, 0
    %v531 = vsel %vm74, %v216, 0
    %v534 = vsel %vm74, %v217, 0
    %v537 = vsel %vm74, %v218, 0
    %v540 = vsel %vm74, %v219, 0
    %v543 = vsel %vm74, %v220, 0
    %v546 = vsel %vm74, %v221, 0
    %v549 = vsel %vm74, %v222, 0
    %v552 = vsel %vm74, %v223, 0
    %554 = vmatprep.subr.mxu0 0.0
    %555 = vmatpush1.msra.mxu0 %v418
    %556 = vmatprep.subr.mxu0 0.0
    %557 = vmatpush1.msra.mxu0 %v419
    %558 = vmatprep.subr.mxu0 0.0
    %559 = vmatpush1.msra.mxu0 %v420
    %560 = vmatprep.subr.mxu0 0.0
    %561 = vmatpush1.msra.mxu0 %v421
    %562 = vmatprep.subr.mxu0 0.0
    %563 = vmatpush1.msra.mxu0 0.0
    %564 = vmatprep.subr.mxu0 0.0
    %565 = vmatpush1.msra.mxu0 0.0
    %566 = vmatprep.subr.mxu0 0.0
    %567 = vmatpush1.msra.mxu0 0.0
    %568 = vmatprep.subr.mxu0 0.0
    %569 = vmatpush1.msra.mxu0 0.0
    %570 = vmatprep.subr.mxu0 0.0
    %571 = vmatpush1.msra.mxu0 0.0
    %572 = vmatprep.subr.mxu0 0.0
    %573 = vmatpush1.msra.mxu0 0.0
    %574 = vmatprep.subr.mxu0 0.0
    %575 = vmatpush1.msra.mxu0 0.0
    %576 = vmatprep.subr.mxu0 0.0
    %577 = vmatpush1.msra.mxu0 0.0
    %578 = vmatprep.subr.mxu0 0.0
    %579 = vmatpush1.msra.mxu0 0.0
    %580 = vmatprep.subr.mxu0 0.0
    %581 = vmatpush1.msra.mxu0 0.0
    %582 = vmatprep.subr.mxu0 0.0
    %583 = vmatpush1.msra.mxu0 0.0
    %584 = vmatprep.subr.mxu0 0.0
    %585 = vmatpush1.msra.mxu0 0.0
    %586 = vmatprep.subr.mxu0 0.0
    %587 = vmatpush1.msra.mxu0 0.0
    %588 = vmatprep.subr.mxu0 0.0
    %589 = vmatpush1.msra.mxu0 0.0
    %590 = vmatprep.subr.mxu0 0.0
    %591 = vmatpush1.msra.mxu0 0.0
    %592 = vmatprep.subr.mxu0 0.0
    %593 = vmatpush1.msra.mxu0 0.0
    %594 = vmatprep.subr.mxu0 0.0
    %595 = vmatpush1.msra.mxu0 0.0
    %596 = vmatprep.subr.mxu0 0.0
    %597 = vmatpush1.msra.mxu0 0.0
    %598 = vmatprep.subr.mxu0 0.0
    %599 = vmatpush1.msra.mxu0 0.0
    %600 = vmatprep.subr.mxu0 0.0
    %601 = vmatpush1.msra.mxu0 0.0
    %602 = vmatprep.subr.mxu0 0.0
    %603 = vmatpush1.msra.mxu0 0.0
    %604 = vmatprep.subr.mxu0 0.0
    %605 = vmatpush1.msra.mxu0 0.0
    %606 = vmatprep.subr.mxu0 0.0
    %607 = vmatpush1.msra.mxu0 0.0
    %608 = vmatprep.subr.mxu0 0.0
    %609 = vmatpush1.msra.mxu0 0.0
    %610 = vmatprep.subr.mxu0 0.0
    %611 = vmatpush1.msra.mxu0 0.0
    %612 = vmatprep.subr.mxu0 0.0
    %613 = vmatpush1.msra.mxu0 0.0
    %614 = vmatprep.subr.mxu0 0.0
    %615 = vmatpush1.msra.mxu0 0.0
    %616 = vmatprep.subr.mxu0 0.0
    %617 = vmatpush1.msra.mxu0 0.0
    %618 = vmatprep.mubr.f32.mxu0 0.0
    %619 = vmatmul.mubr.f32.gmra.mrb[0].mxu0 %v423
    %v620 = vpop.f32.mrb[0].mxu0
    %v621 = vadd.f32 0.0, %v620
    %v622 = vpop.f32.mrb[0].mxu0
    %623 = vmatprep.mubr.f32.mxu0 0.0
    %624 = vmatmul.mubr.f32.gmra.mrb[0].mxu0 %v426
    %v625 = vpop.f32.mrb[0].mxu0
    %v626 = vadd.f32 0.0, %v625
    %v627 = vpop.f32.mrb[0].mxu0
    %628 = vmatprep.mubr.f32.mxu0 0.0
    %629 = vmatmul.mubr.f32.gmra.mrb[0].mxu0 %v429
    %v630 = vpop.f32.mrb[0].mxu0
    %v631 = vadd.f32 0.0, %v630
    %v632 = vpop.f32.mrb[0].mxu0
    %633 = vmatprep.mubr.f32.mxu0 0.0
    %634 = vmatmul.mubr.f32.gmra.mrb[0].mxu0 %v432
    %v635 = vpop.f32.mrb[0].mxu0
    %v636 = vadd.f32 0.0, %v635
    %v637 = vpop.f32.mrb[0].mxu0
    %638 = vmatprep.mubr.f32.mxu0 0.0
    %639 = vmatmul.mubr.f32.gmra.mrb[0].mxu0 %v435
    %v640 = vpop.f32.mrb[0].mxu0
    %v641 = vadd.f32 0.0, %v640
    %v642 = vpop.f32.mrb[0].mxu0
    %643 = vmatprep.mubr.f32.mxu0 0.0
    %644 = vmatmul.mubr.f32.gmra.mrb[0].mxu0 %v438
    %v645 = vpop.f32.mrb[0].mxu0
    %v646 = vadd.f32 0.0, %v645
    %v647 = vpop.f32.mrb[0].mxu0
    %648 = vmatprep.mubr.f32.mxu0 0.0
    %649 = vmatmul.mubr.f32.gmra.mrb[0].mxu0 %v441
    %v650 = vpop.f32.mrb[0].mxu0
    %v651 = vadd.f32 0.0, %v650
    %v652 = vpop.f32.mrb[0].mxu0
    %653 = vmatprep.mubr.f32.mxu0 0.0
    %654 = vmatmul.mubr.f32.gmra.mrb[0].mxu0 %v444
    %v655 = vpop.f32.mrb[0].mxu0
    %v656 = vadd.f32 0.0, %v655
    %v657 = vpop.f32.mrb[0].mxu0
    %658 = vmatprep.mubr.f32.mxu0 0.0
    %659 = vmatmul.mubr.f32.gmra.mrb[0].mxu0 %v447
    %v660 = vpop.f32.mrb[0].mxu0
    %v661 = vadd.f32 0.0, %v660
    %v662 = vpop.f32.mrb[0].mxu0
    %663 = vmatprep.mubr.f32.mxu0 0.0
    %664 = vmatmul.mubr.f32.gmra.mrb[0].mxu0 %v450
    %v665 = vpop.f32.mrb[0].mxu0
    %v666 = vadd.f32 0.0, %v665
    %v667 = vpop.f32.mrb[0].mxu0
    %668 = vmatprep.mubr.f32.mxu0 0.0
    %669 = vmatmul.mubr.f32.gmra.mrb[0].mxu0 %v453
    %v670 = vpop.f32.mrb[0].mxu0
    %v671 = vadd.f32 0.0, %v670
    %v672 = vpop.f32.mrb[0].mxu0
    %673 = vmatprep.mubr.f32.mxu0 0.0
    %674 = vmatmul.mubr.f32.gmra.mrb[0].mxu0 %v456
    %v675 = vpop.f32.mrb[0].mxu0
    %v676 = vadd.f32 0.0, %v675
    %v677 = vpop.f32.mrb[0].mxu0
    %678 = vmatprep.mubr.f32.mxu0 0.0
    %679 = vmatmul.mubr.f32.gmra.mrb[0].mxu0 %v459
    %v680 = vpop.f32.mrb[0].mxu0
    %v681 = vadd.f32 0.0, %v680
    %v682 = vpop.f32.mrb[0].mxu0
    %683 = vmatprep.mubr.f32.mxu0 0.0
    %684 = vmatmul.mubr.f32.gmra.mrb[0].mxu0 %v462
    %v685 = vpop.f32.mrb[0].mxu0
    %v686 = vadd.f32 0.0, %v685
    %v687 = vpop.f32.mrb[0].mxu0
    %688 = vmatprep.mubr.f32.mxu0 0.0
    %689 = vmatmul.mubr.f32.gmra.mrb[0].mxu0 %v465
    %v690 = vpop.f32.mrb[0].mxu0
    %v691 = vadd.f32 0.0, %v690
    %v692 = vpop.f32.mrb[0].mxu0
    %693 = vmatprep.mubr.f32.mxu0 0.0
    %694 = vmatmul.mubr.f32.gmra.mrb[0].mxu0 %v468
    %v695 = vpop.f32.mrb[0].mxu0
    %v696 = vadd.f32 0.0, %v695
    %v697 = vpop.f32.mrb[0].mxu0
    %698 = vmatprep.mubr.f32.mxu0 0.0
    %699 = vmatmul.mubr.f32.gmra.mrb[0].mxu0 %v471
    %v700 = vpop.f32.mrb[0].mxu0
    %v701 = vadd.f32 0.0, %v700
    %v702 = vpop.f32.mrb[0].mxu0
    %703 = vmatprep.mubr.f32.mxu0 0.0
    %704 = vmatmul.mubr.f32.gmra.mrb[0].mxu0 %v474
    %v705 = vpop.f32.mrb[0].mxu0
    %v706 = vadd.f32 0.0, %v705
    %v707 = vpop.f32.mrb[0].mxu0
    %708 = vmatprep.mubr.f32.mxu0 0.0
    %709 = vmatmul.mubr.f32.gmra.mrb[0].mxu0 %v477
    %v710 = vpop.f32.mrb[0].mxu0
    %v711 = vadd.f32 0.0, %v710
    %v712 = vpop.f32.mrb[0].mxu0
    %713 = vmatprep.mubr.f32.mxu0 0.0
    %714 = vmatmul.mubr.f32.gmra.mrb[0].mxu0 %v480
    %v715 = vpop.f32.mrb[0].mxu0
    %v716 = vadd.f32 0.0, %v715
    %v717 = vpop.f32.mrb[0].mxu0
    %718 = vmatprep.mubr.f32.mxu0 0.0
    %719 = vmatmul.mubr.f32.gmra.mrb[0].mxu0 %v483
    %v720 = vpop.f32.mrb[0].mxu0
    %v721 = vadd.f32 0.0, %v720
    %v722 = vpop.f32.mrb[0].mxu0
    %723 = vmatprep.mubr.f32.mxu0 0.0
    %724 = vmatmul.mubr.f32.gmra.mrb[0].mxu0 %v486
    %v725 = vpop.f32.mrb[0].mxu0
    %v726 = vadd.f32 0.0, %v725
    %v727 = vpop.f32.mrb[0].mxu0
    %728 = vmatprep.mubr.f32.mxu0 0.0
    %729 = vmatmul.mubr.f32.gmra.mrb[0].mxu0 %v489
    %v730 = vpop.f32.mrb[0].mxu0
    %v731 = vadd.f32 0.0, %v730
    %v732 = vpop.f32.mrb[0].mxu0
    %733 = vmatprep.mubr.f32.mxu0 0.0
    %734 = vmatmul.mubr.f32.gmra.mrb[0].mxu0 %v492
    %v735 = vpop.f32.mrb[0].mxu0
    %v736 = vadd.f32 0.0, %v735
    %v737 = vpop.f32.mrb[0].mxu0
    %738 = vmatprep.mubr.f32.mxu0 0.0
    %739 = vmatmul.mubr.f32.gmra.mrb[0].mxu0 %v495
    %v740 = vpop.f32.mrb[0].mxu0
    %v741 = vadd.f32 0.0, %v740
    %v742 = vpop.f32.mrb[0].mxu0
    %743 = vmatprep.mubr.f32.mxu0 0.0
    %744 = vmatmul.mubr.f32.gmra.mrb[0].mxu0 %v498
    %v745 = vpop.f32.mrb[0].mxu0
    %v746 = vadd.f32 0.0, %v745
    %v747 = vpop.f32.mrb[0].mxu0
    %748 = vmatprep.mubr.f32.mxu0 0.0
    %749 = vmatmul.mubr.f32.gmra.mrb[0].mxu0 %v501
    %v750 = vpop.f32.mrb[0].mxu0
    %v751 = vadd.f32 0.0, %v750
    %v752 = vpop.f32.mrb[0].mxu0
    %753 = vmatprep.mubr.f32.mxu0 0.0
    %754 = vmatmul.mubr.f32.gmra.mrb[0].mxu0 %v504
    %v755 = vpop.f32.mrb[0].mxu0
    %v756 = vadd.f32 0.0, %v755
    %v757 = vpop.f32.mrb[0].mxu0
    %758 = vmatprep.mubr.f32.mxu0 0.0
    %759 = vmatmul.mubr.f32.gmra.mrb[0].mxu0 %v507
    %v760 = vpop.f32.mrb[0].mxu0
    %v761 = vadd.f32 0.0, %v760
    %v762 = vpop.f32.mrb[0].mxu0
    %763 = vmatprep.mubr.f32.mxu0 0.0
    %764 = vmatmul.mubr.f32.gmra.mrb[0].mxu0 %v510
    %v765 = vpop.f32.mrb[0].mxu0
    %v766 = vadd.f32 0.0, %v765
    %v767 = vpop.f32.mrb[0].mxu0
    %768 = vmatprep.mubr.f32.mxu0 0.0
    %769 = vmatmul.mubr.f32.gmra.mrb[0].mxu0 %v513
    %v770 = vpop.f32.mrb[0].mxu0
    %v771 = vadd.f32 0.0, %v770
    %v772 = vpop.f32.mrb[0].mxu0
    %773 = vmatprep.mubr.f32.mxu0 0.0
    %774 = vmatmul.mubr.f32.gmra.mrb[0].mxu0 %v516
    %v775 = vpop.f32.mrb[0].mxu0
    %v776 = vadd.f32 0.0, %v775
    %v777 = vpop.f32.mrb[0].mxu0
    %778 = vmatprep.mubr.f32.mxu0 0.0
    %779 = vmatmul.mubr.f32.gmra.mrb[0].mxu0 %v519
    %v780 = vpop.f32.mrb[0].mxu0
    %v781 = vadd.f32 0.0, %v780
    %v782 = vpop.f32.mrb[0].mxu0
    %783 = vmatprep.mubr.f32.mxu0 0.0
    %784 = vmatmul.mubr.f32.gmra.mrb[0].mxu0 %v522
    %v785 = vpop.f32.mrb[0].mxu0
    %v786 = vadd.f32 0.0, %v785
    %v787 = vpop.f32.mrb[0].mxu0
    %788 = vmatprep.mubr.f32.mxu0 0.0
    %789 = vmatmul.mubr.f32.gmra.mrb[0].mxu0 %v525
    %v790 = vpop.f32.mrb[0].mxu0
    %v791 = vadd.f32 0.0, %v790
    %v792 = vpop.f32.mrb[0].mxu0
    %793 = vmatprep.mubr.f32.mxu0 0.0
    %794 = vmatmul.mubr.f32.gmra.mrb[0].mxu0 %v528
    %v795 = vpop.f32.mrb[0].mxu0
    %v796 = vadd.f32 0.0, %v795
    %v797 = vpop.f32.mrb[0].mxu0
    %798 = vmatprep.mubr.f32.mxu0 0.0
    %799 = vmatmul.mubr.f32.gmra.mrb[0].mxu0 %v531
    %v800 = vpop.f32.mrb[0].mxu0
    %v801 = vadd.f32 0.0, %v800
    %v802 = vpop.f32.mrb[0].mxu0
    %803 = vmatprep.mubr.f32.mxu0 0.0
    %804 = vmatmul.mubr.f32.gmra.mrb[0].mxu0 %v534
    %v805 = vpop.f32.mrb[0].mxu0
    %v806 = vadd.f32 0.0, %v805
    %v807 = vpop.f32.mrb[0].mxu0
    %808 = vmatprep.mubr.f32.mxu0 0.0
    %809 = vmatmul.mubr.f32.gmra.mrb[0].mxu0 %v537
    %v810 = vpop.f32.mrb[0].mxu0
    %v811 = vadd.f32 0.0, %v810
    %v812 = vpop.f32.mrb[0].mxu0
    %813 = vmatprep.mubr.f32.mxu0 0.0
    %814 = vmatmul.mubr.f32.gmra.mrb[0].mxu0 %v540
    %v815 = vpop.f32.mrb[0].mxu0
    %v816 = vadd.f32 0.0, %v815
    %v817 = vpop.f32.mrb[0].mxu0
    %818 = vmatprep.mubr.f32.mxu0 0.0
    %819 = vmatmul.mubr.f32.gmra.mrb[0].mxu0 %v543
    %v820 = vpop.f32.mrb[0].mxu0
    %v821 = vadd.f32 0.0, %v820
    %v822 = vpop.f32.mrb[0].mxu0
    %823 = vmatprep.mubr.f32.mxu0 0.0
    %824 = vmatmul.mubr.f32.gmra.mrb[0].mxu0 %v546
    %v825 = vpop.f32.mrb[0].mxu0
    %v826 = vadd.f32 0.0, %v825
    %v827 = vpop.f32.mrb[0].mxu0
    %828 = vmatprep.mubr.f32.mxu0 0.0
    %829 = vmatmul.mubr.f32.gmra.mrb[0].mxu0 %v549
    %v830 = vpop.f32.mrb[0].mxu0
    %v831 = vadd.f32 0.0, %v830
    %v832 = vpop.f32.mrb[0].mxu0
    %833 = vmatprep.mubr.f32.mxu0 0.0
    %834 = vmatmul.mubr.f32.gmra.mrb[0].mxu0 %v552
    %v835 = vpop.f32.mrb[0].mxu0
    %v836 = vadd.f32 0.0, %v835
    %v837 = vpop.f32.mrb[0].mxu0
    %838 = vdwg.mxu0
    %v839 = vld [vmem:[#allocation2] sm:$0xff]
    %v840 = vld [vmem:[#allocation2 + $0x8] sm:$0xff]
    %v841 = vld [vmem:[#allocation2 + $0x10] sm:$0xff]
    %v842 = vld [vmem:[#allocation2 + $0x18] sm:$0xff]
    %s843 = scalar_lea.vmem [#allocation2], 32
    %v844 = vld [vmem:[%s843] sm:$0xff]
    %v845 = vld [vmem:[%s843 + $0x8] sm:$0xff]
    %v846 = vld [vmem:[%s843 + $0x10] sm:$0xff]
    %v847 = vld [vmem:[%s843 + $0x18] sm:$0xff]
    %v849 = vsel %vm74, %v641, 0
    %v852 = vsel %vm74, %v646, 0
    %v855 = vsel %vm74, %v651, 0
    %v858 = vsel %vm74, %v656, 0
    %860 = vmatprep.subr.mxu0 0.0
    %861 = vmatpush1.msra.mxu0 %v844
    %862 = vmatprep.subr.mxu0 0.0
    %863 = vmatpush1.msra.mxu0 %v845
    %864 = vmatprep.subr.mxu0 0.0
    %865 = vmatpush1.msra.mxu0 %v846
    %866 = vmatprep.subr.mxu0 0.0
    %867 = vmatpush1.msra.mxu0 %v847
    %868 = vmatprep.subr.mxu0 0.0
    %869 = vmatpush1.msra.mxu0 0.0
    %870 = vmatprep.subr.mxu0 0.0
    %871 = vmatpush1.msra.mxu0 0.0
    %872 = vmatprep.subr.mxu0 0.0
    %873 = vmatpush1.msra.mxu0 0.0
    %874 = vmatprep.subr.mxu0 0.0
    %875 = vmatpush1.msra.mxu0 0.0
    %876 = vmatprep.subr.mxu0 0.0
    %877 = vmatpush1.msra.mxu0 0.0
    %878 = vmatprep.subr.mxu0 0.0
    %879 = vmatpush1.msra.mxu0 0.0
    %880 = vmatprep.subr.mxu0 0.0
    %881 = vmatpush1.msra.mxu0 0.0
    %882 = vmatprep.subr.mxu0 0.0
    %883 = vmatpush1.msra.mxu0 0.0
    %884 = vmatprep.subr.mxu0 0.0
    %885 = vmatpush1.msra.mxu0 0.0
    %886 = vmatprep.subr.mxu0 0.0
    %887 = vmatpush1.msra.mxu0 0.0
    %888 = vmatprep.subr.mxu0 0.0
    %889 = vmatpush1.msra.mxu0 0.0
    %890 = vmatprep.subr.mxu0 0.0
    %891 = vmatpush1.msra.mxu0 0.0
    %892 = vmatprep.subr.mxu0 0.0
    %893 = vmatpush1.msra.mxu0 0.0
    %894 = vmatprep.subr.mxu0 0.0
    %895 = vmatpush1.msra.mxu0 0.0
    %896 = vmatprep.subr.mxu0 0.0
    %897 = vmatpush1.msra.mxu0 0.0
    %898 = vmatprep.subr.mxu0 0.0
    %899 = vmatpush1.msra.mxu0 0.0
    %900 = vmatprep.subr.mxu0 0.0
    %901 = vmatpush1.msra.mxu0 0.0
    %902 = vmatprep.subr.mxu0 0.0
    %903 = vmatpush1.msra.mxu0 0.0
    %904 = vmatprep.subr.mxu0 0.0
    %905 = vmatpush1.msra.mxu0 0.0
    %906 = vmatprep.subr.mxu0 0.0
    %907 = vmatpush1.msra.mxu0 0.0
    %908 = vmatprep.subr.mxu0 0.0
    %909 = vmatpush1.msra.mxu0 0.0
    %910 = vmatprep.subr.mxu0 0.0
    %911 = vmatpush1.msra.mxu0 0.0
    %912 = vmatprep.subr.mxu0 0.0
    %913 = vmatpush1.msra.mxu0 0.0
    %914 = vmatprep.subr.mxu0 0.0
    %915 = vmatpush1.msra.mxu0 0.0
    %916 = vmatprep.subr.mxu0 0.0
    %917 = vmatpush1.msra.mxu0 0.0
    %918 = vmatprep.subr.mxu0 0.0
    %919 = vmatpush1.msra.mxu0 0.0
    %920 = vmatprep.subr.mxu0 0.0
    %921 = vmatpush1.msra.mxu0 0.0
    %922 = vmatprep.subr.mxu0 0.0
    %923 = vmatpush1.msra.mxu0 0.0
    %924 = vmatprep.mubr.f32.mxu0 0.0
    %925 = vmatmul.mubr.f32.gmra.mrb[0].mxu0 %v849
    %v926 = vpop.f32.mrb[0].mxu0
    %v927 = vadd.f32 0.0, %v926
    %v928 = vpop.f32.mrb[0].mxu0
    %929 = vmatprep.mubr.f32.mxu0 0.0
    %930 = vmatmul.mubr.f32.gmra.mrb[0].mxu0 %v852
    %v931 = vpop.f32.mrb[0].mxu0
    %v932 = vadd.f32 0.0, %v931
    %v933 = vpop.f32.mrb[0].mxu0
    %934 = vmatprep.mubr.f32.mxu0 0.0
    %935 = vmatmul.mubr.f32.gmra.mrb[0].mxu0 %v855
    %v936 = vpop.f32.mrb[0].mxu0
    %v937 = vadd.f32 0.0, %v936
    %v938 = vpop.f32.mrb[0].mxu0
    %939 = vmatprep.mubr.f32.mxu0 0.0
    %940 = vmatmul.mubr.f32.gmra.mrb[0].mxu0 %v858
    %v941 = vpop.f32.mrb[0].mxu0
    %v942 = vadd.f32 0.0, %v941
    %v943 = vpop.f32.mrb[0].mxu0
    %944 = vdwg.mxu0
    %s945 = scalar_lea.vmem [#allocation2], 64
    %v946 = vld [vmem:[%s945] sm:$0xff]
    %v947 = vld [vmem:[%s945 + $0x8] sm:$0xff]
    %v948 = vld [vmem:[%s945 + $0x10] sm:$0xff]
    %v949 = vld [vmem:[%s945 + $0x18] sm:$0xff]
    %s950 = scalar_lea.vmem [#allocation2], 96
    %v951 = vld [vmem:[%s950] sm:$0xff]
    %v952 = vld [vmem:[%s950 + $0x8] sm:$0xff]
    %v953 = vld [vmem:[%s950 + $0x10] sm:$0xff]
    %v954 = vld [vmem:[%s950 + $0x18] sm:$0xff]
    %v956 = vsel %vm74, %v681, 0
    %v959 = vsel %vm74, %v686, 0
    %v962 = vsel %vm74, %v691, 0
    %v965 = vsel %vm74, %v696, 0
    %967 = vmatprep.subr.mxu0 0.0
    %968 = vmatpush1.msra.mxu0 %v951
    %969 = vmatprep.subr.mxu0 0.0
    %970 = vmatpush1.msra.mxu0 %v952
    %971 = vmatprep.subr.mxu0 0.0
    %972 = vmatpush1.msra.mxu0 %v953
    %973 = vmatprep.subr.mxu0 0.0
    %974 = vmatpush1.msra.mxu0 %v954
    %975 = vmatprep.subr.mxu0 0.0
    %976 = vmatpush1.msra.mxu0 0.0
    %977 = vmatprep.subr.mxu0 0.0
    %978 = vmatpush1.msra.mxu0 0.0
    %979 = vmatprep.subr.mxu0 0.0
    %980 = vmatpush1.msra.mxu0 0.0
    %981 = vmatprep.subr.mxu0 0.0
    %982 = vmatpush1.msra.mxu0 0.0
    %983 = vmatprep.subr.mxu0 0.0
    %984 = vmatpush1.msra.mxu0 0.0
    %985 = vmatprep.subr.mxu0 0.0
    %986 = vmatpush1.msra.mxu0 0.0
    %987 = vmatprep.subr.mxu0 0.0
    %988 = vmatpush1.msra.mxu0 0.0
    %989 = vmatprep.subr.mxu0 0.0
    %990 = vmatpush1.msra.mxu0 0.0
    %991 = vmatprep.subr.mxu0 0.0
    %992 = vmatpush1.msra.mxu0 0.0
    %993 = vmatprep.subr.mxu0 0.0
    %994 = vmatpush1.msra.mxu0 0.0
    %995 = vmatprep.subr.mxu0 0.0
    %996 = vmatpush1.msra.mxu0 0.0
    %997 = vmatprep.subr.mxu0 0.0
    %998 = vmatpush1.msra.mxu0 0.0
    %999 = vmatprep.subr.mxu0 0.0
    %1000 = vmatpush1.msra.mxu0 0.0
    %1001 = vmatprep.subr.mxu0 0.0
    %1002 = vmatpush1.msra.mxu0 0.0
    %1003 = vmatprep.subr.mxu0 0.0
    %1004 = vmatpush1.msra.mxu0 0.0
    %1005 = vmatprep.subr.mxu0 0.0
    %1006 = vmatpush1.msra.mxu0 0.0
    %1007 = vmatprep.subr.mxu0 0.0
    %1008 = vmatpush1.msra.mxu0 0.0
    %1009 = vmatprep.subr.mxu0 0.0
    %1010 = vmatpush1.msra.mxu0 0.0
    %1011 = vmatprep.subr.mxu0 0.0
    %1012 = vmatpush1.msra.mxu0 0.0
    %1013 = vmatprep.subr.mxu0 0.0
    %1014 = vmatpush1.msra.mxu0 0.0
    %1015 = vmatprep.subr.mxu0 0.0
    %1016 = vmatpush1.msra.mxu0 0.0
    %1017 = vmatprep.subr.mxu0 0.0
    %1018 = vmatpush1.msra.mxu0 0.0
    %1019 = vmatprep.subr.mxu0 0.0
    %1020 = vmatpush1.msra.mxu0 0.0
    %1021 = vmatprep.subr.mxu0 0.0
    %1022 = vmatpush1.msra.mxu0 0.0
    %1023 = vmatprep.subr.mxu0 0.0
    %1024 = vmatpush1.msra.mxu0 0.0
    %1025 = vmatprep.subr.mxu0 0.0
    %1026 = vmatpush1.msra.mxu0 0.0
    %1027 = vmatprep.subr.mxu0 0.0
    %1028 = vmatpush1.msra.mxu0 0.0
    %1029 = vmatprep.subr.mxu0 0.0
    %1030 = vmatpush1.msra.mxu0 0.0
    %1031 = vmatprep.mubr.f32.mxu0 0.0
    %1032 = vmatmul.mubr.f32.gmra.mrb[0].mxu0 %v956
    %v1033 = vpop.f32.mrb[0].mxu0
    %v1034 = vadd.f32 0.0, %v1033
    %v1035 = vpop.f32.mrb[0].mxu0
    %1036 = vmatprep.mubr.f32.mxu0 0.0
    %1037 = vmatmul.mubr.f32.gmra.mrb[0].mxu0 %v959
    %v1038 = vpop.f32.mrb[0].mxu0
    %v1039 = vadd.f32 0.0, %v1038
    %v1040 = vpop.f32.mrb[0].mxu0
    %1041 = vmatprep.mubr.f32.mxu0 0.0
    %1042 = vmatmul.mubr.f32.gmra.mrb[0].mxu0 %v962
    %v1043 = vpop.f32.mrb[0].mxu0
    %v1044 = vadd.f32 0.0, %v1043
    %v1045 = vpop.f32.mrb[0].mxu0
    %1046 = vmatprep.mubr.f32.mxu0 0.0
    %1047 = vmatmul.mubr.f32.gmra.mrb[0].mxu0 %v965
    %v1048 = vpop.f32.mrb[0].mxu0
    %v1049 = vadd.f32 0.0, %v1048
    %v1050 = vpop.f32.mrb[0].mxu0
    %1051 = vdwg.mxu0
    %s1052 = scalar_lea.vmem [#allocation2], 128
    %v1053 = vld [vmem:[%s1052] sm:$0xff]
    %v1054 = vld [vmem:[%s1052 + $0x8] sm:$0xff]
    %v1055 = vld [vmem:[%s1052 + $0x10] sm:$0xff]
    %v1056 = vld [vmem:[%s1052 + $0x18] sm:$0xff]
    %s1057 = scalar_lea.vmem [#allocation2], 160
    %v1058 = vld [vmem:[%s1057] sm:$0xff]
    %v1059 = vld [vmem:[%s1057 + $0x8] sm:$0xff]
    %v1060 = vld [vmem:[%s1057 + $0x10] sm:$0xff]
    %v1061 = vld [vmem:[%s1057 + $0x18] sm:$0xff]
    %v1063 = vsel %vm74, %v721, 0
    %v1066 = vsel %vm74, %v726, 0
    %v1069 = vsel %vm74, %v731, 0
    %v1072 = vsel %vm74, %v736, 0
    %1074 = vmatprep.subr.mxu0 0.0
    %1075 = vmatpush1.msra.mxu0 %v1058
    %1076 = vmatprep.subr.mxu0 0.0
    %1077 = vmatpush1.msra.mxu0 %v1059
    %1078 = vmatprep.subr.mxu0 0.0
    %1079 = vmatpush1.msra.mxu0 %v1060
    %1080 = vmatprep.subr.mxu0 0.0
    %1081 = vmatpush1.msra.mxu0 %v1061
    %1082 = vmatprep.subr.mxu0 0.0
    %1083 = vmatpush1.msra.mxu0 0.0
    %1084 = vmatprep.subr.mxu0 0.0
    %1085 = vmatpush1.msra.mxu0 0.0
    %1086 = vmatprep.subr.mxu0 0.0
    %1087 = vmatpush1.msra.mxu0 0.0
    %1088 = vmatprep.subr.mxu0 0.0
    %1089 = vmatpush1.msra.mxu0 0.0
    %1090 = vmatprep.subr.mxu0 0.0
    %1091 = vmatpush1.msra.mxu0 0.0
    %1092 = vmatprep.subr.mxu0 0.0
    %1093 = vmatpush1.msra.mxu0 0.0
    %1094 = vmatprep.subr.mxu0 0.0
    %1095 = vmatpush1.msra.mxu0 0.0
    %1096 = vmatprep.subr.mxu0 0.0
    %1097 = vmatpush1.msra.mxu0 0.0
    %1098 = vmatprep.subr.mxu0 0.0
    %1099 = vmatpush1.msra.mxu0 0.0
    %1100 = vmatprep.subr.mxu0 0.0
    %1101 = vmatpush1.msra.mxu0 0.0
    %1102 = vmatprep.subr.mxu0 0.0
    %1103 = vmatpush1.msra.mxu0 0.0
    %1104 = vmatprep.subr.mxu0 0.0
    %1105 = vmatpush1.msra.mxu0 0.0
    %1106 = vmatprep.subr.mxu0 0.0
    %1107 = vmatpush1.msra.mxu0 0.0
    %1108 = vmatprep.subr.mxu0 0.0
    %1109 = vmatpush1.msra.mxu0 0.0
    %1110 = vmatprep.subr.mxu0 0.0
    %1111 = vmatpush1.msra.mxu0 0.0
    %1112 = vmatprep.subr.mxu0 0.0
    %1113 = vmatpush1.msra.mxu0 0.0
    %1114 = vmatprep.subr.mxu0 0.0
    %1115 = vmatpush1.msra.mxu0 0.0
    %1116 = vmatprep.subr.mxu0 0.0
    %1117 = vmatpush1.msra.mxu0 0.0
    %1118 = vmatprep.subr.mxu0 0.0
    %1119 = vmatpush1.msra.mxu0 0.0
    %1120 = vmatprep.subr.mxu0 0.0
    %1121 = vmatpush1.msra.mxu0 0.0
    %1122 = vmatprep.subr.mxu0 0.0
    %1123 = vmatpush1.msra.mxu0 0.0
    %1124 = vmatprep.subr.mxu0 0.0
    %1125 = vmatpush1.msra.mxu0 0.0
    %1126 = vmatprep.subr.mxu0 0.0
    %1127 = vmatpush1.msra.mxu0 0.0
    %1128 = vmatprep.subr.mxu0 0.0
    %1129 = vmatpush1.msra.mxu0 0.0
    %1130 = vmatprep.subr.mxu0 0.0
    %1131 = vmatpush1.msra.mxu0 0.0
    %1132 = vmatprep.subr.mxu0 0.0
    %1133 = vmatpush1.msra.mxu0 0.0
    %1134 = vmatprep.subr.mxu0 0.0
    %1135 = vmatpush1.msra.mxu0 0.0
    %1136 = vmatprep.subr.mxu0 0.0
    %1137 = vmatpush1.msra.mxu0 0.0
    %1138 = vmatprep.mubr.f32.mxu0 0.0
    %1139 = vmatmul.mubr.f32.gmra.mrb[0].mxu0 %v1063
    %v1140 = vpop.f32.mrb[0].mxu0
    %v1141 = vadd.f32 0.0, %v1140
    %v1142 = vpop.f32.mrb[0].mxu0
    %1143 = vmatprep.mubr.f32.mxu0 0.0
    %1144 = vmatmul.mubr.f32.gmra.mrb[0].mxu0 %v1066
    %v1145 = vpop.f32.mrb[0].mxu0
    %v1146 = vadd.f32 0.0, %v1145
    %v1147 = vpop.f32.mrb[0].mxu0
    %1148 = vmatprep.mubr.f32.mxu0 0.0
    %1149 = vmatmul.mubr.f32.gmra.mrb[0].mxu0 %v1069
    %v1150 = vpop.f32.mrb[0].mxu0
    %v1151 = vadd.f32 0.0, %v1150
    %v1152 = vpop.f32.mrb[0].mxu0
    %1153 = vmatprep.mubr.f32.mxu0 0.0
    %1154 = vmatmul.mubr.f32.gmra.mrb[0].mxu0 %v1072
    %v1155 = vpop.f32.mrb[0].mxu0
    %v1156 = vadd.f32 0.0, %v1155
    %v1157 = vpop.f32.mrb[0].mxu0
    %1158 = vdwg.mxu0
    %s1159 = scalar_lea.vmem [#allocation2], 192
    %v1160 = vld [vmem:[%s1159] sm:$0xff]
    %v1161 = vld [vmem:[%s1159 + $0x8] sm:$0xff]
    %v1162 = vld [vmem:[%s1159 + $0x10] sm:$0xff]
    %v1163 = vld [vmem:[%s1159 + $0x18] sm:$0xff]
    %s1164 = scalar_lea.vmem [#allocation2], 224
    %v1165 = vld [vmem:[%s1164] sm:$0xff]
    %v1166 = vld [vmem:[%s1164 + $0x8] sm:$0xff]
    %v1167 = vld [vmem:[%s1164 + $0x10] sm:$0xff]
    %v1168 = vld [vmem:[%s1164 + $0x18] sm:$0xff]
    %v1170 = vsel %vm74, %v761, 0
    %v1173 = vsel %vm74, %v766, 0
    %v1176 = vsel %vm74, %v771, 0
    %v1179 = vsel %vm74, %v776, 0
    %1181 = vmatprep.subr.mxu0 0.0
    %1182 = vmatpush1.msra.mxu0 %v1165
    %1183 = vmatprep.subr.mxu0 0.0
    %1184 = vmatpush1.msra.mxu0 %v1166
    %1185 = vmatprep.subr.mxu0 0.0
    %1186 = vmatpush1.msra.mxu0 %v1167
    %1187 = vmatprep.subr.mxu0 0.0
    %1188 = vmatpush1.msra.mxu0 %v1168
    %1189 = vmatprep.subr.mxu0 0.0
    %1190 = vmatpush1.msra.mxu0 0.0
    %1191 = vmatprep.subr.mxu0 0.0
    %1192 = vmatpush1.msra.mxu0 0.0
    %1193 = vmatprep.subr.mxu0 0.0
    %1194 = vmatpush1.msra.mxu0 0.0
    %1195 = vmatprep.subr.mxu0 0.0
    %1196 = vmatpush1.msra.mxu0 0.0
    %1197 = vmatprep.subr.mxu0 0.0
    %1198 = vmatpush1.msra.mxu0 0.0
    %1199 = vmatprep.subr.mxu0 0.0
    %1200 = vmatpush1.msra.mxu0 0.0
    %1201 = vmatprep.subr.mxu0 0.0
    %1202 = vmatpush1.msra.mxu0 0.0
    %1203 = vmatprep.subr.mxu0 0.0
    %1204 = vmatpush1.msra.mxu0 0.0
    %1205 = vmatprep.subr.mxu0 0.0
    %1206 = vmatpush1.msra.mxu0 0.0
    %1207 = vmatprep.subr.mxu0 0.0
    %1208 = vmatpush1.msra.mxu0 0.0
    %1209 = vmatprep.subr.mxu0 0.0
    %1210 = vmatpush1.msra.mxu0 0.0
    %1211 = vmatprep.subr.mxu0 0.0
    %1212 = vmatpush1.msra.mxu0 0.0
    %1213 = vmatprep.subr.mxu0 0.0
    %1214 = vmatpush1.msra.mxu0 0.0
    %1215 = vmatprep.subr.mxu0 0.0
    %1216 = vmatpush1.msra.mxu0 0.0
    %1217 = vmatprep.subr.mxu0 0.0
    %1218 = vmatpush1.msra.mxu0 0.0
    %1219 = vmatprep.subr.mxu0 0.0
    %1220 = vmatpush1.msra.mxu0 0.0
    %1221 = vmatprep.subr.mxu0 0.0
    %1222 = vmatpush1.msra.mxu0 0.0
    %1223 = vmatprep.subr.mxu0 0.0
    %1224 = vmatpush1.msra.mxu0 0.0
    %1225 = vmatprep.subr.mxu0 0.0
    %1226 = vmatpush1.msra.mxu0 0.0
    %1227 = vmatprep.subr.mxu0 0.0
    %1228 = vmatpush1.msra.mxu0 0.0
    %1229 = vmatprep.subr.mxu0 0.0
    %1230 = vmatpush1.msra.mxu0 0.0
    %1231 = vmatprep.subr.mxu0 0.0
    %1232 = vmatpush1.msra.mxu0 0.0
    %1233 = vmatprep.subr.mxu0 0.0
    %1234 = vmatpush1.msra.mxu0 0.0
    %1235 = vmatprep.subr.mxu0 0.0
    %1236 = vmatpush1.msra.mxu0 0.0
    %1237 = vmatprep.subr.mxu0 0.0
    %1238 = vmatpush1.msra.mxu0 0.0
    %1239 = vmatprep.subr.mxu0 0.0
    %1240 = vmatpush1.msra.mxu0 0.0
    %1241 = vmatprep.subr.mxu0 0.0
    %1242 = vmatpush1.msra.mxu0 0.0
    %1243 = vmatprep.subr.mxu0 0.0
    %1244 = vmatpush1.msra.mxu0 0.0
    %1245 = vmatprep.mubr.f32.mxu0 0.0
    %1246 = vmatmul.mubr.f32.gmra.mrb[0].mxu0 %v1170
    %v1247 = vpop.f32.mrb[0].mxu0
    %v1248 = vadd.f32 0.0, %v1247
    %v1249 = vpop.f32.mrb[0].mxu0
    %1250 = vmatprep.mubr.f32.mxu0 0.0
    %1251 = vmatmul.mubr.f32.gmra.mrb[0].mxu0 %v1173
    %v1252 = vpop.f32.mrb[0].mxu0
    %v1253 = vadd.f32 0.0, %v1252
    %v1254 = vpop.f32.mrb[0].mxu0
    %1255 = vmatprep.mubr.f32.mxu0 0.0
    %1256 = vmatmul.mubr.f32.gmra.mrb[0].mxu0 %v1176
    %v1257 = vpop.f32.mrb[0].mxu0
    %v1258 = vadd.f32 0.0, %v1257
    %v1259 = vpop.f32.mrb[0].mxu0
    %1260 = vmatprep.mubr.f32.mxu0 0.0
    %1261 = vmatmul.mubr.f32.gmra.mrb[0].mxu0 %v1179
    %v1262 = vpop.f32.mrb[0].mxu0
    %v1263 = vadd.f32 0.0, %v1262
    %v1264 = vpop.f32.mrb[0].mxu0
    %1265 = vdwg.mxu0
    %s1266 = scalar_lea.vmem [#allocation2], 256
    %v1267 = vld [vmem:[%s1266] sm:$0xff]
    %v1268 = vld [vmem:[%s1266 + $0x8] sm:$0xff]
    %v1269 = vld [vmem:[%s1266 + $0x10] sm:$0xff]
    %v1270 = vld [vmem:[%s1266 + $0x18] sm:$0xff]
    %s1271 = scalar_lea.vmem [#allocation2], 288
    %v1272 = vld [vmem:[%s1271] sm:$0xff]
    %v1273 = vld [vmem:[%s1271 + $0x8] sm:$0xff]
    %v1274 = vld [vmem:[%s1271 + $0x10] sm:$0xff]
    %v1275 = vld [vmem:[%s1271 + $0x18] sm:$0xff]
    %v1277 = vsel %vm74, %v801, 0
    %v1280 = vsel %vm74, %v806, 0
    %v1283 = vsel %vm74, %v811, 0
    %v1286 = vsel %vm74, %v816, 0
    %1288 = vmatprep.subr.mxu0 0.0
    %1289 = vmatpush1.msra.mxu0 %v1272
    %1290 = vmatprep.subr.mxu0 0.0
    %1291 = vmatpush1.msra.mxu0 %v1273
    %1292 = vmatprep.subr.mxu0 0.0
    %1293 = vmatpush1.msra.mxu0 %v1274
    %1294 = vmatprep.subr.mxu0 0.0
    %1295 = vmatpush1.msra.mxu0 %v1275
    %1296 = vmatprep.subr.mxu0 0.0
    %1297 = vmatpush1.msra.mxu0 0.0
    %1298 = vmatprep.subr.mxu0 0.0
    %1299 = vmatpush1.msra.mxu0 0.0
    %1300 = vmatprep.subr.mxu0 0.0
    %1301 = vmatpush1.msra.mxu0 0.0
    %1302 = vmatprep.subr.mxu0 0.0
    %1303 = vmatpush1.msra.mxu0 0.0
    %1304 = vmatprep.subr.mxu0 0.0
    %1305 = vmatpush1.msra.mxu0 0.0
    %1306 = vmatprep.subr.mxu0 0.0
    %1307 = vmatpush1.msra.mxu0 0.0
    %1308 = vmatprep.subr.mxu0 0.0
    %1309 = vmatpush1.msra.mxu0 0.0
    %1310 = vmatprep.subr.mxu0 0.0
    %1311 = vmatpush1.msra.mxu0 0.0
    %1312 = vmatprep.subr.mxu0 0.0
    %1313 = vmatpush1.msra.mxu0 0.0
    %1314 = vmatprep.subr.mxu0 0.0
    %1315 = vmatpush1.msra.mxu0 0.0
    %1316 = vmatprep.subr.mxu0 0.0
    %1317 = vmatpush1.msra.mxu0 0.0
    %1318 = vmatprep.subr.mxu0 0.0
    %1319 = vmatpush1.msra.mxu0 0.0
    %1320 = vmatprep.subr.mxu0 0.0
    %1321 = vmatpush1.msra.mxu0 0.0
    %1322 = vmatprep.subr.mxu0 0.0
    %1323 = vmatpush1.msra.mxu0 0.0
    %1324 = vmatprep.subr.mxu0 0.0
    %1325 = vmatpush1.msra.mxu0 0.0
    %1326 = vmatprep.subr.mxu0 0.0
    %1327 = vmatpush1.msra.mxu0 0.0
    %1328 = vmatprep.subr.mxu0 0.0
    %1329 = vmatpush1.msra.mxu0 0.0
    %1330 = vmatprep.subr.mxu0 0.0
    %1331 = vmatpush1.msra.mxu0 0.0
    %1332 = vmatprep.subr.mxu0 0.0
    %1333 = vmatpush1.msra.mxu0 0.0
    %1334 = vmatprep.subr.mxu0 0.0
    %1335 = vmatpush1.msra.mxu0 0.0
    %1336 = vmatprep.subr.mxu0 0.0
    %1337 = vmatpush1.msra.mxu0 0.0
    %1338 = vmatprep.subr.mxu0 0.0
    %1339 = vmatpush1.msra.mxu0 0.0
    %1340 = vmatprep.subr.mxu0 0.0
    %1341 = vmatpush1.msra.mxu0 0.0
    %1342 = vmatprep.subr.mxu0 0.0
    %1343 = vmatpush1.msra.mxu0 0.0
    %1344 = vmatprep.subr.mxu0 0.0
    %1345 = vmatpush1.msra.mxu0 0.0
    %1346 = vmatprep.subr.mxu0 0.0
    %1347 = vmatpush1.msra.mxu0 0.0
    %1348 = vmatprep.subr.mxu0 0.0
    %1349 = vmatpush1.msra.mxu0 0.0
    %1350 = vmatprep.subr.mxu0 0.0
    %1351 = vmatpush1.msra.mxu0 0.0
    %1352 = vmatprep.mubr.f32.mxu0 0.0
    %1353 = vmatmul.mubr.f32.gmra.mrb[0].mxu0 %v1277
    %v1354 = vpop.f32.mrb[0].mxu0
    %v1355 = vadd.f32 0.0, %v1354
    %v1356 = vpop.f32.mrb[0].mxu0
    %1357 = vmatprep.mubr.f32.mxu0 0.0
    %1358 = vmatmul.mubr.f32.gmra.mrb[0].mxu0 %v1280
    %v1359 = vpop.f32.mrb[0].mxu0
    %v1360 = vadd.f32 0.0, %v1359
    %v1361 = vpop.f32.mrb[0].mxu0
    %1362 = vmatprep.mubr.f32.mxu0 0.0
    %1363 = vmatmul.mubr.f32.gmra.mrb[0].mxu0 %v1283
    %v1364 = vpop.f32.mrb[0].mxu0
    %v1365 = vadd.f32 0.0, %v1364
    %v1366 = vpop.f32.mrb[0].mxu0
    %1367 = vmatprep.mubr.f32.mxu0 0.0
    %1368 = vmatmul.mubr.f32.gmra.mrb[0].mxu0 %v1286
    %v1369 = vpop.f32.mrb[0].mxu0
    %v1370 = vadd.f32 0.0, %v1369
    %v1371 = vpop.f32.mrb[0].mxu0
    %1372 = vdwg.mxu0
    %s1373 = scalar_lea.vmem [#allocation2], 320
    %v1374 = vld [vmem:[%s1373] sm:$0xff]
    %v1375 = vld [vmem:[%s1373 + $0x8] sm:$0xff]
    %v1376 = vld [vmem:[%s1373 + $0x10] sm:$0xff]
    %v1377 = vld [vmem:[%s1373 + $0x18] sm:$0xff]
    %v1379 = vsel %vm74, %v821, 0
    %v1382 = vsel %vm74, %v826, 0
    %v1385 = vsel %vm74, %v831, 0
    %v1388 = vsel %vm74, %v836, 0
    %1390 = vmatprep.subr.mxu0 0.0
    %1391 = vmatpush1.msra.mxu0 %v1374
    %1392 = vmatprep.subr.mxu0 0.0
    %1393 = vmatpush1.msra.mxu0 %v1375
    %1394 = vmatprep.subr.mxu0 0.0
    %1395 = vmatpush1.msra.mxu0 %v1376
    %1396 = vmatprep.subr.mxu0 0.0
    %1397 = vmatpush1.msra.mxu0 %v1377
    %1398 = vmatprep.subr.mxu0 0.0
    %1399 = vmatpush1.msra.mxu0 0.0
    %1400 = vmatprep.subr.mxu0 0.0
    %1401 = vmatpush1.msra.mxu0 0.0
    %1402 = vmatprep.subr.mxu0 0.0
    %1403 = vmatpush1.msra.mxu0 0.0
    %1404 = vmatprep.subr.mxu0 0.0
    %1405 = vmatpush1.msra.mxu0 0.0
    %1406 = vmatprep.subr.mxu0 0.0
    %1407 = vmatpush1.msra.mxu0 0.0
    %1408 = vmatprep.subr.mxu0 0.0
    %1409 = vmatpush1.msra.mxu0 0.0
    %1410 = vmatprep.subr.mxu0 0.0
    %1411 = vmatpush1.msra.mxu0 0.0
    %1412 = vmatprep.subr.mxu0 0.0
    %1413 = vmatpush1.msra.mxu0 0.0
    %1414 = vmatprep.subr.mxu0 0.0
    %1415 = vmatpush1.msra.mxu0 0.0
    %1416 = vmatprep.subr.mxu0 0.0
    %1417 = vmatpush1.msra.mxu0 0.0
    %1418 = vmatprep.subr.mxu0 0.0
    %1419 = vmatpush1.msra.mxu0 0.0
    %1420 = vmatprep.subr.mxu0 0.0
    %1421 = vmatpush1.msra.mxu0 0.0
    %1422 = vmatprep.subr.mxu0 0.0
    %1423 = vmatpush1.msra.mxu0 0.0
    %1424 = vmatprep.subr.mxu0 0.0
    %1425 = vmatpush1.msra.mxu0 0.0
    %1426 = vmatprep.subr.mxu0 0.0
    %1427 = vmatpush1.msra.mxu0 0.0
    %1428 = vmatprep.subr.mxu0 0.0
    %1429 = vmatpush1.msra.mxu0 0.0
    %1430 = vmatprep.subr.mxu0 0.0
    %1431 = vmatpush1.msra.mxu0 0.0
    %1432 = vmatprep.subr.mxu0 0.0
    %1433 = vmatpush1.msra.mxu0 0.0
    %1434 = vmatprep.subr.mxu0 0.0
    %1435 = vmatpush1.msra.mxu0 0.0
    %1436 = vmatprep.subr.mxu0 0.0
    %1437 = vmatpush1.msra.mxu0 0.0
    %1438 = vmatprep.subr.mxu0 0.0
    %1439 = vmatpush1.msra.mxu0 0.0
    %1440 = vmatprep.subr.mxu0 0.0
    %1441 = vmatpush1.msra.mxu0 0.0
    %1442 = vmatprep.subr.mxu0 0.0
    %1443 = vmatpush1.msra.mxu0 0.0
    %1444 = vmatprep.subr.mxu0 0.0
    %1445 = vmatpush1.msra.mxu0 0.0
    %1446 = vmatprep.subr.mxu0 0.0
    %1447 = vmatpush1.msra.mxu0 0.0
    %1448 = vmatprep.subr.mxu0 0.0
    %1449 = vmatpush1.msra.mxu0 0.0
    %1450 = vmatprep.subr.mxu0 0.0
    %1451 = vmatpush1.msra.mxu0 0.0
    %1452 = vmatprep.subr.mxu0 0.0
    %1453 = vmatpush1.msra.mxu0 0.0
    %1454 = vmatprep.mubr.f32.mxu0 0.0
    %1455 = vmatmul.mubr.f32.gmra.mrb[0].mxu0 %v1379
    %v1456 = vpop.f32.mrb[0].mxu0
    %v1457 = vadd.f32 0.0, %v1456
    %v1458 = vpop.f32.mrb[0].mxu0
    %1459 = vmatprep.mubr.f32.mxu0 0.0
    %1460 = vmatmul.mubr.f32.gmra.mrb[0].mxu0 %v1382
    %v1461 = vpop.f32.mrb[0].mxu0
    %v1462 = vadd.f32 0.0, %v1461
    %v1463 = vpop.f32.mrb[0].mxu0
    %1464 = vmatprep.mubr.f32.mxu0 0.0
    %1465 = vmatmul.mubr.f32.gmra.mrb[0].mxu0 %v1385
    %v1466 = vpop.f32.mrb[0].mxu0
    %v1467 = vadd.f32 0.0, %v1466
    %v1468 = vpop.f32.mrb[0].mxu0
    %1469 = vmatprep.mubr.f32.mxu0 0.0
    %1470 = vmatmul.mubr.f32.gmra.mrb[0].mxu0 %v1388
    %v1471 = vpop.f32.mrb[0].mxu0
    %v1472 = vadd.f32 0.0, %v1471
    %v1473 = vpop.f32.mrb[0].mxu0
    %1474 = vdwg.mxu0
    %v1476 = vsel %vm74, %v621, 0
    %v1479 = vsel %vm74, %v626, 0
    %v1482 = vsel %vm74, %v631, 0
    %v1485 = vsel %vm74, %v636, 0
    %1487 = vmatprep.subr.mxu0 0.0
    %1488 = vmatpush1.msra.mxu0 %v839
    %1489 = vmatprep.subr.mxu0 0.0
    %1490 = vmatpush1.msra.mxu0 %v840
    %1491 = vmatprep.subr.mxu0 0.0
    %1492 = vmatpush1.msra.mxu0 %v841
    %1493 = vmatprep.subr.mxu0 0.0
    %1494 = vmatpush1.msra.mxu0 %v842
    %1495 = vmatprep.subr.mxu0 0.0
    %1496 = vmatpush1.msra.mxu0 0.0
    %1497 = vmatprep.subr.mxu0 0.0
    %1498 = vmatpush1.msra.mxu0 0.0
    %1499 = vmatprep.subr.mxu0 0.0
    %1500 = vmatpush1.msra.mxu0 0.0
    %1501 = vmatprep.subr.mxu0 0.0
    %1502 = vmatpush1.msra.mxu0 0.0
    %1503 = vmatprep.subr.mxu0 0.0
    %1504 = vmatpush1.msra.mxu0 0.0
    %1505 = vmatprep.subr.mxu0 0.0
    %1506 = vmatpush1.msra.mxu0 0.0
    %1507 = vmatprep.subr.mxu0 0.0
    %1508 = vmatpush1.msra.mxu0 0.0
    %1509 = vmatprep.subr.mxu0 0.0
    %1510 = vmatpush1.msra.mxu0 0.0
    %1511 = vmatprep.subr.mxu0 0.0
    %1512 = vmatpush1.msra.mxu0 0.0
    %1513 = vmatprep.subr.mxu0 0.0
    %1514 = vmatpush1.msra.mxu0 0.0
    %1515 = vmatprep.subr.mxu0 0.0
    %1516 = vmatpush1.msra.mxu0 0.0
    %1517 = vmatprep.subr.mxu0 0.0
    %1518 = vmatpush1.msra.mxu0 0.0
    %1519 = vmatprep.subr.mxu0 0.0
    %1520 = vmatpush1.msra.mxu0 0.0
    %1521 = vmatprep.subr.mxu0 0.0
    %1522 = vmatpush1.msra.mxu0 0.0
    %1523 = vmatprep.subr.mxu0 0.0
    %1524 = vmatpush1.msra.mxu0 0.0
    %1525 = vmatprep.subr.mxu0 0.0
    %1526 = vmatpush1.msra.mxu0 0.0
    %1527 = vmatprep.subr.mxu0 0.0
    %1528 = vmatpush1.msra.mxu0 0.0
    %1529 = vmatprep.subr.mxu0 0.0
    %1530 = vmatpush1.msra.mxu0 0.0
    %1531 = vmatprep.subr.mxu0 0.0
    %1532 = vmatpush1.msra.mxu0 0.0
    %1533 = vmatprep.subr.mxu0 0.0
    %1534 = vmatpush1.msra.mxu0 0.0
    %1535 = vmatprep.subr.mxu0 0.0
    %1536 = vmatpush1.msra.mxu0 0.0
    %1537 = vmatprep.subr.mxu0 0.0
    %1538 = vmatpush1.msra.mxu0 0.0
    %1539 = vmatprep.subr.mxu0 0.0
    %1540 = vmatpush1.msra.mxu0 0.0
    %1541 = vmatprep.subr.mxu0 0.0
    %1542 = vmatpush1.msra.mxu0 0.0
    %1543 = vmatprep.subr.mxu0 0.0
    %1544 = vmatpush1.msra.mxu0 0.0
    %1545 = vmatprep.subr.mxu0 0.0
    %1546 = vmatpush1.msra.mxu0 0.0
    %1547 = vmatprep.subr.mxu0 0.0
    %1548 = vmatpush1.msra.mxu0 0.0
    %1549 = vmatprep.subr.mxu0 0.0
    %1550 = vmatpush1.msra.mxu0 0.0
    %1551 = vmatprep.mubr.f32.mxu0 0.0
    %1552 = vmatmul.mubr.f32.gmra.mrb[0].mxu0 %v1476
    %v1553 = vpop.f32.mrb[0].mxu0
    %v1554 = vadd.f32 %v927, %v1553
    %v1555 = vpop.f32.mrb[0].mxu0
    %1556 = vmatprep.mubr.f32.mxu0 0.0
    %1557 = vmatmul.mubr.f32.gmra.mrb[0].mxu0 %v1479
    %v1558 = vpop.f32.mrb[0].mxu0
    %v1559 = vadd.f32 %v932, %v1558
    %v1560 = vpop.f32.mrb[0].mxu0
    %1561 = vmatprep.mubr.f32.mxu0 0.0
    %1562 = vmatmul.mubr.f32.gmra.mrb[0].mxu0 %v1482
    %v1563 = vpop.f32.mrb[0].mxu0
    %v1564 = vadd.f32 %v937, %v1563
    %v1565 = vpop.f32.mrb[0].mxu0
    %1566 = vmatprep.mubr.f32.mxu0 0.0
    %1567 = vmatmul.mubr.f32.gmra.mrb[0].mxu0 %v1485
    %v1568 = vpop.f32.mrb[0].mxu0
    %v1569 = vadd.f32 %v942, %v1568
    %v1570 = vpop.f32.mrb[0].mxu0
    %1571 = vdwg.mxu0
    %v1573 = vsel %vm74, %v661, 0
    %v1576 = vsel %vm74, %v666, 0
    %v1579 = vsel %vm74, %v671, 0
    %v1582 = vsel %vm74, %v676, 0
    %1584 = vmatprep.subr.mxu0 0.0
    %1585 = vmatpush1.msra.mxu0 %v946
    %1586 = vmatprep.subr.mxu0 0.0
    %1587 = vmatpush1.msra.mxu0 %v947
    %1588 = vmatprep.subr.mxu0 0.0
    %1589 = vmatpush1.msra.mxu0 %v948
    %1590 = vmatprep.subr.mxu0 0.0
    %1591 = vmatpush1.msra.mxu0 %v949
    %1592 = vmatprep.subr.mxu0 0.0
    %1593 = vmatpush1.msra.mxu0 0.0
    %1594 = vmatprep.subr.mxu0 0.0
    %1595 = vmatpush1.msra.mxu0 0.0
    %1596 = vmatprep.subr.mxu0 0.0
    %1597 = vmatpush1.msra.mxu0 0.0
    %1598 = vmatprep.subr.mxu0 0.0
    %1599 = vmatpush1.msra.mxu0 0.0
    %1600 = vmatprep.subr.mxu0 0.0
    %1601 = vmatpush1.msra.mxu0 0.0
    %1602 = vmatprep.subr.mxu0 0.0
    %1603 = vmatpush1.msra.mxu0 0.0
    %1604 = vmatprep.subr.mxu0 0.0
    %1605 = vmatpush1.msra.mxu0 0.0
    %1606 = vmatprep.subr.mxu0 0.0
    %1607 = vmatpush1.msra.mxu0 0.0
    %1608 = vmatprep.subr.mxu0 0.0
    %1609 = vmatpush1.msra.mxu0 0.0
    %1610 = vmatprep.subr.mxu0 0.0
    %1611 = vmatpush1.msra.mxu0 0.0
    %1612 = vmatprep.subr.mxu0 0.0
    %1613 = vmatpush1.msra.mxu0 0.0
    %1614 = vmatprep.subr.mxu0 0.0
    %1615 = vmatpush1.msra.mxu0 0.0
    %1616 = vmatprep.subr.mxu0 0.0
    %1617 = vmatpush1.msra.mxu0 0.0
    %1618 = vmatprep.subr.mxu0 0.0
    %1619 = vmatpush1.msra.mxu0 0.0
    %1620 = vmatprep.subr.mxu0 0.0
    %1621 = vmatpush1.msra.mxu0 0.0
    %1622 = vmatprep.subr.mxu0 0.0
    %1623 = vmatpush1.msra.mxu0 0.0
    %1624 = vmatprep.subr.mxu0 0.0
    %1625 = vmatpush1.msra.mxu0 0.0
    %1626 = vmatprep.subr.mxu0 0.0
    %1627 = vmatpush1.msra.mxu0 0.0
    %1628 = vmatprep.subr.mxu0 0.0
    %1629 = vmatpush1.msra.mxu0 0.0
    %1630 = vmatprep.subr.mxu0 0.0
    %1631 = vmatpush1.msra.mxu0 0.0
    %1632 = vmatprep.subr.mxu0 0.0
    %1633 = vmatpush1.msra.mxu0 0.0
    %1634 = vmatprep.subr.mxu0 0.0
    %1635 = vmatpush1.msra.mxu0 0.0
    %1636 = vmatprep.subr.mxu0 0.0
    %1637 = vmatpush1.msra.mxu0 0.0
    %1638 = vmatprep.subr.mxu0 0.0
    %1639 = vmatpush1.msra.mxu0 0.0
    %1640 = vmatprep.subr.mxu0 0.0
    %1641 = vmatpush1.msra.mxu0 0.0
    %1642 = vmatprep.subr.mxu0 0.0
    %1643 = vmatpush1.msra.mxu0 0.0
    %1644 = vmatprep.subr.mxu0 0.0
    %1645 = vmatpush1.msra.mxu0 0.0
    %1646 = vmatprep.subr.mxu0 0.0
    %1647 = vmatpush1.msra.mxu0 0.0
    %1648 = vmatprep.mubr.f32.mxu0 0.0
    %1649 = vmatmul.mubr.f32.gmra.mrb[0].mxu0 %v1573
    %v1650 = vpop.f32.mrb[0].mxu0
    %v1651 = vadd.f32 %v1034, %v1650
    %v1652 = vpop.f32.mrb[0].mxu0
    %1653 = vmatprep.mubr.f32.mxu0 0.0
    %1654 = vmatmul.mubr.f32.gmra.mrb[0].mxu0 %v1576
    %v1655 = vpop.f32.mrb[0].mxu0
    %v1656 = vadd.f32 %v1039, %v1655
    %v1657 = vpop.f32.mrb[0].mxu0
    %1658 = vmatprep.mubr.f32.mxu0 0.0
    %1659 = vmatmul.mubr.f32.gmra.mrb[0].mxu0 %v1579
    %v1660 = vpop.f32.mrb[0].mxu0
    %v1661 = vadd.f32 %v1044, %v1660
    %v1662 = vpop.f32.mrb[0].mxu0
    %1663 = vmatprep.mubr.f32.mxu0 0.0
    %1664 = vmatmul.mubr.f32.gmra.mrb[0].mxu0 %v1582
    %v1665 = vpop.f32.mrb[0].mxu0
    %v1666 = vadd.f32 %v1049, %v1665
    %v1667 = vpop.f32.mrb[0].mxu0
    %1668 = vdwg.mxu0
    %v1670 = vsel %vm74, %v701, 0
    %v1673 = vsel %vm74, %v706, 0
    %v1676 = vsel %vm74, %v711, 0
    %v1679 = vsel %vm74, %v716, 0
    %1681 = vmatprep.subr.mxu0 0.0
    %1682 = vmatpush1.msra.mxu0 %v1053
    %1683 = vmatprep.subr.mxu0 0.0
    %1684 = vmatpush1.msra.mxu0 %v1054
    %1685 = vmatprep.subr.mxu0 0.0
    %1686 = vmatpush1.msra.mxu0 %v1055
    %1687 = vmatprep.subr.mxu0 0.0
    %1688 = vmatpush1.msra.mxu0 %v1056
    %1689 = vmatprep.subr.mxu0 0.0
    %1690 = vmatpush1.msra.mxu0 0.0
    %1691 = vmatprep.subr.mxu0 0.0
    %1692 = vmatpush1.msra.mxu0 0.0
    %1693 = vmatprep.subr.mxu0 0.0
    %1694 = vmatpush1.msra.mxu0 0.0
    %1695 = vmatprep.subr.mxu0 0.0
    %1696 = vmatpush1.msra.mxu0 0.0
    %1697 = vmatprep.subr.mxu0 0.0
    %1698 = vmatpush1.msra.mxu0 0.0
    %1699 = vmatprep.subr.mxu0 0.0
    %1700 = vmatpush1.msra.mxu0 0.0
    %1701 = vmatprep.subr.mxu0 0.0
    %1702 = vmatpush1.msra.mxu0 0.0
    %1703 = vmatprep.subr.mxu0 0.0
    %1704 = vmatpush1.msra.mxu0 0.0
    %1705 = vmatprep.subr.mxu0 0.0
    %1706 = vmatpush1.msra.mxu0 0.0
    %1707 = vmatprep.subr.mxu0 0.0
    %1708 = vmatpush1.msra.mxu0 0.0
    %1709 = vmatprep.subr.mxu0 0.0
    %1710 = vmatpush1.msra.mxu0 0.0
    %1711 = vmatprep.subr.mxu0 0.0
    %1712 = vmatpush1.msra.mxu0 0.0
    %1713 = vmatprep.subr.mxu0 0.0
    %1714 = vmatpush1.msra.mxu0 0.0
    %1715 = vmatprep.subr.mxu0 0.0
    %1716 = vmatpush1.msra.mxu0 0.0
    %1717 = vmatprep.subr.mxu0 0.0
    %1718 = vmatpush1.msra.mxu0 0.0
    %1719 = vmatprep.subr.mxu0 0.0
    %1720 = vmatpush1.msra.mxu0 0.0
    %1721 = vmatprep.subr.mxu0 0.0
    %1722 = vmatpush1.msra.mxu0 0.0
    %1723 = vmatprep.subr.mxu0 0.0
    %1724 = vmatpush1.msra.mxu0 0.0
    %1725 = vmatprep.subr.mxu0 0.0
    %1726 = vmatpush1.msra.mxu0 0.0
    %1727 = vmatprep.subr.mxu0 0.0
    %1728 = vmatpush1.msra.mxu0 0.0
    %1729 = vmatprep.subr.mxu0 0.0
    %1730 = vmatpush1.msra.mxu0 0.0
    %1731 = vmatprep.subr.mxu0 0.0
    %1732 = vmatpush1.msra.mxu0 0.0
    %1733 = vmatprep.subr.mxu0 0.0
    %1734 = vmatpush1.msra.mxu0 0.0
    %1735 = vmatprep.subr.mxu0 0.0
    %1736 = vmatpush1.msra.mxu0 0.0
    %1737 = vmatprep.subr.mxu0 0.0
    %1738 = vmatpush1.msra.mxu0 0.0
    %1739 = vmatprep.subr.mxu0 0.0
    %1740 = vmatpush1.msra.mxu0 0.0
    %1741 = vmatprep.subr.mxu0 0.0
    %1742 = vmatpush1.msra.mxu0 0.0
    %1743 = vmatprep.subr.mxu0 0.0
    %1744 = vmatpush1.msra.mxu0 0.0
    %1745 = vmatprep.mubr.f32.mxu0 0.0
    %1746 = vmatmul.mubr.f32.gmra.mrb[0].mxu0 %v1670
    %v1747 = vpop.f32.mrb[0].mxu0
    %v1748 = vadd.f32 %v1141, %v1747
    %v1749 = vpop.f32.mrb[0].mxu0
    %1750 = vmatprep.mubr.f32.mxu0 0.0
    %1751 = vmatmul.mubr.f32.gmra.mrb[0].mxu0 %v1673
    %v1752 = vpop.f32.mrb[0].mxu0
    %v1753 = vadd.f32 %v1146, %v1752
    %v1754 = vpop.f32.mrb[0].mxu0
    %1755 = vmatprep.mubr.f32.mxu0 0.0
    %1756 = vmatmul.mubr.f32.gmra.mrb[0].mxu0 %v1676
    %v1757 = vpop.f32.mrb[0].mxu0
    %v1758 = vadd.f32 %v1151, %v1757
    %v1759 = vpop.f32.mrb[0].mxu0
    %1760 = vmatprep.mubr.f32.mxu0 0.0
    %1761 = vmatmul.mubr.f32.gmra.mrb[0].mxu0 %v1679
    %v1762 = vpop.f32.mrb[0].mxu0
    %v1763 = vadd.f32 %v1156, %v1762
    %v1764 = vpop.f32.mrb[0].mxu0
    %1765 = vdwg.mxu0
    %v1767 = vsel %vm74, %v741, 0
    %v1770 = vsel %vm74, %v746, 0
    %v1773 = vsel %vm74, %v751, 0
    %v1776 = vsel %vm74, %v756, 0
    %1778 = vmatprep.subr.mxu0 0.0
    %1779 = vmatpush1.msra.mxu0 %v1160
    %1780 = vmatprep.subr.mxu0 0.0
    %1781 = vmatpush1.msra.mxu0 %v1161
    %1782 = vmatprep.subr.mxu0 0.0
    %1783 = vmatpush1.msra.mxu0 %v1162
    %1784 = vmatprep.subr.mxu0 0.0
    %1785 = vmatpush1.msra.mxu0 %v1163
    %1786 = vmatprep.subr.mxu0 0.0
    %1787 = vmatpush1.msra.mxu0 0.0
    %1788 = vmatprep.subr.mxu0 0.0
    %1789 = vmatpush1.msra.mxu0 0.0
    %1790 = vmatprep.subr.mxu0 0.0
    %1791 = vmatpush1.msra.mxu0 0.0
    %1792 = vmatprep.subr.mxu0 0.0
    %1793 = vmatpush1.msra.mxu0 0.0
    %1794 = vmatprep.subr.mxu0 0.0
    %1795 = vmatpush1.msra.mxu0 0.0
    %1796 = vmatprep.subr.mxu0 0.0
    %1797 = vmatpush1.msra.mxu0 0.0
    %1798 = vmatprep.subr.mxu0 0.0
    %1799 = vmatpush1.msra.mxu0 0.0
    %1800 = vmatprep.subr.mxu0 0.0
    %1801 = vmatpush1.msra.mxu0 0.0
    %1802 = vmatprep.subr.mxu0 0.0
    %1803 = vmatpush1.msra.mxu0 0.0
    %1804 = vmatprep.subr.mxu0 0.0
    %1805 = vmatpush1.msra.mxu0 0.0
    %1806 = vmatprep.subr.mxu0 0.0
    %1807 = vmatpush1.msra.mxu0 0.0
    %1808 = vmatprep.subr.mxu0 0.0
    %1809 = vmatpush1.msra.mxu0 0.0
    %1810 = vmatprep.subr.mxu0 0.0
    %1811 = vmatpush1.msra.mxu0 0.0
    %1812 = vmatprep.subr.mxu0 0.0
    %1813 = vmatpush1.msra.mxu0 0.0
    %1814 = vmatprep.subr.mxu0 0.0
    %1815 = vmatpush1.msra.mxu0 0.0
    %1816 = vmatprep.subr.mxu0 0.0
    %1817 = vmatpush1.msra.mxu0 0.0
    %1818 = vmatprep.subr.mxu0 0.0
    %1819 = vmatpush1.msra.mxu0 0.0
    %1820 = vmatprep.subr.mxu0 0.0
    %1821 = vmatpush1.msra.mxu0 0.0
    %1822 = vmatprep.subr.mxu0 0.0
    %1823 = vmatpush1.msra.mxu0 0.0
    %1824 = vmatprep.subr.mxu0 0.0
    %1825 = vmatpush1.msra.mxu0 0.0
    %1826 = vmatprep.subr.mxu0 0.0
    %1827 = vmatpush1.msra.mxu0 0.0
    %1828 = vmatprep.subr.mxu0 0.0
    %1829 = vmatpush1.msra.mxu0 0.0
    %1830 = vmatprep.subr.mxu0 0.0
    %1831 = vmatpush1.msra.mxu0 0.0
    %1832 = vmatprep.subr.mxu0 0.0
    %1833 = vmatpush1.msra.mxu0 0.0
    %1834 = vmatprep.subr.mxu0 0.0
    %1835 = vmatpush1.msra.mxu0 0.0
    %1836 = vmatprep.subr.mxu0 0.0
    %1837 = vmatpush1.msra.mxu0 0.0
    %1838 = vmatprep.subr.mxu0 0.0
    %1839 = vmatpush1.msra.mxu0 0.0
    %1840 = vmatprep.subr.mxu0 0.0
    %1841 = vmatpush1.msra.mxu0 0.0
    %1842 = vmatprep.mubr.f32.mxu0 0.0
    %1843 = vmatmul.mubr.f32.gmra.mrb[0].mxu0 %v1767
    %v1844 = vpop.f32.mrb[0].mxu0
    %v1845 = vadd.f32 %v1248, %v1844
    %v1846 = vpop.f32.mrb[0].mxu0
    %1847 = vmatprep.mubr.f32.mxu0 0.0
    %1848 = vmatmul.mubr.f32.gmra.mrb[0].mxu0 %v1770
    %v1849 = vpop.f32.mrb[0].mxu0
    %v1850 = vadd.f32 %v1253, %v1849
    %v1851 = vpop.f32.mrb[0].mxu0
    %1852 = vmatprep.mubr.f32.mxu0 0.0
    %1853 = vmatmul.mubr.f32.gmra.mrb[0].mxu0 %v1773
    %v1854 = vpop.f32.mrb[0].mxu0
    %v1855 = vadd.f32 %v1258, %v1854
    %v1856 = vpop.f32.mrb[0].mxu0
    %1857 = vmatprep.mubr.f32.mxu0 0.0
    %1858 = vmatmul.mubr.f32.gmra.mrb[0].mxu0 %v1776
    %v1859 = vpop.f32.mrb[0].mxu0
    %v1860 = vadd.f32 %v1263, %v1859
    %v1861 = vpop.f32.mrb[0].mxu0
    %1862 = vdwg.mxu0
    %v1864 = vsel %vm74, %v781, 0
    %v1867 = vsel %vm74, %v786, 0
    %v1870 = vsel %vm74, %v791, 0
    %v1873 = vsel %vm74, %v796, 0
    %1875 = vmatprep.subr.mxu0 0.0
    %1876 = vmatpush1.msra.mxu0 %v1267
    %1877 = vmatprep.subr.mxu0 0.0
    %1878 = vmatpush1.msra.mxu0 %v1268
    %1879 = vmatprep.subr.mxu0 0.0
    %1880 = vmatpush1.msra.mxu0 %v1269
    %1881 = vmatprep.subr.mxu0 0.0
    %1882 = vmatpush1.msra.mxu0 %v1270
    %1883 = vmatprep.subr.mxu0 0.0
    %1884 = vmatpush1.msra.mxu0 0.0
    %1885 = vmatprep.subr.mxu0 0.0
    %1886 = vmatpush1.msra.mxu0 0.0
    %1887 = vmatprep.subr.mxu0 0.0
    %1888 = vmatpush1.msra.mxu0 0.0
    %1889 = vmatprep.subr.mxu0 0.0
    %1890 = vmatpush1.msra.mxu0 0.0
    %1891 = vmatprep.subr.mxu0 0.0
    %1892 = vmatpush1.msra.mxu0 0.0
    %1893 = vmatprep.subr.mxu0 0.0
    %1894 = vmatpush1.msra.mxu0 0.0
    %1895 = vmatprep.subr.mxu0 0.0
    %1896 = vmatpush1.msra.mxu0 0.0
    %1897 = vmatprep.subr.mxu0 0.0
    %1898 = vmatpush1.msra.mxu0 0.0
    %1899 = vmatprep.subr.mxu0 0.0
    %1900 = vmatpush1.msra.mxu0 0.0
    %1901 = vmatprep.subr.mxu0 0.0
    %1902 = vmatpush1.msra.mxu0 0.0
    %1903 = vmatprep.subr.mxu0 0.0
    %1904 = vmatpush1.msra.mxu0 0.0
    %1905 = vmatprep.subr.mxu0 0.0
    %1906 = vmatpush1.msra.mxu0 0.0
    %1907 = vmatprep.subr.mxu0 0.0
    %1908 = vmatpush1.msra.mxu0 0.0
    %1909 = vmatprep.subr.mxu0 0.0
    %1910 = vmatpush1.msra.mxu0 0.0
    %1911 = vmatprep.subr.mxu0 0.0
    %1912 = vmatpush1.msra.mxu0 0.0
    %1913 = vmatprep.subr.mxu0 0.0
    %1914 = vmatpush1.msra.mxu0 0.0
    %1915 = vmatprep.subr.mxu0 0.0
    %1916 = vmatpush1.msra.mxu0 0.0
    %1917 = vmatprep.subr.mxu0 0.0
    %1918 = vmatpush1.msra.mxu0 0.0
    %1919 = vmatprep.subr.mxu0 0.0
    %1920 = vmatpush1.msra.mxu0 0.0
    %1921 = vmatprep.subr.mxu0 0.0
    %1922 = vmatpush1.msra.mxu0 0.0
    %1923 = vmatprep.subr.mxu0 0.0
    %1924 = vmatpush1.msra.mxu0 0.0
    %1925 = vmatprep.subr.mxu0 0.0
    %1926 = vmatpush1.msra.mxu0 0.0
    %1927 = vmatprep.subr.mxu0 0.0
    %1928 = vmatpush1.msra.mxu0 0.0
    %1929 = vmatprep.subr.mxu0 0.0
    %1930 = vmatpush1.msra.mxu0 0.0
    %1931 = vmatprep.subr.mxu0 0.0
    %1932 = vmatpush1.msra.mxu0 0.0
    %1933 = vmatprep.subr.mxu0 0.0
    %1934 = vmatpush1.msra.mxu0 0.0
    %1935 = vmatprep.subr.mxu0 0.0
    %1936 = vmatpush1.msra.mxu0 0.0
    %1937 = vmatprep.subr.mxu0 0.0
    %1938 = vmatpush1.msra.mxu0 0.0
    %1939 = vmatprep.mubr.f32.mxu0 0.0
    %1940 = vmatmul.mubr.f32.gmra.mrb[0].mxu0 %v1864
    %v1941 = vpop.f32.mrb[0].mxu0
    %v1942 = vadd.f32 %v1355, %v1941
    %v1943 = vpop.f32.mrb[0].mxu0
    %1944 = vmatprep.mubr.f32.mxu0 0.0
    %1945 = vmatmul.mubr.f32.gmra.mrb[0].mxu0 %v1867
    %v1946 = vpop.f32.mrb[0].mxu0
    %v1947 = vadd.f32 %v1360, %v1946
    %v1948 = vpop.f32.mrb[0].mxu0
    %1949 = vmatprep.mubr.f32.mxu0 0.0
    %1950 = vmatmul.mubr.f32.gmra.mrb[0].mxu0 %v1870
    %v1951 = vpop.f32.mrb[0].mxu0
    %v1952 = vadd.f32 %v1365, %v1951
    %v1953 = vpop.f32.mrb[0].mxu0
    %1954 = vmatprep.mubr.f32.mxu0 0.0
    %1955 = vmatmul.mubr.f32.gmra.mrb[0].mxu0 %v1873
    %v1956 = vpop.f32.mrb[0].mxu0
    %v1957 = vadd.f32 %v1370, %v1956
    %v1958 = vpop.f32.mrb[0].mxu0
    %1959 = vdwg.mxu0
    %v1960 = vadd.f32 %v1554, %v1651
    %v1961 = vadd.f32 %v1559, %v1656
    %v1962 = vadd.f32 %v1564, %v1661
    %v1963 = vadd.f32 %v1569, %v1666
    %v1964 = vadd.f32 %v1748, %v1845
    %v1965 = vadd.f32 %v1753, %v1850
    %v1966 = vadd.f32 %v1758, %v1855
    %v1967 = vadd.f32 %v1763, %v1860
    %v1968 = vadd.f32 %v1942, %v1457
    %v1969 = vadd.f32 %v1947, %v1462
    %v1970 = vadd.f32 %v1952, %v1467
    %v1971 = vadd.f32 %v1957, %v1472
    %v1972 = vadd.f32 %v1960, %v1964
    %v1973 = vadd.f32 %v1961, %v1965
    %v1974 = vadd.f32 %v1962, %v1966
    %v1975 = vadd.f32 %v1963, %v1967
    %v1976 = vadd.f32 %v1972, %v1968
    %v1977 = vadd.f32 %v1973, %v1969
    %v1978 = vadd.f32 %v1974, %v1970
    %v1979 = vadd.f32 %v1975, %v1971
    %v1980 = vsel %vm74, %v1976, 0.0
    %1981 = vadd.xlane.f32.xlu0 %v1980
    %v1982 = vpop.xlane.xlu0 %1981
    %v1983 = vsel %vm74, %v1977, 0.0
    %1984 = vadd.xlane.f32.xlu0 %v1983
    %v1985 = vpop.xlane.xlu0 %1984
    %v1986 = vsel %vm74, %v1978, 0.0
    %1987 = vadd.xlane.f32.xlu0 %v1986
    %v1988 = vpop.xlane.xlu0 %1987
    %v1989 = vsel %vm74, %v1979, 0.0
    %1990 = vadd.xlane.f32.xlu0 %v1989
    %v1991 = vpop.xlane.xlu0 %1990
    %v1992 = vmul.f32 %v1982, %v297
    %v1993 = vmul.f32 %v1985, %v297
    %v1994 = vmul.f32 %v1988, %v297
    %v1995 = vmul.f32 %v1991, %v297
    %v1996 = vsub.f32 %v1976, %v1992
    %v1997 = vsub.f32 %v1977, %v1993
    %v1998 = vsub.f32 %v1978, %v1994
    %v1999 = vsub.f32 %v1979, %v1995
    %v2000 = vmul.f32 %v1996, %v1996
    %v2001 = vmul.f32 %v1997, %v1997
    %v2002 = vmul.f32 %v1998, %v1998
    %v2003 = vmul.f32 %v1999, %v1999
    %v2004 = vsel %vm74, %v2000, 0.0
    %2005 = vadd.xlane.f32.xlu0 %v2004
    %v2006 = vpop.xlane.xlu0 %2005
    %v2007 = vsel %vm74, %v2001, 0.0
    %2008 = vadd.xlane.f32.xlu0 %v2007
    %v2009 = vpop.xlane.xlu0 %2008
    %v2010 = vsel %vm74, %v2002, 0.0
    %2011 = vadd.xlane.f32.xlu0 %v2010
    %v2012 = vpop.xlane.xlu0 %2011
    %v2013 = vsel %vm74, %v2003, 0.0
    %2014 = vadd.xlane.f32.xlu0 %v2013
    %v2015 = vpop.xlane.xlu0 %2014
    %v2016 = vmul.f32 %v2006, %v297
    %v2017 = vmul.f32 %v2009, %v297
    %v2018 = vmul.f32 %v2012, %v297
    %v2019 = vmul.f32 %v2015, %v297
    %v2020 = vadd.f32 %v2016, 1e-05
    %v2021 = vadd.f32 %v2017, 1e-05
    %v2022 = vadd.f32 %v2018, 1e-05
    %v2023 = vadd.f32 %v2019, 1e-05
    %v2024 = vrsqrt.pop %v2020
    %v2025 = vrsqrt.pop %v2021
    %v2026 = vrsqrt.pop %v2022
    %v2027 = vrsqrt.pop %v2023
    %v2028 = vmul.f32 %v1996, %v2024
    %v2029 = vmul.f32 %v1997, %v2025
    %v2030 = vmul.f32 %v1998, %v2026
    %v2031 = vmul.f32 %v1999, %v2027
    %v2032 = vlaneseq
    %v2033 = vshrl.u32 %v2032, 7
    %v2034 = vsub.s32 6, %v2033
    %v2035 = vrot.slane %v284, %v2034
    %v2036 = vmul.f32 %v2028, %v2035
    %v2037 = vmul.f32 %v2029, %v2035
    %v2038 = vmul.f32 %v2030, %v2035
    %v2039 = vmul.f32 %v2031, %v2035
    %v2040 = vlaneseq
    %v2041 = vshrl.u32 %v2040, 7
    %v2042 = vsub.s32 7, %v2041
    %v2043 = vrot.slane %v284, %v2042
    %v2044 = vadd.f32 %v2036, %v2043
    %v2045 = vadd.f32 %v2037, %v2043
    %v2046 = vadd.f32 %v2038, %v2043
    %v2047 = vadd.f32 %v2039, %v2043
    %v2049 = vsel %vm74, %v224, 0
    %v2052 = vsel %vm74, %v225, 0
    %v2055 = vsel %vm74, %v226, 0
    %v2058 = vsel %vm74, %v227, 0
    %v2061 = vsel %vm74, %v228, 0
    %v2064 = vsel %vm74, %v229, 0
    %v2067 = vsel %vm74, %v230, 0
    %v2070 = vsel %vm74, %v231, 0
    %v2073 = vsel %vm74, %v232, 0
    %v2076 = vsel %vm74, %v233, 0
    %v2079 = vsel %vm74, %v234, 0
    %v2082 = vsel %vm74, %v235, 0
    %v2085 = vsel %vm74, %v236, 0
    %v2088 = vsel %vm74, %v237, 0
    %v2091 = vsel %vm74, %v238, 0
    %v2094 = vsel %vm74, %v239, 0
    %v2097 = vsel %vm74, %v240, 0
    %v2100 = vsel %vm74, %v241, 0
    %v2103 = vsel %vm74, %v242, 0
    %v2106 = vsel %vm74, %v243, 0
    %v2109 = vsel %vm74, %v244, 0
    %v2112 = vsel %vm74, %v245, 0
    %v2115 = vsel %vm74, %v246, 0
    %v2118 = vsel %vm74, %v247, 0
    %v2121 = vsel %vm74, %v248, 0
    %v2124 = vsel %vm74, %v249, 0
    %v2127 = vsel %vm74, %v250, 0
    %v2130 = vsel %vm74, %v251, 0
    %v2133 = vsel %vm74, %v252, 0
    %v2136 = vsel %vm74, %v253, 0
    %v2139 = vsel %vm74, %v254, 0
    %v2142 = vsel %vm74, %v255, 0
    %v2145 = vsel %vm74, %v256, 0
    %v2148 = vsel %vm74, %v257, 0
    %v2151 = vsel %vm74, %v258, 0
    %v2154 = vsel %vm74, %v259, 0
    %v2157 = vsel %vm74, %v260, 0
    %v2160 = vsel %vm74, %v261, 0
    %v2163 = vsel %vm74, %v262, 0
    %v2166 = vsel %vm74, %v263, 0
    %v2169 = vsel %vm74, %v264, 0
    %v2172 = vsel %vm74, %v265, 0
    %v2175 = vsel %vm74, %v266, 0
    %v2178 = vsel %vm74, %v267, 0
    %v2181 = vsel %vm74, %v268, 0
    %v2184 = vsel %vm74, %v269, 0
    %v2187 = vsel %vm74, %v270, 0
    %v2190 = vsel %vm74, %v271, 0
    %v2193 = vsel %vm74, %v272, 0
    %v2196 = vsel %vm74, %v273, 0
    %v2199 = vsel %vm74, %v274, 0
    %v2202 = vsel %vm74, %v275, 0
    %v2205 = vsel %vm74, %v276, 0
    %v2208 = vsel %vm74, %v277, 0
    %v2211 = vsel %vm74, %v278, 0
    %v2214 = vsel %vm74, %v279, 0
    %v2217 = vsel %vm74, %v280, 0
    %v2220 = vsel %vm74, %v281, 0
    %v2223 = vsel %vm74, %v282, 0
    %v2226 = vsel %vm74, %v283, 0
    %2228 = vmatprep.subr.mxu0 0.0
    %2229 = vmatpush1.msra.mxu0 %v2044
    %2230 = vmatprep.subr.mxu0 0.0
    %2231 = vmatpush1.msra.mxu0 %v2045
    %2232 = vmatprep.subr.mxu0 0.0
    %2233 = vmatpush1.msra.mxu0 %v2046
    %2234 = vmatprep.subr.mxu0 0.0
    %2235 = vmatpush1.msra.mxu0 %v2047
    %2236 = vmatprep.subr.mxu0 0.0
    %2237 = vmatpush1.msra.mxu0 0.0
    %2238 = vmatprep.subr.mxu0 0.0
    %2239 = vmatpush1.msra.mxu0 0.0
    %2240 = vmatprep.subr.mxu0 0.0
    %2241 = vmatpush1.msra.mxu0 0.0
    %2242 = vmatprep.subr.mxu0 0.0
    %2243 = vmatpush1.msra.mxu0 0.0
    %2244 = vmatprep.subr.mxu0 0.0
    %2245 = vmatpush1.msra.mxu0 0.0
    %2246 = vmatprep.subr.mxu0 0.0
    %2247 = vmatpush1.msra.mxu0 0.0
    %2248 = vmatprep.subr.mxu0 0.0
    %2249 = vmatpush1.msra.mxu0 0.0
    %2250 = vmatprep.subr.mxu0 0.0
    %2251 = vmatpush1.msra.mxu0 0.0
    %2252 = vmatprep.subr.mxu0 0.0
    %2253 = vmatpush1.msra.mxu0 0.0
    %2254 = vmatprep.subr.mxu0 0.0
    %2255 = vmatpush1.msra.mxu0 0.0
    %2256 = vmatprep.subr.mxu0 0.0
    %2257 = vmatpush1.msra.mxu0 0.0
    %2258 = vmatprep.subr.mxu0 0.0
    %2259 = vmatpush1.msra.mxu0 0.0
    %2260 = vmatprep.subr.mxu0 0.0
    %2261 = vmatpush1.msra.mxu0 0.0
    %2262 = vmatprep.subr.mxu0 0.0
    %2263 = vmatpush1.msra.mxu0 0.0
    %2264 = vmatprep.subr.mxu0 0.0
    %2265 = vmatpush1.msra.mxu0 0.0
    %2266 = vmatprep.subr.mxu0 0.0
    %2267 = vmatpush1.msra.mxu0 0.0
    %2268 = vmatprep.subr.mxu0 0.0
    %2269 = vmatpush1.msra.mxu0 0.0
    %2270 = vmatprep.subr.mxu0 0.0
    %2271 = vmatpush1.msra.mxu0 0.0
    %2272 = vmatprep.subr.mxu0 0.0
    %2273 = vmatpush1.msra.mxu0 0.0
    %2274 = vmatprep.subr.mxu0 0.0
    %2275 = vmatpush1.msra.mxu0 0.0
    %2276 = vmatprep.subr.mxu0 0.0
    %2277 = vmatpush1.msra.mxu0 0.0
    %2278 = vmatprep.subr.mxu0 0.0
    %2279 = vmatpush1.msra.mxu0 0.0
    %2280 = vmatprep.subr.mxu0 0.0
    %2281 = vmatpush1.msra.mxu0 0.0
    %2282 = vmatprep.subr.mxu0 0.0
    %2283 = vmatpush1.msra.mxu0 0.0
    %2284 = vmatprep.subr.mxu0 0.0
    %2285 = vmatpush1.msra.mxu0 0.0
    %2286 = vmatprep.subr.mxu0 0.0
    %2287 = vmatpush1.msra.mxu0 0.0
    %2288 = vmatprep.subr.mxu0 0.0
    %2289 = vmatpush1.msra.mxu0 0.0
    %2290 = vmatprep.subr.mxu0 0.0
    %2291 = vmatpush1.msra.mxu0 0.0
    %2292 = vmatprep.mubr.f32.mxu0 0.0
    %2293 = vmatmul.mubr.f32.gmra.mrb[0].mxu0 %v2049
    %v2294 = vpop.f32.mrb[0].mxu0
    %v2295 = vadd.f32 0.0, %v2294
    %v2296 = vpop.f32.mrb[0].mxu0
    %2297 = vmatprep.mubr.f32.mxu0 0.0
    %2298 = vmatmul.mubr.f32.gmra.mrb[0].mxu0 %v2052
    %v2299 = vpop.f32.mrb[0].mxu0
    %v2300 = vadd.f32 0.0, %v2299
    %v2301 = vpop.f32.mrb[0].mxu0
    %2302 = vmatprep.mubr.f32.mxu0 0.0
    %2303 = vmatmul.mubr.f32.gmra.mrb[0].mxu0 %v2055
    %v2304 = vpop.f32.mrb[0].mxu0
    %v2305 = vadd.f32 0.0, %v2304
    %v2306 = vpop.f32.mrb[0].mxu0
    %2307 = vmatprep.mubr.f32.mxu0 0.0
    %2308 = vmatmul.mubr.f32.gmra.mrb[0].mxu0 %v2058
    %v2309 = vpop.f32.mrb[0].mxu0
    %v2310 = vadd.f32 0.0, %v2309
    %v2311 = vpop.f32.mrb[0].mxu0
    %2312 = vmatprep.mubr.f32.mxu0 0.0
    %2313 = vmatmul.mubr.f32.gmra.mrb[0].mxu0 %v2061
    %v2314 = vpop.f32.mrb[0].mxu0
    %v2315 = vadd.f32 0.0, %v2314
    %v2316 = vpop.f32.mrb[0].mxu0
    %2317 = vmatprep.mubr.f32.mxu0 0.0
    %2318 = vmatmul.mubr.f32.gmra.mrb[0].mxu0 %v2064
    %v2319 = vpop.f32.mrb[0].mxu0
    %v2320 = vadd.f32 0.0, %v2319
    %v2321 = vpop.f32.mrb[0].mxu0
    %2322 = vmatprep.mubr.f32.mxu0 0.0
    %2323 = vmatmul.mubr.f32.gmra.mrb[0].mxu0 %v2067
    %v2324 = vpop.f32.mrb[0].mxu0
    %v2325 = vadd.f32 0.0, %v2324
    %v2326 = vpop.f32.mrb[0].mxu0
    %2327 = vmatprep.mubr.f32.mxu0 0.0
    %2328 = vmatmul.mubr.f32.gmra.mrb[0].mxu0 %v2070
    %v2329 = vpop.f32.mrb[0].mxu0
    %v2330 = vadd.f32 0.0, %v2329
    %v2331 = vpop.f32.mrb[0].mxu0
    %2332 = vmatprep.mubr.f32.mxu0 0.0
    %2333 = vmatmul.mubr.f32.gmra.mrb[0].mxu0 %v2073
    %v2334 = vpop.f32.mrb[0].mxu0
    %v2335 = vadd.f32 0.0, %v2334
    %v2336 = vpop.f32.mrb[0].mxu0
    %2337 = vmatprep.mubr.f32.mxu0 0.0
    %2338 = vmatmul.mubr.f32.gmra.mrb[0].mxu0 %v2076
    %v2339 = vpop.f32.mrb[0].mxu0
    %v2340 = vadd.f32 0.0, %v2339
    %v2341 = vpop.f32.mrb[0].mxu0
    %2342 = vmatprep.mubr.f32.mxu0 0.0
    %2343 = vmatmul.mubr.f32.gmra.mrb[0].mxu0 %v2079
    %v2344 = vpop.f32.mrb[0].mxu0
    %v2345 = vadd.f32 0.0, %v2344
    %v2346 = vpop.f32.mrb[0].mxu0
    %2347 = vmatprep.mubr.f32.mxu0 0.0
    %2348 = vmatmul.mubr.f32.gmra.mrb[0].mxu0 %v2082
    %v2349 = vpop.f32.mrb[0].mxu0
    %v2350 = vadd.f32 0.0, %v2349
    %v2351 = vpop.f32.mrb[0].mxu0
    %2352 = vmatprep.mubr.f32.mxu0 0.0
    %2353 = vmatmul.mubr.f32.gmra.mrb[0].mxu0 %v2085
    %v2354 = vpop.f32.mrb[0].mxu0
    %v2355 = vadd.f32 0.0, %v2354
    %v2356 = vpop.f32.mrb[0].mxu0
    %2357 = vmatprep.mubr.f32.mxu0 0.0
    %2358 = vmatmul.mubr.f32.gmra.mrb[0].mxu0 %v2088
    %v2359 = vpop.f32.mrb[0].mxu0
    %v2360 = vadd.f32 0.0, %v2359
    %v2361 = vpop.f32.mrb[0].mxu0
    %2362 = vmatprep.mubr.f32.mxu0 0.0
    %2363 = vmatmul.mubr.f32.gmra.mrb[0].mxu0 %v2091
    %v2364 = vpop.f32.mrb[0].mxu0
    %v2365 = vadd.f32 0.0, %v2364
    %v2366 = vpop.f32.mrb[0].mxu0
    %2367 = vmatprep.mubr.f32.mxu0 0.0
    %2368 = vmatmul.mubr.f32.gmra.mrb[0].mxu0 %v2094
    %v2369 = vpop.f32.mrb[0].mxu0
    %v2370 = vadd.f32 0.0, %v2369
    %v2371 = vpop.f32.mrb[0].mxu0
    %2372 = vmatprep.mubr.f32.mxu0 0.0
    %2373 = vmatmul.mubr.f32.gmra.mrb[0].mxu0 %v2097
    %v2374 = vpop.f32.mrb[0].mxu0
    %v2375 = vadd.f32 0.0, %v2374
    %v2376 = vpop.f32.mrb[0].mxu0
    %2377 = vmatprep.mubr.f32.mxu0 0.0
    %2378 = vmatmul.mubr.f32.gmra.mrb[0].mxu0 %v2100
    %v2379 = vpop.f32.mrb[0].mxu0
    %v2380 = vadd.f32 0.0, %v2379
    %v2381 = vpop.f32.mrb[0].mxu0
    %2382 = vmatprep.mubr.f32.mxu0 0.0
    %2383 = vmatmul.mubr.f32.gmra.mrb[0].mxu0 %v2103
    %v2384 = vpop.f32.mrb[0].mxu0
    %v2385 = vadd.f32 0.0, %v2384
    %v2386 = vpop.f32.mrb[0].mxu0
    %2387 = vmatprep.mubr.f32.mxu0 0.0
    %2388 = vmatmul.mubr.f32.gmra.mrb[0].mxu0 %v2106
    %v2389 = vpop.f32.mrb[0].mxu0
    %v2390 = vadd.f32 0.0, %v2389
    %v2391 = vpop.f32.mrb[0].mxu0
    %2392 = vmatprep.mubr.f32.mxu0 0.0
    %2393 = vmatmul.mubr.f32.gmra.mrb[0].mxu0 %v2109
    %v2394 = vpop.f32.mrb[0].mxu0
    %v2395 = vadd.f32 0.0, %v2394
    %v2396 = vpop.f32.mrb[0].mxu0
    %2397 = vmatprep.mubr.f32.mxu0 0.0
    %2398 = vmatmul.mubr.f32.gmra.mrb[0].mxu0 %v2112
    %v2399 = vpop.f32.mrb[0].mxu0
    %v2400 = vadd.f32 0.0, %v2399
    %v2401 = vpop.f32.mrb[0].mxu0
    %2402 = vmatprep.mubr.f32.mxu0 0.0
    %2403 = vmatmul.mubr.f32.gmra.mrb[0].mxu0 %v2115
    %v2404 = vpop.f32.mrb[0].mxu0
    %v2405 = vadd.f32 0.0, %v2404
    %v2406 = vpop.f32.mrb[0].mxu0
    %2407 = vmatprep.mubr.f32.mxu0 0.0
    %2408 = vmatmul.mubr.f32.gmra.mrb[0].mxu0 %v2118
    %v2409 = vpop.f32.mrb[0].mxu0
    %v2410 = vadd.f32 0.0, %v2409
    %v2411 = vpop.f32.mrb[0].mxu0
    %2412 = vmatprep.mubr.f32.mxu0 0.0
    %2413 = vmatmul.mubr.f32.gmra.mrb[0].mxu0 %v2121
    %v2414 = vpop.f32.mrb[0].mxu0
    %v2415 = vadd.f32 0.0, %v2414
    %v2416 = vpop.f32.mrb[0].mxu0
    %2417 = vmatprep.mubr.f32.mxu0 0.0
    %2418 = vmatmul.mubr.f32.gmra.mrb[0].mxu0 %v2124
    %v2419 = vpop.f32.mrb[0].mxu0
    %v2420 = vadd.f32 0.0, %v2419
    %v2421 = vpop.f32.mrb[0].mxu0
    %2422 = vmatprep.mubr.f32.mxu0 0.0
    %2423 = vmatmul.mubr.f32.gmra.mrb[0].mxu0 %v2127
    %v2424 = vpop.f32.mrb[0].mxu0
    %v2425 = vadd.f32 0.0, %v2424
    %v2426 = vpop.f32.mrb[0].mxu0
    %2427 = vmatprep.mubr.f32.mxu0 0.0
    %2428 = vmatmul.mubr.f32.gmra.mrb[0].mxu0 %v2130
    %v2429 = vpop.f32.mrb[0].mxu0
    %v2430 = vadd.f32 0.0, %v2429
    %v2431 = vpop.f32.mrb[0].mxu0
    %2432 = vmatprep.mubr.f32.mxu0 0.0
    %2433 = vmatmul.mubr.f32.gmra.mrb[0].mxu0 %v2133
    %v2434 = vpop.f32.mrb[0].mxu0
    %v2435 = vadd.f32 0.0, %v2434
    %v2436 = vpop.f32.mrb[0].mxu0
    %2437 = vmatprep.mubr.f32.mxu0 0.0
    %2438 = vmatmul.mubr.f32.gmra.mrb[0].mxu0 %v2136
    %v2439 = vpop.f32.mrb[0].mxu0
    %v2440 = vadd.f32 0.0, %v2439
    %v2441 = vpop.f32.mrb[0].mxu0
    %2442 = vmatprep.mubr.f32.mxu0 0.0
    %2443 = vmatmul.mubr.f32.gmra.mrb[0].mxu0 %v2139
    %v2444 = vpop.f32.mrb[0].mxu0
    %v2445 = vadd.f32 0.0, %v2444
    %v2446 = vpop.f32.mrb[0].mxu0
    %2447 = vmatprep.mubr.f32.mxu0 0.0
    %2448 = vmatmul.mubr.f32.gmra.mrb[0].mxu0 %v2142
    %v2449 = vpop.f32.mrb[0].mxu0
    %v2450 = vadd.f32 0.0, %v2449
    %v2451 = vpop.f32.mrb[0].mxu0
    %2452 = vmatprep.mubr.f32.mxu0 0.0
    %2453 = vmatmul.mubr.f32.gmra.mrb[0].mxu0 %v2145
    %v2454 = vpop.f32.mrb[0].mxu0
    %v2455 = vadd.f32 0.0, %v2454
    %v2456 = vpop.f32.mrb[0].mxu0
    %2457 = vmatprep.mubr.f32.mxu0 0.0
    %2458 = vmatmul.mubr.f32.gmra.mrb[0].mxu0 %v2148
    %v2459 = vpop.f32.mrb[0].mxu0
    %v2460 = vadd.f32 0.0, %v2459
    %v2461 = vpop.f32.mrb[0].mxu0
    %2462 = vmatprep.mubr.f32.mxu0 0.0
    %2463 = vmatmul.mubr.f32.gmra.mrb[0].mxu0 %v2151
    %v2464 = vpop.f32.mrb[0].mxu0
    %v2465 = vadd.f32 0.0, %v2464
    %v2466 = vpop.f32.mrb[0].mxu0
    %2467 = vmatprep.mubr.f32.mxu0 0.0
    %2468 = vmatmul.mubr.f32.gmra.mrb[0].mxu0 %v2154
    %v2469 = vpop.f32.mrb[0].mxu0
    %v2470 = vadd.f32 0.0, %v2469
    %v2471 = vpop.f32.mrb[0].mxu0
    %2472 = vmatprep.mubr.f32.mxu0 0.0
    %2473 = vmatmul.mubr.f32.gmra.mrb[0].mxu0 %v2157
    %v2474 = vpop.f32.mrb[0].mxu0
    %v2475 = vadd.f32 0.0, %v2474
    %v2476 = vpop.f32.mrb[0].mxu0
    %2477 = vmatprep.mubr.f32.mxu0 0.0
    %2478 = vmatmul.mubr.f32.gmra.mrb[0].mxu0 %v2160
    %v2479 = vpop.f32.mrb[0].mxu0
    %v2480 = vadd.f32 0.0, %v2479
    %v2481 = vpop.f32.mrb[0].mxu0
    %2482 = vmatprep.mubr.f32.mxu0 0.0
    %2483 = vmatmul.mubr.f32.gmra.mrb[0].mxu0 %v2163
    %v2484 = vpop.f32.mrb[0].mxu0
    %v2485 = vadd.f32 0.0, %v2484
    %v2486 = vpop.f32.mrb[0].mxu0
    %2487 = vmatprep.mubr.f32.mxu0 0.0
    %2488 = vmatmul.mubr.f32.gmra.mrb[0].mxu0 %v2166
    %v2489 = vpop.f32.mrb[0].mxu0
    %v2490 = vadd.f32 0.0, %v2489
    %v2491 = vpop.f32.mrb[0].mxu0
    %2492 = vmatprep.mubr.f32.mxu0 0.0
    %2493 = vmatmul.mubr.f32.gmra.mrb[0].mxu0 %v2169
    %v2494 = vpop.f32.mrb[0].mxu0
    %v2495 = vadd.f32 0.0, %v2494
    %v2496 = vpop.f32.mrb[0].mxu0
    %2497 = vmatprep.mubr.f32.mxu0 0.0
    %2498 = vmatmul.mubr.f32.gmra.mrb[0].mxu0 %v2172
    %v2499 = vpop.f32.mrb[0].mxu0
    %v2500 = vadd.f32 0.0, %v2499
    %v2501 = vpop.f32.mrb[0].mxu0
    %2502 = vmatprep.mubr.f32.mxu0 0.0
    %2503 = vmatmul.mubr.f32.gmra.mrb[0].mxu0 %v2175
    %v2504 = vpop.f32.mrb[0].mxu0
    %v2505 = vadd.f32 0.0, %v2504
    %v2506 = vpop.f32.mrb[0].mxu0
    %2507 = vmatprep.mubr.f32.mxu0 0.0
    %2508 = vmatmul.mubr.f32.gmra.mrb[0].mxu0 %v2178
    %v2509 = vpop.f32.mrb[0].mxu0
    %v2510 = vadd.f32 0.0, %v2509
    %v2511 = vpop.f32.mrb[0].mxu0
    %2512 = vmatprep.mubr.f32.mxu0 0.0
    %2513 = vmatmul.mubr.f32.gmra.mrb[0].mxu0 %v2181
    %v2514 = vpop.f32.mrb[0].mxu0
    %v2515 = vadd.f32 0.0, %v2514
    %v2516 = vpop.f32.mrb[0].mxu0
    %2517 = vmatprep.mubr.f32.mxu0 0.0
    %2518 = vmatmul.mubr.f32.gmra.mrb[0].mxu0 %v2184
    %v2519 = vpop.f32.mrb[0].mxu0
    %v2520 = vadd.f32 0.0, %v2519
    %v2521 = vpop.f32.mrb[0].mxu0
    %2522 = vmatprep.mubr.f32.mxu0 0.0
    %2523 = vmatmul.mubr.f32.gmra.mrb[0].mxu0 %v2187
    %v2524 = vpop.f32.mrb[0].mxu0
    %v2525 = vadd.f32 0.0, %v2524
    %v2526 = vpop.f32.mrb[0].mxu0
    %2527 = vmatprep.mubr.f32.mxu0 0.0
    %2528 = vmatmul.mubr.f32.gmra.mrb[0].mxu0 %v2190
    %v2529 = vpop.f32.mrb[0].mxu0
    %v2530 = vadd.f32 0.0, %v2529
    %v2531 = vpop.f32.mrb[0].mxu0
    %2532 = vmatprep.mubr.f32.mxu0 0.0
    %2533 = vmatmul.mubr.f32.gmra.mrb[0].mxu0 %v2193
    %v2534 = vpop.f32.mrb[0].mxu0
    %v2535 = vadd.f32 0.0, %v2534
    %v2536 = vpop.f32.mrb[0].mxu0
    %2537 = vmatprep.mubr.f32.mxu0 0.0
    %2538 = vmatmul.mubr.f32.gmra.mrb[0].mxu0 %v2196
    %v2539 = vpop.f32.mrb[0].mxu0
    %v2540 = vadd.f32 0.0, %v2539
    %v2541 = vpop.f32.mrb[0].mxu0
    %2542 = vmatprep.mubr.f32.mxu0 0.0
    %2543 = vmatmul.mubr.f32.gmra.mrb[0].mxu0 %v2199
    %v2544 = vpop.f32.mrb[0].mxu0
    %v2545 = vadd.f32 0.0, %v2544
    %v2546 = vpop.f32.mrb[0].mxu0
    %2547 = vmatprep.mubr.f32.mxu0 0.0
    %2548 = vmatmul.mubr.f32.gmra.mrb[0].mxu0 %v2202
    %v2549 = vpop.f32.mrb[0].mxu0
    %v2550 = vadd.f32 0.0, %v2549
    %v2551 = vpop.f32.mrb[0].mxu0
    %2552 = vmatprep.mubr.f32.mxu0 0.0
    %2553 = vmatmul.mubr.f32.gmra.mrb[0].mxu0 %v2205
    %v2554 = vpop.f32.mrb[0].mxu0
    %v2555 = vadd.f32 0.0, %v2554
    %v2556 = vpop.f32.mrb[0].mxu0
    %2557 = vmatprep.mubr.f32.mxu0 0.0
    %2558 = vmatmul.mubr.f32.gmra.mrb[0].mxu0 %v2208
    %v2559 = vpop.f32.mrb[0].mxu0
    %v2560 = vadd.f32 0.0, %v2559
    %v2561 = vpop.f32.mrb[0].mxu0
    %2562 = vmatprep.mubr.f32.mxu0 0.0
    %2563 = vmatmul.mubr.f32.gmra.mrb[0].mxu0 %v2211
    %v2564 = vpop.f32.mrb[0].mxu0
    %v2565 = vadd.f32 0.0, %v2564
    %v2566 = vpop.f32.mrb[0].mxu0
    %2567 = vmatprep.mubr.f32.mxu0 0.0
    %2568 = vmatmul.mubr.f32.gmra.mrb[0].mxu0 %v2214
    %v2569 = vpop.f32.mrb[0].mxu0
    %v2570 = vadd.f32 0.0, %v2569
    %v2571 = vpop.f32.mrb[0].mxu0
    %2572 = vmatprep.mubr.f32.mxu0 0.0
    %2573 = vmatmul.mubr.f32.gmra.mrb[0].mxu0 %v2217
    %v2574 = vpop.f32.mrb[0].mxu0
    %v2575 = vadd.f32 0.0, %v2574
    %v2576 = vpop.f32.mrb[0].mxu0
    %2577 = vmatprep.mubr.f32.mxu0 0.0
    %2578 = vmatmul.mubr.f32.gmra.mrb[0].mxu0 %v2220
    %v2579 = vpop.f32.mrb[0].mxu0
    %v2580 = vadd.f32 0.0, %v2579
    %v2581 = vpop.f32.mrb[0].mxu0
    %2582 = vmatprep.mubr.f32.mxu0 0.0
    %2583 = vmatmul.mubr.f32.gmra.mrb[0].mxu0 %v2223
    %v2584 = vpop.f32.mrb[0].mxu0
    %v2585 = vadd.f32 0.0, %v2584
    %v2586 = vpop.f32.mrb[0].mxu0
    %2587 = vmatprep.mubr.f32.mxu0 0.0
    %2588 = vmatmul.mubr.f32.gmra.mrb[0].mxu0 %v2226
    %v2589 = vpop.f32.mrb[0].mxu0
    %v2590 = vadd.f32 0.0, %v2589
    %v2591 = vpop.f32.mrb[0].mxu0
    %2592 = vdwg.mxu0
    %v2593 = vld [vmem:[%s7] sm:$0xff]
    %v2594 = vld [vmem:[%s7 + $0x8] sm:$0xff]
    %v2595 = vld [vmem:[%s7 + $0x10] sm:$0xff]
    %v2596 = vld [vmem:[%s7 + $0x18] sm:$0xff]
    %v2598 = vsel %vm74, %v2295, 0
    %v2601 = vsel %vm74, %v2300, 0
    %v2604 = vsel %vm74, %v2305, 0
    %v2607 = vsel %vm74, %v2310, 0
    %2609 = vmatprep.subr.mxu0 0.0
    %2610 = vmatpush1.msra.mxu0 %v2593
    %2611 = vmatprep.subr.mxu0 0.0
    %2612 = vmatpush1.msra.mxu0 %v2594
    %2613 = vmatprep.subr.mxu0 0.0
    %2614 = vmatpush1.msra.mxu0 %v2595
    %2615 = vmatprep.subr.mxu0 0.0
    %2616 = vmatpush1.msra.mxu0 %v2596
    %2617 = vmatprep.subr.mxu0 0.0
    %2618 = vmatpush1.msra.mxu0 0.0
    %2619 = vmatprep.subr.mxu0 0.0
    %2620 = vmatpush1.msra.mxu0 0.0
    %2621 = vmatprep.subr.mxu0 0.0
    %2622 = vmatpush1.msra.mxu0 0.0
    %2623 = vmatprep.subr.mxu0 0.0
    %2624 = vmatpush1.msra.mxu0 0.0
    %2625 = vmatprep.subr.mxu0 0.0
    %2626 = vmatpush1.msra.mxu0 0.0
    %2627 = vmatprep.subr.mxu0 0.0
    %2628 = vmatpush1.msra.mxu0 0.0
    %2629 = vmatprep.subr.mxu0 0.0
    %2630 = vmatpush1.msra.mxu0 0.0
    %2631 = vmatprep.subr.mxu0 0.0
    %2632 = vmatpush1.msra.mxu0 0.0
    %2633 = vmatprep.subr.mxu0 0.0
    %2634 = vmatpush1.msra.mxu0 0.0
    %2635 = vmatprep.subr.mxu0 0.0
    %2636 = vmatpush1.msra.mxu0 0.0
    %2637 = vmatprep.subr.mxu0 0.0
    %2638 = vmatpush1.msra.mxu0 0.0
    %2639 = vmatprep.subr.mxu0 0.0
    %2640 = vmatpush1.msra.mxu0 0.0
    %2641 = vmatprep.subr.mxu0 0.0
    %2642 = vmatpush1.msra.mxu0 0.0
    %2643 = vmatprep.subr.mxu0 0.0
    %2644 = vmatpush1.msra.mxu0 0.0
    %2645 = vmatprep.subr.mxu0 0.0
    %2646 = vmatpush1.msra.mxu0 0.0
    %2647 = vmatprep.subr.mxu0 0.0
    %2648 = vmatpush1.msra.mxu0 0.0
    %2649 = vmatprep.subr.mxu0 0.0
    %2650 = vmatpush1.msra.mxu0 0.0
    %2651 = vmatprep.subr.mxu0 0.0
    %2652 = vmatpush1.msra.mxu0 0.0
    %2653 = vmatprep.subr.mxu0 0.0
    %2654 = vmatpush1.msra.mxu0 0.0
    %2655 = vmatprep.subr.mxu0 0.0
    %2656 = vmatpush1.msra.mxu0 0.0
    %2657 = vmatprep.subr.mxu0 0.0
    %2658 = vmatpush1.msra.mxu0 0.0
    %2659 = vmatprep.subr.mxu0 0.0
    %2660 = vmatpush1.msra.mxu0 0.0
    %2661 = vmatprep.subr.mxu0 0.0
    %2662 = vmatpush1.msra.mxu0 0.0
    %2663 = vmatprep.subr.mxu0 0.0
    %2664 = vmatpush1.msra.mxu0 0.0
    %2665 = vmatprep.subr.mxu0 0.0
    %2666 = vmatpush1.msra.mxu0 0.0
    %2667 = vmatprep.subr.mxu0 0.0
    %2668 = vmatpush1.msra.mxu0 0.0
    %2669 = vmatprep.subr.mxu0 0.0
    %2670 = vmatpush1.msra.mxu0 0.0
    %2671 = vmatprep.subr.mxu0 0.0
    %2672 = vmatpush1.msra.mxu0 0.0
    %2673 = vmatprep.mubr.f32.mxu0 0.0
    %2674 = vmatmul.mubr.f32.gmra.mrb[0].mxu0 %v2598
    %v2675 = vpop.f32.mrb[0].mxu0
    %v2676 = vadd.f32 0.0, %v2675
    %v2677 = vpop.f32.mrb[0].mxu0
    %2678 = vmatprep.mubr.f32.mxu0 0.0
    %2679 = vmatmul.mubr.f32.gmra.mrb[0].mxu0 %v2601
    %v2680 = vpop.f32.mrb[0].mxu0
    %v2681 = vadd.f32 0.0, %v2680
    %v2682 = vpop.f32.mrb[0].mxu0
    %2683 = vmatprep.mubr.f32.mxu0 0.0
    %2684 = vmatmul.mubr.f32.gmra.mrb[0].mxu0 %v2604
    %v2685 = vpop.f32.mrb[0].mxu0
    %v2686 = vadd.f32 0.0, %v2685
    %v2687 = vpop.f32.mrb[0].mxu0
    %2688 = vmatprep.mubr.f32.mxu0 0.0
    %2689 = vmatmul.mubr.f32.gmra.mrb[0].mxu0 %v2607
    %v2690 = vpop.f32.mrb[0].mxu0
    %v2691 = vadd.f32 0.0, %v2690
    %v2692 = vpop.f32.mrb[0].mxu0
    %2693 = vdwg.mxu0
    %s2694 = scalar_lea.vmem %s7, 32
    %v2695 = vld [vmem:[%s2694] sm:$0xff]
    %v2696 = vld [vmem:[%s2694 + $0x8] sm:$0xff]
    %v2697 = vld [vmem:[%s2694 + $0x10] sm:$0xff]
    %v2698 = vld [vmem:[%s2694 + $0x18] sm:$0xff]
    %s2699 = scalar_lea.vmem %s7, 64
    %v2700 = vld [vmem:[%s2699] sm:$0xff]
    %v2701 = vld [vmem:[%s2699 + $0x8] sm:$0xff]
    %v2702 = vld [vmem:[%s2699 + $0x10] sm:$0xff]
    %v2703 = vld [vmem:[%s2699 + $0x18] sm:$0xff]
    %v2705 = vsel %vm74, %v2335, 0
    %v2708 = vsel %vm74, %v2340, 0
    %v2711 = vsel %vm74, %v2345, 0
    %v2714 = vsel %vm74, %v2350, 0
    %2716 = vmatprep.subr.mxu0 0.0
    %2717 = vmatpush1.msra.mxu0 %v2700
    %2718 = vmatprep.subr.mxu0 0.0
    %2719 = vmatpush1.msra.mxu0 %v2701
    %2720 = vmatprep.subr.mxu0 0.0
    %2721 = vmatpush1.msra.mxu0 %v2702
    %2722 = vmatprep.subr.mxu0 0.0
    %2723 = vmatpush1.msra.mxu0 %v2703
    %2724 = vmatprep.subr.mxu0 0.0
    %2725 = vmatpush1.msra.mxu0 0.0
    %2726 = vmatprep.subr.mxu0 0.0
    %2727 = vmatpush1.msra.mxu0 0.0
    %2728 = vmatprep.subr.mxu0 0.0
    %2729 = vmatpush1.msra.mxu0 0.0
    %2730 = vmatprep.subr.mxu0 0.0
    %2731 = vmatpush1.msra.mxu0 0.0
    %2732 = vmatprep.subr.mxu0 0.0
    %2733 = vmatpush1.msra.mxu0 0.0
    %2734 = vmatprep.subr.mxu0 0.0
    %2735 = vmatpush1.msra.mxu0 0.0
    %2736 = vmatprep.subr.mxu0 0.0
    %2737 = vmatpush1.msra.mxu0 0.0
    %2738 = vmatprep.subr.mxu0 0.0
    %2739 = vmatpush1.msra.mxu0 0.0
    %2740 = vmatprep.subr.mxu0 0.0
    %2741 = vmatpush1.msra.mxu0 0.0
    %2742 = vmatprep.subr.mxu0 0.0
    %2743 = vmatpush1.msra.mxu0 0.0
    %2744 = vmatprep.subr.mxu0 0.0
    %2745 = vmatpush1.msra.mxu0 0.0
    %2746 = vmatprep.subr.mxu0 0.0
    %2747 = vmatpush1.msra.mxu0 0.0
    %2748 = vmatprep.subr.mxu0 0.0
    %2749 = vmatpush1.msra.mxu0 0.0
    %2750 = vmatprep.subr.mxu0 0.0
    %2751 = vmatpush1.msra.mxu0 0.0
    %2752 = vmatprep.subr.mxu0 0.0
    %2753 = vmatpush1.msra.mxu0 0.0
    %2754 = vmatprep.subr.mxu0 0.0
    %2755 = vmatpush1.msra.mxu0 0.0
    %2756 = vmatprep.subr.mxu0 0.0
    %2757 = vmatpush1.msra.mxu0 0.0
    %2758 = vmatprep.subr.mxu0 0.0
    %2759 = vmatpush1.msra.mxu0 0.0
    %2760 = vmatprep.subr.mxu0 0.0
    %2761 = vmatpush1.msra.mxu0 0.0
    %2762 = vmatprep.subr.mxu0 0.0
    %2763 = vmatpush1.msra.mxu0 0.0
    %2764 = vmatprep.subr.mxu0 0.0
    %2765 = vmatpush1.msra.mxu0 0.0
    %2766 = vmatprep.subr.mxu0 0.0
    %2767 = vmatpush1.msra.mxu0 0.0
    %2768 = vmatprep.subr.mxu0 0.0
    %2769 = vmatpush1.msra.mxu0 0.0
    %2770 = vmatprep.subr.mxu0 0.0
    %2771 = vmatpush1.msra.mxu0 0.0
    %2772 = vmatprep.subr.mxu0 0.0
    %2773 = vmatpush1.msra.mxu0 0.0
    %2774 = vmatprep.subr.mxu0 0.0
    %2775 = vmatpush1.msra.mxu0 0.0
    %2776 = vmatprep.subr.mxu0 0.0
    %2777 = vmatpush1.msra.mxu0 0.0
    %2778 = vmatprep.subr.mxu0 0.0
    %2779 = vmatpush1.msra.mxu0 0.0
    %2780 = vmatprep.mubr.f32.mxu0 0.0
    %2781 = vmatmul.mubr.f32.gmra.mrb[0].mxu0 %v2705
    %v2782 = vpop.f32.mrb[0].mxu0
    %v2783 = vadd.f32 0.0, %v2782
    %v2784 = vpop.f32.mrb[0].mxu0
    %2785 = vmatprep.mubr.f32.mxu0 0.0
    %2786 = vmatmul.mubr.f32.gmra.mrb[0].mxu0 %v2708
    %v2787 = vpop.f32.mrb[0].mxu0
    %v2788 = vadd.f32 0.0, %v2787
    %v2789 = vpop.f32.mrb[0].mxu0
    %2790 = vmatprep.mubr.f32.mxu0 0.0
    %2791 = vmatmul.mubr.f32.gmra.mrb[0].mxu0 %v2711
    %v2792 = vpop.f32.mrb[0].mxu0
    %v2793 = vadd.f32 0.0, %v2792
    %v2794 = vpop.f32.mrb[0].mxu0
    %2795 = vmatprep.mubr.f32.mxu0 0.0
    %2796 = vmatmul.mubr.f32.gmra.mrb[0].mxu0 %v2714
    %v2797 = vpop.f32.mrb[0].mxu0
    %v2798 = vadd.f32 0.0, %v2797
    %v2799 = vpop.f32.mrb[0].mxu0
    %2800 = vdwg.mxu0
    %s2801 = scalar_lea.vmem %s7, 96
    %v2802 = vld [vmem:[%s2801] sm:$0xff]
    %v2803 = vld [vmem:[%s2801 + $0x8] sm:$0xff]
    %v2804 = vld [vmem:[%s2801 + $0x10] sm:$0xff]
    %v2805 = vld [vmem:[%s2801 + $0x18] sm:$0xff]
    %s2806 = scalar_lea.vmem %s7, 128
    %v2807 = vld [vmem:[%s2806] sm:$0xff]
    %v2808 = vld [vmem:[%s2806 + $0x8] sm:$0xff]
    %v2809 = vld [vmem:[%s2806 + $0x10] sm:$0xff]
    %v2810 = vld [vmem:[%s2806 + $0x18] sm:$0xff]
    %v2812 = vsel %vm74, %v2375, 0
    %v2815 = vsel %vm74, %v2380, 0
    %v2818 = vsel %vm74, %v2385, 0
    %v2821 = vsel %vm74, %v2390, 0
    %2823 = vmatprep.subr.mxu0 0.0
    %2824 = vmatpush1.msra.mxu0 %v2807
    %2825 = vmatprep.subr.mxu0 0.0
    %2826 = vmatpush1.msra.mxu0 %v2808
    %2827 = vmatprep.subr.mxu0 0.0
    %2828 = vmatpush1.msra.mxu0 %v2809
    %2829 = vmatprep.subr.mxu0 0.0
    %2830 = vmatpush1.msra.mxu0 %v2810
    %2831 = vmatprep.subr.mxu0 0.0
    %2832 = vmatpush1.msra.mxu0 0.0
    %2833 = vmatprep.subr.mxu0 0.0
    %2834 = vmatpush1.msra.mxu0 0.0
    %2835 = vmatprep.subr.mxu0 0.0
    %2836 = vmatpush1.msra.mxu0 0.0
    %2837 = vmatprep.subr.mxu0 0.0
    %2838 = vmatpush1.msra.mxu0 0.0
    %2839 = vmatprep.subr.mxu0 0.0
    %2840 = vmatpush1.msra.mxu0 0.0
    %2841 = vmatprep.subr.mxu0 0.0
    %2842 = vmatpush1.msra.mxu0 0.0
    %2843 = vmatprep.subr.mxu0 0.0
    %2844 = vmatpush1.msra.mxu0 0.0
    %2845 = vmatprep.subr.mxu0 0.0
    %2846 = vmatpush1.msra.mxu0 0.0
    %2847 = vmatprep.subr.mxu0 0.0
    %2848 = vmatpush1.msra.mxu0 0.0
    %2849 = vmatprep.subr.mxu0 0.0
    %2850 = vmatpush1.msra.mxu0 0.0
    %2851 = vmatprep.subr.mxu0 0.0
    %2852 = vmatpush1.msra.mxu0 0.0
    %2853 = vmatprep.subr.mxu0 0.0
    %2854 = vmatpush1.msra.mxu0 0.0
    %2855 = vmatprep.subr.mxu0 0.0
    %2856 = vmatpush1.msra.mxu0 0.0
    %2857 = vmatprep.subr.mxu0 0.0
    %2858 = vmatpush1.msra.mxu0 0.0
    %2859 = vmatprep.subr.mxu0 0.0
    %2860 = vmatpush1.msra.mxu0 0.0
    %2861 = vmatprep.subr.mxu0 0.0
    %2862 = vmatpush1.msra.mxu0 0.0
    %2863 = vmatprep.subr.mxu0 0.0
    %2864 = vmatpush1.msra.mxu0 0.0
    %2865 = vmatprep.subr.mxu0 0.0
    %2866 = vmatpush1.msra.mxu0 0.0
    %2867 = vmatprep.subr.mxu0 0.0
    %2868 = vmatpush1.msra.mxu0 0.0
    %2869 = vmatprep.subr.mxu0 0.0
    %2870 = vmatpush1.msra.mxu0 0.0
    %2871 = vmatprep.subr.mxu0 0.0
    %2872 = vmatpush1.msra.mxu0 0.0
    %2873 = vmatprep.subr.mxu0 0.0
    %2874 = vmatpush1.msra.mxu0 0.0
    %2875 = vmatprep.subr.mxu0 0.0
    %2876 = vmatpush1.msra.mxu0 0.0
    %2877 = vmatprep.subr.mxu0 0.0
    %2878 = vmatpush1.msra.mxu0 0.0
    %2879 = vmatprep.subr.mxu0 0.0
    %2880 = vmatpush1.msra.mxu0 0.0
    %2881 = vmatprep.subr.mxu0 0.0
    %2882 = vmatpush1.msra.mxu0 0.0
    %2883 = vmatprep.subr.mxu0 0.0
    %2884 = vmatpush1.msra.mxu0 0.0
    %2885 = vmatprep.subr.mxu0 0.0
    %2886 = vmatpush1.msra.mxu0 0.0
    %2887 = vmatprep.mubr.f32.mxu0 0.0
    %2888 = vmatmul.mubr.f32.gmra.mrb[0].mxu0 %v2812
    %v2889 = vpop.f32.mrb[0].mxu0
    %v2890 = vadd.f32 0.0, %v2889
    %v2891 = vpop.f32.mrb[0].mxu0
    %2892 = vmatprep.mubr.f32.mxu0 0.0
    %2893 = vmatmul.mubr.f32.gmra.mrb[0].mxu0 %v2815
    %v2894 = vpop.f32.mrb[0].mxu0
    %v2895 = vadd.f32 0.0, %v2894
    %v2896 = vpop.f32.mrb[0].mxu0
    %2897 = vmatprep.mubr.f32.mxu0 0.0
    %2898 = vmatmul.mubr.f32.gmra.mrb[0].mxu0 %v2818
    %v2899 = vpop.f32.mrb[0].mxu0
    %v2900 = vadd.f32 0.0, %v2899
    %v2901 = vpop.f32.mrb[0].mxu0
    %2902 = vmatprep.mubr.f32.mxu0 0.0
    %2903 = vmatmul.mubr.f32.gmra.mrb[0].mxu0 %v2821
    %v2904 = vpop.f32.mrb[0].mxu0
    %v2905 = vadd.f32 0.0, %v2904
    %v2906 = vpop.f32.mrb[0].mxu0
    %2907 = vdwg.mxu0
    %s2908 = scalar_lea.vmem %s7, 160
    %v2909 = vld [vmem:[%s2908] sm:$0xff]
    %v2910 = vld [vmem:[%s2908 + $0x8] sm:$0xff]
    %v2911 = vld [vmem:[%s2908 + $0x10] sm:$0xff]
    %v2912 = vld [vmem:[%s2908 + $0x18] sm:$0xff]
    %s2913 = scalar_lea.vmem %s7, 192
    %v2914 = vld [vmem:[%s2913] sm:$0xff]
    %v2915 = vld [vmem:[%s2913 + $0x8] sm:$0xff]
    %v2916 = vld [vmem:[%s2913 + $0x10] sm:$0xff]
    %v2917 = vld [vmem:[%s2913 + $0x18] sm:$0xff]
    %v2919 = vsel %vm74, %v2415, 0
    %v2922 = vsel %vm74, %v2420, 0
    %v2925 = vsel %vm74, %v2425, 0
    %v2928 = vsel %vm74, %v2430, 0
    %2930 = vmatprep.subr.mxu0 0.0
    %2931 = vmatpush1.msra.mxu0 %v2914
    %2932 = vmatprep.subr.mxu0 0.0
    %2933 = vmatpush1.msra.mxu0 %v2915
    %2934 = vmatprep.subr.mxu0 0.0
    %2935 = vmatpush1.msra.mxu0 %v2916
    %2936 = vmatprep.subr.mxu0 0.0
    %2937 = vmatpush1.msra.mxu0 %v2917
    %2938 = vmatprep.subr.mxu0 0.0
    %2939 = vmatpush1.msra.mxu0 0.0
    %2940 = vmatprep.subr.mxu0 0.0
    %2941 = vmatpush1.msra.mxu0 0.0
    %2942 = vmatprep.subr.mxu0 0.0
    %2943 = vmatpush1.msra.mxu0 0.0
    %2944 = vmatprep.subr.mxu0 0.0
    %2945 = vmatpush1.msra.mxu0 0.0
    %2946 = vmatprep.subr.mxu0 0.0
    %2947 = vmatpush1.msra.mxu0 0.0
    %2948 = vmatprep.subr.mxu0 0.0
    %2949 = vmatpush1.msra.mxu0 0.0
    %2950 = vmatprep.subr.mxu0 0.0
    %2951 = vmatpush1.msra.mxu0 0.0
    %2952 = vmatprep.subr.mxu0 0.0
    %2953 = vmatpush1.msra.mxu0 0.0
    %2954 = vmatprep.subr.mxu0 0.0
    %2955 = vmatpush1.msra.mxu0 0.0
    %2956 = vmatprep.subr.mxu0 0.0
    %2957 = vmatpush1.msra.mxu0 0.0
    %2958 = vmatprep.subr.mxu0 0.0
    %2959 = vmatpush1.msra.mxu0 0.0
    %2960 = vmatprep.subr.mxu0 0.0
    %2961 = vmatpush1.msra.mxu0 0.0
    %2962 = vmatprep.subr.mxu0 0.0
    %2963 = vmatpush1.msra.mxu0 0.0
    %2964 = vmatprep.subr.mxu0 0.0
    %2965 = vmatpush1.msra.mxu0 0.0
    %2966 = vmatprep.subr.mxu0 0.0
    %2967 = vmatpush1.msra.mxu0 0.0
    %2968 = vmatprep.subr.mxu0 0.0
    %2969 = vmatpush1.msra.mxu0 0.0
    %2970 = vmatprep.subr.mxu0 0.0
    %2971 = vmatpush1.msra.mxu0 0.0
    %2972 = vmatprep.subr.mxu0 0.0
    %2973 = vmatpush1.msra.mxu0 0.0
    %2974 = vmatprep.subr.mxu0 0.0
    %2975 = vmatpush1.msra.mxu0 0.0
    %2976 = vmatprep.subr.mxu0 0.0
    %2977 = vmatpush1.msra.mxu0 0.0
    %2978 = vmatprep.subr.mxu0 0.0
    %2979 = vmatpush1.msra.mxu0 0.0
    %2980 = vmatprep.subr.mxu0 0.0
    %2981 = vmatpush1.msra.mxu0 0.0
    %2982 = vmatprep.subr.mxu0 0.0
    %2983 = vmatpush1.msra.mxu0 0.0
    %2984 = vmatprep.subr.mxu0 0.0
    %2985 = vmatpush1.msra.mxu0 0.0
    %2986 = vmatprep.subr.mxu0 0.0
    %2987 = vmatpush1.msra.mxu0 0.0
    %2988 = vmatprep.subr.mxu0 0.0
    %2989 = vmatpush1.msra.mxu0 0.0
    %2990 = vmatprep.subr.mxu0 0.0
    %2991 = vmatpush1.msra.mxu0 0.0
    %2992 = vmatprep.subr.mxu0 0.0
    %2993 = vmatpush1.msra.mxu0 0.0
    %2994 = vmatprep.mubr.f32.mxu0 0.0
    %2995 = vmatmul.mubr.f32.gmra.mrb[0].mxu0 %v2919
    %v2996 = vpop.f32.mrb[0].mxu0
    %v2997 = vadd.f32 0.0, %v2996
    %v2998 = vpop.f32.mrb[0].mxu0
    %2999 = vmatprep.mubr.f32.mxu0 0.0
    %3000 = vmatmul.mubr.f32.gmra.mrb[0].mxu0 %v2922
    %v3001 = vpop.f32.mrb[0].mxu0
    %v3002 = vadd.f32 0.0, %v3001
    %v3003 = vpop.f32.mrb[0].mxu0
    %3004 = vmatprep.mubr.f32.mxu0 0.0
    %3005 = vmatmul.mubr.f32.gmra.mrb[0].mxu0 %v2925
    %v3006 = vpop.f32.mrb[0].mxu0
    %v3007 = vadd.f32 0.0, %v3006
    %v3008 = vpop.f32.mrb[0].mxu0
    %3009 = vmatprep.mubr.f32.mxu0 0.0
    %3010 = vmatmul.mubr.f32.gmra.mrb[0].mxu0 %v2928
    %v3011 = vpop.f32.mrb[0].mxu0
    %v3012 = vadd.f32 0.0, %v3011
    %v3013 = vpop.f32.mrb[0].mxu0
    %3014 = vdwg.mxu0
    %s3015 = scalar_lea.vmem %s7, 224
    %v3016 = vld [vmem:[%s3015] sm:$0xff]
    %v3017 = vld [vmem:[%s3015 + $0x8] sm:$0xff]
    %v3018 = vld [vmem:[%s3015 + $0x10] sm:$0xff]
    %v3019 = vld [vmem:[%s3015 + $0x18] sm:$0xff]
    %s3020 = scalar_lea.vmem %s7, 256
    %v3021 = vld [vmem:[%s3020] sm:$0xff]
    %v3022 = vld [vmem:[%s3020 + $0x8] sm:$0xff]
    %v3023 = vld [vmem:[%s3020 + $0x10] sm:$0xff]
    %v3024 = vld [vmem:[%s3020 + $0x18] sm:$0xff]
    %v3026 = vsel %vm74, %v2455, 0
    %v3029 = vsel %vm74, %v2460, 0
    %v3032 = vsel %vm74, %v2465, 0
    %v3035 = vsel %vm74, %v2470, 0
    %3037 = vmatprep.subr.mxu0 0.0
    %3038 = vmatpush1.msra.mxu0 %v3021
    %3039 = vmatprep.subr.mxu0 0.0
    %3040 = vmatpush1.msra.mxu0 %v3022
    %3041 = vmatprep.subr.mxu0 0.0
    %3042 = vmatpush1.msra.mxu0 %v3023
    %3043 = vmatprep.subr.mxu0 0.0
    %3044 = vmatpush1.msra.mxu0 %v3024
    %3045 = vmatprep.subr.mxu0 0.0
    %3046 = vmatpush1.msra.mxu0 0.0
    %3047 = vmatprep.subr.mxu0 0.0
    %3048 = vmatpush1.msra.mxu0 0.0
    %3049 = vmatprep.subr.mxu0 0.0
    %3050 = vmatpush1.msra.mxu0 0.0
    %3051 = vmatprep.subr.mxu0 0.0
    %3052 = vmatpush1.msra.mxu0 0.0
    %3053 = vmatprep.subr.mxu0 0.0
    %3054 = vmatpush1.msra.mxu0 0.0
    %3055 = vmatprep.subr.mxu0 0.0
    %3056 = vmatpush1.msra.mxu0 0.0
    %3057 = vmatprep.subr.mxu0 0.0
    %3058 = vmatpush1.msra.mxu0 0.0
    %3059 = vmatprep.subr.mxu0 0.0
    %3060 = vmatpush1.msra.mxu0 0.0
    %3061 = vmatprep.subr.mxu0 0.0
    %3062 = vmatpush1.msra.mxu0 0.0
    %3063 = vmatprep.subr.mxu0 0.0
    %3064 = vmatpush1.msra.mxu0 0.0
    %3065 = vmatprep.subr.mxu0 0.0
    %3066 = vmatpush1.msra.mxu0 0.0
    %3067 = vmatprep.subr.mxu0 0.0
    %3068 = vmatpush1.msra.mxu0 0.0
    %3069 = vmatprep.subr.mxu0 0.0
    %3070 = vmatpush1.msra.mxu0 0.0
    %3071 = vmatprep.subr.mxu0 0.0
    %3072 = vmatpush1.msra.mxu0 0.0
    %3073 = vmatprep.subr.mxu0 0.0
    %3074 = vmatpush1.msra.mxu0 0.0
    %3075 = vmatprep.subr.mxu0 0.0
    %3076 = vmatpush1.msra.mxu0 0.0
    %3077 = vmatprep.subr.mxu0 0.0
    %3078 = vmatpush1.msra.mxu0 0.0
    %3079 = vmatprep.subr.mxu0 0.0
    %3080 = vmatpush1.msra.mxu0 0.0
    %3081 = vmatprep.subr.mxu0 0.0
    %3082 = vmatpush1.msra.mxu0 0.0
    %3083 = vmatprep.subr.mxu0 0.0
    %3084 = vmatpush1.msra.mxu0 0.0
    %3085 = vmatprep.subr.mxu0 0.0
    %3086 = vmatpush1.msra.mxu0 0.0
    %3087 = vmatprep.subr.mxu0 0.0
    %3088 = vmatpush1.msra.mxu0 0.0
    %3089 = vmatprep.subr.mxu0 0.0
    %3090 = vmatpush1.msra.mxu0 0.0
    %3091 = vmatprep.subr.mxu0 0.0
    %3092 = vmatpush1.msra.mxu0 0.0
    %3093 = vmatprep.subr.mxu0 0.0
    %3094 = vmatpush1.msra.mxu0 0.0
    %3095 = vmatprep.subr.mxu0 0.0
    %3096 = vmatpush1.msra.mxu0 0.0
    %3097 = vmatprep.subr.mxu0 0.0
    %3098 = vmatpush1.msra.mxu0 0.0
    %3099 = vmatprep.subr.mxu0 0.0
    %3100 = vmatpush1.msra.mxu0 0.0
    %3101 = vmatprep.mubr.f32.mxu0 0.0
    %3102 = vmatmul.mubr.f32.gmra.mrb[0].mxu0 %v3026
    %v3103 = vpop.f32.mrb[0].mxu0
    %v3104 = vadd.f32 0.0, %v3103
    %v3105 = vpop.f32.mrb[0].mxu0
    %3106 = vmatprep.mubr.f32.mxu0 0.0
    %3107 = vmatmul.mubr.f32.gmra.mrb[0].mxu0 %v3029
    %v3108 = vpop.f32.mrb[0].mxu0
    %v3109 = vadd.f32 0.0, %v3108
    %v3110 = vpop.f32.mrb[0].mxu0
    %3111 = vmatprep.mubr.f32.mxu0 0.0
    %3112 = vmatmul.mubr.f32.gmra.mrb[0].mxu0 %v3032
    %v3113 = vpop.f32.mrb[0].mxu0
    %v3114 = vadd.f32 0.0, %v3113
    %v3115 = vpop.f32.mrb[0].mxu0
    %3116 = vmatprep.mubr.f32.mxu0 0.0
    %3117 = vmatmul.mubr.f32.gmra.mrb[0].mxu0 %v3035
    %v3118 = vpop.f32.mrb[0].mxu0
    %v3119 = vadd.f32 0.0, %v3118
    %v3120 = vpop.f32.mrb[0].mxu0
    %3121 = vdwg.mxu0
    %s3122 = scalar_lea.vmem %s7, 288
    %v3123 = vld [vmem:[%s3122] sm:$0xff]
    %v3124 = vld [vmem:[%s3122 + $0x8] sm:$0xff]
    %v3125 = vld [vmem:[%s3122 + $0x10] sm:$0xff]
    %v3126 = vld [vmem:[%s3122 + $0x18] sm:$0xff]
    %s3127 = scalar_lea.vmem %s7, 320
    %v3128 = vld [vmem:[%s3127] sm:$0xff]
    %v3129 = vld [vmem:[%s3127 + $0x8] sm:$0xff]
    %v3130 = vld [vmem:[%s3127 + $0x10] sm:$0xff]
    %v3131 = vld [vmem:[%s3127 + $0x18] sm:$0xff]
    %v3133 = vsel %vm74, %v2495, 0
    %v3136 = vsel %vm74, %v2500, 0
    %v3139 = vsel %vm74, %v2505, 0
    %v3142 = vsel %vm74, %v2510, 0
    %3144 = vmatprep.subr.mxu0 0.0
    %3145 = vmatpush1.msra.mxu0 %v3128
    %3146 = vmatprep.subr.mxu0 0.0
    %3147 = vmatpush1.msra.mxu0 %v3129
    %3148 = vmatprep.subr.mxu0 0.0
    %3149 = vmatpush1.msra.mxu0 %v3130
    %3150 = vmatprep.subr.mxu0 0.0
    %3151 = vmatpush1.msra.mxu0 %v3131
    %3152 = vmatprep.subr.mxu0 0.0
    %3153 = vmatpush1.msra.mxu0 0.0
    %3154 = vmatprep.subr.mxu0 0.0
    %3155 = vmatpush1.msra.mxu0 0.0
    %3156 = vmatprep.subr.mxu0 0.0
    %3157 = vmatpush1.msra.mxu0 0.0
    %3158 = vmatprep.subr.mxu0 0.0
    %3159 = vmatpush1.msra.mxu0 0.0
    %3160 = vmatprep.subr.mxu0 0.0
    %3161 = vmatpush1.msra.mxu0 0.0
    %3162 = vmatprep.subr.mxu0 0.0
    %3163 = vmatpush1.msra.mxu0 0.0
    %3164 = vmatprep.subr.mxu0 0.0
    %3165 = vmatpush1.msra.mxu0 0.0
    %3166 = vmatprep.subr.mxu0 0.0
    %3167 = vmatpush1.msra.mxu0 0.0
    %3168 = vmatprep.subr.mxu0 0.0
    %3169 = vmatpush1.msra.mxu0 0.0
    %3170 = vmatprep.subr.mxu0 0.0
    %3171 = vmatpush1.msra.mxu0 0.0
    %3172 = vmatprep.subr.mxu0 0.0
    %3173 = vmatpush1.msra.mxu0 0.0
    %3174 = vmatprep.subr.mxu0 0.0
    %3175 = vmatpush1.msra.mxu0 0.0
    %3176 = vmatprep.subr.mxu0 0.0
    %3177 = vmatpush1.msra.mxu0 0.0
    %3178 = vmatprep.subr.mxu0 0.0
    %3179 = vmatpush1.msra.mxu0 0.0
    %3180 = vmatprep.subr.mxu0 0.0
    %3181 = vmatpush1.msra.mxu0 0.0
    %3182 = vmatprep.subr.mxu0 0.0
    %3183 = vmatpush1.msra.mxu0 0.0
    %3184 = vmatprep.subr.mxu0 0.0
    %3185 = vmatpush1.msra.mxu0 0.0
    %3186 = vmatprep.subr.mxu0 0.0
    %3187 = vmatpush1.msra.mxu0 0.0
    %3188 = vmatprep.subr.mxu0 0.0
    %3189 = vmatpush1.msra.mxu0 0.0
    %3190 = vmatprep.subr.mxu0 0.0
    %3191 = vmatpush1.msra.mxu0 0.0
    %3192 = vmatprep.subr.mxu0 0.0
    %3193 = vmatpush1.msra.mxu0 0.0
    %3194 = vmatprep.subr.mxu0 0.0
    %3195 = vmatpush1.msra.mxu0 0.0
    %3196 = vmatprep.subr.mxu0 0.0
    %3197 = vmatpush1.msra.mxu0 0.0
    %3198 = vmatprep.subr.mxu0 0.0
    %3199 = vmatpush1.msra.mxu0 0.0
    %3200 = vmatprep.subr.mxu0 0.0
    %3201 = vmatpush1.msra.mxu0 0.0
    %3202 = vmatprep.subr.mxu0 0.0
    %3203 = vmatpush1.msra.mxu0 0.0
    %3204 = vmatprep.subr.mxu0 0.0
    %3205 = vmatpush1.msra.mxu0 0.0
    %3206 = vmatprep.subr.mxu0 0.0
    %3207 = vmatpush1.msra.mxu0 0.0
    %3208 = vmatprep.mubr.f32.mxu0 0.0
    %3209 = vmatmul.mubr.f32.gmra.mrb[0].mxu0 %v3133
    %v3210 = vpop.f32.mrb[0].mxu0
    %v3211 = vadd.f32 0.0, %v3210
    %v3212 = vpop.f32.mrb[0].mxu0
    %3213 = vmatprep.mubr.f32.mxu0 0.0
    %3214 = vmatmul.mubr.f32.gmra.mrb[0].mxu0 %v3136
    %v3215 = vpop.f32.mrb[0].mxu0
    %v3216 = vadd.f32 0.0, %v3215
    %v3217 = vpop.f32.mrb[0].mxu0
    %3218 = vmatprep.mubr.f32.mxu0 0.0
    %3219 = vmatmul.mubr.f32.gmra.mrb[0].mxu0 %v3139
    %v3220 = vpop.f32.mrb[0].mxu0
    %v3221 = vadd.f32 0.0, %v3220
    %v3222 = vpop.f32.mrb[0].mxu0
    %3223 = vmatprep.mubr.f32.mxu0 0.0
    %3224 = vmatmul.mubr.f32.gmra.mrb[0].mxu0 %v3142
    %v3225 = vpop.f32.mrb[0].mxu0
    %v3226 = vadd.f32 0.0, %v3225
    %v3227 = vpop.f32.mrb[0].mxu0
    %3228 = vdwg.mxu0
    %s3229 = scalar_lea.vmem %s7, 352
    %v3230 = vld [vmem:[%s3229] sm:$0xff]
    %v3231 = vld [vmem:[%s3229 + $0x8] sm:$0xff]
    %v3232 = vld [vmem:[%s3229 + $0x10] sm:$0xff]
    %v3233 = vld [vmem:[%s3229 + $0x18] sm:$0xff]
    %s3234 = scalar_lea.vmem %s7, 384
    %v3235 = vld [vmem:[%s3234] sm:$0xff]
    %v3236 = vld [vmem:[%s3234 + $0x8] sm:$0xff]
    %v3237 = vld [vmem:[%s3234 + $0x10] sm:$0xff]
    %v3238 = vld [vmem:[%s3234 + $0x18] sm:$0xff]
    %v3240 = vsel %vm74, %v2535, 0
    %v3243 = vsel %vm74, %v2540, 0
    %v3246 = vsel %vm74, %v2545, 0
    %v3249 = vsel %vm74, %v2550, 0
    %3251 = vmatprep.subr.mxu0 0.0
    %3252 = vmatpush1.msra.mxu0 %v3235
    %3253 = vmatprep.subr.mxu0 0.0
    %3254 = vmatpush1.msra.mxu0 %v3236
    %3255 = vmatprep.subr.mxu0 0.0
    %3256 = vmatpush1.msra.mxu0 %v3237
    %3257 = vmatprep.subr.mxu0 0.0
    %3258 = vmatpush1.msra.mxu0 %v3238
    %3259 = vmatprep.subr.mxu0 0.0
    %3260 = vmatpush1.msra.mxu0 0.0
    %3261 = vmatprep.subr.mxu0 0.0
    %3262 = vmatpush1.msra.mxu0 0.0
    %3263 = vmatprep.subr.mxu0 0.0
    %3264 = vmatpush1.msra.mxu0 0.0
    %3265 = vmatprep.subr.mxu0 0.0
    %3266 = vmatpush1.msra.mxu0 0.0
    %3267 = vmatprep.subr.mxu0 0.0
    %3268 = vmatpush1.msra.mxu0 0.0
    %3269 = vmatprep.subr.mxu0 0.0
    %3270 = vmatpush1.msra.mxu0 0.0
    %3271 = vmatprep.subr.mxu0 0.0
    %3272 = vmatpush1.msra.mxu0 0.0
    %3273 = vmatprep.subr.mxu0 0.0
    %3274 = vmatpush1.msra.mxu0 0.0
    %3275 = vmatprep.subr.mxu0 0.0
    %3276 = vmatpush1.msra.mxu0 0.0
    %3277 = vmatprep.subr.mxu0 0.0
    %3278 = vmatpush1.msra.mxu0 0.0
    %3279 = vmatprep.subr.mxu0 0.0
    %3280 = vmatpush1.msra.mxu0 0.0
    %3281 = vmatprep.subr.mxu0 0.0
    %3282 = vmatpush1.msra.mxu0 0.0
    %3283 = vmatprep.subr.mxu0 0.0
    %3284 = vmatpush1.msra.mxu0 0.0
    %3285 = vmatprep.subr.mxu0 0.0
    %3286 = vmatpush1.msra.mxu0 0.0
    %3287 = vmatprep.subr.mxu0 0.0
    %3288 = vmatpush1.msra.mxu0 0.0
    %3289 = vmatprep.subr.mxu0 0.0
    %3290 = vmatpush1.msra.mxu0 0.0
    %3291 = vmatprep.subr.mxu0 0.0
    %3292 = vmatpush1.msra.mxu0 0.0
    %3293 = vmatprep.subr.mxu0 0.0
    %3294 = vmatpush1.msra.mxu0 0.0
    %3295 = vmatprep.subr.mxu0 0.0
    %3296 = vmatpush1.msra.mxu0 0.0
    %3297 = vmatprep.subr.mxu0 0.0
    %3298 = vmatpush1.msra.mxu0 0.0
    %3299 = vmatprep.subr.mxu0 0.0
    %3300 = vmatpush1.msra.mxu0 0.0
    %3301 = vmatprep.subr.mxu0 0.0
    %3302 = vmatpush1.msra.mxu0 0.0
    %3303 = vmatprep.subr.mxu0 0.0
    %3304 = vmatpush1.msra.mxu0 0.0
    %3305 = vmatprep.subr.mxu0 0.0
    %3306 = vmatpush1.msra.mxu0 0.0
    %3307 = vmatprep.subr.mxu0 0.0
    %3308 = vmatpush1.msra.mxu0 0.0
    %3309 = vmatprep.subr.mxu0 0.0
    %3310 = vmatpush1.msra.mxu0 0.0
    %3311 = vmatprep.subr.mxu0 0.0
    %3312 = vmatpush1.msra.mxu0 0.0
    %3313 = vmatprep.subr.mxu0 0.0
    %3314 = vmatpush1.msra.mxu0 0.0
    %3315 = vmatprep.mubr.f32.mxu0 0.0
    %3316 = vmatmul.mubr.f32.gmra.mrb[0].mxu0 %v3240
    %v3317 = vpop.f32.mrb[0].mxu0
    %v3318 = vadd.f32 0.0, %v3317
    %v3319 = vpop.f32.mrb[0].mxu0
    %3320 = vmatprep.mubr.f32.mxu0 0.0
    %3321 = vmatmul.mubr.f32.gmra.mrb[0].mxu0 %v3243
    %v3322 = vpop.f32.mrb[0].mxu0
    %v3323 = vadd.f32 0.0, %v3322
    %v3324 = vpop.f32.mrb[0].mxu0
    %3325 = vmatprep.mubr.f32.mxu0 0.0
    %3326 = vmatmul.mubr.f32.gmra.mrb[0].mxu0 %v3246
    %v3327 = vpop.f32.mrb[0].mxu0
    %v3328 = vadd.f32 0.0, %v3327
    %v3329 = vpop.f32.mrb[0].mxu0
    %3330 = vmatprep.mubr.f32.mxu0 0.0
    %3331 = vmatmul.mubr.f32.gmra.mrb[0].mxu0 %v3249
    %v3332 = vpop.f32.mrb[0].mxu0
    %v3333 = vadd.f32 0.0, %v3332
    %v3334 = vpop.f32.mrb[0].mxu0
    %3335 = vdwg.mxu0
    %s3336 = scalar_lea.vmem %s7, 416
    %v3337 = vld [vmem:[%s3336] sm:$0xff]
    %v3338 = vld [vmem:[%s3336 + $0x8] sm:$0xff]
    %v3339 = vld [vmem:[%s3336 + $0x10] sm:$0xff]
    %v3340 = vld [vmem:[%s3336 + $0x18] sm:$0xff]
    %s3341 = scalar_lea.vmem %s7, 448
    %v3342 = vld [vmem:[%s3341] sm:$0xff]
    %v3343 = vld [vmem:[%s3341 + $0x8] sm:$0xff]
    %v3344 = vld [vmem:[%s3341 + $0x10] sm:$0xff]
    %v3345 = vld [vmem:[%s3341 + $0x18] sm:$0xff]
    %v3347 = vsel %vm74, %v2575, 0
    %v3350 = vsel %vm74, %v2580, 0
    %v3353 = vsel %vm74, %v2585, 0
    %v3356 = vsel %vm74, %v2590, 0
    %3358 = vmatprep.subr.mxu0 0.0
    %3359 = vmatpush1.msra.mxu0 %v3342
    %3360 = vmatprep.subr.mxu0 0.0
    %3361 = vmatpush1.msra.mxu0 %v3343
    %3362 = vmatprep.subr.mxu0 0.0
    %3363 = vmatpush1.msra.mxu0 %v3344
    %3364 = vmatprep.subr.mxu0 0.0
    %3365 = vmatpush1.msra.mxu0 %v3345
    %3366 = vmatprep.subr.mxu0 0.0
    %3367 = vmatpush1.msra.mxu0 0.0
    %3368 = vmatprep.subr.mxu0 0.0
    %3369 = vmatpush1.msra.mxu0 0.0
    %3370 = vmatprep.subr.mxu0 0.0
    %3371 = vmatpush1.msra.mxu0 0.0
    %3372 = vmatprep.subr.mxu0 0.0
    %3373 = vmatpush1.msra.mxu0 0.0
    %3374 = vmatprep.subr.mxu0 0.0
    %3375 = vmatpush1.msra.mxu0 0.0
    %3376 = vmatprep.subr.mxu0 0.0
    %3377 = vmatpush1.msra.mxu0 0.0
    %3378 = vmatprep.subr.mxu0 0.0
    %3379 = vmatpush1.msra.mxu0 0.0
    %3380 = vmatprep.subr.mxu0 0.0
    %3381 = vmatpush1.msra.mxu0 0.0
    %3382 = vmatprep.subr.mxu0 0.0
    %3383 = vmatpush1.msra.mxu0 0.0
    %3384 = vmatprep.subr.mxu0 0.0
    %3385 = vmatpush1.msra.mxu0 0.0
    %3386 = vmatprep.subr.mxu0 0.0
    %3387 = vmatpush1.msra.mxu0 0.0
    %3388 = vmatprep.subr.mxu0 0.0
    %3389 = vmatpush1.msra.mxu0 0.0
    %3390 = vmatprep.subr.mxu0 0.0
    %3391 = vmatpush1.msra.mxu0 0.0
    %3392 = vmatprep.subr.mxu0 0.0
    %3393 = vmatpush1.msra.mxu0 0.0
    %3394 = vmatprep.subr.mxu0 0.0
    %3395 = vmatpush1.msra.mxu0 0.0
    %3396 = vmatprep.subr.mxu0 0.0
    %3397 = vmatpush1.msra.mxu0 0.0
    %3398 = vmatprep.subr.mxu0 0.0
    %3399 = vmatpush1.msra.mxu0 0.0
    %3400 = vmatprep.subr.mxu0 0.0
    %3401 = vmatpush1.msra.mxu0 0.0
    %3402 = vmatprep.subr.mxu0 0.0
    %3403 = vmatpush1.msra.mxu0 0.0
    %3404 = vmatprep.subr.mxu0 0.0
    %3405 = vmatpush1.msra.mxu0 0.0
    %3406 = vmatprep.subr.mxu0 0.0
    %3407 = vmatpush1.msra.mxu0 0.0
    %3408 = vmatprep.subr.mxu0 0.0
    %3409 = vmatpush1.msra.mxu0 0.0
    %3410 = vmatprep.subr.mxu0 0.0
    %3411 = vmatpush1.msra.mxu0 0.0
    %3412 = vmatprep.subr.mxu0 0.0
    %3413 = vmatpush1.msra.mxu0 0.0
    %3414 = vmatprep.subr.mxu0 0.0
    %3415 = vmatpush1.msra.mxu0 0.0
    %3416 = vmatprep.subr.mxu0 0.0
    %3417 = vmatpush1.msra.mxu0 0.0
    %3418 = vmatprep.subr.mxu0 0.0
    %3419 = vmatpush1.msra.mxu0 0.0
    %3420 = vmatprep.subr.mxu0 0.0
    %3421 = vmatpush1.msra.mxu0 0.0
    %3422 = vmatprep.mubr.f32.mxu0 0.0
    %3423 = vmatmul.mubr.f32.gmra.mrb[0].mxu0 %v3347
    %v3424 = vpop.f32.mrb[0].mxu0
    %v3425 = vadd.f32 0.0, %v3424
    %v3426 = vpop.f32.mrb[0].mxu0
    %3427 = vmatprep.mubr.f32.mxu0 0.0
    %3428 = vmatmul.mubr.f32.gmra.mrb[0].mxu0 %v3350
    %v3429 = vpop.f32.mrb[0].mxu0
    %v3430 = vadd.f32 0.0, %v3429
    %v3431 = vpop.f32.mrb[0].mxu0
    %3432 = vmatprep.mubr.f32.mxu0 0.0
    %3433 = vmatmul.mubr.f32.gmra.mrb[0].mxu0 %v3353
    %v3434 = vpop.f32.mrb[0].mxu0
    %v3435 = vadd.f32 0.0, %v3434
    %v3436 = vpop.f32.mrb[0].mxu0
    %3437 = vmatprep.mubr.f32.mxu0 0.0
    %3438 = vmatmul.mubr.f32.gmra.mrb[0].mxu0 %v3356
    %v3439 = vpop.f32.mrb[0].mxu0
    %v3440 = vadd.f32 0.0, %v3439
    %v3441 = vpop.f32.mrb[0].mxu0
    %3442 = vdwg.mxu0
    %v3443 = vadd.f32 %v2044, %v2676
    %v3444 = vadd.f32 %v2045, %v2681
    %v3445 = vadd.f32 %v2046, %v2686
    %v3446 = vadd.f32 %v2047, %v2691
    %v3448 = vsel %vm74, %v2315, 0
    %v3451 = vsel %vm74, %v2320, 0
    %v3454 = vsel %vm74, %v2325, 0
    %v3457 = vsel %vm74, %v2330, 0
    %3459 = vmatprep.subr.mxu0 0.0
    %3460 = vmatpush1.msra.mxu0 %v2695
    %3461 = vmatprep.subr.mxu0 0.0
    %3462 = vmatpush1.msra.mxu0 %v2696
    %3463 = vmatprep.subr.mxu0 0.0
    %3464 = vmatpush1.msra.mxu0 %v2697
    %3465 = vmatprep.subr.mxu0 0.0
    %3466 = vmatpush1.msra.mxu0 %v2698
    %3467 = vmatprep.subr.mxu0 0.0
    %3468 = vmatpush1.msra.mxu0 0.0
    %3469 = vmatprep.subr.mxu0 0.0
    %3470 = vmatpush1.msra.mxu0 0.0
    %3471 = vmatprep.subr.mxu0 0.0
    %3472 = vmatpush1.msra.mxu0 0.0
    %3473 = vmatprep.subr.mxu0 0.0
    %3474 = vmatpush1.msra.mxu0 0.0
    %3475 = vmatprep.subr.mxu0 0.0
    %3476 = vmatpush1.msra.mxu0 0.0
    %3477 = vmatprep.subr.mxu0 0.0
    %3478 = vmatpush1.msra.mxu0 0.0
    %3479 = vmatprep.subr.mxu0 0.0
    %3480 = vmatpush1.msra.mxu0 0.0
    %3481 = vmatprep.subr.mxu0 0.0
    %3482 = vmatpush1.msra.mxu0 0.0
    %3483 = vmatprep.subr.mxu0 0.0
    %3484 = vmatpush1.msra.mxu0 0.0
    %3485 = vmatprep.subr.mxu0 0.0
    %3486 = vmatpush1.msra.mxu0 0.0
    %3487 = vmatprep.subr.mxu0 0.0
    %3488 = vmatpush1.msra.mxu0 0.0
    %3489 = vmatprep.subr.mxu0 0.0
    %3490 = vmatpush1.msra.mxu0 0.0
    %3491 = vmatprep.subr.mxu0 0.0
    %3492 = vmatpush1.msra.mxu0 0.0
    %3493 = vmatprep.subr.mxu0 0.0
    %3494 = vmatpush1.msra.mxu0 0.0
    %3495 = vmatprep.subr.mxu0 0.0
    %3496 = vmatpush1.msra.mxu0 0.0
    %3497 = vmatprep.subr.mxu0 0.0
    %3498 = vmatpush1.msra.mxu0 0.0
    %3499 = vmatprep.subr.mxu0 0.0
    %3500 = vmatpush1.msra.mxu0 0.0
    %3501 = vmatprep.subr.mxu0 0.0
    %3502 = vmatpush1.msra.mxu0 0.0
    %3503 = vmatprep.subr.mxu0 0.0
    %3504 = vmatpush1.msra.mxu0 0.0
    %3505 = vmatprep.subr.mxu0 0.0
    %3506 = vmatpush1.msra.mxu0 0.0
    %3507 = vmatprep.subr.mxu0 0.0
    %3508 = vmatpush1.msra.mxu0 0.0
    %3509 = vmatprep.subr.mxu0 0.0
    %3510 = vmatpush1.msra.mxu0 0.0
    %3511 = vmatprep.subr.mxu0 0.0
    %3512 = vmatpush1.msra.mxu0 0.0
    %3513 = vmatprep.subr.mxu0 0.0
    %3514 = vmatpush1.msra.mxu0 0.0
    %3515 = vmatprep.subr.mxu0 0.0
    %3516 = vmatpush1.msra.mxu0 0.0
    %3517 = vmatprep.subr.mxu0 0.0
    %3518 = vmatpush1.msra.mxu0 0.0
    %3519 = vmatprep.subr.mxu0 0.0
    %3520 = vmatpush1.msra.mxu0 0.0
    %3521 = vmatprep.subr.mxu0 0.0
    %3522 = vmatpush1.msra.mxu0 0.0
    %3523 = vmatprep.mubr.f32.mxu0 0.0
    %3524 = vmatmul.mubr.f32.gmra.mrb[0].mxu0 %v3448
    %v3525 = vpop.f32.mrb[0].mxu0
    %v3526 = vadd.f32 %v2783, %v3525
    %v3527 = vpop.f32.mrb[0].mxu0
    %3528 = vmatprep.mubr.f32.mxu0 0.0
    %3529 = vmatmul.mubr.f32.gmra.mrb[0].mxu0 %v3451
    %v3530 = vpop.f32.mrb[0].mxu0
    %v3531 = vadd.f32 %v2788, %v3530
    %v3532 = vpop.f32.mrb[0].mxu0
    %3533 = vmatprep.mubr.f32.mxu0 0.0
    %3534 = vmatmul.mubr.f32.gmra.mrb[0].mxu0 %v3454
    %v3535 = vpop.f32.mrb[0].mxu0
    %v3536 = vadd.f32 %v2793, %v3535
    %v3537 = vpop.f32.mrb[0].mxu0
    %3538 = vmatprep.mubr.f32.mxu0 0.0
    %3539 = vmatmul.mubr.f32.gmra.mrb[0].mxu0 %v3457
    %v3540 = vpop.f32.mrb[0].mxu0
    %v3541 = vadd.f32 %v2798, %v3540
    %v3542 = vpop.f32.mrb[0].mxu0
    %3543 = vdwg.mxu0
    %v3545 = vsel %vm74, %v2355, 0
    %v3548 = vsel %vm74, %v2360, 0
    %v3551 = vsel %vm74, %v2365, 0
    %v3554 = vsel %vm74, %v2370, 0
    %3556 = vmatprep.subr.mxu0 0.0
    %3557 = vmatpush1.msra.mxu0 %v2802
    %3558 = vmatprep.subr.mxu0 0.0
    %3559 = vmatpush1.msra.mxu0 %v2803
    %3560 = vmatprep.subr.mxu0 0.0
    %3561 = vmatpush1.msra.mxu0 %v2804
    %3562 = vmatprep.subr.mxu0 0.0
    %3563 = vmatpush1.msra.mxu0 %v2805
    %3564 = vmatprep.subr.mxu0 0.0
    %3565 = vmatpush1.msra.mxu0 0.0
    %3566 = vmatprep.subr.mxu0 0.0
    %3567 = vmatpush1.msra.mxu0 0.0
    %3568 = vmatprep.subr.mxu0 0.0
    %3569 = vmatpush1.msra.mxu0 0.0
    %3570 = vmatprep.subr.mxu0 0.0
    %3571 = vmatpush1.msra.mxu0 0.0
    %3572 = vmatprep.subr.mxu0 0.0
    %3573 = vmatpush1.msra.mxu0 0.0
    %3574 = vmatprep.subr.mxu0 0.0
    %3575 = vmatpush1.msra.mxu0 0.0
    %3576 = vmatprep.subr.mxu0 0.0
    %3577 = vmatpush1.msra.mxu0 0.0
    %3578 = vmatprep.subr.mxu0 0.0
    %3579 = vmatpush1.msra.mxu0 0.0
    %3580 = vmatprep.subr.mxu0 0.0
    %3581 = vmatpush1.msra.mxu0 0.0
    %3582 = vmatprep.subr.mxu0 0.0
    %3583 = vmatpush1.msra.mxu0 0.0
    %3584 = vmatprep.subr.mxu0 0.0
    %3585 = vmatpush1.msra.mxu0 0.0
    %3586 = vmatprep.subr.mxu0 0.0
    %3587 = vmatpush1.msra.mxu0 0.0
    %3588 = vmatprep.subr.mxu0 0.0
    %3589 = vmatpush1.msra.mxu0 0.0
    %3590 = vmatprep.subr.mxu0 0.0
    %3591 = vmatpush1.msra.mxu0 0.0
    %3592 = vmatprep.subr.mxu0 0.0
    %3593 = vmatpush1.msra.mxu0 0.0
    %3594 = vmatprep.subr.mxu0 0.0
    %3595 = vmatpush1.msra.mxu0 0.0
    %3596 = vmatprep.subr.mxu0 0.0
    %3597 = vmatpush1.msra.mxu0 0.0
    %3598 = vmatprep.subr.mxu0 0.0
    %3599 = vmatpush1.msra.mxu0 0.0
    %3600 = vmatprep.subr.mxu0 0.0
    %3601 = vmatpush1.msra.mxu0 0.0
    %3602 = vmatprep.subr.mxu0 0.0
    %3603 = vmatpush1.msra.mxu0 0.0
    %3604 = vmatprep.subr.mxu0 0.0
    %3605 = vmatpush1.msra.mxu0 0.0
    %3606 = vmatprep.subr.mxu0 0.0
    %3607 = vmatpush1.msra.mxu0 0.0
    %3608 = vmatprep.subr.mxu0 0.0
    %3609 = vmatpush1.msra.mxu0 0.0
    %3610 = vmatprep.subr.mxu0 0.0
    %3611 = vmatpush1.msra.mxu0 0.0
    %3612 = vmatprep.subr.mxu0 0.0
    %3613 = vmatpush1.msra.mxu0 0.0
    %3614 = vmatprep.subr.mxu0 0.0
    %3615 = vmatpush1.msra.mxu0 0.0
    %3616 = vmatprep.subr.mxu0 0.0
    %3617 = vmatpush1.msra.mxu0 0.0
    %3618 = vmatprep.subr.mxu0 0.0
    %3619 = vmatpush1.msra.mxu0 0.0
    %3620 = vmatprep.mubr.f32.mxu0 0.0
    %3621 = vmatmul.mubr.f32.gmra.mrb[0].mxu0 %v3545
    %v3622 = vpop.f32.mrb[0].mxu0
    %v3623 = vadd.f32 %v2890, %v3622
    %v3624 = vpop.f32.mrb[0].mxu0
    %3625 = vmatprep.mubr.f32.mxu0 0.0
    %3626 = vmatmul.mubr.f32.gmra.mrb[0].mxu0 %v3548
    %v3627 = vpop.f32.mrb[0].mxu0
    %v3628 = vadd.f32 %v2895, %v3627
    %v3629 = vpop.f32.mrb[0].mxu0
    %3630 = vmatprep.mubr.f32.mxu0 0.0
    %3631 = vmatmul.mubr.f32.gmra.mrb[0].mxu0 %v3551
    %v3632 = vpop.f32.mrb[0].mxu0
    %v3633 = vadd.f32 %v2900, %v3632
    %v3634 = vpop.f32.mrb[0].mxu0
    %3635 = vmatprep.mubr.f32.mxu0 0.0
    %3636 = vmatmul.mubr.f32.gmra.mrb[0].mxu0 %v3554
    %v3637 = vpop.f32.mrb[0].mxu0
    %v3638 = vadd.f32 %v2905, %v3637
    %v3639 = vpop.f32.mrb[0].mxu0
    %3640 = vdwg.mxu0
    %v3642 = vsel %vm74, %v2395, 0
    %v3645 = vsel %vm74, %v2400, 0
    %v3648 = vsel %vm74, %v2405, 0
    %v3651 = vsel %vm74, %v2410, 0
    %3653 = vmatprep.subr.mxu0 0.0
    %3654 = vmatpush1.msra.mxu0 %v2909
    %3655 = vmatprep.subr.mxu0 0.0
    %3656 = vmatpush1.msra.mxu0 %v2910
    %3657 = vmatprep.subr.mxu0 0.0
    %3658 = vmatpush1.msra.mxu0 %v2911
    %3659 = vmatprep.subr.mxu0 0.0
    %3660 = vmatpush1.msra.mxu0 %v2912
    %3661 = vmatprep.subr.mxu0 0.0
    %3662 = vmatpush1.msra.mxu0 0.0
    %3663 = vmatprep.subr.mxu0 0.0
    %3664 = vmatpush1.msra.mxu0 0.0
    %3665 = vmatprep.subr.mxu0 0.0
    %3666 = vmatpush1.msra.mxu0 0.0
    %3667 = vmatprep.subr.mxu0 0.0
    %3668 = vmatpush1.msra.mxu0 0.0
    %3669 = vmatprep.subr.mxu0 0.0
    %3670 = vmatpush1.msra.mxu0 0.0
    %3671 = vmatprep.subr.mxu0 0.0
    %3672 = vmatpush1.msra.mxu0 0.0
    %3673 = vmatprep.subr.mxu0 0.0
    %3674 = vmatpush1.msra.mxu0 0.0
    %3675 = vmatprep.subr.mxu0 0.0
    %3676 = vmatpush1.msra.mxu0 0.0
    %3677 = vmatprep.subr.mxu0 0.0
    %3678 = vmatpush1.msra.mxu0 0.0
    %3679 = vmatprep.subr.mxu0 0.0
    %3680 = vmatpush1.msra.mxu0 0.0
    %3681 = vmatprep.subr.mxu0 0.0
    %3682 = vmatpush1.msra.mxu0 0.0
    %3683 = vmatprep.subr.mxu0 0.0
    %3684 = vmatpush1.msra.mxu0 0.0
    %3685 = vmatprep.subr.mxu0 0.0
    %3686 = vmatpush1.msra.mxu0 0.0
    %3687 = vmatprep.subr.mxu0 0.0
    %3688 = vmatpush1.msra.mxu0 0.0
    %3689 = vmatprep.subr.mxu0 0.0
    %3690 = vmatpush1.msra.mxu0 0.0
    %3691 = vmatprep.subr.mxu0 0.0
    %3692 = vmatpush1.msra.mxu0 0.0
    %3693 = vmatprep.subr.mxu0 0.0
    %3694 = vmatpush1.msra.mxu0 0.0
    %3695 = vmatprep.subr.mxu0 0.0
    %3696 = vmatpush1.msra.mxu0 0.0
    %3697 = vmatprep.subr.mxu0 0.0
    %3698 = vmatpush1.msra.mxu0 0.0
    %3699 = vmatprep.subr.mxu0 0.0
    %3700 = vmatpush1.msra.mxu0 0.0
    %3701 = vmatprep.subr.mxu0 0.0
    %3702 = vmatpush1.msra.mxu0 0.0
    %3703 = vmatprep.subr.mxu0 0.0
    %3704 = vmatpush1.msra.mxu0 0.0
    %3705 = vmatprep.subr.mxu0 0.0
    %3706 = vmatpush1.msra.mxu0 0.0
    %3707 = vmatprep.subr.mxu0 0.0
    %3708 = vmatpush1.msra.mxu0 0.0
    %3709 = vmatprep.subr.mxu0 0.0
    %3710 = vmatpush1.msra.mxu0 0.0
    %3711 = vmatprep.subr.mxu0 0.0
    %3712 = vmatpush1.msra.mxu0 0.0
    %3713 = vmatprep.subr.mxu0 0.0
    %3714 = vmatpush1.msra.mxu0 0.0
    %3715 = vmatprep.subr.mxu0 0.0
    %3716 = vmatpush1.msra.mxu0 0.0
    %3717 = vmatprep.mubr.f32.mxu0 0.0
    %3718 = vmatmul.mubr.f32.gmra.mrb[0].mxu0 %v3642
    %v3719 = vpop.f32.mrb[0].mxu0
    %v3720 = vadd.f32 %v2997, %v3719
    %v3721 = vpop.f32.mrb[0].mxu0
    %3722 = vmatprep.mubr.f32.mxu0 0.0
    %3723 = vmatmul.mubr.f32.gmra.mrb[0].mxu0 %v3645
    %v3724 = vpop.f32.mrb[0].mxu0
    %v3725 = vadd.f32 %v3002, %v3724
    %v3726 = vpop.f32.mrb[0].mxu0
    %3727 = vmatprep.mubr.f32.mxu0 0.0
    %3728 = vmatmul.mubr.f32.gmra.mrb[0].mxu0 %v3648
    %v3729 = vpop.f32.mrb[0].mxu0
    %v3730 = vadd.f32 %v3007, %v3729
    %v3731 = vpop.f32.mrb[0].mxu0
    %3732 = vmatprep.mubr.f32.mxu0 0.0
    %3733 = vmatmul.mubr.f32.gmra.mrb[0].mxu0 %v3651
    %v3734 = vpop.f32.mrb[0].mxu0
    %v3735 = vadd.f32 %v3012, %v3734
    %v3736 = vpop.f32.mrb[0].mxu0
    %3737 = vdwg.mxu0
    %v3739 = vsel %vm74, %v2435, 0
    %v3742 = vsel %vm74, %v2440, 0
    %v3745 = vsel %vm74, %v2445, 0
    %v3748 = vsel %vm74, %v2450, 0
    %3750 = vmatprep.subr.mxu0 0.0
    %3751 = vmatpush1.msra.mxu0 %v3016
    %3752 = vmatprep.subr.mxu0 0.0
    %3753 = vmatpush1.msra.mxu0 %v3017
    %3754 = vmatprep.subr.mxu0 0.0
    %3755 = vmatpush1.msra.mxu0 %v3018
    %3756 = vmatprep.subr.mxu0 0.0
    %3757 = vmatpush1.msra.mxu0 %v3019
    %3758 = vmatprep.subr.mxu0 0.0
    %3759 = vmatpush1.msra.mxu0 0.0
    %3760 = vmatprep.subr.mxu0 0.0
    %3761 = vmatpush1.msra.mxu0 0.0
    %3762 = vmatprep.subr.mxu0 0.0
    %3763 = vmatpush1.msra.mxu0 0.0
    %3764 = vmatprep.subr.mxu0 0.0
    %3765 = vmatpush1.msra.mxu0 0.0
    %3766 = vmatprep.subr.mxu0 0.0
    %3767 = vmatpush1.msra.mxu0 0.0
    %3768 = vmatprep.subr.mxu0 0.0
    %3769 = vmatpush1.msra.mxu0 0.0
    %3770 = vmatprep.subr.mxu0 0.0
    %3771 = vmatpush1.msra.mxu0 0.0
    %3772 = vmatprep.subr.mxu0 0.0
    %3773 = vmatpush1.msra.mxu0 0.0
    %3774 = vmatprep.subr.mxu0 0.0
    %3775 = vmatpush1.msra.mxu0 0.0
    %3776 = vmatprep.subr.mxu0 0.0
    %3777 = vmatpush1.msra.mxu0 0.0
    %3778 = vmatprep.subr.mxu0 0.0
    %3779 = vmatpush1.msra.mxu0 0.0
    %3780 = vmatprep.subr.mxu0 0.0
    %3781 = vmatpush1.msra.mxu0 0.0
    %3782 = vmatprep.subr.mxu0 0.0
    %3783 = vmatpush1.msra.mxu0 0.0
    %3784 = vmatprep.subr.mxu0 0.0
    %3785 = vmatpush1.msra.mxu0 0.0
    %3786 = vmatprep.subr.mxu0 0.0
    %3787 = vmatpush1.msra.mxu0 0.0
    %3788 = vmatprep.subr.mxu0 0.0
    %3789 = vmatpush1.msra.mxu0 0.0
    %3790 = vmatprep.subr.mxu0 0.0
    %3791 = vmatpush1.msra.mxu0 0.0
    %3792 = vmatprep.subr.mxu0 0.0
    %3793 = vmatpush1.msra.mxu0 0.0
    %3794 = vmatprep.subr.mxu0 0.0
    %3795 = vmatpush1.msra.mxu0 0.0
    %3796 = vmatprep.subr.mxu0 0.0
    %3797 = vmatpush1.msra.mxu0 0.0
    %3798 = vmatprep.subr.mxu0 0.0
    %3799 = vmatpush1.msra.mxu0 0.0
    %3800 = vmatprep.subr.mxu0 0.0
    %3801 = vmatpush1.msra.mxu0 0.0
    %3802 = vmatprep.subr.mxu0 0.0
    %3803 = vmatpush1.msra.mxu0 0.0
    %3804 = vmatprep.subr.mxu0 0.0
    %3805 = vmatpush1.msra.mxu0 0.0
    %3806 = vmatprep.subr.mxu0 0.0
    %3807 = vmatpush1.msra.mxu0 0.0
    %3808 = vmatprep.subr.mxu0 0.0
    %3809 = vmatpush1.msra.mxu0 0.0
    %3810 = vmatprep.subr.mxu0 0.0
    %3811 = vmatpush1.msra.mxu0 0.0
    %3812 = vmatprep.subr.mxu0 0.0
    %3813 = vmatpush1.msra.mxu0 0.0
    %3814 = vmatprep.mubr.f32.mxu0 0.0
    %3815 = vmatmul.mubr.f32.gmra.mrb[0].mxu0 %v3739
    %v3816 = vpop.f32.mrb[0].mxu0
    %v3817 = vadd.f32 %v3104, %v3816
    %v3818 = vpop.f32.mrb[0].mxu0
    %3819 = vmatprep.mubr.f32.mxu0 0.0
    %3820 = vmatmul.mubr.f32.gmra.mrb[0].mxu0 %v3742
    %v3821 = vpop.f32.mrb[0].mxu0
    %v3822 = vadd.f32 %v3109, %v3821
    %v3823 = vpop.f32.mrb[0].mxu0
    %3824 = vmatprep.mubr.f32.mxu0 0.0
    %3825 = vmatmul.mubr.f32.gmra.mrb[0].mxu0 %v3745
    %v3826 = vpop.f32.mrb[0].mxu0
    %v3827 = vadd.f32 %v3114, %v3826
    %v3828 = vpop.f32.mrb[0].mxu0
    %3829 = vmatprep.mubr.f32.mxu0 0.0
    %3830 = vmatmul.mubr.f32.gmra.mrb[0].mxu0 %v3748
    %v3831 = vpop.f32.mrb[0].mxu0
    %v3832 = vadd.f32 %v3119, %v3831
    %v3833 = vpop.f32.mrb[0].mxu0
    %3834 = vdwg.mxu0
    %v3836 = vsel %vm74, %v2475, 0
    %v3839 = vsel %vm74, %v2480, 0
    %v3842 = vsel %vm74, %v2485, 0
    %v3845 = vsel %vm74, %v2490, 0
    %3847 = vmatprep.subr.mxu0 0.0
    %3848 = vmatpush1.msra.mxu0 %v3123
    %3849 = vmatprep.subr.mxu0 0.0
    %3850 = vmatpush1.msra.mxu0 %v3124
    %3851 = vmatprep.subr.mxu0 0.0
    %3852 = vmatpush1.msra.mxu0 %v3125
    %3853 = vmatprep.subr.mxu0 0.0
    %3854 = vmatpush1.msra.mxu0 %v3126
    %3855 = vmatprep.subr.mxu0 0.0
    %3856 = vmatpush1.msra.mxu0 0.0
    %3857 = vmatprep.subr.mxu0 0.0
    %3858 = vmatpush1.msra.mxu0 0.0
    %3859 = vmatprep.subr.mxu0 0.0
    %3860 = vmatpush1.msra.mxu0 0.0
    %3861 = vmatprep.subr.mxu0 0.0
    %3862 = vmatpush1.msra.mxu0 0.0
    %3863 = vmatprep.subr.mxu0 0.0
    %3864 = vmatpush1.msra.mxu0 0.0
    %3865 = vmatprep.subr.mxu0 0.0
    %3866 = vmatpush1.msra.mxu0 0.0
    %3867 = vmatprep.subr.mxu0 0.0
    %3868 = vmatpush1.msra.mxu0 0.0
    %3869 = vmatprep.subr.mxu0 0.0
    %3870 = vmatpush1.msra.mxu0 0.0
    %3871 = vmatprep.subr.mxu0 0.0
    %3872 = vmatpush1.msra.mxu0 0.0
    %3873 = vmatprep.subr.mxu0 0.0
    %3874 = vmatpush1.msra.mxu0 0.0
    %3875 = vmatprep.subr.mxu0 0.0
    %3876 = vmatpush1.msra.mxu0 0.0
    %3877 = vmatprep.subr.mxu0 0.0
    %3878 = vmatpush1.msra.mxu0 0.0
    %3879 = vmatprep.subr.mxu0 0.0
    %3880 = vmatpush1.msra.mxu0 0.0
    %3881 = vmatprep.subr.mxu0 0.0
    %3882 = vmatpush1.msra.mxu0 0.0
    %3883 = vmatprep.subr.mxu0 0.0
    %3884 = vmatpush1.msra.mxu0 0.0
    %3885 = vmatprep.subr.mxu0 0.0
    %3886 = vmatpush1.msra.mxu0 0.0
    %3887 = vmatprep.subr.mxu0 0.0
    %3888 = vmatpush1.msra.mxu0 0.0
    %3889 = vmatprep.subr.mxu0 0.0
    %3890 = vmatpush1.msra.mxu0 0.0
    %3891 = vmatprep.subr.mxu0 0.0
    %3892 = vmatpush1.msra.mxu0 0.0
    %3893 = vmatprep.subr.mxu0 0.0
    %3894 = vmatpush1.msra.mxu0 0.0
    %3895 = vmatprep.subr.mxu0 0.0
    %3896 = vmatpush1.msra.mxu0 0.0
    %3897 = vmatprep.subr.mxu0 0.0
    %3898 = vmatpush1.msra.mxu0 0.0
    %3899 = vmatprep.subr.mxu0 0.0
    %3900 = vmatpush1.msra.mxu0 0.0
    %3901 = vmatprep.subr.mxu0 0.0
    %3902 = vmatpush1.msra.mxu0 0.0
    %3903 = vmatprep.subr.mxu0 0.0
    %3904 = vmatpush1.msra.mxu0 0.0
    %3905 = vmatprep.subr.mxu0 0.0
    %3906 = vmatpush1.msra.mxu0 0.0
    %3907 = vmatprep.subr.mxu0 0.0
    %3908 = vmatpush1.msra.mxu0 0.0
    %3909 = vmatprep.subr.mxu0 0.0
    %3910 = vmatpush1.msra.mxu0 0.0
    %3911 = vmatprep.mubr.f32.mxu0 0.0
    %3912 = vmatmul.mubr.f32.gmra.mrb[0].mxu0 %v3836
    %v3913 = vpop.f32.mrb[0].mxu0
    %v3914 = vadd.f32 %v3211, %v3913
    %v3915 = vpop.f32.mrb[0].mxu0
    %3916 = vmatprep.mubr.f32.mxu0 0.0
    %3917 = vmatmul.mubr.f32.gmra.mrb[0].mxu0 %v3839
    %v3918 = vpop.f32.mrb[0].mxu0
    %v3919 = vadd.f32 %v3216, %v3918
    %v3920 = vpop.f32.mrb[0].mxu0
    %3921 = vmatprep.mubr.f32.mxu0 0.0
    %3922 = vmatmul.mubr.f32.gmra.mrb[0].mxu0 %v3842
    %v3923 = vpop.f32.mrb[0].mxu0
    %v3924 = vadd.f32 %v3221, %v3923
    %v3925 = vpop.f32.mrb[0].mxu0
    %3926 = vmatprep.mubr.f32.mxu0 0.0
    %3927 = vmatmul.mubr.f32.gmra.mrb[0].mxu0 %v3845
    %v3928 = vpop.f32.mrb[0].mxu0
    %v3929 = vadd.f32 %v3226, %v3928
    %v3930 = vpop.f32.mrb[0].mxu0
    %3931 = vdwg.mxu0
    %v3933 = vsel %vm74, %v2515, 0
    %v3936 = vsel %vm74, %v2520, 0
    %v3939 = vsel %vm74, %v2525, 0
    %v3942 = vsel %vm74, %v2530, 0
    %3944 = vmatprep.subr.mxu0 0.0
    %3945 = vmatpush1.msra.mxu0 %v3230
    %3946 = vmatprep.subr.mxu0 0.0
    %3947 = vmatpush1.msra.mxu0 %v3231
    %3948 = vmatprep.subr.mxu0 0.0
    %3949 = vmatpush1.msra.mxu0 %v3232
    %3950 = vmatprep.subr.mxu0 0.0
    %3951 = vmatpush1.msra.mxu0 %v3233
    %3952 = vmatprep.subr.mxu0 0.0
    %3953 = vmatpush1.msra.mxu0 0.0
    %3954 = vmatprep.subr.mxu0 0.0
    %3955 = vmatpush1.msra.mxu0 0.0
    %3956 = vmatprep.subr.mxu0 0.0
    %3957 = vmatpush1.msra.mxu0 0.0
    %3958 = vmatprep.subr.mxu0 0.0
    %3959 = vmatpush1.msra.mxu0 0.0
    %3960 = vmatprep.subr.mxu0 0.0
    %3961 = vmatpush1.msra.mxu0 0.0
    %3962 = vmatprep.subr.mxu0 0.0
    %3963 = vmatpush1.msra.mxu0 0.0
    %3964 = vmatprep.subr.mxu0 0.0
    %3965 = vmatpush1.msra.mxu0 0.0
    %3966 = vmatprep.subr.mxu0 0.0
    %3967 = vmatpush1.msra.mxu0 0.0
    %3968 = vmatprep.subr.mxu0 0.0
    %3969 = vmatpush1.msra.mxu0 0.0
    %3970 = vmatprep.subr.mxu0 0.0
    %3971 = vmatpush1.msra.mxu0 0.0
    %3972 = vmatprep.subr.mxu0 0.0
    %3973 = vmatpush1.msra.mxu0 0.0
    %3974 = vmatprep.subr.mxu0 0.0
    %3975 = vmatpush1.msra.mxu0 0.0
    %3976 = vmatprep.subr.mxu0 0.0
    %3977 = vmatpush1.msra.mxu0 0.0
    %3978 = vmatprep.subr.mxu0 0.0
    %3979 = vmatpush1.msra.mxu0 0.0
    %3980 = vmatprep.subr.mxu0 0.0
    %3981 = vmatpush1.msra.mxu0 0.0
    %3982 = vmatprep.subr.mxu0 0.0
    %3983 = vmatpush1.msra.mxu0 0.0
    %3984 = vmatprep.subr.mxu0 0.0
    %3985 = vmatpush1.msra.mxu0 0.0
    %3986 = vmatprep.subr.mxu0 0.0
    %3987 = vmatpush1.msra.mxu0 0.0
    %3988 = vmatprep.subr.mxu0 0.0
    %3989 = vmatpush1.msra.mxu0 0.0
    %3990 = vmatprep.subr.mxu0 0.0
    %3991 = vmatpush1.msra.mxu0 0.0
    %3992 = vmatprep.subr.mxu0 0.0
    %3993 = vmatpush1.msra.mxu0 0.0
    %3994 = vmatprep.subr.mxu0 0.0
    %3995 = vmatpush1.msra.mxu0 0.0
    %3996 = vmatprep.subr.mxu0 0.0
    %3997 = vmatpush1.msra.mxu0 0.0
    %3998 = vmatprep.subr.mxu0 0.0
    %3999 = vmatpush1.msra.mxu0 0.0
    %4000 = vmatprep.subr.mxu0 0.0
    %4001 = vmatpush1.msra.mxu0 0.0
    %4002 = vmatprep.subr.mxu0 0.0
    %4003 = vmatpush1.msra.mxu0 0.0
    %4004 = vmatprep.subr.mxu0 0.0
    %4005 = vmatpush1.msra.mxu0 0.0
    %4006 = vmatprep.subr.mxu0 0.0
    %4007 = vmatpush1.msra.mxu0 0.0
    %4008 = vmatprep.mubr.f32.mxu0 0.0
    %4009 = vmatmul.mubr.f32.gmra.mrb[0].mxu0 %v3933
    %v4010 = vpop.f32.mrb[0].mxu0
    %v4011 = vadd.f32 %v3318, %v4010
    %v4012 = vpop.f32.mrb[0].mxu0
    %4013 = vmatprep.mubr.f32.mxu0 0.0
    %4014 = vmatmul.mubr.f32.gmra.mrb[0].mxu0 %v3936
    %v4015 = vpop.f32.mrb[0].mxu0
    %v4016 = vadd.f32 %v3323, %v4015
    %v4017 = vpop.f32.mrb[0].mxu0
    %4018 = vmatprep.mubr.f32.mxu0 0.0
    %4019 = vmatmul.mubr.f32.gmra.mrb[0].mxu0 %v3939
    %v4020 = vpop.f32.mrb[0].mxu0
    %v4021 = vadd.f32 %v3328, %v4020
    %v4022 = vpop.f32.mrb[0].mxu0
    %4023 = vmatprep.mubr.f32.mxu0 0.0
    %4024 = vmatmul.mubr.f32.gmra.mrb[0].mxu0 %v3942
    %v4025 = vpop.f32.mrb[0].mxu0
    %v4026 = vadd.f32 %v3333, %v4025
    %v4027 = vpop.f32.mrb[0].mxu0
    %4028 = vdwg.mxu0
    %v4030 = vsel %vm74, %v2555, 0
    %v4033 = vsel %vm74, %v2560, 0
    %v4036 = vsel %vm74, %v2565, 0
    %v4039 = vsel %vm74, %v2570, 0
    %4041 = vmatprep.subr.mxu0 0.0
    %4042 = vmatpush1.msra.mxu0 %v3337
    %4043 = vmatprep.subr.mxu0 0.0
    %4044 = vmatpush1.msra.mxu0 %v3338
    %4045 = vmatprep.subr.mxu0 0.0
    %4046 = vmatpush1.msra.mxu0 %v3339
    %4047 = vmatprep.subr.mxu0 0.0
    %4048 = vmatpush1.msra.mxu0 %v3340
    %4049 = vmatprep.subr.mxu0 0.0
    %4050 = vmatpush1.msra.mxu0 0.0
    %4051 = vmatprep.subr.mxu0 0.0
    %4052 = vmatpush1.msra.mxu0 0.0
    %4053 = vmatprep.subr.mxu0 0.0
    %4054 = vmatpush1.msra.mxu0 0.0
    %4055 = vmatprep.subr.mxu0 0.0
    %4056 = vmatpush1.msra.mxu0 0.0
    %4057 = vmatprep.subr.mxu0 0.0
    %4058 = vmatpush1.msra.mxu0 0.0
    %4059 = vmatprep.subr.mxu0 0.0
    %4060 = vmatpush1.msra.mxu0 0.0
    %4061 = vmatprep.subr.mxu0 0.0
    %4062 = vmatpush1.msra.mxu0 0.0
    %4063 = vmatprep.subr.mxu0 0.0
    %4064 = vmatpush1.msra.mxu0 0.0
    %4065 = vmatprep.subr.mxu0 0.0
    %4066 = vmatpush1.msra.mxu0 0.0
    %4067 = vmatprep.subr.mxu0 0.0
    %4068 = vmatpush1.msra.mxu0 0.0
    %4069 = vmatprep.subr.mxu0 0.0
    %4070 = vmatpush1.msra.mxu0 0.0
    %4071 = vmatprep.subr.mxu0 0.0
    %4072 = vmatpush1.msra.mxu0 0.0
    %4073 = vmatprep.subr.mxu0 0.0
    %4074 = vmatpush1.msra.mxu0 0.0
    %4075 = vmatprep.subr.mxu0 0.0
    %4076 = vmatpush1.msra.mxu0 0.0
    %4077 = vmatprep.subr.mxu0 0.0
    %4078 = vmatpush1.msra.mxu0 0.0
    %4079 = vmatprep.subr.mxu0 0.0
    %4080 = vmatpush1.msra.mxu0 0.0
    %4081 = vmatprep.subr.mxu0 0.0
    %4082 = vmatpush1.msra.mxu0 0.0
    %4083 = vmatprep.subr.mxu0 0.0
    %4084 = vmatpush1.msra.mxu0 0.0
    %4085 = vmatprep.subr.mxu0 0.0
    %4086 = vmatpush1.msra.mxu0 0.0
    %4087 = vmatprep.subr.mxu0 0.0
    %4088 = vmatpush1.msra.mxu0 0.0
    %4089 = vmatprep.subr.mxu0 0.0
    %4090 = vmatpush1.msra.mxu0 0.0
    %4091 = vmatprep.subr.mxu0 0.0
    %4092 = vmatpush1.msra.mxu0 0.0
    %4093 = vmatprep.subr.mxu0 0.0
    %4094 = vmatpush1.msra.mxu0 0.0
    %4095 = vmatprep.subr.mxu0 0.0
    %4096 = vmatpush1.msra.mxu0 0.0
    %4097 = vmatprep.subr.mxu0 0.0
    %4098 = vmatpush1.msra.mxu0 0.0
    %4099 = vmatprep.subr.mxu0 0.0
    %4100 = vmatpush1.msra.mxu0 0.0
    %4101 = vmatprep.subr.mxu0 0.0
    %4102 = vmatpush1.msra.mxu0 0.0
    %4103 = vmatprep.subr.mxu0 0.0
    %4104 = vmatpush1.msra.mxu0 0.0
    %4105 = vmatprep.mubr.f32.mxu0 0.0
    %4106 = vmatmul.mubr.f32.gmra.mrb[0].mxu0 %v4030
    %v4107 = vpop.f32.mrb[0].mxu0
    %v4108 = vadd.f32 %v3425, %v4107
    %v4109 = vpop.f32.mrb[0].mxu0
    %4110 = vmatprep.mubr.f32.mxu0 0.0
    %4111 = vmatmul.mubr.f32.gmra.mrb[0].mxu0 %v4033
    %v4112 = vpop.f32.mrb[0].mxu0
    %v4113 = vadd.f32 %v3430, %v4112
    %v4114 = vpop.f32.mrb[0].mxu0
    %4115 = vmatprep.mubr.f32.mxu0 0.0
    %4116 = vmatmul.mubr.f32.gmra.mrb[0].mxu0 %v4036
    %v4117 = vpop.f32.mrb[0].mxu0
    %v4118 = vadd.f32 %v3435, %v4117
    %v4119 = vpop.f32.mrb[0].mxu0
    %4120 = vmatprep.mubr.f32.mxu0 0.0
    %4121 = vmatmul.mubr.f32.gmra.mrb[0].mxu0 %v4039
    %v4122 = vpop.f32.mrb[0].mxu0
    %v4123 = vadd.f32 %v3440, %v4122
    %v4124 = vpop.f32.mrb[0].mxu0
    %4125 = vdwg.mxu0
    %v4126 = vadd.f32 %v3443, %v3526
    %v4127 = vadd.f32 %v3444, %v3531
    %v4128 = vadd.f32 %v3445, %v3536
    %v4129 = vadd.f32 %v3446, %v3541
    %v4130 = vadd.f32 %v3623, %v3720
    %v4131 = vadd.f32 %v3628, %v3725
    %v4132 = vadd.f32 %v3633, %v3730
    %v4133 = vadd.f32 %v3638, %v3735
    %v4134 = vadd.f32 %v3817, %v3914
    %v4135 = vadd.f32 %v3822, %v3919
    %v4136 = vadd.f32 %v3827, %v3924
    %v4137 = vadd.f32 %v3832, %v3929
    %v4138 = vadd.f32 %v4011, %v4108
    %v4139 = vadd.f32 %v4016, %v4113
    %v4140 = vadd.f32 %v4021, %v4118
    %v4141 = vadd.f32 %v4026, %v4123
    %v4142 = vadd.f32 %v4126, %v4130
    %v4143 = vadd.f32 %v4127, %v4131
    %v4144 = vadd.f32 %v4128, %v4132
    %v4145 = vadd.f32 %v4129, %v4133
    %v4146 = vadd.f32 %v4134, %v4138
    %v4147 = vadd.f32 %v4135, %v4139
    %v4148 = vadd.f32 %v4136, %v4140
    %v4149 = vadd.f32 %v4137, %v4141
    %v4150 = vadd.f32 %v4142, %v4146
    %v4151 = vadd.f32 %v4143, %v4147
    %v4152 = vadd.f32 %v4144, %v4148
    %v4153 = vadd.f32 %v4145, %v4149
    %v4154 = vadd.f32 %v176, %v350
    %v4155 = vadd.f32 %v177, %v351
    %v4156 = vadd.f32 %v178, %v352
    %v4157 = vadd.f32 %v179, %v353
    %v4158 = vadd.f32 %v4154, %v4150
    %v4159 = vadd.f32 %v4155, %v4151
    %v4160 = vadd.f32 %v4156, %v4152
    %v4161 = vadd.f32 %v4157, %v4153
    %v4162 = vsel %vm74, %v4158, 0.0
    %4163 = vadd.xlane.f32.xlu0 %v4162
    %v4164 = vpop.xlane.xlu0 %4163
    %v4165 = vsel %vm74, %v4159, 0.0
    %4166 = vadd.xlane.f32.xlu0 %v4165
    %v4167 = vpop.xlane.xlu0 %4166
    %v4168 = vsel %vm74, %v4160, 0.0
    %4169 = vadd.xlane.f32.xlu0 %v4168
    %v4170 = vpop.xlane.xlu0 %4169
    %v4171 = vsel %vm74, %v4161, 0.0
    %4172 = vadd.xlane.f32.xlu0 %v4171
    %v4173 = vpop.xlane.xlu0 %4172
    %v4174 = vmul.f32 %v4164, %v297
    %v4175 = vmul.f32 %v4167, %v297
    %v4176 = vmul.f32 %v4170, %v297
    %v4177 = vmul.f32 %v4173, %v297
    %v4178 = vsub.f32 %v4158, %v4174
    %v4179 = vsub.f32 %v4159, %v4175
    %v4180 = vsub.f32 %v4160, %v4176
    %v4181 = vsub.f32 %v4161, %v4177
    %v4182 = vmul.f32 %v4178, %v4178
    %v4183 = vmul.f32 %v4179, %v4179
    %v4184 = vmul.f32 %v4180, %v4180
    %v4185 = vmul.f32 %v4181, %v4181
    %v4186 = vsel %vm74, %v4182, 0.0
    %4187 = vadd.xlane.f32.xlu0 %v4186
    %v4188 = vpop.xlane.xlu0 %4187
    %v4189 = vsel %vm74, %v4183, 0.0
    %4190 = vadd.xlane.f32.xlu0 %v4189
    %v4191 = vpop.xlane.xlu0 %4190
    %v4192 = vsel %vm74, %v4184, 0.0
    %4193 = vadd.xlane.f32.xlu0 %v4192
    %v4194 = vpop.xlane.xlu0 %4193
    %v4195 = vsel %vm74, %v4185, 0.0
    %4196 = vadd.xlane.f32.xlu0 %v4195
    %v4197 = vpop.xlane.xlu0 %4196
    %v4198 = vmul.f32 %v4188, %v297
    %v4199 = vmul.f32 %v4191, %v297
    %v4200 = vmul.f32 %v4194, %v297
    %v4201 = vmul.f32 %v4197, %v297
    %v4202 = vadd.f32 %v4198, 1e-05
    %v4203 = vadd.f32 %v4199, 1e-05
    %v4204 = vadd.f32 %v4200, 1e-05
    %v4205 = vadd.f32 %v4201, 1e-05
    %v4206 = vrsqrt.pop %v4202
    %v4207 = vrsqrt.pop %v4203
    %v4208 = vrsqrt.pop %v4204
    %v4209 = vrsqrt.pop %v4205
    %v4210 = vmul.f32 %v4178, %v4206
    %v4211 = vmul.f32 %v4179, %v4207
    %v4212 = vmul.f32 %v4180, %v4208
    %v4213 = vmul.f32 %v4181, %v4209
    %v4214 = vlaneseq
    %v4215 = vshrl.u32 %v4214, 7
    %v4216 = vsub.s32 2, %v4215
    %v4217 = vrot.slane %v284, %v4216
    %v4218 = vmul.f32 %v4210, %v4217
    %v4219 = vmul.f32 %v4211, %v4217
    %v4220 = vmul.f32 %v4212, %v4217
    %v4221 = vmul.f32 %v4213, %v4217
    %v4222 = vlaneseq
    %v4223 = vshrl.u32 %v4222, 7
    %v4224 = vsub.s32 3, %v4223
    %v4225 = vrot.slane %v284, %v4224
    %v4226 = vadd.f32 %v4218, %v4225
    %v4227 = vadd.f32 %v4219, %v4225
    %v4228 = vadd.f32 %v4220, %v4225
    %v4229 = vadd.f32 %v4221, %v4225
    %v4230 = vld [vmem:[%s9] sm:$0xff]
    %v4231 = vld [vmem:[%s9 + $0x8] sm:$0xff]
    %v4232 = vld [vmem:[%s9 + $0x10] sm:$0xff]
    %v4233 = vld [vmem:[%s9 + $0x18] sm:$0xff]
    %v4235 = vsel %vm74, %v4226, 0
    %v4238 = vsel %vm74, %v4227, 0
    %v4241 = vsel %vm74, %v4228, 0
    %v4244 = vsel %vm74, %v4229, 0
    %4246 = vmatprep.subr.mxu0 0.0
    %4247 = vmatpush1.msra.mxu0 %v4230
    %4248 = vmatprep.subr.mxu0 0.0
    %4249 = vmatpush1.msra.mxu0 %v4231
    %4250 = vmatprep.subr.mxu0 0.0
    %4251 = vmatpush1.msra.mxu0 %v4232
    %4252 = vmatprep.subr.mxu0 0.0
    %4253 = vmatpush1.msra.mxu0 %v4233
    %4254 = vmatprep.subr.mxu0 0.0
    %4255 = vmatpush1.msra.mxu0 0.0
    %4256 = vmatprep.subr.mxu0 0.0
    %4257 = vmatpush1.msra.mxu0 0.0
    %4258 = vmatprep.subr.mxu0 0.0
    %4259 = vmatpush1.msra.mxu0 0.0
    %4260 = vmatprep.subr.mxu0 0.0
    %4261 = vmatpush1.msra.mxu0 0.0
    %4262 = vmatprep.subr.mxu0 0.0
    %4263 = vmatpush1.msra.mxu0 0.0
    %4264 = vmatprep.subr.mxu0 0.0
    %4265 = vmatpush1.msra.mxu0 0.0
    %4266 = vmatprep.subr.mxu0 0.0
    %4267 = vmatpush1.msra.mxu0 0.0
    %4268 = vmatprep.subr.mxu0 0.0
    %4269 = vmatpush1.msra.mxu0 0.0
    %4270 = vmatprep.subr.mxu0 0.0
    %4271 = vmatpush1.msra.mxu0 0.0
    %4272 = vmatprep.subr.mxu0 0.0
    %4273 = vmatpush1.msra.mxu0 0.0
    %4274 = vmatprep.subr.mxu0 0.0
    %4275 = vmatpush1.msra.mxu0 0.0
    %4276 = vmatprep.subr.mxu0 0.0
    %4277 = vmatpush1.msra.mxu0 0.0
    %4278 = vmatprep.subr.mxu0 0.0
    %4279 = vmatpush1.msra.mxu0 0.0
    %4280 = vmatprep.subr.mxu0 0.0
    %4281 = vmatpush1.msra.mxu0 0.0
    %4282 = vmatprep.subr.mxu0 0.0
    %4283 = vmatpush1.msra.mxu0 0.0
    %4284 = vmatprep.subr.mxu0 0.0
    %4285 = vmatpush1.msra.mxu0 0.0
    %4286 = vmatprep.subr.mxu0 0.0
    %4287 = vmatpush1.msra.mxu0 0.0
    %4288 = vmatprep.subr.mxu0 0.0
    %4289 = vmatpush1.msra.mxu0 0.0
    %4290 = vmatprep.subr.mxu0 0.0
    %4291 = vmatpush1.msra.mxu0 0.0
    %4292 = vmatprep.subr.mxu0 0.0
    %4293 = vmatpush1.msra.mxu0 0.0
    %4294 = vmatprep.subr.mxu0 0.0
    %4295 = vmatpush1.msra.mxu0 0.0
    %4296 = vmatprep.subr.mxu0 0.0
    %4297 = vmatpush1.msra.mxu0 0.0
    %4298 = vmatprep.subr.mxu0 0.0
    %4299 = vmatpush1.msra.mxu0 0.0
    %4300 = vmatprep.subr.mxu0 0.0
    %4301 = vmatpush1.msra.mxu0 0.0
    %4302 = vmatprep.subr.mxu0 0.0
    %4303 = vmatpush1.msra.mxu0 0.0
    %4304 = vmatprep.subr.mxu0 0.0
    %4305 = vmatpush1.msra.mxu0 0.0
    %4306 = vmatprep.subr.mxu0 0.0
    %4307 = vmatpush1.msra.mxu0 0.0
    %4308 = vmatprep.subr.mxu0 0.0
    %4309 = vmatpush1.msra.mxu0 0.0
    %4310 = vmatprep.mubr.f32.mxu0 0.0
    %4311 = vmatmul.mubr.f32.gmra.mrb[0].mxu0 %v4235
    %v4312 = vpop.f32.mrb[0].mxu0
    %v4313 = vadd.f32 0.0, %v4312
    %v4314 = vpop.f32.mrb[0].mxu0
    %4315 = vmatprep.mubr.f32.mxu0 0.0
    %4316 = vmatmul.mubr.f32.gmra.mrb[0].mxu0 %v4238
    %v4317 = vpop.f32.mrb[0].mxu0
    %v4318 = vadd.f32 0.0, %v4317
    %v4319 = vpop.f32.mrb[0].mxu0
    %4320 = vmatprep.mubr.f32.mxu0 0.0
    %4321 = vmatmul.mubr.f32.gmra.mrb[0].mxu0 %v4241
    %v4322 = vpop.f32.mrb[0].mxu0
    %v4323 = vadd.f32 0.0, %v4322
    %v4324 = vpop.f32.mrb[0].mxu0
    %4325 = vmatprep.mubr.f32.mxu0 0.0
    %4326 = vmatmul.mubr.f32.gmra.mrb[0].mxu0 %v4244
    %v4327 = vpop.f32.mrb[0].mxu0
    %v4328 = vadd.f32 0.0, %v4327
    %v4329 = vpop.f32.mrb[0].mxu0
    %4330 = vdwg.mxu0
    %v4331 = vxor.u32 %v4313, 2147483648
    %v4332 = vxor.u32 %v4318, 2147483648
    %v4333 = vxor.u32 %v4323, 2147483648
    %v4334 = vxor.u32 %v4328, 2147483648
    %v4335 = vmul.f32 %v4331, 1.442695
    %v4336 = vpow.pop %v4335
    %v4337 = vmul.f32 %v4332, 1.442695
    %v4338 = vpow.pop %v4337
    %v4339 = vmul.f32 %v4333, 1.442695
    %v4340 = vpow.pop %v4339
    %v4341 = vmul.f32 %v4334, 1.442695
    %v4342 = vpow.pop %v4341
    %v4343 = vadd.f32 %v4336, 1.0
    %v4344 = vadd.f32 %v4338, 1.0
    %v4345 = vadd.f32 %v4340, 1.0
    %v4346 = vadd.f32 %v4342, 1.0
    %v4347 = vrcp.pop %v4343
    %v4348 = vmul.f32 1.0, %v4347
    %v4349 = vrcp.pop %v4344
    %v4350 = vmul.f32 1.0, %v4349
    %v4351 = vrcp.pop %v4345
    %v4352 = vmul.f32 1.0, %v4351
    %v4353 = vrcp.pop %v4346
    %v4354 = vmul.f32 1.0, %v4353
    %v4355 = vmul.f32 %v4313, %v4348
    %v4356 = vmul.f32 %v4318, %v4350
    %v4357 = vmul.f32 %v4323, %v4352
    %v4358 = vmul.f32 %v4328, %v4354
    %4363 = vrot.lane.b32.xlu0 %v4313, 64
    %v4364 = vpop.permute.xlu0 %4363
    %4365 = vrot.lane.b32.xlu0 %v4318, 64
    %v4366 = vpop.permute.xlu0 %4365
    %4367 = vrot.lane.b32.xlu0 %v4323, 64
    %v4368 = vpop.permute.xlu0 %4367
    %4369 = vrot.lane.b32.xlu0 %v4328, 64
    %v4370 = vpop.permute.xlu0 %4369
    %v4375 = vmul.f32 %v4355, %v4364
    %v4376 = vmul.f32 %v4356, %v4366
    %v4377 = vmul.f32 %v4357, %v4368
    %v4378 = vmul.f32 %v4358, %v4370
    %v4379 = vld [vmem:[%s10] sm:$0xff]
    %v4380 = vld [vmem:[%s10 + $0x8] sm:$0xff]
    %v4381 = vld [vmem:[%s10 + $0x10] sm:$0xff]
    %v4382 = vld [vmem:[%s10 + $0x18] sm:$0xff]
    %v4383 = vld [vmem:[%s10 + $0x20] sm:$0xff]
    %v4384 = vld [vmem:[%s10 + $0x28] sm:$0xff]
    %v4385 = vld [vmem:[%s10 + $0x30] sm:$0xff]
    %v4386 = vld [vmem:[%s10 + $0x38] sm:$0xff]
    %vm4387 = vcmask 523264
    %v4389 = vsel %vm4387, %v4375, 0
    %v4392 = vsel %vm4387, %v4376, 0
    %v4395 = vsel %vm4387, %v4377, 0
    %v4398 = vsel %vm4387, %v4378, 0
    %4400 = vmatprep.subr.mxu0 0.0
    %4401 = vmatpush1.msra.mxu0 %v4379
    %4402 = vmatprep.subr.mxu0 0.0
    %4403 = vmatpush1.msra.mxu0 %v4380
    %4404 = vmatprep.subr.mxu0 0.0
    %4405 = vmatpush1.msra.mxu0 %v4381
    %4406 = vmatprep.subr.mxu0 0.0
    %4407 = vmatpush1.msra.mxu0 %v4382
    %4408 = vmatprep.subr.mxu0 0.0
    %4409 = vmatpush1.msra.mxu0 %v4383
    %4410 = vmatprep.subr.mxu0 0.0
    %4411 = vmatpush1.msra.mxu0 %v4384
    %4412 = vmatprep.subr.mxu0 0.0
    %4413 = vmatpush1.msra.mxu0 %v4385
    %4414 = vmatprep.subr.mxu0 0.0
    %4415 = vmatpush1.msra.mxu0 %v4386
    %4416 = vmatprep.subr.mxu0 0.0
    %4417 = vmatpush1.msra.mxu0 0.0
    %4418 = vmatprep.subr.mxu0 0.0
    %4419 = vmatpush1.msra.mxu0 0.0
    %4420 = vmatprep.subr.mxu0 0.0
    %4421 = vmatpush1.msra.mxu0 0.0
    %4422 = vmatprep.subr.mxu0 0.0
    %4423 = vmatpush1.msra.mxu0 0.0
    %4424 = vmatprep.subr.mxu0 0.0
    %4425 = vmatpush1.msra.mxu0 0.0
    %4426 = vmatprep.subr.mxu0 0.0
    %4427 = vmatpush1.msra.mxu0 0.0
    %4428 = vmatprep.subr.mxu0 0.0
    %4429 = vmatpush1.msra.mxu0 0.0
    %4430 = vmatprep.subr.mxu0 0.0
    %4431 = vmatpush1.msra.mxu0 0.0
    %4432 = vmatprep.subr.mxu0 0.0
    %4433 = vmatpush1.msra.mxu0 0.0
    %4434 = vmatprep.subr.mxu0 0.0
    %4435 = vmatpush1.msra.mxu0 0.0
    %4436 = vmatprep.subr.mxu0 0.0
    %4437 = vmatpush1.msra.mxu0 0.0
    %4438 = vmatprep.subr.mxu0 0.0
    %4439 = vmatpush1.msra.mxu0 0.0
    %4440 = vmatprep.subr.mxu0 0.0
    %4441 = vmatpush1.msra.mxu0 0.0
    %4442 = vmatprep.subr.mxu0 0.0
    %4443 = vmatpush1.msra.mxu0 0.0
    %4444 = vmatprep.subr.mxu0 0.0
    %4445 = vmatpush1.msra.mxu0 0.0
    %4446 = vmatprep.subr.mxu0 0.0
    %4447 = vmatpush1.msra.mxu0 0.0
    %4448 = vmatprep.subr.mxu0 0.0
    %4449 = vmatpush1.msra.mxu0 0.0
    %4450 = vmatprep.subr.mxu0 0.0
    %4451 = vmatpush1.msra.mxu0 0.0
    %4452 = vmatprep.subr.mxu0 0.0
    %4453 = vmatpush1.msra.mxu0 0.0
    %4454 = vmatprep.subr.mxu0 0.0
    %4455 = vmatpush1.msra.mxu0 0.0
    %4456 = vmatprep.subr.mxu0 0.0
    %4457 = vmatpush1.msra.mxu0 0.0
    %4458 = vmatprep.subr.mxu0 0.0
    %4459 = vmatpush1.msra.mxu0 0.0
    %4460 = vmatprep.subr.mxu0 0.0
    %4461 = vmatpush1.msra.mxu0 0.0
    %4462 = vmatprep.subr.mxu0 0.0
    %4463 = vmatpush1.msra.mxu0 0.0
    %4464 = vmatprep.mubr.f32.mxu0 0.0
    %4465 = vmatmul.mubr.f32.gmra.mrb[0].mxu0 %v4389
    %v4466 = vpop.f32.mrb[0].mxu0
    %v4467 = vadd.f32 0.0, %v4466
    %v4468 = vpop.f32.mrb[0].mxu0
    %4469 = vmatprep.mubr.f32.mxu0 0.0
    %4470 = vmatmul.mubr.f32.gmra.mrb[0].mxu0 %v4392
    %v4471 = vpop.f32.mrb[0].mxu0
    %v4472 = vadd.f32 0.0, %v4471
    %v4473 = vpop.f32.mrb[0].mxu0
    %4474 = vmatprep.mubr.f32.mxu0 0.0
    %4475 = vmatmul.mubr.f32.gmra.mrb[0].mxu0 %v4395
    %v4476 = vpop.f32.mrb[0].mxu0
    %v4477 = vadd.f32 0.0, %v4476
    %v4478 = vpop.f32.mrb[0].mxu0
    %4479 = vmatprep.mubr.f32.mxu0 0.0
    %4480 = vmatmul.mubr.f32.gmra.mrb[0].mxu0 %v4398
    %v4481 = vpop.f32.mrb[0].mxu0
    %v4482 = vadd.f32 0.0, %v4481
    %v4483 = vpop.f32.mrb[0].mxu0
    %4484 = vdwg.mxu0
    %v4485 = vadd.f32 %v4158, %v4467
    %v4486 = vadd.f32 %v4159, %v4472
    %v4487 = vadd.f32 %v4160, %v4477
    %v4488 = vadd.f32 %v4161, %v4482
    %s4489 = scalar_lea.vmem %s8, 8
    %v4490 = vld [vmem:[%s4489] sm:$0xff]
    %v4491 = vsel %vm74, %v4485, 0.0
    %4492 = vadd.xlane.f32.xlu0 %v4491
    %v4493 = vpop.xlane.xlu0 %4492
    %v4494 = vsel %vm74, %v4486, 0.0
    %4495 = vadd.xlane.f32.xlu0 %v4494
    %v4496 = vpop.xlane.xlu0 %4495
    %v4497 = vsel %vm74, %v4487, 0.0
    %4498 = vadd.xlane.f32.xlu0 %v4497
    %v4499 = vpop.xlane.xlu0 %4498
    %v4500 = vsel %vm74, %v4488, 0.0
    %4501 = vadd.xlane.f32.xlu0 %v4500
    %v4502 = vpop.xlane.xlu0 %4501
    %v4503 = vmul.f32 %v4493, %v297
    %v4504 = vmul.f32 %v4496, %v297
    %v4505 = vmul.f32 %v4499, %v297
    %v4506 = vmul.f32 %v4502, %v297
    %v4507 = vsub.f32 %v4485, %v4503
    %v4508 = vsub.f32 %v4486, %v4504
    %v4509 = vsub.f32 %v4487, %v4505
    %v4510 = vsub.f32 %v4488, %v4506
    %v4511 = vmul.f32 %v4507, %v4507
    %v4512 = vmul.f32 %v4508, %v4508
    %v4513 = vmul.f32 %v4509, %v4509
    %v4514 = vmul.f32 %v4510, %v4510
    %v4515 = vsel %vm74, %v4511, 0.0
    %4516 = vadd.xlane.f32.xlu0 %v4515
    %v4517 = vpop.xlane.xlu0 %4516
    %v4518 = vsel %vm74, %v4512, 0.0
    %4519 = vadd.xlane.f32.xlu0 %v4518
    %v4520 = vpop.xlane.xlu0 %4519
    %v4521 = vsel %vm74, %v4513, 0.0
    %4522 = vadd.xlane.f32.xlu0 %v4521
    %v4523 = vpop.xlane.xlu0 %4522
    %v4524 = vsel %vm74, %v4514, 0.0
    %4525 = vadd.xlane.f32.xlu0 %v4524
    %v4526 = vpop.xlane.xlu0 %4525
    %v4527 = vmul.f32 %v4517, %v297
    %v4528 = vmul.f32 %v4520, %v297
    %v4529 = vmul.f32 %v4523, %v297
    %v4530 = vmul.f32 %v4526, %v297
    %v4531 = vadd.f32 %v4527, 1e-05
    %v4532 = vadd.f32 %v4528, 1e-05
    %v4533 = vadd.f32 %v4529, 1e-05
    %v4534 = vadd.f32 %v4530, 1e-05
    %v4535 = vrsqrt.pop %v4531
    %v4536 = vrsqrt.pop %v4532
    %v4537 = vrsqrt.pop %v4533
    %v4538 = vrsqrt.pop %v4534
    %v4539 = vmul.f32 %v4507, %v4535
    %v4540 = vmul.f32 %v4508, %v4536
    %v4541 = vmul.f32 %v4509, %v4537
    %v4542 = vmul.f32 %v4510, %v4538
    %v4543 = vlaneseq
    %v4544 = vshrl.u32 %v4543, 7
    %v4545 = vsub.s32 0, %v4544
    %v4546 = vrot.slane %v4490, %v4545
    %v4547 = vmul.f32 %v4539, %v4546
    %v4548 = vmul.f32 %v4540, %v4546
    %v4549 = vmul.f32 %v4541, %v4546
    %v4550 = vmul.f32 %v4542, %v4546
    %v4551 = vlaneseq
    %v4552 = vshrl.u32 %v4551, 7
    %v4553 = vsub.s32 1, %v4552
    %v4554 = vrot.slane %v4490, %v4553
    %v4555 = vadd.f32 %v4547, %v4554
    %v4556 = vadd.f32 %v4548, %v4554
    %v4557 = vadd.f32 %v4549, %v4554
    %v4558 = vadd.f32 %v4550, %v4554
    %v4559 = vsel %vm74, %v4555, 0.0
    %4560 = vadd.xlane.f32.xlu0 %v4559
    %v4561 = vpop.xlane.xlu0 %4560
    %v4562 = vsel %vm74, %v4556, 0.0
    %4563 = vadd.xlane.f32.xlu0 %v4562
    %v4564 = vpop.xlane.xlu0 %4563
    %v4565 = vsel %vm74, %v4557, 0.0
    %4566 = vadd.xlane.f32.xlu0 %v4565
    %v4567 = vpop.xlane.xlu0 %4566
    %v4568 = vsel %vm74, %v4558, 0.0
    %4569 = vadd.xlane.f32.xlu0 %v4568
    %v4570 = vpop.xlane.xlu0 %4569
    %v4571 = vmul.f32 %v4561, %v297
    %v4572 = vmul.f32 %v4564, %v297
    %v4573 = vmul.f32 %v4567, %v297
    %v4574 = vmul.f32 %v4570, %v297
    %v4575 = vsub.f32 %v4555, %v4571
    %v4576 = vsub.f32 %v4556, %v4572
    %v4577 = vsub.f32 %v4557, %v4573
    %v4578 = vsub.f32 %v4558, %v4574
    %v4579 = vmul.f32 %v4575, %v4575
    %v4580 = vmul.f32 %v4576, %v4576
    %v4581 = vmul.f32 %v4577, %v4577
    %v4582 = vmul.f32 %v4578, %v4578
    %v4583 = vsel %vm74, %v4579, 0.0
    %4584 = vadd.xlane.f32.xlu0 %v4583
    %v4585 = vpop.xlane.xlu0 %4584
    %v4586 = vsel %vm74, %v4580, 0.0
    %4587 = vadd.xlane.f32.xlu0 %v4586
    %v4588 = vpop.xlane.xlu0 %4587
    %v4589 = vsel %vm74, %v4581, 0.0
    %4590 = vadd.xlane.f32.xlu0 %v4589
    %v4591 = vpop.xlane.xlu0 %4590
    %v4592 = vsel %vm74, %v4582, 0.0
    %4593 = vadd.xlane.f32.xlu0 %v4592
    %v4594 = vpop.xlane.xlu0 %4593
    %v4595 = vmul.f32 %v4585, %v297
    %v4596 = vmul.f32 %v4588, %v297
    %v4597 = vmul.f32 %v4591, %v297
    %v4598 = vmul.f32 %v4594, %v297
    %v4599 = vadd.f32 %v4595, 1e-05
    %v4600 = vadd.f32 %v4596, 1e-05
    %v4601 = vadd.f32 %v4597, 1e-05
    %v4602 = vadd.f32 %v4598, 1e-05
    %v4603 = vrsqrt.pop %v4599
    %v4604 = vrsqrt.pop %v4600
    %v4605 = vrsqrt.pop %v4601
    %v4606 = vrsqrt.pop %v4602
    %v4607 = vmul.f32 %v4575, %v4603
    %v4608 = vmul.f32 %v4576, %v4604
    %v4609 = vmul.f32 %v4577, %v4605
    %v4610 = vmul.f32 %v4578, %v4606
    %v4611 = vlaneseq
    %v4612 = vshrl.u32 %v4611, 7
    %v4613 = vsub.s32 4, %v4612
    %v4614 = vrot.slane %v4490, %v4613
    %v4615 = vmul.f32 %v4607, %v4614
    %v4616 = vmul.f32 %v4608, %v4614
    %v4617 = vmul.f32 %v4609, %v4614
    %v4618 = vmul.f32 %v4610, %v4614
    %v4619 = vlaneseq
    %v4620 = vshrl.u32 %v4619, 7
    %v4621 = vsub.s32 5, %v4620
    %v4622 = vrot.slane %v4490, %v4621
    %v4623 = vadd.f32 %v4615, %v4622
    %v4624 = vadd.f32 %v4616, %v4622
    %v4625 = vadd.f32 %v4617, %v4622
    %v4626 = vadd.f32 %v4618, %v4622
    %4627 = vmatprep.subr.mxu0 0.0
    %4628 = vmatpush1.msra.mxu0 %v4623
    %4629 = vmatprep.subr.mxu0 0.0
    %4630 = vmatpush1.msra.mxu0 %v4624
    %4631 = vmatprep.subr.mxu0 0.0
    %4632 = vmatpush1.msra.mxu0 %v4625
    %4633 = vmatprep.subr.mxu0 0.0
    %4634 = vmatpush1.msra.mxu0 %v4626
    %4635 = vmatprep.subr.mxu0 0.0
    %4636 = vmatpush1.msra.mxu0 0.0
    %4637 = vmatprep.subr.mxu0 0.0
    %4638 = vmatpush1.msra.mxu0 0.0
    %4639 = vmatprep.subr.mxu0 0.0
    %4640 = vmatpush1.msra.mxu0 0.0
    %4641 = vmatprep.subr.mxu0 0.0
    %4642 = vmatpush1.msra.mxu0 0.0
    %4643 = vmatprep.subr.mxu0 0.0
    %4644 = vmatpush1.msra.mxu0 0.0
    %4645 = vmatprep.subr.mxu0 0.0
    %4646 = vmatpush1.msra.mxu0 0.0
    %4647 = vmatprep.subr.mxu0 0.0
    %4648 = vmatpush1.msra.mxu0 0.0
    %4649 = vmatprep.subr.mxu0 0.0
    %4650 = vmatpush1.msra.mxu0 0.0
    %4651 = vmatprep.subr.mxu0 0.0
    %4652 = vmatpush1.msra.mxu0 0.0
    %4653 = vmatprep.subr.mxu0 0.0
    %4654 = vmatpush1.msra.mxu0 0.0
    %4655 = vmatprep.subr.mxu0 0.0
    %4656 = vmatpush1.msra.mxu0 0.0
    %4657 = vmatprep.subr.mxu0 0.0
    %4658 = vmatpush1.msra.mxu0 0.0
    %4659 = vmatprep.subr.mxu0 0.0
    %4660 = vmatpush1.msra.mxu0 0.0
    %4661 = vmatprep.subr.mxu0 0.0
    %4662 = vmatpush1.msra.mxu0 0.0
    %4663 = vmatprep.subr.mxu0 0.0
    %4664 = vmatpush1.msra.mxu0 0.0
    %4665 = vmatprep.subr.mxu0 0.0
    %4666 = vmatpush1.msra.mxu0 0.0
    %4667 = vmatprep.subr.mxu0 0.0
    %4668 = vmatpush1.msra.mxu0 0.0
    %4669 = vmatprep.subr.mxu0 0.0
    %4670 = vmatpush1.msra.mxu0 0.0
    %4671 = vmatprep.subr.mxu0 0.0
    %4672 = vmatpush1.msra.mxu0 0.0
    %4673 = vmatprep.subr.mxu0 0.0
    %4674 = vmatpush1.msra.mxu0 0.0
    %4675 = vmatprep.subr.mxu0 0.0
    %4676 = vmatpush1.msra.mxu0 0.0
    %4677 = vmatprep.subr.mxu0 0.0
    %4678 = vmatpush1.msra.mxu0 0.0
    %4679 = vmatprep.subr.mxu0 0.0
    %4680 = vmatpush1.msra.mxu0 0.0
    %4681 = vmatprep.subr.mxu0 0.0
    %4682 = vmatpush1.msra.mxu0 0.0
    %4683 = vmatprep.subr.mxu0 0.0
    %4684 = vmatpush1.msra.mxu0 0.0
    %4685 = vmatprep.subr.mxu0 0.0
    %4686 = vmatpush1.msra.mxu0 0.0
    %4687 = vmatprep.subr.mxu0 0.0
    %4688 = vmatpush1.msra.mxu0 0.0
    %4689 = vmatprep.subr.mxu0 0.0
    %4690 = vmatpush1.msra.mxu0 0.0
    %4691 = vmatprep.mubr.f32.mxu0 0.0
    %4692 = vmatmul.mubr.f32.gmra.mrb[0].mxu0 %v423
    %v4693 = vpop.f32.mrb[0].mxu0
    %v4694 = vadd.f32 0.0, %v4693
    %v4695 = vpop.f32.mrb[0].mxu0
    %4696 = vmatprep.mubr.f32.mxu0 0.0
    %4697 = vmatmul.mubr.f32.gmra.mrb[0].mxu0 %v426
    %v4698 = vpop.f32.mrb[0].mxu0
    %v4699 = vadd.f32 0.0, %v4698
    %v4700 = vpop.f32.mrb[0].mxu0
    %4701 = vmatprep.mubr.f32.mxu0 0.0
    %4702 = vmatmul.mubr.f32.gmra.mrb[0].mxu0 %v429
    %v4703 = vpop.f32.mrb[0].mxu0
    %v4704 = vadd.f32 0.0, %v4703
    %v4705 = vpop.f32.mrb[0].mxu0
    %4706 = vmatprep.mubr.f32.mxu0 0.0
    %4707 = vmatmul.mubr.f32.gmra.mrb[0].mxu0 %v432
    %v4708 = vpop.f32.mrb[0].mxu0
    %v4709 = vadd.f32 0.0, %v4708
    %v4710 = vpop.f32.mrb[0].mxu0
    %4711 = vmatprep.mubr.f32.mxu0 0.0
    %4712 = vmatmul.mubr.f32.gmra.mrb[0].mxu0 %v435
    %v4713 = vpop.f32.mrb[0].mxu0
    %v4714 = vadd.f32 0.0, %v4713
    %v4715 = vpop.f32.mrb[0].mxu0
    %4716 = vmatprep.mubr.f32.mxu0 0.0
    %4717 = vmatmul.mubr.f32.gmra.mrb[0].mxu0 %v438
    %v4718 = vpop.f32.mrb[0].mxu0
    %v4719 = vadd.f32 0.0, %v4718
    %v4720 = vpop.f32.mrb[0].mxu0
    %4721 = vmatprep.mubr.f32.mxu0 0.0
    %4722 = vmatmul.mubr.f32.gmra.mrb[0].mxu0 %v441
    %v4723 = vpop.f32.mrb[0].mxu0
    %v4724 = vadd.f32 0.0, %v4723
    %v4725 = vpop.f32.mrb[0].mxu0
    %4726 = vmatprep.mubr.f32.mxu0 0.0
    %4727 = vmatmul.mubr.f32.gmra.mrb[0].mxu0 %v444
    %v4728 = vpop.f32.mrb[0].mxu0
    %v4729 = vadd.f32 0.0, %v4728
    %v4730 = vpop.f32.mrb[0].mxu0
    %4731 = vmatprep.mubr.f32.mxu0 0.0
    %4732 = vmatmul.mubr.f32.gmra.mrb[0].mxu0 %v447
    %v4733 = vpop.f32.mrb[0].mxu0
    %v4734 = vadd.f32 0.0, %v4733
    %v4735 = vpop.f32.mrb[0].mxu0
    %4736 = vmatprep.mubr.f32.mxu0 0.0
    %4737 = vmatmul.mubr.f32.gmra.mrb[0].mxu0 %v450
    %v4738 = vpop.f32.mrb[0].mxu0
    %v4739 = vadd.f32 0.0, %v4738
    %v4740 = vpop.f32.mrb[0].mxu0
    %4741 = vmatprep.mubr.f32.mxu0 0.0
    %4742 = vmatmul.mubr.f32.gmra.mrb[0].mxu0 %v453
    %v4743 = vpop.f32.mrb[0].mxu0
    %v4744 = vadd.f32 0.0, %v4743
    %v4745 = vpop.f32.mrb[0].mxu0
    %4746 = vmatprep.mubr.f32.mxu0 0.0
    %4747 = vmatmul.mubr.f32.gmra.mrb[0].mxu0 %v456
    %v4748 = vpop.f32.mrb[0].mxu0
    %v4749 = vadd.f32 0.0, %v4748
    %v4750 = vpop.f32.mrb[0].mxu0
    %4751 = vmatprep.mubr.f32.mxu0 0.0
    %4752 = vmatmul.mubr.f32.gmra.mrb[0].mxu0 %v459
    %v4753 = vpop.f32.mrb[0].mxu0
    %v4754 = vadd.f32 0.0, %v4753
    %v4755 = vpop.f32.mrb[0].mxu0
    %4756 = vmatprep.mubr.f32.mxu0 0.0
    %4757 = vmatmul.mubr.f32.gmra.mrb[0].mxu0 %v462
    %v4758 = vpop.f32.mrb[0].mxu0
    %v4759 = vadd.f32 0.0, %v4758
    %v4760 = vpop.f32.mrb[0].mxu0
    %4761 = vmatprep.mubr.f32.mxu0 0.0
    %4762 = vmatmul.mubr.f32.gmra.mrb[0].mxu0 %v465
    %v4763 = vpop.f32.mrb[0].mxu0
    %v4764 = vadd.f32 0.0, %v4763
    %v4765 = vpop.f32.mrb[0].mxu0
    %4766 = vmatprep.mubr.f32.mxu0 0.0
    %4767 = vmatmul.mubr.f32.gmra.mrb[0].mxu0 %v468
    %v4768 = vpop.f32.mrb[0].mxu0
    %v4769 = vadd.f32 0.0, %v4768
    %v4770 = vpop.f32.mrb[0].mxu0
    %4771 = vmatprep.mubr.f32.mxu0 0.0
    %4772 = vmatmul.mubr.f32.gmra.mrb[0].mxu0 %v471
    %v4773 = vpop.f32.mrb[0].mxu0
    %v4774 = vadd.f32 0.0, %v4773
    %v4775 = vpop.f32.mrb[0].mxu0
    %4776 = vmatprep.mubr.f32.mxu0 0.0
    %4777 = vmatmul.mubr.f32.gmra.mrb[0].mxu0 %v474
    %v4778 = vpop.f32.mrb[0].mxu0
    %v4779 = vadd.f32 0.0, %v4778
    %v4780 = vpop.f32.mrb[0].mxu0
    %4781 = vmatprep.mubr.f32.mxu0 0.0
    %4782 = vmatmul.mubr.f32.gmra.mrb[0].mxu0 %v477
    %v4783 = vpop.f32.mrb[0].mxu0
    %v4784 = vadd.f32 0.0, %v4783
    %v4785 = vpop.f32.mrb[0].mxu0
    %4786 = vmatprep.mubr.f32.mxu0 0.0
    %4787 = vmatmul.mubr.f32.gmra.mrb[0].mxu0 %v480
    %v4788 = vpop.f32.mrb[0].mxu0
    %v4789 = vadd.f32 0.0, %v4788
    %v4790 = vpop.f32.mrb[0].mxu0
    %4791 = vmatprep.mubr.f32.mxu0 0.0
    %4792 = vmatmul.mubr.f32.gmra.mrb[0].mxu0 %v483
    %v4793 = vpop.f32.mrb[0].mxu0
    %v4794 = vadd.f32 0.0, %v4793
    %v4795 = vpop.f32.mrb[0].mxu0
    %4796 = vmatprep.mubr.f32.mxu0 0.0
    %4797 = vmatmul.mubr.f32.gmra.mrb[0].mxu0 %v486
    %v4798 = vpop.f32.mrb[0].mxu0
    %v4799 = vadd.f32 0.0, %v4798
    %v4800 = vpop.f32.mrb[0].mxu0
    %4801 = vmatprep.mubr.f32.mxu0 0.0
    %4802 = vmatmul.mubr.f32.gmra.mrb[0].mxu0 %v489
    %v4803 = vpop.f32.mrb[0].mxu0
    %v4804 = vadd.f32 0.0, %v4803
    %v4805 = vpop.f32.mrb[0].mxu0
    %4806 = vmatprep.mubr.f32.mxu0 0.0
    %4807 = vmatmul.mubr.f32.gmra.mrb[0].mxu0 %v492
    %v4808 = vpop.f32.mrb[0].mxu0
    %v4809 = vadd.f32 0.0, %v4808
    %v4810 = vpop.f32.mrb[0].mxu0
    %4811 = vmatprep.mubr.f32.mxu0 0.0
    %4812 = vmatmul.mubr.f32.gmra.mrb[0].mxu0 %v495
    %v4813 = vpop.f32.mrb[0].mxu0
    %v4814 = vadd.f32 0.0, %v4813
    %v4815 = vpop.f32.mrb[0].mxu0
    %4816 = vmatprep.mubr.f32.mxu0 0.0
    %4817 = vmatmul.mubr.f32.gmra.mrb[0].mxu0 %v498
    %v4818 = vpop.f32.mrb[0].mxu0
    %v4819 = vadd.f32 0.0, %v4818
    %v4820 = vpop.f32.mrb[0].mxu0
    %4821 = vmatprep.mubr.f32.mxu0 0.0
    %4822 = vmatmul.mubr.f32.gmra.mrb[0].mxu0 %v501
    %v4823 = vpop.f32.mrb[0].mxu0
    %v4824 = vadd.f32 0.0, %v4823
    %v4825 = vpop.f32.mrb[0].mxu0
    %4826 = vmatprep.mubr.f32.mxu0 0.0
    %4827 = vmatmul.mubr.f32.gmra.mrb[0].mxu0 %v504
    %v4828 = vpop.f32.mrb[0].mxu0
    %v4829 = vadd.f32 0.0, %v4828
    %v4830 = vpop.f32.mrb[0].mxu0
    %4831 = vmatprep.mubr.f32.mxu0 0.0
    %4832 = vmatmul.mubr.f32.gmra.mrb[0].mxu0 %v507
    %v4833 = vpop.f32.mrb[0].mxu0
    %v4834 = vadd.f32 0.0, %v4833
    %v4835 = vpop.f32.mrb[0].mxu0
    %4836 = vmatprep.mubr.f32.mxu0 0.0
    %4837 = vmatmul.mubr.f32.gmra.mrb[0].mxu0 %v510
    %v4838 = vpop.f32.mrb[0].mxu0
    %v4839 = vadd.f32 0.0, %v4838
    %v4840 = vpop.f32.mrb[0].mxu0
    %4841 = vmatprep.mubr.f32.mxu0 0.0
    %4842 = vmatmul.mubr.f32.gmra.mrb[0].mxu0 %v513
    %v4843 = vpop.f32.mrb[0].mxu0
    %v4844 = vadd.f32 0.0, %v4843
    %v4845 = vpop.f32.mrb[0].mxu0
    %4846 = vmatprep.mubr.f32.mxu0 0.0
    %4847 = vmatmul.mubr.f32.gmra.mrb[0].mxu0 %v516
    %v4848 = vpop.f32.mrb[0].mxu0
    %v4849 = vadd.f32 0.0, %v4848
    %v4850 = vpop.f32.mrb[0].mxu0
    %4851 = vmatprep.mubr.f32.mxu0 0.0
    %4852 = vmatmul.mubr.f32.gmra.mrb[0].mxu0 %v519
    %v4853 = vpop.f32.mrb[0].mxu0
    %v4854 = vadd.f32 0.0, %v4853
    %v4855 = vpop.f32.mrb[0].mxu0
    %4856 = vmatprep.mubr.f32.mxu0 0.0
    %4857 = vmatmul.mubr.f32.gmra.mrb[0].mxu0 %v522
    %v4858 = vpop.f32.mrb[0].mxu0
    %v4859 = vadd.f32 0.0, %v4858
    %v4860 = vpop.f32.mrb[0].mxu0
    %4861 = vmatprep.mubr.f32.mxu0 0.0
    %4862 = vmatmul.mubr.f32.gmra.mrb[0].mxu0 %v525
    %v4863 = vpop.f32.mrb[0].mxu0
    %v4864 = vadd.f32 0.0, %v4863
    %v4865 = vpop.f32.mrb[0].mxu0
    %4866 = vmatprep.mubr.f32.mxu0 0.0
    %4867 = vmatmul.mubr.f32.gmra.mrb[0].mxu0 %v528
    %v4868 = vpop.f32.mrb[0].mxu0
    %v4869 = vadd.f32 0.0, %v4868
    %v4870 = vpop.f32.mrb[0].mxu0
    %4871 = vmatprep.mubr.f32.mxu0 0.0
    %4872 = vmatmul.mubr.f32.gmra.mrb[0].mxu0 %v531
    %v4873 = vpop.f32.mrb[0].mxu0
    %v4874 = vadd.f32 0.0, %v4873
    %v4875 = vpop.f32.mrb[0].mxu0
    %4876 = vmatprep.mubr.f32.mxu0 0.0
    %4877 = vmatmul.mubr.f32.gmra.mrb[0].mxu0 %v534
    %v4878 = vpop.f32.mrb[0].mxu0
    %v4879 = vadd.f32 0.0, %v4878
    %v4880 = vpop.f32.mrb[0].mxu0
    %4881 = vmatprep.mubr.f32.mxu0 0.0
    %4882 = vmatmul.mubr.f32.gmra.mrb[0].mxu0 %v537
    %v4883 = vpop.f32.mrb[0].mxu0
    %v4884 = vadd.f32 0.0, %v4883
    %v4885 = vpop.f32.mrb[0].mxu0
    %4886 = vmatprep.mubr.f32.mxu0 0.0
    %4887 = vmatmul.mubr.f32.gmra.mrb[0].mxu0 %v540
    %v4888 = vpop.f32.mrb[0].mxu0
    %v4889 = vadd.f32 0.0, %v4888
    %v4890 = vpop.f32.mrb[0].mxu0
    %4891 = vmatprep.mubr.f32.mxu0 0.0
    %4892 = vmatmul.mubr.f32.gmra.mrb[0].mxu0 %v543
    %v4893 = vpop.f32.mrb[0].mxu0
    %v4894 = vadd.f32 0.0, %v4893
    %v4895 = vpop.f32.mrb[0].mxu0
    %4896 = vmatprep.mubr.f32.mxu0 0.0
    %4897 = vmatmul.mubr.f32.gmra.mrb[0].mxu0 %v546
    %v4898 = vpop.f32.mrb[0].mxu0
    %v4899 = vadd.f32 0.0, %v4898
    %v4900 = vpop.f32.mrb[0].mxu0
    %4901 = vmatprep.mubr.f32.mxu0 0.0
    %4902 = vmatmul.mubr.f32.gmra.mrb[0].mxu0 %v549
    %v4903 = vpop.f32.mrb[0].mxu0
    %v4904 = vadd.f32 0.0, %v4903
    %v4905 = vpop.f32.mrb[0].mxu0
    %4906 = vmatprep.mubr.f32.mxu0 0.0
    %4907 = vmatmul.mubr.f32.gmra.mrb[0].mxu0 %v552
    %v4908 = vpop.f32.mrb[0].mxu0
    %v4909 = vadd.f32 0.0, %v4908
    %v4910 = vpop.f32.mrb[0].mxu0
    %4911 = vdwg.mxu0
    %s4912 = scalar_lea.vmem [#allocation2], 352
    %v4913 = vld [vmem:[%s4912] sm:$0xff]
    %v4914 = vld [vmem:[%s4912 + $0x8] sm:$0xff]
    %v4915 = vld [vmem:[%s4912 + $0x10] sm:$0xff]
    %v4916 = vld [vmem:[%s4912 + $0x18] sm:$0xff]
    %s4917 = scalar_lea.vmem [#allocation2], 384
    %v4918 = vld [vmem:[%s4917] sm:$0xff]
    %v4919 = vld [vmem:[%s4917 + $0x8] sm:$0xff]
    %v4920 = vld [vmem:[%s4917 + $0x10] sm:$0xff]
    %v4921 = vld [vmem:[%s4917 + $0x18] sm:$0xff]
    %v4923 = vsel %vm74, %v4714, 0
    %v4926 = vsel %vm74, %v4719, 0
    %v4929 = vsel %vm74, %v4724, 0
    %v4932 = vsel %vm74, %v4729, 0
    %4934 = vmatprep.subr.mxu0 0.0
    %4935 = vmatpush1.msra.mxu0 %v4918
    %4936 = vmatprep.subr.mxu0 0.0
    %4937 = vmatpush1.msra.mxu0 %v4919
    %4938 = vmatprep.subr.mxu0 0.0
    %4939 = vmatpush1.msra.mxu0 %v4920
    %4940 = vmatprep.subr.mxu0 0.0
    %4941 = vmatpush1.msra.mxu0 %v4921
    %4942 = vmatprep.subr.mxu0 0.0
    %4943 = vmatpush1.msra.mxu0 0.0
    %4944 = vmatprep.subr.mxu0 0.0
    %4945 = vmatpush1.msra.mxu0 0.0
    %4946 = vmatprep.subr.mxu0 0.0
    %4947 = vmatpush1.msra.mxu0 0.0
    %4948 = vmatprep.subr.mxu0 0.0
    %4949 = vmatpush1.msra.mxu0 0.0
    %4950 = vmatprep.subr.mxu0 0.0
    %4951 = vmatpush1.msra.mxu0 0.0
    %4952 = vmatprep.subr.mxu0 0.0
    %4953 = vmatpush1.msra.mxu0 0.0
    %4954 = vmatprep.subr.mxu0 0.0
    %4955 = vmatpush1.msra.mxu0 0.0
    %4956 = vmatprep.subr.mxu0 0.0
    %4957 = vmatpush1.msra.mxu0 0.0
    %4958 = vmatprep.subr.mxu0 0.0
    %4959 = vmatpush1.msra.mxu0 0.0
    %4960 = vmatprep.subr.mxu0 0.0
    %4961 = vmatpush1.msra.mxu0 0.0
    %4962 = vmatprep.subr.mxu0 0.0
    %4963 = vmatpush1.msra.mxu0 0.0
    %4964 = vmatprep.subr.mxu0 0.0
    %4965 = vmatpush1.msra.mxu0 0.0
    %4966 = vmatprep.subr.mxu0 0.0
    %4967 = vmatpush1.msra.mxu0 0.0
    %4968 = vmatprep.subr.mxu0 0.0
    %4969 = vmatpush1.msra.mxu0 0.0
    %4970 = vmatprep.subr.mxu0 0.0
    %4971 = vmatpush1.msra.mxu0 0.0
    %4972 = vmatprep.subr.mxu0 0.0
    %4973 = vmatpush1.msra.mxu0 0.0
    %4974 = vmatprep.subr.mxu0 0.0
    %4975 = vmatpush1.msra.mxu0 0.0
    %4976 = vmatprep.subr.mxu0 0.0
    %4977 = vmatpush1.msra.mxu0 0.0
    %4978 = vmatprep.subr.mxu0 0.0
    %4979 = vmatpush1.msra.mxu0 0.0
    %4980 = vmatprep.subr.mxu0 0.0
    %4981 = vmatpush1.msra.mxu0 0.0
    %4982 = vmatprep.subr.mxu0 0.0
    %4983 = vmatpush1.msra.mxu0 0.0
    %4984 = vmatprep.subr.mxu0 0.0
    %4985 = vmatpush1.msra.mxu0 0.0
    %4986 = vmatprep.subr.mxu0 0.0
    %4987 = vmatpush1.msra.mxu0 0.0
    %4988 = vmatprep.subr.mxu0 0.0
    %4989 = vmatpush1.msra.mxu0 0.0
    %4990 = vmatprep.subr.mxu0 0.0
    %4991 = vmatpush1.msra.mxu0 0.0
    %4992 = vmatprep.subr.mxu0 0.0
    %4993 = vmatpush1.msra.mxu0 0.0
    %4994 = vmatprep.subr.mxu0 0.0
    %4995 = vmatpush1.msra.mxu0 0.0
    %4996 = vmatprep.subr.mxu0 0.0
    %4997 = vmatpush1.msra.mxu0 0.0
    %4998 = vmatprep.mubr.f32.mxu0 0.0
    %4999 = vmatmul.mubr.f32.gmra.mrb[0].mxu0 %v4923
    %v5000 = vpop.f32.mrb[0].mxu0
    %v5001 = vadd.f32 0.0, %v5000
    %v5002 = vpop.f32.mrb[0].mxu0
    %5003 = vmatprep.mubr.f32.mxu0 0.0
    %5004 = vmatmul.mubr.f32.gmra.mrb[0].mxu0 %v4926
    %v5005 = vpop.f32.mrb[0].mxu0
    %v5006 = vadd.f32 0.0, %v5005
    %v5007 = vpop.f32.mrb[0].mxu0
    %5008 = vmatprep.mubr.f32.mxu0 0.0
    %5009 = vmatmul.mubr.f32.gmra.mrb[0].mxu0 %v4929
    %v5010 = vpop.f32.mrb[0].mxu0
    %v5011 = vadd.f32 0.0, %v5010
    %v5012 = vpop.f32.mrb[0].mxu0
    %5013 = vmatprep.mubr.f32.mxu0 0.0
    %5014 = vmatmul.mubr.f32.gmra.mrb[0].mxu0 %v4932
    %v5015 = vpop.f32.mrb[0].mxu0
    %v5016 = vadd.f32 0.0, %v5015
    %v5017 = vpop.f32.mrb[0].mxu0
    %5018 = vdwg.mxu0
    %s5019 = scalar_lea.vmem [#allocation2], 416
    %v5020 = vld [vmem:[%s5019] sm:$0xff]
    %v5021 = vld [vmem:[%s5019 + $0x8] sm:$0xff]
    %v5022 = vld [vmem:[%s5019 + $0x10] sm:$0xff]
    %v5023 = vld [vmem:[%s5019 + $0x18] sm:$0xff]
    %s5024 = scalar_lea.vmem [#allocation2], 448
    %v5025 = vld [vmem:[%s5024] sm:$0xff]
    %v5026 = vld [vmem:[%s5024 + $0x8] sm:$0xff]
    %v5027 = vld [vmem:[%s5024 + $0x10] sm:$0xff]
    %v5028 = vld [vmem:[%s5024 + $0x18] sm:$0xff]
    %v5030 = vsel %vm74, %v4754, 0
    %v5033 = vsel %vm74, %v4759, 0
    %v5036 = vsel %vm74, %v4764, 0
    %v5039 = vsel %vm74, %v4769, 0
    %5041 = vmatprep.subr.mxu0 0.0
    %5042 = vmatpush1.msra.mxu0 %v5025
    %5043 = vmatprep.subr.mxu0 0.0
    %5044 = vmatpush1.msra.mxu0 %v5026
    %5045 = vmatprep.subr.mxu0 0.0
    %5046 = vmatpush1.msra.mxu0 %v5027
    %5047 = vmatprep.subr.mxu0 0.0
    %5048 = vmatpush1.msra.mxu0 %v5028
    %5049 = vmatprep.subr.mxu0 0.0
    %5050 = vmatpush1.msra.mxu0 0.0
    %5051 = vmatprep.subr.mxu0 0.0
    %5052 = vmatpush1.msra.mxu0 0.0
    %5053 = vmatprep.subr.mxu0 0.0
    %5054 = vmatpush1.msra.mxu0 0.0
    %5055 = vmatprep.subr.mxu0 0.0
    %5056 = vmatpush1.msra.mxu0 0.0
    %5057 = vmatprep.subr.mxu0 0.0
    %5058 = vmatpush1.msra.mxu0 0.0
    %5059 = vmatprep.subr.mxu0 0.0
    %5060 = vmatpush1.msra.mxu0 0.0
    %5061 = vmatprep.subr.mxu0 0.0
    %5062 = vmatpush1.msra.mxu0 0.0
    %5063 = vmatprep.subr.mxu0 0.0
    %5064 = vmatpush1.msra.mxu0 0.0
    %5065 = vmatprep.subr.mxu0 0.0
    %5066 = vmatpush1.msra.mxu0 0.0
    %5067 = vmatprep.subr.mxu0 0.0
    %5068 = vmatpush1.msra.mxu0 0.0
    %5069 = vmatprep.subr.mxu0 0.0
    %5070 = vmatpush1.msra.mxu0 0.0
    %5071 = vmatprep.subr.mxu0 0.0
    %5072 = vmatpush1.msra.mxu0 0.0
    %5073 = vmatprep.subr.mxu0 0.0
    %5074 = vmatpush1.msra.mxu0 0.0
    %5075 = vmatprep.subr.mxu0 0.0
    %5076 = vmatpush1.msra.mxu0 0.0
    %5077 = vmatprep.subr.mxu0 0.0
    %5078 = vmatpush1.msra.mxu0 0.0
    %5079 = vmatprep.subr.mxu0 0.0
    %5080 = vmatpush1.msra.mxu0 0.0
    %5081 = vmatprep.subr.mxu0 0.0
    %5082 = vmatpush1.msra.mxu0 0.0
    %5083 = vmatprep.subr.mxu0 0.0
    %5084 = vmatpush1.msra.mxu0 0.0
    %5085 = vmatprep.subr.mxu0 0.0
    %5086 = vmatpush1.msra.mxu0 0.0
    %5087 = vmatprep.subr.mxu0 0.0
    %5088 = vmatpush1.msra.mxu0 0.0
    %5089 = vmatprep.subr.mxu0 0.0
    %5090 = vmatpush1.msra.mxu0 0.0
    %5091 = vmatprep.subr.mxu0 0.0
    %5092 = vmatpush1.msra.mxu0 0.0
    %5093 = vmatprep.subr.mxu0 0.0
    %5094 = vmatpush1.msra.mxu0 0.0
    %5095 = vmatprep.subr.mxu0 0.0
    %5096 = vmatpush1.msra.mxu0 0.0
    %5097 = vmatprep.subr.mxu0 0.0
    %5098 = vmatpush1.msra.mxu0 0.0
    %5099 = vmatprep.subr.mxu0 0.0
    %5100 = vmatpush1.msra.mxu0 0.0
    %5101 = vmatprep.subr.mxu0 0.0
    %5102 = vmatpush1.msra.mxu0 0.0
    %5103 = vmatprep.subr.mxu0 0.0
    %5104 = vmatpush1.msra.mxu0 0.0
    %5105 = vmatprep.mubr.f32.mxu0 0.0
    %5106 = vmatmul.mubr.f32.gmra.mrb[0].mxu0 %v5030
    %v5107 = vpop.f32.mrb[0].mxu0
    %v5108 = vadd.f32 0.0, %v5107
    %v5109 = vpop.f32.mrb[0].mxu0
    %5110 = vmatprep.mubr.f32.mxu0 0.0
    %5111 = vmatmul.mubr.f32.gmra.mrb[0].mxu0 %v5033
    %v5112 = vpop.f32.mrb[0].mxu0
    %v5113 = vadd.f32 0.0, %v5112
    %v5114 = vpop.f32.mrb[0].mxu0
    %5115 = vmatprep.mubr.f32.mxu0 0.0
    %5116 = vmatmul.mubr.f32.gmra.mrb[0].mxu0 %v5036
    %v5117 = vpop.f32.mrb[0].mxu0
    %v5118 = vadd.f32 0.0, %v5117
    %v5119 = vpop.f32.mrb[0].mxu0
    %5120 = vmatprep.mubr.f32.mxu0 0.0
    %5121 = vmatmul.mubr.f32.gmra.mrb[0].mxu0 %v5039
    %v5122 = vpop.f32.mrb[0].mxu0
    %v5123 = vadd.f32 0.0, %v5122
    %v5124 = vpop.f32.mrb[0].mxu0
    %5125 = vdwg.mxu0
    %s5126 = scalar_lea.vmem [#allocation2], 480
    %v5127 = vld [vmem:[%s5126] sm:$0xff]
    %v5128 = vld [vmem:[%s5126 + $0x8] sm:$0xff]
    %v5129 = vld [vmem:[%s5126 + $0x10] sm:$0xff]
    %v5130 = vld [vmem:[%s5126 + $0x18] sm:$0xff]
    %s5131 = scalar_lea.vmem [#allocation2], 512
    %v5132 = vld [vmem:[%s5131] sm:$0xff]
    %v5133 = vld [vmem:[%s5131 + $0x8] sm:$0xff]
    %v5134 = vld [vmem:[%s5131 + $0x10] sm:$0xff]
    %v5135 = vld [vmem:[%s5131 + $0x18] sm:$0xff]
    %v5137 = vsel %vm74, %v4794, 0
    %v5140 = vsel %vm74, %v4799, 0
    %v5143 = vsel %vm74, %v4804, 0
    %v5146 = vsel %vm74, %v4809, 0
    %5148 = vmatprep.subr.mxu0 0.0
    %5149 = vmatpush1.msra.mxu0 %v5132
    %5150 = vmatprep.subr.mxu0 0.0
    %5151 = vmatpush1.msra.mxu0 %v5133
    %5152 = vmatprep.subr.mxu0 0.0
    %5153 = vmatpush1.msra.mxu0 %v5134
    %5154 = vmatprep.subr.mxu0 0.0
    %5155 = vmatpush1.msra.mxu0 %v5135
    %5156 = vmatprep.subr.mxu0 0.0
    %5157 = vmatpush1.msra.mxu0 0.0
    %5158 = vmatprep.subr.mxu0 0.0
    %5159 = vmatpush1.msra.mxu0 0.0
    %5160 = vmatprep.subr.mxu0 0.0
    %5161 = vmatpush1.msra.mxu0 0.0
    %5162 = vmatprep.subr.mxu0 0.0
    %5163 = vmatpush1.msra.mxu0 0.0
    %5164 = vmatprep.subr.mxu0 0.0
    %5165 = vmatpush1.msra.mxu0 0.0
    %5166 = vmatprep.subr.mxu0 0.0
    %5167 = vmatpush1.msra.mxu0 0.0
    %5168 = vmatprep.subr.mxu0 0.0
    %5169 = vmatpush1.msra.mxu0 0.0
    %5170 = vmatprep.subr.mxu0 0.0
    %5171 = vmatpush1.msra.mxu0 0.0
    %5172 = vmatprep.subr.mxu0 0.0
    %5173 = vmatpush1.msra.mxu0 0.0
    %5174 = vmatprep.subr.mxu0 0.0
    %5175 = vmatpush1.msra.mxu0 0.0
    %5176 = vmatprep.subr.mxu0 0.0
    %5177 = vmatpush1.msra.mxu0 0.0
    %5178 = vmatprep.subr.mxu0 0.0
    %5179 = vmatpush1.msra.mxu0 0.0
    %5180 = vmatprep.subr.mxu0 0.0
    %5181 = vmatpush1.msra.mxu0 0.0
    %5182 = vmatprep.subr.mxu0 0.0
    %5183 = vmatpush1.msra.mxu0 0.0
    %5184 = vmatprep.subr.mxu0 0.0
    %5185 = vmatpush1.msra.mxu0 0.0
    %5186 = vmatprep.subr.mxu0 0.0
    %5187 = vmatpush1.msra.mxu0 0.0
    %5188 = vmatprep.subr.mxu0 0.0
    %5189 = vmatpush1.msra.mxu0 0.0
    %5190 = vmatprep.subr.mxu0 0.0
    %5191 = vmatpush1.msra.mxu0 0.0
    %5192 = vmatprep.subr.mxu0 0.0
    %5193 = vmatpush1.msra.mxu0 0.0
    %5194 = vmatprep.subr.mxu0 0.0
    %5195 = vmatpush1.msra.mxu0 0.0
    %5196 = vmatprep.subr.mxu0 0.0
    %5197 = vmatpush1.msra.mxu0 0.0
    %5198 = vmatprep.subr.mxu0 0.0
    %5199 = vmatpush1.msra.mxu0 0.0
    %5200 = vmatprep.subr.mxu0 0.0
    %5201 = vmatpush1.msra.mxu0 0.0
    %5202 = vmatprep.subr.mxu0 0.0
    %5203 = vmatpush1.msra.mxu0 0.0
    %5204 = vmatprep.subr.mxu0 0.0
    %5205 = vmatpush1.msra.mxu0 0.0
    %5206 = vmatprep.subr.mxu0 0.0
    %5207 = vmatpush1.msra.mxu0 0.0
    %5208 = vmatprep.subr.mxu0 0.0
    %5209 = vmatpush1.msra.mxu0 0.0
    %5210 = vmatprep.subr.mxu0 0.0
    %5211 = vmatpush1.msra.mxu0 0.0
    %5212 = vmatprep.mubr.f32.mxu0 0.0
    %5213 = vmatmul.mubr.f32.gmra.mrb[0].mxu0 %v5137
    %v5214 = vpop.f32.mrb[0].mxu0
    %v5215 = vadd.f32 0.0, %v5214
    %v5216 = vpop.f32.mrb[0].mxu0
    %5217 = vmatprep.mubr.f32.mxu0 0.0
    %5218 = vmatmul.mubr.f32.gmra.mrb[0].mxu0 %v5140
    %v5219 = vpop.f32.mrb[0].mxu0
    %v5220 = vadd.f32 0.0, %v5219
    %v5221 = vpop.f32.mrb[0].mxu0
    %5222 = vmatprep.mubr.f32.mxu0 0.0
    %5223 = vmatmul.mubr.f32.gmra.mrb[0].mxu0 %v5143
    %v5224 = vpop.f32.mrb[0].mxu0
    %v5225 = vadd.f32 0.0, %v5224
    %v5226 = vpop.f32.mrb[0].mxu0
    %5227 = vmatprep.mubr.f32.mxu0 0.0
    %5228 = vmatmul.mubr.f32.gmra.mrb[0].mxu0 %v5146
    %v5229 = vpop.f32.mrb[0].mxu0
    %v5230 = vadd.f32 0.0, %v5229
    %v5231 = vpop.f32.mrb[0].mxu0
    %5232 = vdwg.mxu0
    %s5233 = scalar_lea.vmem [#allocation2], 544
    %v5234 = vld [vmem:[%s5233] sm:$0xff]
    %v5235 = vld [vmem:[%s5233 + $0x8] sm:$0xff]
    %v5236 = vld [vmem:[%s5233 + $0x10] sm:$0xff]
    %v5237 = vld [vmem:[%s5233 + $0x18] sm:$0xff]
    %s5238 = scalar_lea.vmem [#allocation2], 576
    %v5239 = vld [vmem:[%s5238] sm:$0xff]
    %v5240 = vld [vmem:[%s5238 + $0x8] sm:$0xff]
    %v5241 = vld [vmem:[%s5238 + $0x10] sm:$0xff]
    %v5242 = vld [vmem:[%s5238 + $0x18] sm:$0xff]
    %v5244 = vsel %vm74, %v4834, 0
    %v5247 = vsel %vm74, %v4839, 0
    %v5250 = vsel %vm74, %v4844, 0
    %v5253 = vsel %vm74, %v4849, 0
    %5255 = vmatprep.subr.mxu0 0.0
    %5256 = vmatpush1.msra.mxu0 %v5239
    %5257 = vmatprep.subr.mxu0 0.0
    %5258 = vmatpush1.msra.mxu0 %v5240
    %5259 = vmatprep.subr.mxu0 0.0
    %5260 = vmatpush1.msra.mxu0 %v5241
    %5261 = vmatprep.subr.mxu0 0.0
    %5262 = vmatpush1.msra.mxu0 %v5242
    %5263 = vmatprep.subr.mxu0 0.0
    %5264 = vmatpush1.msra.mxu0 0.0
    %5265 = vmatprep.subr.mxu0 0.0
    %5266 = vmatpush1.msra.mxu0 0.0
    %5267 = vmatprep.subr.mxu0 0.0
    %5268 = vmatpush1.msra.mxu0 0.0
    %5269 = vmatprep.subr.mxu0 0.0
    %5270 = vmatpush1.msra.mxu0 0.0
    %5271 = vmatprep.subr.mxu0 0.0
    %5272 = vmatpush1.msra.mxu0 0.0
    %5273 = vmatprep.subr.mxu0 0.0
    %5274 = vmatpush1.msra.mxu0 0.0
    %5275 = vmatprep.subr.mxu0 0.0
    %5276 = vmatpush1.msra.mxu0 0.0
    %5277 = vmatprep.subr.mxu0 0.0
    %5278 = vmatpush1.msra.mxu0 0.0
    %5279 = vmatprep.subr.mxu0 0.0
    %5280 = vmatpush1.msra.mxu0 0.0
    %5281 = vmatprep.subr.mxu0 0.0
    %5282 = vmatpush1.msra.mxu0 0.0
    %5283 = vmatprep.subr.mxu0 0.0
    %5284 = vmatpush1.msra.mxu0 0.0
    %5285 = vmatprep.subr.mxu0 0.0
    %5286 = vmatpush1.msra.mxu0 0.0
    %5287 = vmatprep.subr.mxu0 0.0
    %5288 = vmatpush1.msra.mxu0 0.0
    %5289 = vmatprep.subr.mxu0 0.0
    %5290 = vmatpush1.msra.mxu0 0.0
    %5291 = vmatprep.subr.mxu0 0.0
    %5292 = vmatpush1.msra.mxu0 0.0
    %5293 = vmatprep.subr.mxu0 0.0
    %5294 = vmatpush1.msra.mxu0 0.0
    %5295 = vmatprep.subr.mxu0 0.0
    %5296 = vmatpush1.msra.mxu0 0.0
    %5297 = vmatprep.subr.mxu0 0.0
    %5298 = vmatpush1.msra.mxu0 0.0
    %5299 = vmatprep.subr.mxu0 0.0
    %5300 = vmatpush1.msra.mxu0 0.0
    %5301 = vmatprep.subr.mxu0 0.0
    %5302 = vmatpush1.msra.mxu0 0.0
    %5303 = vmatprep.subr.mxu0 0.0
    %5304 = vmatpush1.msra.mxu0 0.0
    %5305 = vmatprep.subr.mxu0 0.0
    %5306 = vmatpush1.msra.mxu0 0.0
    %5307 = vmatprep.subr.mxu0 0.0
    %5308 = vmatpush1.msra.mxu0 0.0
    %5309 = vmatprep.subr.mxu0 0.0
    %5310 = vmatpush1.msra.mxu0 0.0
    %5311 = vmatprep.subr.mxu0 0.0
    %5312 = vmatpush1.msra.mxu0 0.0
    %5313 = vmatprep.subr.mxu0 0.0
    %5314 = vmatpush1.msra.mxu0 0.0
    %5315 = vmatprep.subr.mxu0 0.0
    %5316 = vmatpush1.msra.mxu0 0.0
    %5317 = vmatprep.subr.mxu0 0.0
    %5318 = vmatpush1.msra.mxu0 0.0
    %5319 = vmatprep.mubr.f32.mxu0 0.0
    %5320 = vmatmul.mubr.f32.gmra.mrb[0].mxu0 %v5244
    %v5321 = vpop.f32.mrb[0].mxu0
    %v5322 = vadd.f32 0.0, %v5321
    %v5323 = vpop.f32.mrb[0].mxu0
    %5324 = vmatprep.mubr.f32.mxu0 0.0
    %5325 = vmatmul.mubr.f32.gmra.mrb[0].mxu0 %v5247
    %v5326 = vpop.f32.mrb[0].mxu0
    %v5327 = vadd.f32 0.0, %v5326
    %v5328 = vpop.f32.mrb[0].mxu0
    %5329 = vmatprep.mubr.f32.mxu0 0.0
    %5330 = vmatmul.mubr.f32.gmra.mrb[0].mxu0 %v5250
    %v5331 = vpop.f32.mrb[0].mxu0
    %v5332 = vadd.f32 0.0, %v5331
    %v5333 = vpop.f32.mrb[0].mxu0
    %5334 = vmatprep.mubr.f32.mxu0 0.0
    %5335 = vmatmul.mubr.f32.gmra.mrb[0].mxu0 %v5253
    %v5336 = vpop.f32.mrb[0].mxu0
    %v5337 = vadd.f32 0.0, %v5336
    %v5338 = vpop.f32.mrb[0].mxu0
    %5339 = vdwg.mxu0
    %s5340 = scalar_lea.vmem [#allocation2], 608
    %v5341 = vld [vmem:[%s5340] sm:$0xff]
    %v5342 = vld [vmem:[%s5340 + $0x8] sm:$0xff]
    %v5343 = vld [vmem:[%s5340 + $0x10] sm:$0xff]
    %v5344 = vld [vmem:[%s5340 + $0x18] sm:$0xff]
    %s5345 = scalar_lea.vmem [#allocation2], 640
    %v5346 = vld [vmem:[%s5345] sm:$0xff]
    %v5347 = vld [vmem:[%s5345 + $0x8] sm:$0xff]
    %v5348 = vld [vmem:[%s5345 + $0x10] sm:$0xff]
    %v5349 = vld [vmem:[%s5345 + $0x18] sm:$0xff]
    %v5351 = vsel %vm74, %v4874, 0
    %v5354 = vsel %vm74, %v4879, 0
    %v5357 = vsel %vm74, %v4884, 0
    %v5360 = vsel %vm74, %v4889, 0
    %5362 = vmatprep.subr.mxu0 0.0
    %5363 = vmatpush1.msra.mxu0 %v5346
    %5364 = vmatprep.subr.mxu0 0.0
    %5365 = vmatpush1.msra.mxu0 %v5347
    %5366 = vmatprep.subr.mxu0 0.0
    %5367 = vmatpush1.msra.mxu0 %v5348
    %5368 = vmatprep.subr.mxu0 0.0
    %5369 = vmatpush1.msra.mxu0 %v5349
    %5370 = vmatprep.subr.mxu0 0.0
    %5371 = vmatpush1.msra.mxu0 0.0
    %5372 = vmatprep.subr.mxu0 0.0
    %5373 = vmatpush1.msra.mxu0 0.0
    %5374 = vmatprep.subr.mxu0 0.0
    %5375 = vmatpush1.msra.mxu0 0.0
    %5376 = vmatprep.subr.mxu0 0.0
    %5377 = vmatpush1.msra.mxu0 0.0
    %5378 = vmatprep.subr.mxu0 0.0
    %5379 = vmatpush1.msra.mxu0 0.0
    %5380 = vmatprep.subr.mxu0 0.0
    %5381 = vmatpush1.msra.mxu0 0.0
    %5382 = vmatprep.subr.mxu0 0.0
    %5383 = vmatpush1.msra.mxu0 0.0
    %5384 = vmatprep.subr.mxu0 0.0
    %5385 = vmatpush1.msra.mxu0 0.0
    %5386 = vmatprep.subr.mxu0 0.0
    %5387 = vmatpush1.msra.mxu0 0.0
    %5388 = vmatprep.subr.mxu0 0.0
    %5389 = vmatpush1.msra.mxu0 0.0
    %5390 = vmatprep.subr.mxu0 0.0
    %5391 = vmatpush1.msra.mxu0 0.0
    %5392 = vmatprep.subr.mxu0 0.0
    %5393 = vmatpush1.msra.mxu0 0.0
    %5394 = vmatprep.subr.mxu0 0.0
    %5395 = vmatpush1.msra.mxu0 0.0
    %5396 = vmatprep.subr.mxu0 0.0
    %5397 = vmatpush1.msra.mxu0 0.0
    %5398 = vmatprep.subr.mxu0 0.0
    %5399 = vmatpush1.msra.mxu0 0.0
    %5400 = vmatprep.subr.mxu0 0.0
    %5401 = vmatpush1.msra.mxu0 0.0
    %5402 = vmatprep.subr.mxu0 0.0
    %5403 = vmatpush1.msra.mxu0 0.0
    %5404 = vmatprep.subr.mxu0 0.0
    %5405 = vmatpush1.msra.mxu0 0.0
    %5406 = vmatprep.subr.mxu0 0.0
    %5407 = vmatpush1.msra.mxu0 0.0
    %5408 = vmatprep.subr.mxu0 0.0
    %5409 = vmatpush1.msra.mxu0 0.0
    %5410 = vmatprep.subr.mxu0 0.0
    %5411 = vmatpush1.msra.mxu0 0.0
    %5412 = vmatprep.subr.mxu0 0.0
    %5413 = vmatpush1.msra.mxu0 0.0
    %5414 = vmatprep.subr.mxu0 0.0
    %5415 = vmatpush1.msra.mxu0 0.0
    %5416 = vmatprep.subr.mxu0 0.0
    %5417 = vmatpush1.msra.mxu0 0.0
    %5418 = vmatprep.subr.mxu0 0.0
    %5419 = vmatpush1.msra.mxu0 0.0
    %5420 = vmatprep.subr.mxu0 0.0
    %5421 = vmatpush1.msra.mxu0 0.0
    %5422 = vmatprep.subr.mxu0 0.0
    %5423 = vmatpush1.msra.mxu0 0.0
    %5424 = vmatprep.subr.mxu0 0.0
    %5425 = vmatpush1.msra.mxu0 0.0
    %5426 = vmatprep.mubr.f32.mxu0 0.0
    %5427 = vmatmul.mubr.f32.gmra.mrb[0].mxu0 %v5351
    %v5428 = vpop.f32.mrb[0].mxu0
    %v5429 = vadd.f32 0.0, %v5428
    %v5430 = vpop.f32.mrb[0].mxu0
    %5431 = vmatprep.mubr.f32.mxu0 0.0
    %5432 = vmatmul.mubr.f32.gmra.mrb[0].mxu0 %v5354
    %v5433 = vpop.f32.mrb[0].mxu0
    %v5434 = vadd.f32 0.0, %v5433
    %v5435 = vpop.f32.mrb[0].mxu0
    %5436 = vmatprep.mubr.f32.mxu0 0.0
    %5437 = vmatmul.mubr.f32.gmra.mrb[0].mxu0 %v5357
    %v5438 = vpop.f32.mrb[0].mxu0
    %v5439 = vadd.f32 0.0, %v5438
    %v5440 = vpop.f32.mrb[0].mxu0
    %5441 = vmatprep.mubr.f32.mxu0 0.0
    %5442 = vmatmul.mubr.f32.gmra.mrb[0].mxu0 %v5360
    %v5443 = vpop.f32.mrb[0].mxu0
    %v5444 = vadd.f32 0.0, %v5443
    %v5445 = vpop.f32.mrb[0].mxu0
    %5446 = vdwg.mxu0
    %s5447 = scalar_lea.vmem [#allocation2], 672
    %v5448 = vld [vmem:[%s5447] sm:$0xff]
    %v5449 = vld [vmem:[%s5447 + $0x8] sm:$0xff]
    %v5450 = vld [vmem:[%s5447 + $0x10] sm:$0xff]
    %v5451 = vld [vmem:[%s5447 + $0x18] sm:$0xff]
    %v5453 = vsel %vm74, %v4894, 0
    %v5456 = vsel %vm74, %v4899, 0
    %v5459 = vsel %vm74, %v4904, 0
    %v5462 = vsel %vm74, %v4909, 0
    %5464 = vmatprep.subr.mxu0 0.0
    %5465 = vmatpush1.msra.mxu0 %v5448
    %5466 = vmatprep.subr.mxu0 0.0
    %5467 = vmatpush1.msra.mxu0 %v5449
    %5468 = vmatprep.subr.mxu0 0.0
    %5469 = vmatpush1.msra.mxu0 %v5450
    %5470 = vmatprep.subr.mxu0 0.0
    %5471 = vmatpush1.msra.mxu0 %v5451
    %5472 = vmatprep.subr.mxu0 0.0
    %5473 = vmatpush1.msra.mxu0 0.0
    %5474 = vmatprep.subr.mxu0 0.0
    %5475 = vmatpush1.msra.mxu0 0.0
    %5476 = vmatprep.subr.mxu0 0.0
    %5477 = vmatpush1.msra.mxu0 0.0
    %5478 = vmatprep.subr.mxu0 0.0
    %5479 = vmatpush1.msra.mxu0 0.0
    %5480 = vmatprep.subr.mxu0 0.0
    %5481 = vmatpush1.msra.mxu0 0.0
    %5482 = vmatprep.subr.mxu0 0.0
    %5483 = vmatpush1.msra.mxu0 0.0
    %5484 = vmatprep.subr.mxu0 0.0
    %5485 = vmatpush1.msra.mxu0 0.0
    %5486 = vmatprep.subr.mxu0 0.0
    %5487 = vmatpush1.msra.mxu0 0.0
    %5488 = vmatprep.subr.mxu0 0.0
    %5489 = vmatpush1.msra.mxu0 0.0
    %5490 = vmatprep.subr.mxu0 0.0
    %5491 = vmatpush1.msra.mxu0 0.0
    %5492 = vmatprep.subr.mxu0 0.0
    %5493 = vmatpush1.msra.mxu0 0.0
    %5494 = vmatprep.subr.mxu0 0.0
    %5495 = vmatpush1.msra.mxu0 0.0
    %5496 = vmatprep.subr.mxu0 0.0
    %5497 = vmatpush1.msra.mxu0 0.0
    %5498 = vmatprep.subr.mxu0 0.0
    %5499 = vmatpush1.msra.mxu0 0.0
    %5500 = vmatprep.subr.mxu0 0.0
    %5501 = vmatpush1.msra.mxu0 0.0
    %5502 = vmatprep.subr.mxu0 0.0
    %5503 = vmatpush1.msra.mxu0 0.0
    %5504 = vmatprep.subr.mxu0 0.0
    %5505 = vmatpush1.msra.mxu0 0.0
    %5506 = vmatprep.subr.mxu0 0.0
    %5507 = vmatpush1.msra.mxu0 0.0
    %5508 = vmatprep.subr.mxu0 0.0
    %5509 = vmatpush1.msra.mxu0 0.0
    %5510 = vmatprep.subr.mxu0 0.0
    %5511 = vmatpush1.msra.mxu0 0.0
    %5512 = vmatprep.subr.mxu0 0.0
    %5513 = vmatpush1.msra.mxu0 0.0
    %5514 = vmatprep.subr.mxu0 0.0
    %5515 = vmatpush1.msra.mxu0 0.0
    %5516 = vmatprep.subr.mxu0 0.0
    %5517 = vmatpush1.msra.mxu0 0.0
    %5518 = vmatprep.subr.mxu0 0.0
    %5519 = vmatpush1.msra.mxu0 0.0
    %5520 = vmatprep.subr.mxu0 0.0
    %5521 = vmatpush1.msra.mxu0 0.0
    %5522 = vmatprep.subr.mxu0 0.0
    %5523 = vmatpush1.msra.mxu0 0.0
    %5524 = vmatprep.subr.mxu0 0.0
    %5525 = vmatpush1.msra.mxu0 0.0
    %5526 = vmatprep.subr.mxu0 0.0
    %5527 = vmatpush1.msra.mxu0 0.0
    %5528 = vmatprep.mubr.f32.mxu0 0.0
    %5529 = vmatmul.mubr.f32.gmra.mrb[0].mxu0 %v5453
    %v5530 = vpop.f32.mrb[0].mxu0
    %v5531 = vadd.f32 0.0, %v5530
    %v5532 = vpop.f32.mrb[0].mxu0
    %5533 = vmatprep.mubr.f32.mxu0 0.0
    %5534 = vmatmul.mubr.f32.gmra.mrb[0].mxu0 %v5456
    %v5535 = vpop.f32.mrb[0].mxu0
    %v5536 = vadd.f32 0.0, %v5535
    %v5537 = vpop.f32.mrb[0].mxu0
    %5538 = vmatprep.mubr.f32.mxu0 0.0
    %5539 = vmatmul.mubr.f32.gmra.mrb[0].mxu0 %v5459
    %v5540 = vpop.f32.mrb[0].mxu0
    %v5541 = vadd.f32 0.0, %v5540
    %v5542 = vpop.f32.mrb[0].mxu0
    %5543 = vmatprep.mubr.f32.mxu0 0.0
    %5544 = vmatmul.mubr.f32.gmra.mrb[0].mxu0 %v5462
    %v5545 = vpop.f32.mrb[0].mxu0
    %v5546 = vadd.f32 0.0, %v5545
    %v5547 = vpop.f32.mrb[0].mxu0
    %5548 = vdwg.mxu0
    %v5550 = vsel %vm74, %v4694, 0
    %v5553 = vsel %vm74, %v4699, 0
    %v5556 = vsel %vm74, %v4704, 0
    %v5559 = vsel %vm74, %v4709, 0
    %5561 = vmatprep.subr.mxu0 0.0
    %5562 = vmatpush1.msra.mxu0 %v4913
    %5563 = vmatprep.subr.mxu0 0.0
    %5564 = vmatpush1.msra.mxu0 %v4914
    %5565 = vmatprep.subr.mxu0 0.0
    %5566 = vmatpush1.msra.mxu0 %v4915
    %5567 = vmatprep.subr.mxu0 0.0
    %5568 = vmatpush1.msra.mxu0 %v4916
    %5569 = vmatprep.subr.mxu0 0.0
    %5570 = vmatpush1.msra.mxu0 0.0
    %5571 = vmatprep.subr.mxu0 0.0
    %5572 = vmatpush1.msra.mxu0 0.0
    %5573 = vmatprep.subr.mxu0 0.0
    %5574 = vmatpush1.msra.mxu0 0.0
    %5575 = vmatprep.subr.mxu0 0.0
    %5576 = vmatpush1.msra.mxu0 0.0
    %5577 = vmatprep.subr.mxu0 0.0
    %5578 = vmatpush1.msra.mxu0 0.0
    %5579 = vmatprep.subr.mxu0 0.0
    %5580 = vmatpush1.msra.mxu0 0.0
    %5581 = vmatprep.subr.mxu0 0.0
    %5582 = vmatpush1.msra.mxu0 0.0
    %5583 = vmatprep.subr.mxu0 0.0
    %5584 = vmatpush1.msra.mxu0 0.0
    %5585 = vmatprep.subr.mxu0 0.0
    %5586 = vmatpush1.msra.mxu0 0.0
    %5587 = vmatprep.subr.mxu0 0.0
    %5588 = vmatpush1.msra.mxu0 0.0
    %5589 = vmatprep.subr.mxu0 0.0
    %5590 = vmatpush1.msra.mxu0 0.0
    %5591 = vmatprep.subr.mxu0 0.0
    %5592 = vmatpush1.msra.mxu0 0.0
    %5593 = vmatprep.subr.mxu0 0.0
    %5594 = vmatpush1.msra.mxu0 0.0
    %5595 = vmatprep.subr.mxu0 0.0
    %5596 = vmatpush1.msra.mxu0 0.0
    %5597 = vmatprep.subr.mxu0 0.0
    %5598 = vmatpush1.msra.mxu0 0.0
    %5599 = vmatprep.subr.mxu0 0.0
    %5600 = vmatpush1.msra.mxu0 0.0
    %5601 = vmatprep.subr.mxu0 0.0
    %5602 = vmatpush1.msra.mxu0 0.0
    %5603 = vmatprep.subr.mxu0 0.0
    %5604 = vmatpush1.msra.mxu0 0.0
    %5605 = vmatprep.subr.mxu0 0.0
    %5606 = vmatpush1.msra.mxu0 0.0
    %5607 = vmatprep.subr.mxu0 0.0
    %5608 = vmatpush1.msra.mxu0 0.0
    %5609 = vmatprep.subr.mxu0 0.0
    %5610 = vmatpush1.msra.mxu0 0.0
    %5611 = vmatprep.subr.mxu0 0.0
    %5612 = vmatpush1.msra.mxu0 0.0
    %5613 = vmatprep.subr.mxu0 0.0
    %5614 = vmatpush1.msra.mxu0 0.0
    %5615 = vmatprep.subr.mxu0 0.0
    %5616 = vmatpush1.msra.mxu0 0.0
    %5617 = vmatprep.subr.mxu0 0.0
    %5618 = vmatpush1.msra.mxu0 0.0
    %5619 = vmatprep.subr.mxu0 0.0
    %5620 = vmatpush1.msra.mxu0 0.0
    %5621 = vmatprep.subr.mxu0 0.0
    %5622 = vmatpush1.msra.mxu0 0.0
    %5623 = vmatprep.subr.mxu0 0.0
    %5624 = vmatpush1.msra.mxu0 0.0
    %5625 = vmatprep.mubr.f32.mxu0 0.0
    %5626 = vmatmul.mubr.f32.gmra.mrb[0].mxu0 %v5550
    %v5627 = vpop.f32.mrb[0].mxu0
    %v5628 = vadd.f32 %v5001, %v5627
    %v5629 = vpop.f32.mrb[0].mxu0
    %5630 = vmatprep.mubr.f32.mxu0 0.0
    %5631 = vmatmul.mubr.f32.gmra.mrb[0].mxu0 %v5553
    %v5632 = vpop.f32.mrb[0].mxu0
    %v5633 = vadd.f32 %v5006, %v5632
    %v5634 = vpop.f32.mrb[0].mxu0
    %5635 = vmatprep.mubr.f32.mxu0 0.0
    %5636 = vmatmul.mubr.f32.gmra.mrb[0].mxu0 %v5556
    %v5637 = vpop.f32.mrb[0].mxu0
    %v5638 = vadd.f32 %v5011, %v5637
    %v5639 = vpop.f32.mrb[0].mxu0
    %5640 = vmatprep.mubr.f32.mxu0 0.0
    %5641 = vmatmul.mubr.f32.gmra.mrb[0].mxu0 %v5559
    %v5642 = vpop.f32.mrb[0].mxu0
    %v5643 = vadd.f32 %v5016, %v5642
    %v5644 = vpop.f32.mrb[0].mxu0
    %5645 = vdwg.mxu0
    %v5647 = vsel %vm74, %v4734, 0
    %v5650 = vsel %vm74, %v4739, 0
    %v5653 = vsel %vm74, %v4744, 0
    %v5656 = vsel %vm74, %v4749, 0
    %5658 = vmatprep.subr.mxu0 0.0
    %5659 = vmatpush1.msra.mxu0 %v5020
    %5660 = vmatprep.subr.mxu0 0.0
    %5661 = vmatpush1.msra.mxu0 %v5021
    %5662 = vmatprep.subr.mxu0 0.0
    %5663 = vmatpush1.msra.mxu0 %v5022
    %5664 = vmatprep.subr.mxu0 0.0
    %5665 = vmatpush1.msra.mxu0 %v5023
    %5666 = vmatprep.subr.mxu0 0.0
    %5667 = vmatpush1.msra.mxu0 0.0
    %5668 = vmatprep.subr.mxu0 0.0
    %5669 = vmatpush1.msra.mxu0 0.0
    %5670 = vmatprep.subr.mxu0 0.0
    %5671 = vmatpush1.msra.mxu0 0.0
    %5672 = vmatprep.subr.mxu0 0.0
    %5673 = vmatpush1.msra.mxu0 0.0
    %5674 = vmatprep.subr.mxu0 0.0
    %5675 = vmatpush1.msra.mxu0 0.0
    %5676 = vmatprep.subr.mxu0 0.0
    %5677 = vmatpush1.msra.mxu0 0.0
    %5678 = vmatprep.subr.mxu0 0.0
    %5679 = vmatpush1.msra.mxu0 0.0
    %5680 = vmatprep.subr.mxu0 0.0
    %5681 = vmatpush1.msra.mxu0 0.0
    %5682 = vmatprep.subr.mxu0 0.0
    %5683 = vmatpush1.msra.mxu0 0.0
    %5684 = vmatprep.subr.mxu0 0.0
    %5685 = vmatpush1.msra.mxu0 0.0
    %5686 = vmatprep.subr.mxu0 0.0
    %5687 = vmatpush1.msra.mxu0 0.0
    %5688 = vmatprep.subr.mxu0 0.0
    %5689 = vmatpush1.msra.mxu0 0.0
    %5690 = vmatprep.subr.mxu0 0.0
    %5691 = vmatpush1.msra.mxu0 0.0
    %5692 = vmatprep.subr.mxu0 0.0
    %5693 = vmatpush1.msra.mxu0 0.0
    %5694 = vmatprep.subr.mxu0 0.0
    %5695 = vmatpush1.msra.mxu0 0.0
    %5696 = vmatprep.subr.mxu0 0.0
    %5697 = vmatpush1.msra.mxu0 0.0
    %5698 = vmatprep.subr.mxu0 0.0
    %5699 = vmatpush1.msra.mxu0 0.0
    %5700 = vmatprep.subr.mxu0 0.0
    %5701 = vmatpush1.msra.mxu0 0.0
    %5702 = vmatprep.subr.mxu0 0.0
    %5703 = vmatpush1.msra.mxu0 0.0
    %5704 = vmatprep.subr.mxu0 0.0
    %5705 = vmatpush1.msra.mxu0 0.0
    %5706 = vmatprep.subr.mxu0 0.0
    %5707 = vmatpush1.msra.mxu0 0.0
    %5708 = vmatprep.subr.mxu0 0.0
    %5709 = vmatpush1.msra.mxu0 0.0
    %5710 = vmatprep.subr.mxu0 0.0
    %5711 = vmatpush1.msra.mxu0 0.0
    %5712 = vmatprep.subr.mxu0 0.0
    %5713 = vmatpush1.msra.mxu0 0.0
    %5714 = vmatprep.subr.mxu0 0.0
    %5715 = vmatpush1.msra.mxu0 0.0
    %5716 = vmatprep.subr.mxu0 0.0
    %5717 = vmatpush1.msra.mxu0 0.0
    %5718 = vmatprep.subr.mxu0 0.0
    %5719 = vmatpush1.msra.mxu0 0.0
    %5720 = vmatprep.subr.mxu0 0.0
    %5721 = vmatpush1.msra.mxu0 0.0
    %5722 = vmatprep.mubr.f32.mxu0 0.0
    %5723 = vmatmul.mubr.f32.gmra.mrb[0].mxu0 %v5647
    %v5724 = vpop.f32.mrb[0].mxu0
    %v5725 = vadd.f32 %v5108, %v5724
    %v5726 = vpop.f32.mrb[0].mxu0
    %5727 = vmatprep.mubr.f32.mxu0 0.0
    %5728 = vmatmul.mubr.f32.gmra.mrb[0].mxu0 %v5650
    %v5729 = vpop.f32.mrb[0].mxu0
    %v5730 = vadd.f32 %v5113, %v5729
    %v5731 = vpop.f32.mrb[0].mxu0
    %5732 = vmatprep.mubr.f32.mxu0 0.0
    %5733 = vmatmul.mubr.f32.gmra.mrb[0].mxu0 %v5653
    %v5734 = vpop.f32.mrb[0].mxu0
    %v5735 = vadd.f32 %v5118, %v5734
    %v5736 = vpop.f32.mrb[0].mxu0
    %5737 = vmatprep.mubr.f32.mxu0 0.0
    %5738 = vmatmul.mubr.f32.gmra.mrb[0].mxu0 %v5656
    %v5739 = vpop.f32.mrb[0].mxu0
    %v5740 = vadd.f32 %v5123, %v5739
    %v5741 = vpop.f32.mrb[0].mxu0
    %5742 = vdwg.mxu0
    %v5744 = vsel %vm74, %v4774, 0
    %v5747 = vsel %vm74, %v4779, 0
    %v5750 = vsel %vm74, %v4784, 0
    %v5753 = vsel %vm74, %v4789, 0
    %5755 = vmatprep.subr.mxu0 0.0
    %5756 = vmatpush1.msra.mxu0 %v5127
    %5757 = vmatprep.subr.mxu0 0.0
    %5758 = vmatpush1.msra.mxu0 %v5128
    %5759 = vmatprep.subr.mxu0 0.0
    %5760 = vmatpush1.msra.mxu0 %v5129
    %5761 = vmatprep.subr.mxu0 0.0
    %5762 = vmatpush1.msra.mxu0 %v5130
    %5763 = vmatprep.subr.mxu0 0.0
    %5764 = vmatpush1.msra.mxu0 0.0
    %5765 = vmatprep.subr.mxu0 0.0
    %5766 = vmatpush1.msra.mxu0 0.0
    %5767 = vmatprep.subr.mxu0 0.0
    %5768 = vmatpush1.msra.mxu0 0.0
    %5769 = vmatprep.subr.mxu0 0.0
    %5770 = vmatpush1.msra.mxu0 0.0
    %5771 = vmatprep.subr.mxu0 0.0
    %5772 = vmatpush1.msra.mxu0 0.0
    %5773 = vmatprep.subr.mxu0 0.0
    %5774 = vmatpush1.msra.mxu0 0.0
    %5775 = vmatprep.subr.mxu0 0.0
    %5776 = vmatpush1.msra.mxu0 0.0
    %5777 = vmatprep.subr.mxu0 0.0
    %5778 = vmatpush1.msra.mxu0 0.0
    %5779 = vmatprep.subr.mxu0 0.0
    %5780 = vmatpush1.msra.mxu0 0.0
    %5781 = vmatprep.subr.mxu0 0.0
    %5782 = vmatpush1.msra.mxu0 0.0
    %5783 = vmatprep.subr.mxu0 0.0
    %5784 = vmatpush1.msra.mxu0 0.0
    %5785 = vmatprep.subr.mxu0 0.0
    %5786 = vmatpush1.msra.mxu0 0.0
    %5787 = vmatprep.subr.mxu0 0.0
    %5788 = vmatpush1.msra.mxu0 0.0
    %5789 = vmatprep.subr.mxu0 0.0
    %5790 = vmatpush1.msra.mxu0 0.0
    %5791 = vmatprep.subr.mxu0 0.0
    %5792 = vmatpush1.msra.mxu0 0.0
    %5793 = vmatprep.subr.mxu0 0.0
    %5794 = vmatpush1.msra.mxu0 0.0
    %5795 = vmatprep.subr.mxu0 0.0
    %5796 = vmatpush1.msra.mxu0 0.0
    %5797 = vmatprep.subr.mxu0 0.0
    %5798 = vmatpush1.msra.mxu0 0.0
    %5799 = vmatprep.subr.mxu0 0.0
    %5800 = vmatpush1.msra.mxu0 0.0
    %5801 = vmatprep.subr.mxu0 0.0
    %5802 = vmatpush1.msra.mxu0 0.0
    %5803 = vmatprep.subr.mxu0 0.0
    %5804 = vmatpush1.msra.mxu0 0.0
    %5805 = vmatprep.subr.mxu0 0.0
    %5806 = vmatpush1.msra.mxu0 0.0
    %5807 = vmatprep.subr.mxu0 0.0
    %5808 = vmatpush1.msra.mxu0 0.0
    %5809 = vmatprep.subr.mxu0 0.0
    %5810 = vmatpush1.msra.mxu0 0.0
    %5811 = vmatprep.subr.mxu0 0.0
    %5812 = vmatpush1.msra.mxu0 0.0
    %5813 = vmatprep.subr.mxu0 0.0
    %5814 = vmatpush1.msra.mxu0 0.0
    %5815 = vmatprep.subr.mxu0 0.0
    %5816 = vmatpush1.msra.mxu0 0.0
    %5817 = vmatprep.subr.mxu0 0.0
    %5818 = vmatpush1.msra.mxu0 0.0
    %5819 = vmatprep.mubr.f32.mxu0 0.0
    %5820 = vmatmul.mubr.f32.gmra.mrb[0].mxu0 %v5744
    %v5821 = vpop.f32.mrb[0].mxu0
    %v5822 = vadd.f32 %v5215, %v5821
    %v5823 = vpop.f32.mrb[0].mxu0
    %5824 = vmatprep.mubr.f32.mxu0 0.0
    %5825 = vmatmul.mubr.f32.gmra.mrb[0].mxu0 %v5747
    %v5826 = vpop.f32.mrb[0].mxu0
    %v5827 = vadd.f32 %v5220, %v5826
    %v5828 = vpop.f32.mrb[0].mxu0
    %5829 = vmatprep.mubr.f32.mxu0 0.0
    %5830 = vmatmul.mubr.f32.gmra.mrb[0].mxu0 %v5750
    %v5831 = vpop.f32.mrb[0].mxu0
    %v5832 = vadd.f32 %v5225, %v5831
    %v5833 = vpop.f32.mrb[0].mxu0
    %5834 = vmatprep.mubr.f32.mxu0 0.0
    %5835 = vmatmul.mubr.f32.gmra.mrb[0].mxu0 %v5753
    %v5836 = vpop.f32.mrb[0].mxu0
    %v5837 = vadd.f32 %v5230, %v5836
    %v5838 = vpop.f32.mrb[0].mxu0
    %5839 = vdwg.mxu0
    %v5841 = vsel %vm74, %v4814, 0
    %v5844 = vsel %vm74, %v4819, 0
    %v5847 = vsel %vm74, %v4824, 0
    %v5850 = vsel %vm74, %v4829, 0
    %5852 = vmatprep.subr.mxu0 0.0
    %5853 = vmatpush1.msra.mxu0 %v5234
    %5854 = vmatprep.subr.mxu0 0.0
    %5855 = vmatpush1.msra.mxu0 %v5235
    %5856 = vmatprep.subr.mxu0 0.0
    %5857 = vmatpush1.msra.mxu0 %v5236
    %5858 = vmatprep.subr.mxu0 0.0
    %5859 = vmatpush1.msra.mxu0 %v5237
    %5860 = vmatprep.subr.mxu0 0.0
    %5861 = vmatpush1.msra.mxu0 0.0
    %5862 = vmatprep.subr.mxu0 0.0
    %5863 = vmatpush1.msra.mxu0 0.0
    %5864 = vmatprep.subr.mxu0 0.0
    %5865 = vmatpush1.msra.mxu0 0.0
    %5866 = vmatprep.subr.mxu0 0.0
    %5867 = vmatpush1.msra.mxu0 0.0
    %5868 = vmatprep.subr.mxu0 0.0
    %5869 = vmatpush1.msra.mxu0 0.0
    %5870 = vmatprep.subr.mxu0 0.0
    %5871 = vmatpush1.msra.mxu0 0.0
    %5872 = vmatprep.subr.mxu0 0.0
    %5873 = vmatpush1.msra.mxu0 0.0
    %5874 = vmatprep.subr.mxu0 0.0
    %5875 = vmatpush1.msra.mxu0 0.0
    %5876 = vmatprep.subr.mxu0 0.0
    %5877 = vmatpush1.msra.mxu0 0.0
    %5878 = vmatprep.subr.mxu0 0.0
    %5879 = vmatpush1.msra.mxu0 0.0
    %5880 = vmatprep.subr.mxu0 0.0
    %5881 = vmatpush1.msra.mxu0 0.0
    %5882 = vmatprep.subr.mxu0 0.0
    %5883 = vmatpush1.msra.mxu0 0.0
    %5884 = vmatprep.subr.mxu0 0.0
    %5885 = vmatpush1.msra.mxu0 0.0
    %5886 = vmatprep.subr.mxu0 0.0
    %5887 = vmatpush1.msra.mxu0 0.0
    %5888 = vmatprep.subr.mxu0 0.0
    %5889 = vmatpush1.msra.mxu0 0.0
    %5890 = vmatprep.subr.mxu0 0.0
    %5891 = vmatpush1.msra.mxu0 0.0
    %5892 = vmatprep.subr.mxu0 0.0
    %5893 = vmatpush1.msra.mxu0 0.0
    %5894 = vmatprep.subr.mxu0 0.0
    %5895 = vmatpush1.msra.mxu0 0.0
    %5896 = vmatprep.subr.mxu0 0.0
    %5897 = vmatpush1.msra.mxu0 0.0
    %5898 = vmatprep.subr.mxu0 0.0
    %5899 = vmatpush1.msra.mxu0 0.0
    %5900 = vmatprep.subr.mxu0 0.0
    %5901 = vmatpush1.msra.mxu0 0.0
    %5902 = vmatprep.subr.mxu0 0.0
    %5903 = vmatpush1.msra.mxu0 0.0
    %5904 = vmatprep.subr.mxu0 0.0
    %5905 = vmatpush1.msra.mxu0 0.0
    %5906 = vmatprep.subr.mxu0 0.0
    %5907 = vmatpush1.msra.mxu0 0.0
    %5908 = vmatprep.subr.mxu0 0.0
    %5909 = vmatpush1.msra.mxu0 0.0
    %5910 = vmatprep.subr.mxu0 0.0
    %5911 = vmatpush1.msra.mxu0 0.0
    %5912 = vmatprep.subr.mxu0 0.0
    %5913 = vmatpush1.msra.mxu0 0.0
    %5914 = vmatprep.subr.mxu0 0.0
    %5915 = vmatpush1.msra.mxu0 0.0
    %5916 = vmatprep.mubr.f32.mxu0 0.0
    %5917 = vmatmul.mubr.f32.gmra.mrb[0].mxu0 %v5841
    %v5918 = vpop.f32.mrb[0].mxu0
    %v5919 = vadd.f32 %v5322, %v5918
    %v5920 = vpop.f32.mrb[0].mxu0
    %5921 = vmatprep.mubr.f32.mxu0 0.0
    %5922 = vmatmul.mubr.f32.gmra.mrb[0].mxu0 %v5844
    %v5923 = vpop.f32.mrb[0].mxu0
    %v5924 = vadd.f32 %v5327, %v5923
    %v5925 = vpop.f32.mrb[0].mxu0
    %5926 = vmatprep.mubr.f32.mxu0 0.0
    %5927 = vmatmul.mubr.f32.gmra.mrb[0].mxu0 %v5847
    %v5928 = vpop.f32.mrb[0].mxu0
    %v5929 = vadd.f32 %v5332, %v5928
    %v5930 = vpop.f32.mrb[0].mxu0
    %5931 = vmatprep.mubr.f32.mxu0 0.0
    %5932 = vmatmul.mubr.f32.gmra.mrb[0].mxu0 %v5850
    %v5933 = vpop.f32.mrb[0].mxu0
    %v5934 = vadd.f32 %v5337, %v5933
    %v5935 = vpop.f32.mrb[0].mxu0
    %5936 = vdwg.mxu0
    %v5938 = vsel %vm74, %v4854, 0
    %v5941 = vsel %vm74, %v4859, 0
    %v5944 = vsel %vm74, %v4864, 0
    %v5947 = vsel %vm74, %v4869, 0
    %5949 = vmatprep.subr.mxu0 0.0
    %5950 = vmatpush1.msra.mxu0 %v5341
    %5951 = vmatprep.subr.mxu0 0.0
    %5952 = vmatpush1.msra.mxu0 %v5342
    %5953 = vmatprep.subr.mxu0 0.0
    %5954 = vmatpush1.msra.mxu0 %v5343
    %5955 = vmatprep.subr.mxu0 0.0
    %5956 = vmatpush1.msra.mxu0 %v5344
    %5957 = vmatprep.subr.mxu0 0.0
    %5958 = vmatpush1.msra.mxu0 0.0
    %5959 = vmatprep.subr.mxu0 0.0
    %5960 = vmatpush1.msra.mxu0 0.0
    %5961 = vmatprep.subr.mxu0 0.0
    %5962 = vmatpush1.msra.mxu0 0.0
    %5963 = vmatprep.subr.mxu0 0.0
    %5964 = vmatpush1.msra.mxu0 0.0
    %5965 = vmatprep.subr.mxu0 0.0
    %5966 = vmatpush1.msra.mxu0 0.0
    %5967 = vmatprep.subr.mxu0 0.0
    %5968 = vmatpush1.msra.mxu0 0.0
    %5969 = vmatprep.subr.mxu0 0.0
    %5970 = vmatpush1.msra.mxu0 0.0
    %5971 = vmatprep.subr.mxu0 0.0
    %5972 = vmatpush1.msra.mxu0 0.0
    %5973 = vmatprep.subr.mxu0 0.0
    %5974 = vmatpush1.msra.mxu0 0.0
    %5975 = vmatprep.subr.mxu0 0.0
    %5976 = vmatpush1.msra.mxu0 0.0
    %5977 = vmatprep.subr.mxu0 0.0
    %5978 = vmatpush1.msra.mxu0 0.0
    %5979 = vmatprep.subr.mxu0 0.0
    %5980 = vmatpush1.msra.mxu0 0.0
    %5981 = vmatprep.subr.mxu0 0.0
    %5982 = vmatpush1.msra.mxu0 0.0
    %5983 = vmatprep.subr.mxu0 0.0
    %5984 = vmatpush1.msra.mxu0 0.0
    %5985 = vmatprep.subr.mxu0 0.0
    %5986 = vmatpush1.msra.mxu0 0.0
    %5987 = vmatprep.subr.mxu0 0.0
    %5988 = vmatpush1.msra.mxu0 0.0
    %5989 = vmatprep.subr.mxu0 0.0
    %5990 = vmatpush1.msra.mxu0 0.0
    %5991 = vmatprep.subr.mxu0 0.0
    %5992 = vmatpush1.msra.mxu0 0.0
    %5993 = vmatprep.subr.mxu0 0.0
    %5994 = vmatpush1.msra.mxu0 0.0
    %5995 = vmatprep.subr.mxu0 0.0
    %5996 = vmatpush1.msra.mxu0 0.0
    %5997 = vmatprep.subr.mxu0 0.0
    %5998 = vmatpush1.msra.mxu0 0.0
    %5999 = vmatprep.subr.mxu0 0.0
    %6000 = vmatpush1.msra.mxu0 0.0
    %6001 = vmatprep.subr.mxu0 0.0
    %6002 = vmatpush1.msra.mxu0 0.0
    %6003 = vmatprep.subr.mxu0 0.0
    %6004 = vmatpush1.msra.mxu0 0.0
    %6005 = vmatprep.subr.mxu0 0.0
    %6006 = vmatpush1.msra.mxu0 0.0
    %6007 = vmatprep.subr.mxu0 0.0
    %6008 = vmatpush1.msra.mxu0 0.0
    %6009 = vmatprep.subr.mxu0 0.0
    %6010 = vmatpush1.msra.mxu0 0.0
    %6011 = vmatprep.subr.mxu0 0.0
    %6012 = vmatpush1.msra.mxu0 0.0
    %6013 = vmatprep.mubr.f32.mxu0 0.0
    %6014 = vmatmul.mubr.f32.gmra.mrb[0].mxu0 %v5938
    %v6015 = vpop.f32.mrb[0].mxu0
    %v6016 = vadd.f32 %v5429, %v6015
    %v6017 = vpop.f32.mrb[0].mxu0
    %6018 = vmatprep.mubr.f32.mxu0 0.0
    %6019 = vmatmul.mubr.f32.gmra.mrb[0].mxu0 %v5941
    %v6020 = vpop.f32.mrb[0].mxu0
    %v6021 = vadd.f32 %v5434, %v6020
    %v6022 = vpop.f32.mrb[0].mxu0
    %6023 = vmatprep.mubr.f32.mxu0 0.0
    %6024 = vmatmul.mubr.f32.gmra.mrb[0].mxu0 %v5944
    %v6025 = vpop.f32.mrb[0].mxu0
    %v6026 = vadd.f32 %v5439, %v6025
    %v6027 = vpop.f32.mrb[0].mxu0
    %6028 = vmatprep.mubr.f32.mxu0 0.0
    %6029 = vmatmul.mubr.f32.gmra.mrb[0].mxu0 %v5947
    %v6030 = vpop.f32.mrb[0].mxu0
    %v6031 = vadd.f32 %v5444, %v6030
    %v6032 = vpop.f32.mrb[0].mxu0
    %6033 = vdwg.mxu0
    %v6034 = vadd.f32 %v5628, %v5725
    %v6035 = vadd.f32 %v5633, %v5730
    %v6036 = vadd.f32 %v5638, %v5735
    %v6037 = vadd.f32 %v5643, %v5740
    %v6038 = vadd.f32 %v5822, %v5919
    %v6039 = vadd.f32 %v5827, %v5924
    %v6040 = vadd.f32 %v5832, %v5929
    %v6041 = vadd.f32 %v5837, %v5934
    %v6042 = vadd.f32 %v6016, %v5531
    %v6043 = vadd.f32 %v6021, %v5536
    %v6044 = vadd.f32 %v6026, %v5541
    %v6045 = vadd.f32 %v6031, %v5546
    %v6046 = vadd.f32 %v6034, %v6038
    %v6047 = vadd.f32 %v6035, %v6039
    %v6048 = vadd.f32 %v6036, %v6040
    %v6049 = vadd.f32 %v6037, %v6041
    %v6050 = vadd.f32 %v6046, %v6042
    %v6051 = vadd.f32 %v6047, %v6043
    %v6052 = vadd.f32 %v6048, %v6044
    %v6053 = vadd.f32 %v6049, %v6045
    %v6054 = vsel %vm74, %v6050, 0.0
    %6055 = vadd.xlane.f32.xlu0 %v6054
    %v6056 = vpop.xlane.xlu0 %6055
    %v6057 = vsel %vm74, %v6051, 0.0
    %6058 = vadd.xlane.f32.xlu0 %v6057
    %v6059 = vpop.xlane.xlu0 %6058
    %v6060 = vsel %vm74, %v6052, 0.0
    %6061 = vadd.xlane.f32.xlu0 %v6060
    %v6062 = vpop.xlane.xlu0 %6061
    %v6063 = vsel %vm74, %v6053, 0.0
    %6064 = vadd.xlane.f32.xlu0 %v6063
    %v6065 = vpop.xlane.xlu0 %6064
    %v6066 = vmul.f32 %v6056, %v297
    %v6067 = vmul.f32 %v6059, %v297
    %v6068 = vmul.f32 %v6062, %v297
    %v6069 = vmul.f32 %v6065, %v297
    %v6070 = vsub.f32 %v6050, %v6066
    %v6071 = vsub.f32 %v6051, %v6067
    %v6072 = vsub.f32 %v6052, %v6068
    %v6073 = vsub.f32 %v6053, %v6069
    %v6074 = vmul.f32 %v6070, %v6070
    %v6075 = vmul.f32 %v6071, %v6071
    %v6076 = vmul.f32 %v6072, %v6072
    %v6077 = vmul.f32 %v6073, %v6073
    %v6078 = vsel %vm74, %v6074, 0.0
    %6079 = vadd.xlane.f32.xlu0 %v6078
    %v6080 = vpop.xlane.xlu0 %6079
    %v6081 = vsel %vm74, %v6075, 0.0
    %6082 = vadd.xlane.f32.xlu0 %v6081
    %v6083 = vpop.xlane.xlu0 %6082
    %v6084 = vsel %vm74, %v6076, 0.0
    %6085 = vadd.xlane.f32.xlu0 %v6084
    %v6086 = vpop.xlane.xlu0 %6085
    %v6087 = vsel %vm74, %v6077, 0.0
    %6088 = vadd.xlane.f32.xlu0 %v6087
    %v6089 = vpop.xlane.xlu0 %6088
    %v6090 = vmul.f32 %v6080, %v297
    %v6091 = vmul.f32 %v6083, %v297
    %v6092 = vmul.f32 %v6086, %v297
    %v6093 = vmul.f32 %v6089, %v297
    %v6094 = vadd.f32 %v6090, 1e-05
    %v6095 = vadd.f32 %v6091, 1e-05
    %v6096 = vadd.f32 %v6092, 1e-05
    %v6097 = vadd.f32 %v6093, 1e-05
    %v6098 = vrsqrt.pop %v6094
    %v6099 = vrsqrt.pop %v6095
    %v6100 = vrsqrt.pop %v6096
    %v6101 = vrsqrt.pop %v6097
    %v6102 = vmul.f32 %v6070, %v6098
    %v6103 = vmul.f32 %v6071, %v6099
    %v6104 = vmul.f32 %v6072, %v6100
    %v6105 = vmul.f32 %v6073, %v6101
    %v6106 = vlaneseq
    %v6107 = vshrl.u32 %v6106, 7
    %v6108 = vsub.s32 6, %v6107
    %v6109 = vrot.slane %v4490, %v6108
    %v6110 = vmul.f32 %v6102, %v6109
    %v6111 = vmul.f32 %v6103, %v6109
    %v6112 = vmul.f32 %v6104, %v6109
    %v6113 = vmul.f32 %v6105, %v6109
    %v6114 = vlaneseq
    %v6115 = vshrl.u32 %v6114, 7
    %v6116 = vsub.s32 7, %v6115
    %v6117 = vrot.slane %v4490, %v6116
    %v6118 = vadd.f32 %v6110, %v6117
    %v6119 = vadd.f32 %v6111, %v6117
    %v6120 = vadd.f32 %v6112, %v6117
    %v6121 = vadd.f32 %v6113, %v6117
    %6122 = vmatprep.subr.mxu0 0.0
    %6123 = vmatpush1.msra.mxu0 %v6118
    %6124 = vmatprep.subr.mxu0 0.0
    %6125 = vmatpush1.msra.mxu0 %v6119
    %6126 = vmatprep.subr.mxu0 0.0
    %6127 = vmatpush1.msra.mxu0 %v6120
    %6128 = vmatprep.subr.mxu0 0.0
    %6129 = vmatpush1.msra.mxu0 %v6121
    %6130 = vmatprep.subr.mxu0 0.0
    %6131 = vmatpush1.msra.mxu0 0.0
    %6132 = vmatprep.subr.mxu0 0.0
    %6133 = vmatpush1.msra.mxu0 0.0
    %6134 = vmatprep.subr.mxu0 0.0
    %6135 = vmatpush1.msra.mxu0 0.0
    %6136 = vmatprep.subr.mxu0 0.0
    %6137 = vmatpush1.msra.mxu0 0.0
    %6138 = vmatprep.subr.mxu0 0.0
    %6139 = vmatpush1.msra.mxu0 0.0
    %6140 = vmatprep.subr.mxu0 0.0
    %6141 = vmatpush1.msra.mxu0 0.0
    %6142 = vmatprep.subr.mxu0 0.0
    %6143 = vmatpush1.msra.mxu0 0.0
    %6144 = vmatprep.subr.mxu0 0.0
    %6145 = vmatpush1.msra.mxu0 0.0
    %6146 = vmatprep.subr.mxu0 0.0
    %6147 = vmatpush1.msra.mxu0 0.0
    %6148 = vmatprep.subr.mxu0 0.0
    %6149 = vmatpush1.msra.mxu0 0.0
    %6150 = vmatprep.subr.mxu0 0.0
    %6151 = vmatpush1.msra.mxu0 0.0
    %6152 = vmatprep.subr.mxu0 0.0
    %6153 = vmatpush1.msra.mxu0 0.0
    %6154 = vmatprep.subr.mxu0 0.0
    %6155 = vmatpush1.msra.mxu0 0.0
    %6156 = vmatprep.subr.mxu0 0.0
    %6157 = vmatpush1.msra.mxu0 0.0
    %6158 = vmatprep.subr.mxu0 0.0
    %6159 = vmatpush1.msra.mxu0 0.0
    %6160 = vmatprep.subr.mxu0 0.0
    %6161 = vmatpush1.msra.mxu0 0.0
    %6162 = vmatprep.subr.mxu0 0.0
    %6163 = vmatpush1.msra.mxu0 0.0
    %6164 = vmatprep.subr.mxu0 0.0
    %6165 = vmatpush1.msra.mxu0 0.0
    %6166 = vmatprep.subr.mxu0 0.0
    %6167 = vmatpush1.msra.mxu0 0.0
    %6168 = vmatprep.subr.mxu0 0.0
    %6169 = vmatpush1.msra.mxu0 0.0
    %6170 = vmatprep.subr.mxu0 0.0
    %6171 = vmatpush1.msra.mxu0 0.0
    %6172 = vmatprep.subr.mxu0 0.0
    %6173 = vmatpush1.msra.mxu0 0.0
    %6174 = vmatprep.subr.mxu0 0.0
    %6175 = vmatpush1.msra.mxu0 0.0
    %6176 = vmatprep.subr.mxu0 0.0
    %6177 = vmatpush1.msra.mxu0 0.0
    %6178 = vmatprep.subr.mxu0 0.0
    %6179 = vmatpush1.msra.mxu0 0.0
    %6180 = vmatprep.subr.mxu0 0.0
    %6181 = vmatpush1.msra.mxu0 0.0
    %6182 = vmatprep.subr.mxu0 0.0
    %6183 = vmatpush1.msra.mxu0 0.0
    %6184 = vmatprep.subr.mxu0 0.0
    %6185 = vmatpush1.msra.mxu0 0.0
    %6186 = vmatprep.mubr.f32.mxu0 0.0
    %6187 = vmatmul.mubr.f32.gmra.mrb[0].mxu0 %v2049
    %v6188 = vpop.f32.mrb[0].mxu0
    %v6189 = vadd.f32 0.0, %v6188
    %v6190 = vpop.f32.mrb[0].mxu0
    %6191 = vmatprep.mubr.f32.mxu0 0.0
    %6192 = vmatmul.mubr.f32.gmra.mrb[0].mxu0 %v2052
    %v6193 = vpop.f32.mrb[0].mxu0
    %v6194 = vadd.f32 0.0, %v6193
    %v6195 = vpop.f32.mrb[0].mxu0
    %6196 = vmatprep.mubr.f32.mxu0 0.0
    %6197 = vmatmul.mubr.f32.gmra.mrb[0].mxu0 %v2055
    %v6198 = vpop.f32.mrb[0].mxu0
    %v6199 = vadd.f32 0.0, %v6198
    %v6200 = vpop.f32.mrb[0].mxu0
    %6201 = vmatprep.mubr.f32.mxu0 0.0
    %6202 = vmatmul.mubr.f32.gmra.mrb[0].mxu0 %v2058
    %v6203 = vpop.f32.mrb[0].mxu0
    %v6204 = vadd.f32 0.0, %v6203
    %v6205 = vpop.f32.mrb[0].mxu0
    %6206 = vmatprep.mubr.f32.mxu0 0.0
    %6207 = vmatmul.mubr.f32.gmra.mrb[0].mxu0 %v2061
    %v6208 = vpop.f32.mrb[0].mxu0
    %v6209 = vadd.f32 0.0, %v6208
    %v6210 = vpop.f32.mrb[0].mxu0
    %6211 = vmatprep.mubr.f32.mxu0 0.0
    %6212 = vmatmul.mubr.f32.gmra.mrb[0].mxu0 %v2064
    %v6213 = vpop.f32.mrb[0].mxu0
    %v6214 = vadd.f32 0.0, %v6213
    %v6215 = vpop.f32.mrb[0].mxu0
    %6216 = vmatprep.mubr.f32.mxu0 0.0
    %6217 = vmatmul.mubr.f32.gmra.mrb[0].mxu0 %v2067
    %v6218 = vpop.f32.mrb[0].mxu0
    %v6219 = vadd.f32 0.0, %v6218
    %v6220 = vpop.f32.mrb[0].mxu0
    %6221 = vmatprep.mubr.f32.mxu0 0.0
    %6222 = vmatmul.mubr.f32.gmra.mrb[0].mxu0 %v2070
    %v6223 = vpop.f32.mrb[0].mxu0
    %v6224 = vadd.f32 0.0, %v6223
    %v6225 = vpop.f32.mrb[0].mxu0
    %6226 = vmatprep.mubr.f32.mxu0 0.0
    %6227 = vmatmul.mubr.f32.gmra.mrb[0].mxu0 %v2073
    %v6228 = vpop.f32.mrb[0].mxu0
    %v6229 = vadd.f32 0.0, %v6228
    %v6230 = vpop.f32.mrb[0].mxu0
    %6231 = vmatprep.mubr.f32.mxu0 0.0
    %6232 = vmatmul.mubr.f32.gmra.mrb[0].mxu0 %v2076
    %v6233 = vpop.f32.mrb[0].mxu0
    %v6234 = vadd.f32 0.0, %v6233
    %v6235 = vpop.f32.mrb[0].mxu0
    %6236 = vmatprep.mubr.f32.mxu0 0.0
    %6237 = vmatmul.mubr.f32.gmra.mrb[0].mxu0 %v2079
    %v6238 = vpop.f32.mrb[0].mxu0
    %v6239 = vadd.f32 0.0, %v6238
    %v6240 = vpop.f32.mrb[0].mxu0
    %6241 = vmatprep.mubr.f32.mxu0 0.0
    %6242 = vmatmul.mubr.f32.gmra.mrb[0].mxu0 %v2082
    %v6243 = vpop.f32.mrb[0].mxu0
    %v6244 = vadd.f32 0.0, %v6243
    %v6245 = vpop.f32.mrb[0].mxu0
    %6246 = vmatprep.mubr.f32.mxu0 0.0
    %6247 = vmatmul.mubr.f32.gmra.mrb[0].mxu0 %v2085
    %v6248 = vpop.f32.mrb[0].mxu0
    %v6249 = vadd.f32 0.0, %v6248
    %v6250 = vpop.f32.mrb[0].mxu0
    %6251 = vmatprep.mubr.f32.mxu0 0.0
    %6252 = vmatmul.mubr.f32.gmra.mrb[0].mxu0 %v2088
    %v6253 = vpop.f32.mrb[0].mxu0
    %v6254 = vadd.f32 0.0, %v6253
    %v6255 = vpop.f32.mrb[0].mxu0
    %6256 = vmatprep.mubr.f32.mxu0 0.0
    %6257 = vmatmul.mubr.f32.gmra.mrb[0].mxu0 %v2091
    %v6258 = vpop.f32.mrb[0].mxu0
    %v6259 = vadd.f32 0.0, %v6258
    %v6260 = vpop.f32.mrb[0].mxu0
    %6261 = vmatprep.mubr.f32.mxu0 0.0
    %6262 = vmatmul.mubr.f32.gmra.mrb[0].mxu0 %v2094
    %v6263 = vpop.f32.mrb[0].mxu0
    %v6264 = vadd.f32 0.0, %v6263
    %v6265 = vpop.f32.mrb[0].mxu0
    %6266 = vmatprep.mubr.f32.mxu0 0.0
    %6267 = vmatmul.mubr.f32.gmra.mrb[0].mxu0 %v2097
    %v6268 = vpop.f32.mrb[0].mxu0
    %v6269 = vadd.f32 0.0, %v6268
    %v6270 = vpop.f32.mrb[0].mxu0
    %6271 = vmatprep.mubr.f32.mxu0 0.0
    %6272 = vmatmul.mubr.f32.gmra.mrb[0].mxu0 %v2100
    %v6273 = vpop.f32.mrb[0].mxu0
    %v6274 = vadd.f32 0.0, %v6273
    %v6275 = vpop.f32.mrb[0].mxu0
    %6276 = vmatprep.mubr.f32.mxu0 0.0
    %6277 = vmatmul.mubr.f32.gmra.mrb[0].mxu0 %v2103
    %v6278 = vpop.f32.mrb[0].mxu0
    %v6279 = vadd.f32 0.0, %v6278
    %v6280 = vpop.f32.mrb[0].mxu0
    %6281 = vmatprep.mubr.f32.mxu0 0.0
    %6282 = vmatmul.mubr.f32.gmra.mrb[0].mxu0 %v2106
    %v6283 = vpop.f32.mrb[0].mxu0
    %v6284 = vadd.f32 0.0, %v6283
    %v6285 = vpop.f32.mrb[0].mxu0
    %6286 = vmatprep.mubr.f32.mxu0 0.0
    %6287 = vmatmul.mubr.f32.gmra.mrb[0].mxu0 %v2109
    %v6288 = vpop.f32.mrb[0].mxu0
    %v6289 = vadd.f32 0.0, %v6288
    %v6290 = vpop.f32.mrb[0].mxu0
    %6291 = vmatprep.mubr.f32.mxu0 0.0
    %6292 = vmatmul.mubr.f32.gmra.mrb[0].mxu0 %v2112
    %v6293 = vpop.f32.mrb[0].mxu0
    %v6294 = vadd.f32 0.0, %v6293
    %v6295 = vpop.f32.mrb[0].mxu0
    %6296 = vmatprep.mubr.f32.mxu0 0.0
    %6297 = vmatmul.mubr.f32.gmra.mrb[0].mxu0 %v2115
    %v6298 = vpop.f32.mrb[0].mxu0
    %v6299 = vadd.f32 0.0, %v6298
    %v6300 = vpop.f32.mrb[0].mxu0
    %6301 = vmatprep.mubr.f32.mxu0 0.0
    %6302 = vmatmul.mubr.f32.gmra.mrb[0].mxu0 %v2118
    %v6303 = vpop.f32.mrb[0].mxu0
    %v6304 = vadd.f32 0.0, %v6303
    %v6305 = vpop.f32.mrb[0].mxu0
    %6306 = vmatprep.mubr.f32.mxu0 0.0
    %6307 = vmatmul.mubr.f32.gmra.mrb[0].mxu0 %v2121
    %v6308 = vpop.f32.mrb[0].mxu0
    %v6309 = vadd.f32 0.0, %v6308
    %v6310 = vpop.f32.mrb[0].mxu0
    %6311 = vmatprep.mubr.f32.mxu0 0.0
    %6312 = vmatmul.mubr.f32.gmra.mrb[0].mxu0 %v2124
    %v6313 = vpop.f32.mrb[0].mxu0
    %v6314 = vadd.f32 0.0, %v6313
    %v6315 = vpop.f32.mrb[0].mxu0
    %6316 = vmatprep.mubr.f32.mxu0 0.0
    %6317 = vmatmul.mubr.f32.gmra.mrb[0].mxu0 %v2127
    %v6318 = vpop.f32.mrb[0].mxu0
    %v6319 = vadd.f32 0.0, %v6318
    %v6320 = vpop.f32.mrb[0].mxu0
    %6321 = vmatprep.mubr.f32.mxu0 0.0
    %6322 = vmatmul.mubr.f32.gmra.mrb[0].mxu0 %v2130
    %v6323 = vpop.f32.mrb[0].mxu0
    %v6324 = vadd.f32 0.0, %v6323
    %v6325 = vpop.f32.mrb[0].mxu0
    %6326 = vmatprep.mubr.f32.mxu0 0.0
    %6327 = vmatmul.mubr.f32.gmra.mrb[0].mxu0 %v2133
    %v6328 = vpop.f32.mrb[0].mxu0
    %v6329 = vadd.f32 0.0, %v6328
    %v6330 = vpop.f32.mrb[0].mxu0
    %6331 = vmatprep.mubr.f32.mxu0 0.0
    %6332 = vmatmul.mubr.f32.gmra.mrb[0].mxu0 %v2136
    %v6333 = vpop.f32.mrb[0].mxu0
    %v6334 = vadd.f32 0.0, %v6333
    %v6335 = vpop.f32.mrb[0].mxu0
    %6336 = vmatprep.mubr.f32.mxu0 0.0
    %6337 = vmatmul.mubr.f32.gmra.mrb[0].mxu0 %v2139
    %v6338 = vpop.f32.mrb[0].mxu0
    %v6339 = vadd.f32 0.0, %v6338
    %v6340 = vpop.f32.mrb[0].mxu0
    %6341 = vmatprep.mubr.f32.mxu0 0.0
    %6342 = vmatmul.mubr.f32.gmra.mrb[0].mxu0 %v2142
    %v6343 = vpop.f32.mrb[0].mxu0
    %v6344 = vadd.f32 0.0, %v6343
    %v6345 = vpop.f32.mrb[0].mxu0
    %6346 = vmatprep.mubr.f32.mxu0 0.0
    %6347 = vmatmul.mubr.f32.gmra.mrb[0].mxu0 %v2145
    %v6348 = vpop.f32.mrb[0].mxu0
    %v6349 = vadd.f32 0.0, %v6348
    %v6350 = vpop.f32.mrb[0].mxu0
    %6351 = vmatprep.mubr.f32.mxu0 0.0
    %6352 = vmatmul.mubr.f32.gmra.mrb[0].mxu0 %v2148
    %v6353 = vpop.f32.mrb[0].mxu0
    %v6354 = vadd.f32 0.0, %v6353
    %v6355 = vpop.f32.mrb[0].mxu0
    %6356 = vmatprep.mubr.f32.mxu0 0.0
    %6357 = vmatmul.mubr.f32.gmra.mrb[0].mxu0 %v2151
    %v6358 = vpop.f32.mrb[0].mxu0
    %v6359 = vadd.f32 0.0, %v6358
    %v6360 = vpop.f32.mrb[0].mxu0
    %6361 = vmatprep.mubr.f32.mxu0 0.0
    %6362 = vmatmul.mubr.f32.gmra.mrb[0].mxu0 %v2154
    %v6363 = vpop.f32.mrb[0].mxu0
    %v6364 = vadd.f32 0.0, %v6363
    %v6365 = vpop.f32.mrb[0].mxu0
    %6366 = vmatprep.mubr.f32.mxu0 0.0
    %6367 = vmatmul.mubr.f32.gmra.mrb[0].mxu0 %v2157
    %v6368 = vpop.f32.mrb[0].mxu0
    %v6369 = vadd.f32 0.0, %v6368
    %v6370 = vpop.f32.mrb[0].mxu0
    %6371 = vmatprep.mubr.f32.mxu0 0.0
    %6372 = vmatmul.mubr.f32.gmra.mrb[0].mxu0 %v2160
    %v6373 = vpop.f32.mrb[0].mxu0
    %v6374 = vadd.f32 0.0, %v6373
    %v6375 = vpop.f32.mrb[0].mxu0
    %6376 = vmatprep.mubr.f32.mxu0 0.0
    %6377 = vmatmul.mubr.f32.gmra.mrb[0].mxu0 %v2163
    %v6378 = vpop.f32.mrb[0].mxu0
    %v6379 = vadd.f32 0.0, %v6378
    %v6380 = vpop.f32.mrb[0].mxu0
    %6381 = vmatprep.mubr.f32.mxu0 0.0
    %6382 = vmatmul.mubr.f32.gmra.mrb[0].mxu0 %v2166
    %v6383 = vpop.f32.mrb[0].mxu0
    %v6384 = vadd.f32 0.0, %v6383
    %v6385 = vpop.f32.mrb[0].mxu0
    %6386 = vmatprep.mubr.f32.mxu0 0.0
    %6387 = vmatmul.mubr.f32.gmra.mrb[0].mxu0 %v2169
    %v6388 = vpop.f32.mrb[0].mxu0
    %v6389 = vadd.f32 0.0, %v6388
    %v6390 = vpop.f32.mrb[0].mxu0
    %6391 = vmatprep.mubr.f32.mxu0 0.0
    %6392 = vmatmul.mubr.f32.gmra.mrb[0].mxu0 %v2172
    %v6393 = vpop.f32.mrb[0].mxu0
    %v6394 = vadd.f32 0.0, %v6393
    %v6395 = vpop.f32.mrb[0].mxu0
    %6396 = vmatprep.mubr.f32.mxu0 0.0
    %6397 = vmatmul.mubr.f32.gmra.mrb[0].mxu0 %v2175
    %v6398 = vpop.f32.mrb[0].mxu0
    %v6399 = vadd.f32 0.0, %v6398
    %v6400 = vpop.f32.mrb[0].mxu0
    %6401 = vmatprep.mubr.f32.mxu0 0.0
    %6402 = vmatmul.mubr.f32.gmra.mrb[0].mxu0 %v2178
    %v6403 = vpop.f32.mrb[0].mxu0
    %v6404 = vadd.f32 0.0, %v6403
    %v6405 = vpop.f32.mrb[0].mxu0
    %6406 = vmatprep.mubr.f32.mxu0 0.0
    %6407 = vmatmul.mubr.f32.gmra.mrb[0].mxu0 %v2181
    %v6408 = vpop.f32.mrb[0].mxu0
    %v6409 = vadd.f32 0.0, %v6408
    %v6410 = vpop.f32.mrb[0].mxu0
    %6411 = vmatprep.mubr.f32.mxu0 0.0
    %6412 = vmatmul.mubr.f32.gmra.mrb[0].mxu0 %v2184
    %v6413 = vpop.f32.mrb[0].mxu0
    %v6414 = vadd.f32 0.0, %v6413
    %v6415 = vpop.f32.mrb[0].mxu0
    %6416 = vmatprep.mubr.f32.mxu0 0.0
    %6417 = vmatmul.mubr.f32.gmra.mrb[0].mxu0 %v2187
    %v6418 = vpop.f32.mrb[0].mxu0
    %v6419 = vadd.f32 0.0, %v6418
    %v6420 = vpop.f32.mrb[0].mxu0
    %6421 = vmatprep.mubr.f32.mxu0 0.0
    %6422 = vmatmul.mubr.f32.gmra.mrb[0].mxu0 %v2190
    %v6423 = vpop.f32.mrb[0].mxu0
    %v6424 = vadd.f32 0.0, %v6423
    %v6425 = vpop.f32.mrb[0].mxu0
    %6426 = vmatprep.mubr.f32.mxu0 0.0
    %6427 = vmatmul.mubr.f32.gmra.mrb[0].mxu0 %v2193
    %v6428 = vpop.f32.mrb[0].mxu0
    %v6429 = vadd.f32 0.0, %v6428
    %v6430 = vpop.f32.mrb[0].mxu0
    %6431 = vmatprep.mubr.f32.mxu0 0.0
    %6432 = vmatmul.mubr.f32.gmra.mrb[0].mxu0 %v2196
    %v6433 = vpop.f32.mrb[0].mxu0
    %v6434 = vadd.f32 0.0, %v6433
    %v6435 = vpop.f32.mrb[0].mxu0
    %6436 = vmatprep.mubr.f32.mxu0 0.0
    %6437 = vmatmul.mubr.f32.gmra.mrb[0].mxu0 %v2199
    %v6438 = vpop.f32.mrb[0].mxu0
    %v6439 = vadd.f32 0.0, %v6438
    %v6440 = vpop.f32.mrb[0].mxu0
    %6441 = vmatprep.mubr.f32.mxu0 0.0
    %6442 = vmatmul.mubr.f32.gmra.mrb[0].mxu0 %v2202
    %v6443 = vpop.f32.mrb[0].mxu0
    %v6444 = vadd.f32 0.0, %v6443
    %v6445 = vpop.f32.mrb[0].mxu0
    %6446 = vmatprep.mubr.f32.mxu0 0.0
    %6447 = vmatmul.mubr.f32.gmra.mrb[0].mxu0 %v2205
    %v6448 = vpop.f32.mrb[0].mxu0
    %v6449 = vadd.f32 0.0, %v6448
    %v6450 = vpop.f32.mrb[0].mxu0
    %6451 = vmatprep.mubr.f32.mxu0 0.0
    %6452 = vmatmul.mubr.f32.gmra.mrb[0].mxu0 %v2208
    %v6453 = vpop.f32.mrb[0].mxu0
    %v6454 = vadd.f32 0.0, %v6453
    %v6455 = vpop.f32.mrb[0].mxu0
    %6456 = vmatprep.mubr.f32.mxu0 0.0
    %6457 = vmatmul.mubr.f32.gmra.mrb[0].mxu0 %v2211
    %v6458 = vpop.f32.mrb[0].mxu0
    %v6459 = vadd.f32 0.0, %v6458
    %v6460 = vpop.f32.mrb[0].mxu0
    %6461 = vmatprep.mubr.f32.mxu0 0.0
    %6462 = vmatmul.mubr.f32.gmra.mrb[0].mxu0 %v2214
    %v6463 = vpop.f32.mrb[0].mxu0
    %v6464 = vadd.f32 0.0, %v6463
    %v6465 = vpop.f32.mrb[0].mxu0
    %6466 = vmatprep.mubr.f32.mxu0 0.0
    %6467 = vmatmul.mubr.f32.gmra.mrb[0].mxu0 %v2217
    %v6468 = vpop.f32.mrb[0].mxu0
    %v6469 = vadd.f32 0.0, %v6468
    %v6470 = vpop.f32.mrb[0].mxu0
    %6471 = vmatprep.mubr.f32.mxu0 0.0
    %6472 = vmatmul.mubr.f32.gmra.mrb[0].mxu0 %v2220
    %v6473 = vpop.f32.mrb[0].mxu0
    %v6474 = vadd.f32 0.0, %v6473
    %v6475 = vpop.f32.mrb[0].mxu0
    %6476 = vmatprep.mubr.f32.mxu0 0.0
    %6477 = vmatmul.mubr.f32.gmra.mrb[0].mxu0 %v2223
    %v6478 = vpop.f32.mrb[0].mxu0
    %v6479 = vadd.f32 0.0, %v6478
    %v6480 = vpop.f32.mrb[0].mxu0
    %6481 = vmatprep.mubr.f32.mxu0 0.0
    %6482 = vmatmul.mubr.f32.gmra.mrb[0].mxu0 %v2226
    %v6483 = vpop.f32.mrb[0].mxu0
    %v6484 = vadd.f32 0.0, %v6483
    %v6485 = vpop.f32.mrb[0].mxu0
    %6486 = vdwg.mxu0
    %s6487 = scalar_lea.vmem %s7, 480
    %v6488 = vld [vmem:[%s6487] sm:$0xff]
    %v6489 = vld [vmem:[%s6487 + $0x8] sm:$0xff]
    %v6490 = vld [vmem:[%s6487 + $0x10] sm:$0xff]
    %v6491 = vld [vmem:[%s6487 + $0x18] sm:$0xff]
    %v6493 = vsel %vm74, %v6189, 0
    %v6496 = vsel %vm74, %v6194, 0
    %v6499 = vsel %vm74, %v6199, 0
    %v6502 = vsel %vm74, %v6204, 0
    %6504 = vmatprep.subr.mxu0 0.0
    %6505 = vmatpush1.msra.mxu0 %v6488
    %6506 = vmatprep.subr.mxu0 0.0
    %6507 = vmatpush1.msra.mxu0 %v6489
    %6508 = vmatprep.subr.mxu0 0.0
    %6509 = vmatpush1.msra.mxu0 %v6490
    %6510 = vmatprep.subr.mxu0 0.0
    %6511 = vmatpush1.msra.mxu0 %v6491
    %6512 = vmatprep.subr.mxu0 0.0
    %6513 = vmatpush1.msra.mxu0 0.0
    %6514 = vmatprep.subr.mxu0 0.0
    %6515 = vmatpush1.msra.mxu0 0.0
    %6516 = vmatprep.subr.mxu0 0.0
    %6517 = vmatpush1.msra.mxu0 0.0
    %6518 = vmatprep.subr.mxu0 0.0
    %6519 = vmatpush1.msra.mxu0 0.0
    %6520 = vmatprep.subr.mxu0 0.0
    %6521 = vmatpush1.msra.mxu0 0.0
    %6522 = vmatprep.subr.mxu0 0.0
    %6523 = vmatpush1.msra.mxu0 0.0
    %6524 = vmatprep.subr.mxu0 0.0
    %6525 = vmatpush1.msra.mxu0 0.0
    %6526 = vmatprep.subr.mxu0 0.0
    %6527 = vmatpush1.msra.mxu0 0.0
    %6528 = vmatprep.subr.mxu0 0.0
    %6529 = vmatpush1.msra.mxu0 0.0
    %6530 = vmatprep.subr.mxu0 0.0
    %6531 = vmatpush1.msra.mxu0 0.0
    %6532 = vmatprep.subr.mxu0 0.0
    %6533 = vmatpush1.msra.mxu0 0.0
    %6534 = vmatprep.subr.mxu0 0.0
    %6535 = vmatpush1.msra.mxu0 0.0
    %6536 = vmatprep.subr.mxu0 0.0
    %6537 = vmatpush1.msra.mxu0 0.0
    %6538 = vmatprep.subr.mxu0 0.0
    %6539 = vmatpush1.msra.mxu0 0.0
    %6540 = vmatprep.subr.mxu0 0.0
    %6541 = vmatpush1.msra.mxu0 0.0
    %6542 = vmatprep.subr.mxu0 0.0
    %6543 = vmatpush1.msra.mxu0 0.0
    %6544 = vmatprep.subr.mxu0 0.0
    %6545 = vmatpush1.msra.mxu0 0.0
    %6546 = vmatprep.subr.mxu0 0.0
    %6547 = vmatpush1.msra.mxu0 0.0
    %6548 = vmatprep.subr.mxu0 0.0
    %6549 = vmatpush1.msra.mxu0 0.0
    %6550 = vmatprep.subr.mxu0 0.0
    %6551 = vmatpush1.msra.mxu0 0.0
    %6552 = vmatprep.subr.mxu0 0.0
    %6553 = vmatpush1.msra.mxu0 0.0
    %6554 = vmatprep.subr.mxu0 0.0
    %6555 = vmatpush1.msra.mxu0 0.0
    %6556 = vmatprep.subr.mxu0 0.0
    %6557 = vmatpush1.msra.mxu0 0.0
    %6558 = vmatprep.subr.mxu0 0.0
    %6559 = vmatpush1.msra.mxu0 0.0
    %6560 = vmatprep.subr.mxu0 0.0
    %6561 = vmatpush1.msra.mxu0 0.0
    %6562 = vmatprep.subr.mxu0 0.0
    %6563 = vmatpush1.msra.mxu0 0.0
    %6564 = vmatprep.subr.mxu0 0.0
    %6565 = vmatpush1.msra.mxu0 0.0
    %6566 = vmatprep.subr.mxu0 0.0
    %6567 = vmatpush1.msra.mxu0 0.0
    %6568 = vmatprep.mubr.f32.mxu0 0.0
    %6569 = vmatmul.mubr.f32.gmra.mrb[0].mxu0 %v6493
    %v6570 = vpop.f32.mrb[0].mxu0
    %v6571 = vadd.f32 0.0, %v6570
    %v6572 = vpop.f32.mrb[0].mxu0
    %6573 = vmatprep.mubr.f32.mxu0 0.0
    %6574 = vmatmul.mubr.f32.gmra.mrb[0].mxu0 %v6496
    %v6575 = vpop.f32.mrb[0].mxu0
    %v6576 = vadd.f32 0.0, %v6575
    %v6577 = vpop.f32.mrb[0].mxu0
    %6578 = vmatprep.mubr.f32.mxu0 0.0
    %6579 = vmatmul.mubr.f32.gmra.mrb[0].mxu0 %v6499
    %v6580 = vpop.f32.mrb[0].mxu0
    %v6581 = vadd.f32 0.0, %v6580
    %v6582 = vpop.f32.mrb[0].mxu0
    %6583 = vmatprep.mubr.f32.mxu0 0.0
    %6584 = vmatmul.mubr.f32.gmra.mrb[0].mxu0 %v6502
    %v6585 = vpop.f32.mrb[0].mxu0
    %v6586 = vadd.f32 0.0, %v6585
    %v6587 = vpop.f32.mrb[0].mxu0
    %6588 = vdwg.mxu0
    %s6589 = scalar_lea.vmem %s7, 512
    %v6590 = vld [vmem:[%s6589] sm:$0xff]
    %v6591 = vld [vmem:[%s6589 + $0x8] sm:$0xff]
    %v6592 = vld [vmem:[%s6589 + $0x10] sm:$0xff]
    %v6593 = vld [vmem:[%s6589 + $0x18] sm:$0xff]
    %s6594 = scalar_lea.vmem %s7, 544
    %v6595 = vld [vmem:[%s6594] sm:$0xff]
    %v6596 = vld [vmem:[%s6594 + $0x8] sm:$0xff]
    %v6597 = vld [vmem:[%s6594 + $0x10] sm:$0xff]
    %v6598 = vld [vmem:[%s6594 + $0x18] sm:$0xff]
    %v6600 = vsel %vm74, %v6229, 0
    %v6603 = vsel %vm74, %v6234, 0
    %v6606 = vsel %vm74, %v6239, 0
    %v6609 = vsel %vm74, %v6244, 0
    %6611 = vmatprep.subr.mxu0 0.0
    %6612 = vmatpush1.msra.mxu0 %v6595
    %6613 = vmatprep.subr.mxu0 0.0
    %6614 = vmatpush1.msra.mxu0 %v6596
    %6615 = vmatprep.subr.mxu0 0.0
    %6616 = vmatpush1.msra.mxu0 %v6597
    %6617 = vmatprep.subr.mxu0 0.0
    %6618 = vmatpush1.msra.mxu0 %v6598
    %6619 = vmatprep.subr.mxu0 0.0
    %6620 = vmatpush1.msra.mxu0 0.0
    %6621 = vmatprep.subr.mxu0 0.0
    %6622 = vmatpush1.msra.mxu0 0.0
    %6623 = vmatprep.subr.mxu0 0.0
    %6624 = vmatpush1.msra.mxu0 0.0
    %6625 = vmatprep.subr.mxu0 0.0
    %6626 = vmatpush1.msra.mxu0 0.0
    %6627 = vmatprep.subr.mxu0 0.0
    %6628 = vmatpush1.msra.mxu0 0.0
    %6629 = vmatprep.subr.mxu0 0.0
    %6630 = vmatpush1.msra.mxu0 0.0
    %6631 = vmatprep.subr.mxu0 0.0
    %6632 = vmatpush1.msra.mxu0 0.0
    %6633 = vmatprep.subr.mxu0 0.0
    %6634 = vmatpush1.msra.mxu0 0.0
    %6635 = vmatprep.subr.mxu0 0.0
    %6636 = vmatpush1.msra.mxu0 0.0
    %6637 = vmatprep.subr.mxu0 0.0
    %6638 = vmatpush1.msra.mxu0 0.0
    %6639 = vmatprep.subr.mxu0 0.0
    %6640 = vmatpush1.msra.mxu0 0.0
    %6641 = vmatprep.subr.mxu0 0.0
    %6642 = vmatpush1.msra.mxu0 0.0
    %6643 = vmatprep.subr.mxu0 0.0
    %6644 = vmatpush1.msra.mxu0 0.0
    %6645 = vmatprep.subr.mxu0 0.0
    %6646 = vmatpush1.msra.mxu0 0.0
    %6647 = vmatprep.subr.mxu0 0.0
    %6648 = vmatpush1.msra.mxu0 0.0
    %6649 = vmatprep.subr.mxu0 0.0
    %6650 = vmatpush1.msra.mxu0 0.0
    %6651 = vmatprep.subr.mxu0 0.0
    %6652 = vmatpush1.msra.mxu0 0.0
    %6653 = vmatprep.subr.mxu0 0.0
    %6654 = vmatpush1.msra.mxu0 0.0
    %6655 = vmatprep.subr.mxu0 0.0
    %6656 = vmatpush1.msra.mxu0 0.0
    %6657 = vmatprep.subr.mxu0 0.0
    %6658 = vmatpush1.msra.mxu0 0.0
    %6659 = vmatprep.subr.mxu0 0.0
    %6660 = vmatpush1.msra.mxu0 0.0
    %6661 = vmatprep.subr.mxu0 0.0
    %6662 = vmatpush1.msra.mxu0 0.0
    %6663 = vmatprep.subr.mxu0 0.0
    %6664 = vmatpush1.msra.mxu0 0.0
    %6665 = vmatprep.subr.mxu0 0.0
    %6666 = vmatpush1.msra.mxu0 0.0
    %6667 = vmatprep.subr.mxu0 0.0
    %6668 = vmatpush1.msra.mxu0 0.0
    %6669 = vmatprep.subr.mxu0 0.0
    %6670 = vmatpush1.msra.mxu0 0.0
    %6671 = vmatprep.subr.mxu0 0.0
    %6672 = vmatpush1.msra.mxu0 0.0
    %6673 = vmatprep.subr.mxu0 0.0
    %6674 = vmatpush1.msra.mxu0 0.0
    %6675 = vmatprep.mubr.f32.mxu0 0.0
    %6676 = vmatmul.mubr.f32.gmra.mrb[0].mxu0 %v6600
    %v6677 = vpop.f32.mrb[0].mxu0
    %v6678 = vadd.f32 0.0, %v6677
    %v6679 = vpop.f32.mrb[0].mxu0
    %6680 = vmatprep.mubr.f32.mxu0 0.0
    %6681 = vmatmul.mubr.f32.gmra.mrb[0].mxu0 %v6603
    %v6682 = vpop.f32.mrb[0].mxu0
    %v6683 = vadd.f32 0.0, %v6682
    %v6684 = vpop.f32.mrb[0].mxu0
    %6685 = vmatprep.mubr.f32.mxu0 0.0
    %6686 = vmatmul.mubr.f32.gmra.mrb[0].mxu0 %v6606
    %v6687 = vpop.f32.mrb[0].mxu0
    %v6688 = vadd.f32 0.0, %v6687
    %v6689 = vpop.f32.mrb[0].mxu0
    %6690 = vmatprep.mubr.f32.mxu0 0.0
    %6691 = vmatmul.mubr.f32.gmra.mrb[0].mxu0 %v6609
    %v6692 = vpop.f32.mrb[0].mxu0
    %v6693 = vadd.f32 0.0, %v6692
    %v6694 = vpop.f32.mrb[0].mxu0
    %6695 = vdwg.mxu0
    %s6696 = scalar_lea.vmem %s7, 576
    %v6697 = vld [vmem:[%s6696] sm:$0xff]
    %v6698 = vld [vmem:[%s6696 + $0x8] sm:$0xff]
    %v6699 = vld [vmem:[%s6696 + $0x10] sm:$0xff]
    %v6700 = vld [vmem:[%s6696 + $0x18] sm:$0xff]
    %s6701 = scalar_lea.vmem %s7, 608
    %v6702 = vld [vmem:[%s6701] sm:$0xff]
    %v6703 = vld [vmem:[%s6701 + $0x8] sm:$0xff]
    %v6704 = vld [vmem:[%s6701 + $0x10] sm:$0xff]
    %v6705 = vld [vmem:[%s6701 + $0x18] sm:$0xff]
    %v6707 = vsel %vm74, %v6269, 0
    %v6710 = vsel %vm74, %v6274, 0
    %v6713 = vsel %vm74, %v6279, 0
    %v6716 = vsel %vm74, %v6284, 0
    %6718 = vmatprep.subr.mxu0 0.0
    %6719 = vmatpush1.msra.mxu0 %v6702
    %6720 = vmatprep.subr.mxu0 0.0
    %6721 = vmatpush1.msra.mxu0 %v6703
    %6722 = vmatprep.subr.mxu0 0.0
    %6723 = vmatpush1.msra.mxu0 %v6704
    %6724 = vmatprep.subr.mxu0 0.0
    %6725 = vmatpush1.msra.mxu0 %v6705
    %6726 = vmatprep.subr.mxu0 0.0
    %6727 = vmatpush1.msra.mxu0 0.0
    %6728 = vmatprep.subr.mxu0 0.0
    %6729 = vmatpush1.msra.mxu0 0.0
    %6730 = vmatprep.subr.mxu0 0.0
    %6731 = vmatpush1.msra.mxu0 0.0
    %6732 = vmatprep.subr.mxu0 0.0
    %6733 = vmatpush1.msra.mxu0 0.0
    %6734 = vmatprep.subr.mxu0 0.0
    %6735 = vmatpush1.msra.mxu0 0.0
    %6736 = vmatprep.subr.mxu0 0.0
    %6737 = vmatpush1.msra.mxu0 0.0
    %6738 = vmatprep.subr.mxu0 0.0
    %6739 = vmatpush1.msra.mxu0 0.0
    %6740 = vmatprep.subr.mxu0 0.0
    %6741 = vmatpush1.msra.mxu0 0.0
    %6742 = vmatprep.subr.mxu0 0.0
    %6743 = vmatpush1.msra.mxu0 0.0
    %6744 = vmatprep.subr.mxu0 0.0
    %6745 = vmatpush1.msra.mxu0 0.0
    %6746 = vmatprep.subr.mxu0 0.0
    %6747 = vmatpush1.msra.mxu0 0.0
    %6748 = vmatprep.subr.mxu0 0.0
    %6749 = vmatpush1.msra.mxu0 0.0
    %6750 = vmatprep.subr.mxu0 0.0
    %6751 = vmatpush1.msra.mxu0 0.0
    %6752 = vmatprep.subr.mxu0 0.0
    %6753 = vmatpush1.msra.mxu0 0.0
    %6754 = vmatprep.subr.mxu0 0.0
    %6755 = vmatpush1.msra.mxu0 0.0
    %6756 = vmatprep.subr.mxu0 0.0
    %6757 = vmatpush1.msra.mxu0 0.0
    %6758 = vmatprep.subr.mxu0 0.0
    %6759 = vmatpush1.msra.mxu0 0.0
    %6760 = vmatprep.subr.mxu0 0.0
    %6761 = vmatpush1.msra.mxu0 0.0
    %6762 = vmatprep.subr.mxu0 0.0
    %6763 = vmatpush1.msra.mxu0 0.0
    %6764 = vmatprep.subr.mxu0 0.0
    %6765 = vmatpush1.msra.mxu0 0.0
    %6766 = vmatprep.subr.mxu0 0.0
    %6767 = vmatpush1.msra.mxu0 0.0
    %6768 = vmatprep.subr.mxu0 0.0
    %6769 = vmatpush1.msra.mxu0 0.0
    %6770 = vmatprep.subr.mxu0 0.0
    %6771 = vmatpush1.msra.mxu0 0.0
    %6772 = vmatprep.subr.mxu0 0.0
    %6773 = vmatpush1.msra.mxu0 0.0
    %6774 = vmatprep.subr.mxu0 0.0
    %6775 = vmatpush1.msra.mxu0 0.0
    %6776 = vmatprep.subr.mxu0 0.0
    %6777 = vmatpush1.msra.mxu0 0.0
    %6778 = vmatprep.subr.mxu0 0.0
    %6779 = vmatpush1.msra.mxu0 0.0
    %6780 = vmatprep.subr.mxu0 0.0
    %6781 = vmatpush1.msra.mxu0 0.0
    %6782 = vmatprep.mubr.f32.mxu0 0.0
    %6783 = vmatmul.mubr.f32.gmra.mrb[0].mxu0 %v6707
    %v6784 = vpop.f32.mrb[0].mxu0
    %v6785 = vadd.f32 0.0, %v6784
    %v6786 = vpop.f32.mrb[0].mxu0
    %6787 = vmatprep.mubr.f32.mxu0 0.0
    %6788 = vmatmul.mubr.f32.gmra.mrb[0].mxu0 %v6710
    %v6789 = vpop.f32.mrb[0].mxu0
    %v6790 = vadd.f32 0.0, %v6789
    %v6791 = vpop.f32.mrb[0].mxu0
    %6792 = vmatprep.mubr.f32.mxu0 0.0
    %6793 = vmatmul.mubr.f32.gmra.mrb[0].mxu0 %v6713
    %v6794 = vpop.f32.mrb[0].mxu0
    %v6795 = vadd.f32 0.0, %v6794
    %v6796 = vpop.f32.mrb[0].mxu0
    %6797 = vmatprep.mubr.f32.mxu0 0.0
    %6798 = vmatmul.mubr.f32.gmra.mrb[0].mxu0 %v6716
    %v6799 = vpop.f32.mrb[0].mxu0
    %v6800 = vadd.f32 0.0, %v6799
    %v6801 = vpop.f32.mrb[0].mxu0
    %6802 = vdwg.mxu0
    %s6803 = scalar_lea.vmem %s7, 640
    %v6804 = vld [vmem:[%s6803] sm:$0xff]
    %v6805 = vld [vmem:[%s6803 + $0x8] sm:$0xff]
    %v6806 = vld [vmem:[%s6803 + $0x10] sm:$0xff]
    %v6807 = vld [vmem:[%s6803 + $0x18] sm:$0xff]
    %s6808 = scalar_lea.vmem %s7, 672
    %v6809 = vld [vmem:[%s6808] sm:$0xff]
    %v6810 = vld [vmem:[%s6808 + $0x8] sm:$0xff]
    %v6811 = vld [vmem:[%s6808 + $0x10] sm:$0xff]
    %v6812 = vld [vmem:[%s6808 + $0x18] sm:$0xff]
    %v6814 = vsel %vm74, %v6309, 0
    %v6817 = vsel %vm74, %v6314, 0
    %v6820 = vsel %vm74, %v6319, 0
    %v6823 = vsel %vm74, %v6324, 0
    %6825 = vmatprep.subr.mxu0 0.0
    %6826 = vmatpush1.msra.mxu0 %v6809
    %6827 = vmatprep.subr.mxu0 0.0
    %6828 = vmatpush1.msra.mxu0 %v6810
    %6829 = vmatprep.subr.mxu0 0.0
    %6830 = vmatpush1.msra.mxu0 %v6811
    %6831 = vmatprep.subr.mxu0 0.0
    %6832 = vmatpush1.msra.mxu0 %v6812
    %6833 = vmatprep.subr.mxu0 0.0
    %6834 = vmatpush1.msra.mxu0 0.0
    %6835 = vmatprep.subr.mxu0 0.0
    %6836 = vmatpush1.msra.mxu0 0.0
    %6837 = vmatprep.subr.mxu0 0.0
    %6838 = vmatpush1.msra.mxu0 0.0
    %6839 = vmatprep.subr.mxu0 0.0
    %6840 = vmatpush1.msra.mxu0 0.0
    %6841 = vmatprep.subr.mxu0 0.0
    %6842 = vmatpush1.msra.mxu0 0.0
    %6843 = vmatprep.subr.mxu0 0.0
    %6844 = vmatpush1.msra.mxu0 0.0
    %6845 = vmatprep.subr.mxu0 0.0
    %6846 = vmatpush1.msra.mxu0 0.0
    %6847 = vmatprep.subr.mxu0 0.0
    %6848 = vmatpush1.msra.mxu0 0.0
    %6849 = vmatprep.subr.mxu0 0.0
    %6850 = vmatpush1.msra.mxu0 0.0
    %6851 = vmatprep.subr.mxu0 0.0
    %6852 = vmatpush1.msra.mxu0 0.0
    %6853 = vmatprep.subr.mxu0 0.0
    %6854 = vmatpush1.msra.mxu0 0.0
    %6855 = vmatprep.subr.mxu0 0.0
    %6856 = vmatpush1.msra.mxu0 0.0
    %6857 = vmatprep.subr.mxu0 0.0
    %6858 = vmatpush1.msra.mxu0 0.0
    %6859 = vmatprep.subr.mxu0 0.0
    %6860 = vmatpush1.msra.mxu0 0.0
    %6861 = vmatprep.subr.mxu0 0.0
    %6862 = vmatpush1.msra.mxu0 0.0
    %6863 = vmatprep.subr.mxu0 0.0
    %6864 = vmatpush1.msra.mxu0 0.0
    %6865 = vmatprep.subr.mxu0 0.0
    %6866 = vmatpush1.msra.mxu0 0.0
    %6867 = vmatprep.subr.mxu0 0.0
    %6868 = vmatpush1.msra.mxu0 0.0
    %6869 = vmatprep.subr.mxu0 0.0
    %6870 = vmatpush1.msra.mxu0 0.0
    %6871 = vmatprep.subr.mxu0 0.0
    %6872 = vmatpush1.msra.mxu0 0.0
    %6873 = vmatprep.subr.mxu0 0.0
    %6874 = vmatpush1.msra.mxu0 0.0
    %6875 = vmatprep.subr.mxu0 0.0
    %6876 = vmatpush1.msra.mxu0 0.0
    %6877 = vmatprep.subr.mxu0 0.0
    %6878 = vmatpush1.msra.mxu0 0.0
    %6879 = vmatprep.subr.mxu0 0.0
    %6880 = vmatpush1.msra.mxu0 0.0
    %6881 = vmatprep.subr.mxu0 0.0
    %6882 = vmatpush1.msra.mxu0 0.0
    %6883 = vmatprep.subr.mxu0 0.0
    %6884 = vmatpush1.msra.mxu0 0.0
    %6885 = vmatprep.subr.mxu0 0.0
    %6886 = vmatpush1.msra.mxu0 0.0
    %6887 = vmatprep.subr.mxu0 0.0
    %6888 = vmatpush1.msra.mxu0 0.0
    %6889 = vmatprep.mubr.f32.mxu0 0.0
    %6890 = vmatmul.mubr.f32.gmra.mrb[0].mxu0 %v6814
    %v6891 = vpop.f32.mrb[0].mxu0
    %v6892 = vadd.f32 0.0, %v6891
    %v6893 = vpop.f32.mrb[0].mxu0
    %6894 = vmatprep.mubr.f32.mxu0 0.0
    %6895 = vmatmul.mubr.f32.gmra.mrb[0].mxu0 %v6817
    %v6896 = vpop.f32.mrb[0].mxu0
    %v6897 = vadd.f32 0.0, %v6896
    %v6898 = vpop.f32.mrb[0].mxu0
    %6899 = vmatprep.mubr.f32.mxu0 0.0
    %6900 = vmatmul.mubr.f32.gmra.mrb[0].mxu0 %v6820
    %v6901 = vpop.f32.mrb[0].mxu0
    %v6902 = vadd.f32 0.0, %v6901
    %v6903 = vpop.f32.mrb[0].mxu0
    %6904 = vmatprep.mubr.f32.mxu0 0.0
    %6905 = vmatmul.mubr.f32.gmra.mrb[0].mxu0 %v6823
    %v6906 = vpop.f32.mrb[0].mxu0
    %v6907 = vadd.f32 0.0, %v6906
    %v6908 = vpop.f32.mrb[0].mxu0
    %6909 = vdwg.mxu0
    %s6910 = scalar_lea.vmem %s7, 704
    %v6911 = vld [vmem:[%s6910] sm:$0xff]
    %v6912 = vld [vmem:[%s6910 + $0x8] sm:$0xff]
    %v6913 = vld [vmem:[%s6910 + $0x10] sm:$0xff]
    %v6914 = vld [vmem:[%s6910 + $0x18] sm:$0xff]
    %s6915 = scalar_lea.vmem %s7, 736
    %v6916 = vld [vmem:[%s6915] sm:$0xff]
    %v6917 = vld [vmem:[%s6915 + $0x8] sm:$0xff]
    %v6918 = vld [vmem:[%s6915 + $0x10] sm:$0xff]
    %v6919 = vld [vmem:[%s6915 + $0x18] sm:$0xff]
    %v6921 = vsel %vm74, %v6349, 0
    %v6924 = vsel %vm74, %v6354, 0
    %v6927 = vsel %vm74, %v6359, 0
    %v6930 = vsel %vm74, %v6364, 0
    %6932 = vmatprep.subr.mxu0 0.0
    %6933 = vmatpush1.msra.mxu0 %v6916
    %6934 = vmatprep.subr.mxu0 0.0
    %6935 = vmatpush1.msra.mxu0 %v6917
    %6936 = vmatprep.subr.mxu0 0.0
    %6937 = vmatpush1.msra.mxu0 %v6918
    %6938 = vmatprep.subr.mxu0 0.0
    %6939 = vmatpush1.msra.mxu0 %v6919
    %6940 = vmatprep.subr.mxu0 0.0
    %6941 = vmatpush1.msra.mxu0 0.0
    %6942 = vmatprep.subr.mxu0 0.0
    %6943 = vmatpush1.msra.mxu0 0.0
    %6944 = vmatprep.subr.mxu0 0.0
    %6945 = vmatpush1.msra.mxu0 0.0
    %6946 = vmatprep.subr.mxu0 0.0
    %6947 = vmatpush1.msra.mxu0 0.0
    %6948 = vmatprep.subr.mxu0 0.0
    %6949 = vmatpush1.msra.mxu0 0.0
    %6950 = vmatprep.subr.mxu0 0.0
    %6951 = vmatpush1.msra.mxu0 0.0
    %6952 = vmatprep.subr.mxu0 0.0
    %6953 = vmatpush1.msra.mxu0 0.0
    %6954 = vmatprep.subr.mxu0 0.0
    %6955 = vmatpush1.msra.mxu0 0.0
    %6956 = vmatprep.subr.mxu0 0.0
    %6957 = vmatpush1.msra.mxu0 0.0
    %6958 = vmatprep.subr.mxu0 0.0
    %6959 = vmatpush1.msra.mxu0 0.0
    %6960 = vmatprep.subr.mxu0 0.0
    %6961 = vmatpush1.msra.mxu0 0.0
    %6962 = vmatprep.subr.mxu0 0.0
    %6963 = vmatpush1.msra.mxu0 0.0
    %6964 = vmatprep.subr.mxu0 0.0
    %6965 = vmatpush1.msra.mxu0 0.0
    %6966 = vmatprep.subr.mxu0 0.0
    %6967 = vmatpush1.msra.mxu0 0.0
    %6968 = vmatprep.subr.mxu0 0.0
    %6969 = vmatpush1.msra.mxu0 0.0
    %6970 = vmatprep.subr.mxu0 0.0
    %6971 = vmatpush1.msra.mxu0 0.0
    %6972 = vmatprep.subr.mxu0 0.0
    %6973 = vmatpush1.msra.mxu0 0.0
    %6974 = vmatprep.subr.mxu0 0.0
    %6975 = vmatpush1.msra.mxu0 0.0
    %6976 = vmatprep.subr.mxu0 0.0
    %6977 = vmatpush1.msra.mxu0 0.0
    %6978 = vmatprep.subr.mxu0 0.0
    %6979 = vmatpush1.msra.mxu0 0.0
    %6980 = vmatprep.subr.mxu0 0.0
    %6981 = vmatpush1.msra.mxu0 0.0
    %6982 = vmatprep.subr.mxu0 0.0
    %6983 = vmatpush1.msra.mxu0 0.0
    %6984 = vmatprep.subr.mxu0 0.0
    %6985 = vmatpush1.msra.mxu0 0.0
    %6986 = vmatprep.subr.mxu0 0.0
    %6987 = vmatpush1.msra.mxu0 0.0
    %6988 = vmatprep.subr.mxu0 0.0
    %6989 = vmatpush1.msra.mxu0 0.0
    %6990 = vmatprep.subr.mxu0 0.0
    %6991 = vmatpush1.msra.mxu0 0.0
    %6992 = vmatprep.subr.mxu0 0.0
    %6993 = vmatpush1.msra.mxu0 0.0
    %6994 = vmatprep.subr.mxu0 0.0
    %6995 = vmatpush1.msra.mxu0 0.0
    %6996 = vmatprep.mubr.f32.mxu0 0.0
    %6997 = vmatmul.mubr.f32.gmra.mrb[0].mxu0 %v6921
    %v6998 = vpop.f32.mrb[0].mxu0
    %v6999 = vadd.f32 0.0, %v6998
    %v7000 = vpop.f32.mrb[0].mxu0
    %7001 = vmatprep.mubr.f32.mxu0 0.0
    %7002 = vmatmul.mubr.f32.gmra.mrb[0].mxu0 %v6924
    %v7003 = vpop.f32.mrb[0].mxu0
    %v7004 = vadd.f32 0.0, %v7003
    %v7005 = vpop.f32.mrb[0].mxu0
    %7006 = vmatprep.mubr.f32.mxu0 0.0
    %7007 = vmatmul.mubr.f32.gmra.mrb[0].mxu0 %v6927
    %v7008 = vpop.f32.mrb[0].mxu0
    %v7009 = vadd.f32 0.0, %v7008
    %v7010 = vpop.f32.mrb[0].mxu0
    %7011 = vmatprep.mubr.f32.mxu0 0.0
    %7012 = vmatmul.mubr.f32.gmra.mrb[0].mxu0 %v6930
    %v7013 = vpop.f32.mrb[0].mxu0
    %v7014 = vadd.f32 0.0, %v7013
    %v7015 = vpop.f32.mrb[0].mxu0
    %7016 = vdwg.mxu0
    %s7017 = scalar_lea.vmem %s7, 768
    %v7018 = vld [vmem:[%s7017] sm:$0xff]
    %v7019 = vld [vmem:[%s7017 + $0x8] sm:$0xff]
    %v7020 = vld [vmem:[%s7017 + $0x10] sm:$0xff]
    %v7021 = vld [vmem:[%s7017 + $0x18] sm:$0xff]
    %s7022 = scalar_lea.vmem %s7, 800
    %v7023 = vld [vmem:[%s7022] sm:$0xff]
    %v7024 = vld [vmem:[%s7022 + $0x8] sm:$0xff]
    %v7025 = vld [vmem:[%s7022 + $0x10] sm:$0xff]
    %v7026 = vld [vmem:[%s7022 + $0x18] sm:$0xff]
    %v7028 = vsel %vm74, %v6389, 0
    %v7031 = vsel %vm74, %v6394, 0
    %v7034 = vsel %vm74, %v6399, 0
    %v7037 = vsel %vm74, %v6404, 0
    %7039 = vmatprep.subr.mxu0 0.0
    %7040 = vmatpush1.msra.mxu0 %v7023
    %7041 = vmatprep.subr.mxu0 0.0
    %7042 = vmatpush1.msra.mxu0 %v7024
    %7043 = vmatprep.subr.mxu0 0.0
    %7044 = vmatpush1.msra.mxu0 %v7025
    %7045 = vmatprep.subr.mxu0 0.0
    %7046 = vmatpush1.msra.mxu0 %v7026
    %7047 = vmatprep.subr.mxu0 0.0
    %7048 = vmatpush1.msra.mxu0 0.0
    %7049 = vmatprep.subr.mxu0 0.0
    %7050 = vmatpush1.msra.mxu0 0.0
    %7051 = vmatprep.subr.mxu0 0.0
    %7052 = vmatpush1.msra.mxu0 0.0
    %7053 = vmatprep.subr.mxu0 0.0
    %7054 = vmatpush1.msra.mxu0 0.0
    %7055 = vmatprep.subr.mxu0 0.0
    %7056 = vmatpush1.msra.mxu0 0.0
    %7057 = vmatprep.subr.mxu0 0.0
    %7058 = vmatpush1.msra.mxu0 0.0
    %7059 = vmatprep.subr.mxu0 0.0
    %7060 = vmatpush1.msra.mxu0 0.0
    %7061 = vmatprep.subr.mxu0 0.0
    %7062 = vmatpush1.msra.mxu0 0.0
    %7063 = vmatprep.subr.mxu0 0.0
    %7064 = vmatpush1.msra.mxu0 0.0
    %7065 = vmatprep.subr.mxu0 0.0
    %7066 = vmatpush1.msra.mxu0 0.0
    %7067 = vmatprep.subr.mxu0 0.0
    %7068 = vmatpush1.msra.mxu0 0.0
    %7069 = vmatprep.subr.mxu0 0.0
    %7070 = vmatpush1.msra.mxu0 0.0
    %7071 = vmatprep.subr.mxu0 0.0
    %7072 = vmatpush1.msra.mxu0 0.0
    %7073 = vmatprep.subr.mxu0 0.0
    %7074 = vmatpush1.msra.mxu0 0.0
    %7075 = vmatprep.subr.mxu0 0.0
    %7076 = vmatpush1.msra.mxu0 0.0
    %7077 = vmatprep.subr.mxu0 0.0
    %7078 = vmatpush1.msra.mxu0 0.0
    %7079 = vmatprep.subr.mxu0 0.0
    %7080 = vmatpush1.msra.mxu0 0.0
    %7081 = vmatprep.subr.mxu0 0.0
    %7082 = vmatpush1.msra.mxu0 0.0
    %7083 = vmatprep.subr.mxu0 0.0
    %7084 = vmatpush1.msra.mxu0 0.0
    %7085 = vmatprep.subr.mxu0 0.0
    %7086 = vmatpush1.msra.mxu0 0.0
    %7087 = vmatprep.subr.mxu0 0.0
    %7088 = vmatpush1.msra.mxu0 0.0
    %7089 = vmatprep.subr.mxu0 0.0
    %7090 = vmatpush1.msra.mxu0 0.0
    %7091 = vmatprep.subr.mxu0 0.0
    %7092 = vmatpush1.msra.mxu0 0.0
    %7093 = vmatprep.subr.mxu0 0.0
    %7094 = vmatpush1.msra.mxu0 0.0
    %7095 = vmatprep.subr.mxu0 0.0
    %7096 = vmatpush1.msra.mxu0 0.0
    %7097 = vmatprep.subr.mxu0 0.0
    %7098 = vmatpush1.msra.mxu0 0.0
    %7099 = vmatprep.subr.mxu0 0.0
    %7100 = vmatpush1.msra.mxu0 0.0
    %7101 = vmatprep.subr.mxu0 0.0
    %7102 = vmatpush1.msra.mxu0 0.0
    %7103 = vmatprep.mubr.f32.mxu0 0.0
    %7104 = vmatmul.mubr.f32.gmra.mrb[0].mxu0 %v7028
    %v7105 = vpop.f32.mrb[0].mxu0
    %v7106 = vadd.f32 0.0, %v7105
    %v7107 = vpop.f32.mrb[0].mxu0
    %7108 = vmatprep.mubr.f32.mxu0 0.0
    %7109 = vmatmul.mubr.f32.gmra.mrb[0].mxu0 %v7031
    %v7110 = vpop.f32.mrb[0].mxu0
    %v7111 = vadd.f32 0.0, %v7110
    %v7112 = vpop.f32.mrb[0].mxu0
    %7113 = vmatprep.mubr.f32.mxu0 0.0
    %7114 = vmatmul.mubr.f32.gmra.mrb[0].mxu0 %v7034
    %v7115 = vpop.f32.mrb[0].mxu0
    %v7116 = vadd.f32 0.0, %v7115
    %v7117 = vpop.f32.mrb[0].mxu0
    %7118 = vmatprep.mubr.f32.mxu0 0.0
    %7119 = vmatmul.mubr.f32.gmra.mrb[0].mxu0 %v7037
    %v7120 = vpop.f32.mrb[0].mxu0
    %v7121 = vadd.f32 0.0, %v7120
    %v7122 = vpop.f32.mrb[0].mxu0
    %7123 = vdwg.mxu0
    %s7124 = scalar_lea.vmem %s7, 832
    %v7125 = vld [vmem:[%s7124] sm:$0xff]
    %v7126 = vld [vmem:[%s7124 + $0x8] sm:$0xff]
    %v7127 = vld [vmem:[%s7124 + $0x10] sm:$0xff]
    %v7128 = vld [vmem:[%s7124 + $0x18] sm:$0xff]
    %s7129 = scalar_lea.vmem %s7, 864
    %v7130 = vld [vmem:[%s7129] sm:$0xff]
    %v7131 = vld [vmem:[%s7129 + $0x8] sm:$0xff]
    %v7132 = vld [vmem:[%s7129 + $0x10] sm:$0xff]
    %v7133 = vld [vmem:[%s7129 + $0x18] sm:$0xff]
    %v7135 = vsel %vm74, %v6429, 0
    %v7138 = vsel %vm74, %v6434, 0
    %v7141 = vsel %vm74, %v6439, 0
    %v7144 = vsel %vm74, %v6444, 0
    %7146 = vmatprep.subr.mxu0 0.0
    %7147 = vmatpush1.msra.mxu0 %v7130
    %7148 = vmatprep.subr.mxu0 0.0
    %7149 = vmatpush1.msra.mxu0 %v7131
    %7150 = vmatprep.subr.mxu0 0.0
    %7151 = vmatpush1.msra.mxu0 %v7132
    %7152 = vmatprep.subr.mxu0 0.0
    %7153 = vmatpush1.msra.mxu0 %v7133
    %7154 = vmatprep.subr.mxu0 0.0
    %7155 = vmatpush1.msra.mxu0 0.0
    %7156 = vmatprep.subr.mxu0 0.0
    %7157 = vmatpush1.msra.mxu0 0.0
    %7158 = vmatprep.subr.mxu0 0.0
    %7159 = vmatpush1.msra.mxu0 0.0
    %7160 = vmatprep.subr.mxu0 0.0
    %7161 = vmatpush1.msra.mxu0 0.0
    %7162 = vmatprep.subr.mxu0 0.0
    %7163 = vmatpush1.msra.mxu0 0.0
    %7164 = vmatprep.subr.mxu0 0.0
    %7165 = vmatpush1.msra.mxu0 0.0
    %7166 = vmatprep.subr.mxu0 0.0
    %7167 = vmatpush1.msra.mxu0 0.0
    %7168 = vmatprep.subr.mxu0 0.0
    %7169 = vmatpush1.msra.mxu0 0.0
    %7170 = vmatprep.subr.mxu0 0.0
    %7171 = vmatpush1.msra.mxu0 0.0
    %7172 = vmatprep.subr.mxu0 0.0
    %7173 = vmatpush1.msra.mxu0 0.0
    %7174 = vmatprep.subr.mxu0 0.0
    %7175 = vmatpush1.msra.mxu0 0.0
    %7176 = vmatprep.subr.mxu0 0.0
    %7177 = vmatpush1.msra.mxu0 0.0
    %7178 = vmatprep.subr.mxu0 0.0
    %7179 = vmatpush1.msra.mxu0 0.0
    %7180 = vmatprep.subr.mxu0 0.0
    %7181 = vmatpush1.msra.mxu0 0.0
    %7182 = vmatprep.subr.mxu0 0.0
    %7183 = vmatpush1.msra.mxu0 0.0
    %7184 = vmatprep.subr.mxu0 0.0
    %7185 = vmatpush1.msra.mxu0 0.0
    %7186 = vmatprep.subr.mxu0 0.0
    %7187 = vmatpush1.msra.mxu0 0.0
    %7188 = vmatprep.subr.mxu0 0.0
    %7189 = vmatpush1.msra.mxu0 0.0
    %7190 = vmatprep.subr.mxu0 0.0
    %7191 = vmatpush1.msra.mxu0 0.0
    %7192 = vmatprep.subr.mxu0 0.0
    %7193 = vmatpush1.msra.mxu0 0.0
    %7194 = vmatprep.subr.mxu0 0.0
    %7195 = vmatpush1.msra.mxu0 0.0
    %7196 = vmatprep.subr.mxu0 0.0
    %7197 = vmatpush1.msra.mxu0 0.0
    %7198 = vmatprep.subr.mxu0 0.0
    %7199 = vmatpush1.msra.mxu0 0.0
    %7200 = vmatprep.subr.mxu0 0.0
    %7201 = vmatpush1.msra.mxu0 0.0
    %7202 = vmatprep.subr.mxu0 0.0
    %7203 = vmatpush1.msra.mxu0 0.0
    %7204 = vmatprep.subr.mxu0 0.0
    %7205 = vmatpush1.msra.mxu0 0.0
    %7206 = vmatprep.subr.mxu0 0.0
    %7207 = vmatpush1.msra.mxu0 0.0
    %7208 = vmatprep.subr.mxu0 0.0
    %7209 = vmatpush1.msra.mxu0 0.0
    %7210 = vmatprep.mubr.f32.mxu0 0.0
    %7211 = vmatmul.mubr.f32.gmra.mrb[0].mxu0 %v7135
    %v7212 = vpop.f32.mrb[0].mxu0
    %v7213 = vadd.f32 0.0, %v7212
    %v7214 = vpop.f32.mrb[0].mxu0
    %7215 = vmatprep.mubr.f32.mxu0 0.0
    %7216 = vmatmul.mubr.f32.gmra.mrb[0].mxu0 %v7138
    %v7217 = vpop.f32.mrb[0].mxu0
    %v7218 = vadd.f32 0.0, %v7217
    %v7219 = vpop.f32.mrb[0].mxu0
    %7220 = vmatprep.mubr.f32.mxu0 0.0
    %7221 = vmatmul.mubr.f32.gmra.mrb[0].mxu0 %v7141
    %v7222 = vpop.f32.mrb[0].mxu0
    %v7223 = vadd.f32 0.0, %v7222
    %v7224 = vpop.f32.mrb[0].mxu0
    %7225 = vmatprep.mubr.f32.mxu0 0.0
    %7226 = vmatmul.mubr.f32.gmra.mrb[0].mxu0 %v7144
    %v7227 = vpop.f32.mrb[0].mxu0
    %v7228 = vadd.f32 0.0, %v7227
    %v7229 = vpop.f32.mrb[0].mxu0
    %7230 = vdwg.mxu0
    %s7231 = scalar_lea.vmem %s7, 896
    %v7232 = vld [vmem:[%s7231] sm:$0xff]
    %v7233 = vld [vmem:[%s7231 + $0x8] sm:$0xff]
    %v7234 = vld [vmem:[%s7231 + $0x10] sm:$0xff]
    %v7235 = vld [vmem:[%s7231 + $0x18] sm:$0xff]
    %s7236 = scalar_lea.vmem %s7, 928
    %v7237 = vld [vmem:[%s7236] sm:$0xff]
    %v7238 = vld [vmem:[%s7236 + $0x8] sm:$0xff]
    %v7239 = vld [vmem:[%s7236 + $0x10] sm:$0xff]
    %v7240 = vld [vmem:[%s7236 + $0x18] sm:$0xff]
    %v7242 = vsel %vm74, %v6469, 0
    %v7245 = vsel %vm74, %v6474, 0
    %v7248 = vsel %vm74, %v6479, 0
    %v7251 = vsel %vm74, %v6484, 0
    %7253 = vmatprep.subr.mxu0 0.0
    %7254 = vmatpush1.msra.mxu0 %v7237
    %7255 = vmatprep.subr.mxu0 0.0
    %7256 = vmatpush1.msra.mxu0 %v7238
    %7257 = vmatprep.subr.mxu0 0.0
    %7258 = vmatpush1.msra.mxu0 %v7239
    %7259 = vmatprep.subr.mxu0 0.0
    %7260 = vmatpush1.msra.mxu0 %v7240
    %7261 = vmatprep.subr.mxu0 0.0
    %7262 = vmatpush1.msra.mxu0 0.0
    %7263 = vmatprep.subr.mxu0 0.0
    %7264 = vmatpush1.msra.mxu0 0.0
    %7265 = vmatprep.subr.mxu0 0.0
    %7266 = vmatpush1.msra.mxu0 0.0
    %7267 = vmatprep.subr.mxu0 0.0
    %7268 = vmatpush1.msra.mxu0 0.0
    %7269 = vmatprep.subr.mxu0 0.0
    %7270 = vmatpush1.msra.mxu0 0.0
    %7271 = vmatprep.subr.mxu0 0.0
    %7272 = vmatpush1.msra.mxu0 0.0
    %7273 = vmatprep.subr.mxu0 0.0
    %7274 = vmatpush1.msra.mxu0 0.0
    %7275 = vmatprep.subr.mxu0 0.0
    %7276 = vmatpush1.msra.mxu0 0.0
    %7277 = vmatprep.subr.mxu0 0.0
    %7278 = vmatpush1.msra.mxu0 0.0
    %7279 = vmatprep.subr.mxu0 0.0
    %7280 = vmatpush1.msra.mxu0 0.0
    %7281 = vmatprep.subr.mxu0 0.0
    %7282 = vmatpush1.msra.mxu0 0.0
    %7283 = vmatprep.subr.mxu0 0.0
    %7284 = vmatpush1.msra.mxu0 0.0
    %7285 = vmatprep.subr.mxu0 0.0
    %7286 = vmatpush1.msra.mxu0 0.0
    %7287 = vmatprep.subr.mxu0 0.0
    %7288 = vmatpush1.msra.mxu0 0.0
    %7289 = vmatprep.subr.mxu0 0.0
    %7290 = vmatpush1.msra.mxu0 0.0
    %7291 = vmatprep.subr.mxu0 0.0
    %7292 = vmatpush1.msra.mxu0 0.0
    %7293 = vmatprep.subr.mxu0 0.0
    %7294 = vmatpush1.msra.mxu0 0.0
    %7295 = vmatprep.subr.mxu0 0.0
    %7296 = vmatpush1.msra.mxu0 0.0
    %7297 = vmatprep.subr.mxu0 0.0
    %7298 = vmatpush1.msra.mxu0 0.0
    %7299 = vmatprep.subr.mxu0 0.0
    %7300 = vmatpush1.msra.mxu0 0.0
    %7301 = vmatprep.subr.mxu0 0.0
    %7302 = vmatpush1.msra.mxu0 0.0
    %7303 = vmatprep.subr.mxu0 0.0
    %7304 = vmatpush1.msra.mxu0 0.0
    %7305 = vmatprep.subr.mxu0 0.0
    %7306 = vmatpush1.msra.mxu0 0.0
    %7307 = vmatprep.subr.mxu0 0.0
    %7308 = vmatpush1.msra.mxu0 0.0
    %7309 = vmatprep.subr.mxu0 0.0
    %7310 = vmatpush1.msra.mxu0 0.0
    %7311 = vmatprep.subr.mxu0 0.0
    %7312 = vmatpush1.msra.mxu0 0.0
    %7313 = vmatprep.subr.mxu0 0.0
    %7314 = vmatpush1.msra.mxu0 0.0
    %7315 = vmatprep.subr.mxu0 0.0
    %7316 = vmatpush1.msra.mxu0 0.0
    %7317 = vmatprep.mubr.f32.mxu0 0.0
    %7318 = vmatmul.mubr.f32.gmra.mrb[0].mxu0 %v7242
    %v7319 = vpop.f32.mrb[0].mxu0
    %v7320 = vadd.f32 0.0, %v7319
    %v7321 = vpop.f32.mrb[0].mxu0
    %7322 = vmatprep.mubr.f32.mxu0 0.0
    %7323 = vmatmul.mubr.f32.gmra.mrb[0].mxu0 %v7245
    %v7324 = vpop.f32.mrb[0].mxu0
    %v7325 = vadd.f32 0.0, %v7324
    %v7326 = vpop.f32.mrb[0].mxu0
    %7327 = vmatprep.mubr.f32.mxu0 0.0
    %7328 = vmatmul.mubr.f32.gmra.mrb[0].mxu0 %v7248
    %v7329 = vpop.f32.mrb[0].mxu0
    %v7330 = vadd.f32 0.0, %v7329
    %v7331 = vpop.f32.mrb[0].mxu0
    %7332 = vmatprep.mubr.f32.mxu0 0.0
    %7333 = vmatmul.mubr.f32.gmra.mrb[0].mxu0 %v7251
    %v7334 = vpop.f32.mrb[0].mxu0
    %v7335 = vadd.f32 0.0, %v7334
    %v7336 = vpop.f32.mrb[0].mxu0
    %7337 = vdwg.mxu0
    %v7338 = vadd.f32 %v6118, %v6571
    %v7339 = vadd.f32 %v6119, %v6576
    %v7340 = vadd.f32 %v6120, %v6581
    %v7341 = vadd.f32 %v6121, %v6586
    %v7343 = vsel %vm74, %v6209, 0
    %v7346 = vsel %vm74, %v6214, 0
    %v7349 = vsel %vm74, %v6219, 0
    %v7352 = vsel %vm74, %v6224, 0
    %7354 = vmatprep.subr.mxu0 0.0
    %7355 = vmatpush1.msra.mxu0 %v6590
    %7356 = vmatprep.subr.mxu0 0.0
    %7357 = vmatpush1.msra.mxu0 %v6591
    %7358 = vmatprep.subr.mxu0 0.0
    %7359 = vmatpush1.msra.mxu0 %v6592
    %7360 = vmatprep.subr.mxu0 0.0
    %7361 = vmatpush1.msra.mxu0 %v6593
    %7362 = vmatprep.subr.mxu0 0.0
    %7363 = vmatpush1.msra.mxu0 0.0
    %7364 = vmatprep.subr.mxu0 0.0
    %7365 = vmatpush1.msra.mxu0 0.0
    %7366 = vmatprep.subr.mxu0 0.0
    %7367 = vmatpush1.msra.mxu0 0.0
    %7368 = vmatprep.subr.mxu0 0.0
    %7369 = vmatpush1.msra.mxu0 0.0
    %7370 = vmatprep.subr.mxu0 0.0
    %7371 = vmatpush1.msra.mxu0 0.0
    %7372 = vmatprep.subr.mxu0 0.0
    %7373 = vmatpush1.msra.mxu0 0.0
    %7374 = vmatprep.subr.mxu0 0.0
    %7375 = vmatpush1.msra.mxu0 0.0
    %7376 = vmatprep.subr.mxu0 0.0
    %7377 = vmatpush1.msra.mxu0 0.0
    %7378 = vmatprep.subr.mxu0 0.0
    %7379 = vmatpush1.msra.mxu0 0.0
    %7380 = vmatprep.subr.mxu0 0.0
    %7381 = vmatpush1.msra.mxu0 0.0
    %7382 = vmatprep.subr.mxu0 0.0
    %7383 = vmatpush1.msra.mxu0 0.0
    %7384 = vmatprep.subr.mxu0 0.0
    %7385 = vmatpush1.msra.mxu0 0.0
    %7386 = vmatprep.subr.mxu0 0.0
    %7387 = vmatpush1.msra.mxu0 0.0
    %7388 = vmatprep.subr.mxu0 0.0
    %7389 = vmatpush1.msra.mxu0 0.0
    %7390 = vmatprep.subr.mxu0 0.0
    %7391 = vmatpush1.msra.mxu0 0.0
    %7392 = vmatprep.subr.mxu0 0.0
    %7393 = vmatpush1.msra.mxu0 0.0
    %7394 = vmatprep.subr.mxu0 0.0
    %7395 = vmatpush1.msra.mxu0 0.0
    %7396 = vmatprep.subr.mxu0 0.0
    %7397 = vmatpush1.msra.mxu0 0.0
    %7398 = vmatprep.subr.mxu0 0.0
    %7399 = vmatpush1.msra.mxu0 0.0
    %7400 = vmatprep.subr.mxu0 0.0
    %7401 = vmatpush1.msra.mxu0 0.0
    %7402 = vmatprep.subr.mxu0 0.0
    %7403 = vmatpush1.msra.mxu0 0.0
    %7404 = vmatprep.subr.mxu0 0.0
    %7405 = vmatpush1.msra.mxu0 0.0
    %7406 = vmatprep.subr.mxu0 0.0
    %7407 = vmatpush1.msra.mxu0 0.0
    %7408 = vmatprep.subr.mxu0 0.0
    %7409 = vmatpush1.msra.mxu0 0.0
    %7410 = vmatprep.subr.mxu0 0.0
    %7411 = vmatpush1.msra.mxu0 0.0
    %7412 = vmatprep.subr.mxu0 0.0
    %7413 = vmatpush1.msra.mxu0 0.0
    %7414 = vmatprep.subr.mxu0 0.0
    %7415 = vmatpush1.msra.mxu0 0.0
    %7416 = vmatprep.subr.mxu0 0.0
    %7417 = vmatpush1.msra.mxu0 0.0
    %7418 = vmatprep.mubr.f32.mxu0 0.0
    %7419 = vmatmul.mubr.f32.gmra.mrb[0].mxu0 %v7343
    %v7420 = vpop.f32.mrb[0].mxu0
    %v7421 = vadd.f32 %v6678, %v7420
    %v7422 = vpop.f32.mrb[0].mxu0
    %7423 = vmatprep.mubr.f32.mxu0 0.0
    %7424 = vmatmul.mubr.f32.gmra.mrb[0].mxu0 %v7346
    %v7425 = vpop.f32.mrb[0].mxu0
    %v7426 = vadd.f32 %v6683, %v7425
    %v7427 = vpop.f32.mrb[0].mxu0
    %7428 = vmatprep.mubr.f32.mxu0 0.0
    %7429 = vmatmul.mubr.f32.gmra.mrb[0].mxu0 %v7349
    %v7430 = vpop.f32.mrb[0].mxu0
    %v7431 = vadd.f32 %v6688, %v7430
    %v7432 = vpop.f32.mrb[0].mxu0
    %7433 = vmatprep.mubr.f32.mxu0 0.0
    %7434 = vmatmul.mubr.f32.gmra.mrb[0].mxu0 %v7352
    %v7435 = vpop.f32.mrb[0].mxu0
    %v7436 = vadd.f32 %v6693, %v7435
    %v7437 = vpop.f32.mrb[0].mxu0
    %7438 = vdwg.mxu0
    %v7440 = vsel %vm74, %v6249, 0
    %v7443 = vsel %vm74, %v6254, 0
    %v7446 = vsel %vm74, %v6259, 0
    %v7449 = vsel %vm74, %v6264, 0
    %7451 = vmatprep.subr.mxu0 0.0
    %7452 = vmatpush1.msra.mxu0 %v6697
    %7453 = vmatprep.subr.mxu0 0.0
    %7454 = vmatpush1.msra.mxu0 %v6698
    %7455 = vmatprep.subr.mxu0 0.0
    %7456 = vmatpush1.msra.mxu0 %v6699
    %7457 = vmatprep.subr.mxu0 0.0
    %7458 = vmatpush1.msra.mxu0 %v6700
    %7459 = vmatprep.subr.mxu0 0.0
    %7460 = vmatpush1.msra.mxu0 0.0
    %7461 = vmatprep.subr.mxu0 0.0
    %7462 = vmatpush1.msra.mxu0 0.0
    %7463 = vmatprep.subr.mxu0 0.0
    %7464 = vmatpush1.msra.mxu0 0.0
    %7465 = vmatprep.subr.mxu0 0.0
    %7466 = vmatpush1.msra.mxu0 0.0
    %7467 = vmatprep.subr.mxu0 0.0
    %7468 = vmatpush1.msra.mxu0 0.0
    %7469 = vmatprep.subr.mxu0 0.0
    %7470 = vmatpush1.msra.mxu0 0.0
    %7471 = vmatprep.subr.mxu0 0.0
    %7472 = vmatpush1.msra.mxu0 0.0
    %7473 = vmatprep.subr.mxu0 0.0
    %7474 = vmatpush1.msra.mxu0 0.0
    %7475 = vmatprep.subr.mxu0 0.0
    %7476 = vmatpush1.msra.mxu0 0.0
    %7477 = vmatprep.subr.mxu0 0.0
    %7478 = vmatpush1.msra.mxu0 0.0
    %7479 = vmatprep.subr.mxu0 0.0
    %7480 = vmatpush1.msra.mxu0 0.0
    %7481 = vmatprep.subr.mxu0 0.0
    %7482 = vmatpush1.msra.mxu0 0.0
    %7483 = vmatprep.subr.mxu0 0.0
    %7484 = vmatpush1.msra.mxu0 0.0
    %7485 = vmatprep.subr.mxu0 0.0
    %7486 = vmatpush1.msra.mxu0 0.0
    %7487 = vmatprep.subr.mxu0 0.0
    %7488 = vmatpush1.msra.mxu0 0.0
    %7489 = vmatprep.subr.mxu0 0.0
    %7490 = vmatpush1.msra.mxu0 0.0
    %7491 = vmatprep.subr.mxu0 0.0
    %7492 = vmatpush1.msra.mxu0 0.0
    %7493 = vmatprep.subr.mxu0 0.0
    %7494 = vmatpush1.msra.mxu0 0.0
    %7495 = vmatprep.subr.mxu0 0.0
    %7496 = vmatpush1.msra.mxu0 0.0
    %7497 = vmatprep.subr.mxu0 0.0
    %7498 = vmatpush1.msra.mxu0 0.0
    %7499 = vmatprep.subr.mxu0 0.0
    %7500 = vmatpush1.msra.mxu0 0.0
    %7501 = vmatprep.subr.mxu0 0.0
    %7502 = vmatpush1.msra.mxu0 0.0
    %7503 = vmatprep.subr.mxu0 0.0
    %7504 = vmatpush1.msra.mxu0 0.0
    %7505 = vmatprep.subr.mxu0 0.0
    %7506 = vmatpush1.msra.mxu0 0.0
    %7507 = vmatprep.subr.mxu0 0.0
    %7508 = vmatpush1.msra.mxu0 0.0
    %7509 = vmatprep.subr.mxu0 0.0
    %7510 = vmatpush1.msra.mxu0 0.0
    %7511 = vmatprep.subr.mxu0 0.0
    %7512 = vmatpush1.msra.mxu0 0.0
    %7513 = vmatprep.subr.mxu0 0.0
    %7514 = vmatpush1.msra.mxu0 0.0
    %7515 = vmatprep.mubr.f32.mxu0 0.0
    %7516 = vmatmul.mubr.f32.gmra.mrb[0].mxu0 %v7440
    %v7517 = vpop.f32.mrb[0].mxu0
    %v7518 = vadd.f32 %v6785, %v7517
    %v7519 = vpop.f32.mrb[0].mxu0
    %7520 = vmatprep.mubr.f32.mxu0 0.0
    %7521 = vmatmul.mubr.f32.gmra.mrb[0].mxu0 %v7443
    %v7522 = vpop.f32.mrb[0].mxu0
    %v7523 = vadd.f32 %v6790, %v7522
    %v7524 = vpop.f32.mrb[0].mxu0
    %7525 = vmatprep.mubr.f32.mxu0 0.0
    %7526 = vmatmul.mubr.f32.gmra.mrb[0].mxu0 %v7446
    %v7527 = vpop.f32.mrb[0].mxu0
    %v7528 = vadd.f32 %v6795, %v7527
    %v7529 = vpop.f32.mrb[0].mxu0
    %7530 = vmatprep.mubr.f32.mxu0 0.0
    %7531 = vmatmul.mubr.f32.gmra.mrb[0].mxu0 %v7449
    %v7532 = vpop.f32.mrb[0].mxu0
    %v7533 = vadd.f32 %v6800, %v7532
    %v7534 = vpop.f32.mrb[0].mxu0
    %7535 = vdwg.mxu0
    %v7537 = vsel %vm74, %v6289, 0
    %v7540 = vsel %vm74, %v6294, 0
    %v7543 = vsel %vm74, %v6299, 0
    %v7546 = vsel %vm74, %v6304, 0
    %7548 = vmatprep.subr.mxu0 0.0
    %7549 = vmatpush1.msra.mxu0 %v6804
    %7550 = vmatprep.subr.mxu0 0.0
    %7551 = vmatpush1.msra.mxu0 %v6805
    %7552 = vmatprep.subr.mxu0 0.0
    %7553 = vmatpush1.msra.mxu0 %v6806
    %7554 = vmatprep.subr.mxu0 0.0
    %7555 = vmatpush1.msra.mxu0 %v6807
    %7556 = vmatprep.subr.mxu0 0.0
    %7557 = vmatpush1.msra.mxu0 0.0
    %7558 = vmatprep.subr.mxu0 0.0
    %7559 = vmatpush1.msra.mxu0 0.0
    %7560 = vmatprep.subr.mxu0 0.0
    %7561 = vmatpush1.msra.mxu0 0.0
    %7562 = vmatprep.subr.mxu0 0.0
    %7563 = vmatpush1.msra.mxu0 0.0
    %7564 = vmatprep.subr.mxu0 0.0
    %7565 = vmatpush1.msra.mxu0 0.0
    %7566 = vmatprep.subr.mxu0 0.0
    %7567 = vmatpush1.msra.mxu0 0.0
    %7568 = vmatprep.subr.mxu0 0.0
    %7569 = vmatpush1.msra.mxu0 0.0
    %7570 = vmatprep.subr.mxu0 0.0
    %7571 = vmatpush1.msra.mxu0 0.0
    %7572 = vmatprep.subr.mxu0 0.0
    %7573 = vmatpush1.msra.mxu0 0.0
    %7574 = vmatprep.subr.mxu0 0.0
    %7575 = vmatpush1.msra.mxu0 0.0
    %7576 = vmatprep.subr.mxu0 0.0
    %7577 = vmatpush1.msra.mxu0 0.0
    %7578 = vmatprep.subr.mxu0 0.0
    %7579 = vmatpush1.msra.mxu0 0.0
    %7580 = vmatprep.subr.mxu0 0.0
    %7581 = vmatpush1.msra.mxu0 0.0
    %7582 = vmatprep.subr.mxu0 0.0
    %7583 = vmatpush1.msra.mxu0 0.0
    %7584 = vmatprep.subr.mxu0 0.0
    %7585 = vmatpush1.msra.mxu0 0.0
    %7586 = vmatprep.subr.mxu0 0.0
    %7587 = vmatpush1.msra.mxu0 0.0
    %7588 = vmatprep.subr.mxu0 0.0
    %7589 = vmatpush1.msra.mxu0 0.0
    %7590 = vmatprep.subr.mxu0 0.0
    %7591 = vmatpush1.msra.mxu0 0.0
    %7592 = vmatprep.subr.mxu0 0.0
    %7593 = vmatpush1.msra.mxu0 0.0
    %7594 = vmatprep.subr.mxu0 0.0
    %7595 = vmatpush1.msra.mxu0 0.0
    %7596 = vmatprep.subr.mxu0 0.0
    %7597 = vmatpush1.msra.mxu0 0.0
    %7598 = vmatprep.subr.mxu0 0.0
    %7599 = vmatpush1.msra.mxu0 0.0
    %7600 = vmatprep.subr.mxu0 0.0
    %7601 = vmatpush1.msra.mxu0 0.0
    %7602 = vmatprep.subr.mxu0 0.0
    %7603 = vmatpush1.msra.mxu0 0.0
    %7604 = vmatprep.subr.mxu0 0.0
    %7605 = vmatpush1.msra.mxu0 0.0
    %7606 = vmatprep.subr.mxu0 0.0
    %7607 = vmatpush1.msra.mxu0 0.0
    %7608 = vmatprep.subr.mxu0 0.0
    %7609 = vmatpush1.msra.mxu0 0.0
    %7610 = vmatprep.subr.mxu0 0.0
    %7611 = vmatpush1.msra.mxu0 0.0
    %7612 = vmatprep.mubr.f32.mxu0 0.0
    %7613 = vmatmul.mubr.f32.gmra.mrb[0].mxu0 %v7537
    %v7614 = vpop.f32.mrb[0].mxu0
    %v7615 = vadd.f32 %v6892, %v7614
    %v7616 = vpop.f32.mrb[0].mxu0
    %7617 = vmatprep.mubr.f32.mxu0 0.0
    %7618 = vmatmul.mubr.f32.gmra.mrb[0].mxu0 %v7540
    %v7619 = vpop.f32.mrb[0].mxu0
    %v7620 = vadd.f32 %v6897, %v7619
    %v7621 = vpop.f32.mrb[0].mxu0
    %7622 = vmatprep.mubr.f32.mxu0 0.0
    %7623 = vmatmul.mubr.f32.gmra.mrb[0].mxu0 %v7543
    %v7624 = vpop.f32.mrb[0].mxu0
    %v7625 = vadd.f32 %v6902, %v7624
    %v7626 = vpop.f32.mrb[0].mxu0
    %7627 = vmatprep.mubr.f32.mxu0 0.0
    %7628 = vmatmul.mubr.f32.gmra.mrb[0].mxu0 %v7546
    %v7629 = vpop.f32.mrb[0].mxu0
    %v7630 = vadd.f32 %v6907, %v7629
    %v7631 = vpop.f32.mrb[0].mxu0
    %7632 = vdwg.mxu0
    %v7634 = vsel %vm74, %v6329, 0
    %v7637 = vsel %vm74, %v6334, 0
    %v7640 = vsel %vm74, %v6339, 0
    %v7643 = vsel %vm74, %v6344, 0
    %7645 = vmatprep.subr.mxu0 0.0
    %7646 = vmatpush1.msra.mxu0 %v6911
    %7647 = vmatprep.subr.mxu0 0.0
    %7648 = vmatpush1.msra.mxu0 %v6912
    %7649 = vmatprep.subr.mxu0 0.0
    %7650 = vmatpush1.msra.mxu0 %v6913
    %7651 = vmatprep.subr.mxu0 0.0
    %7652 = vmatpush1.msra.mxu0 %v6914
    %7653 = vmatprep.subr.mxu0 0.0
    %7654 = vmatpush1.msra.mxu0 0.0
    %7655 = vmatprep.subr.mxu0 0.0
    %7656 = vmatpush1.msra.mxu0 0.0
    %7657 = vmatprep.subr.mxu0 0.0
    %7658 = vmatpush1.msra.mxu0 0.0
    %7659 = vmatprep.subr.mxu0 0.0
    %7660 = vmatpush1.msra.mxu0 0.0
    %7661 = vmatprep.subr.mxu0 0.0
    %7662 = vmatpush1.msra.mxu0 0.0
    %7663 = vmatprep.subr.mxu0 0.0
    %7664 = vmatpush1.msra.mxu0 0.0
    %7665 = vmatprep.subr.mxu0 0.0
    %7666 = vmatpush1.msra.mxu0 0.0
    %7667 = vmatprep.subr.mxu0 0.0
    %7668 = vmatpush1.msra.mxu0 0.0
    %7669 = vmatprep.subr.mxu0 0.0
    %7670 = vmatpush1.msra.mxu0 0.0
    %7671 = vmatprep.subr.mxu0 0.0
    %7672 = vmatpush1.msra.mxu0 0.0
    %7673 = vmatprep.subr.mxu0 0.0
    %7674 = vmatpush1.msra.mxu0 0.0
    %7675 = vmatprep.subr.mxu0 0.0
    %7676 = vmatpush1.msra.mxu0 0.0
    %7677 = vmatprep.subr.mxu0 0.0
    %7678 = vmatpush1.msra.mxu0 0.0
    %7679 = vmatprep.subr.mxu0 0.0
    %7680 = vmatpush1.msra.mxu0 0.0
    %7681 = vmatprep.subr.mxu0 0.0
    %7682 = vmatpush1.msra.mxu0 0.0
    %7683 = vmatprep.subr.mxu0 0.0
    %7684 = vmatpush1.msra.mxu0 0.0
    %7685 = vmatprep.subr.mxu0 0.0
    %7686 = vmatpush1.msra.mxu0 0.0
    %7687 = vmatprep.subr.mxu0 0.0
    %7688 = vmatpush1.msra.mxu0 0.0
    %7689 = vmatprep.subr.mxu0 0.0
    %7690 = vmatpush1.msra.mxu0 0.0
    %7691 = vmatprep.subr.mxu0 0.0
    %7692 = vmatpush1.msra.mxu0 0.0
    %7693 = vmatprep.subr.mxu0 0.0
    %7694 = vmatpush1.msra.mxu0 0.0
    %7695 = vmatprep.subr.mxu0 0.0
    %7696 = vmatpush1.msra.mxu0 0.0
    %7697 = vmatprep.subr.mxu0 0.0
    %7698 = vmatpush1.msra.mxu0 0.0
    %7699 = vmatprep.subr.mxu0 0.0
    %7700 = vmatpush1.msra.mxu0 0.0
    %7701 = vmatprep.subr.mxu0 0.0
    %7702 = vmatpush1.msra.mxu0 0.0
    %7703 = vmatprep.subr.mxu0 0.0
    %7704 = vmatpush1.msra.mxu0 0.0
    %7705 = vmatprep.subr.mxu0 0.0
    %7706 = vmatpush1.msra.mxu0 0.0
    %7707 = vmatprep.subr.mxu0 0.0
    %7708 = vmatpush1.msra.mxu0 0.0
    %7709 = vmatprep.mubr.f32.mxu0 0.0
    %7710 = vmatmul.mubr.f32.gmra.mrb[0].mxu0 %v7634
    %v7711 = vpop.f32.mrb[0].mxu0
    %v7712 = vadd.f32 %v6999, %v7711
    %v7713 = vpop.f32.mrb[0].mxu0
    %7714 = vmatprep.mubr.f32.mxu0 0.0
    %7715 = vmatmul.mubr.f32.gmra.mrb[0].mxu0 %v7637
    %v7716 = vpop.f32.mrb[0].mxu0
    %v7717 = vadd.f32 %v7004, %v7716
    %v7718 = vpop.f32.mrb[0].mxu0
    %7719 = vmatprep.mubr.f32.mxu0 0.0
    %7720 = vmatmul.mubr.f32.gmra.mrb[0].mxu0 %v7640
    %v7721 = vpop.f32.mrb[0].mxu0
    %v7722 = vadd.f32 %v7009, %v7721
    %v7723 = vpop.f32.mrb[0].mxu0
    %7724 = vmatprep.mubr.f32.mxu0 0.0
    %7725 = vmatmul.mubr.f32.gmra.mrb[0].mxu0 %v7643
    %v7726 = vpop.f32.mrb[0].mxu0
    %v7727 = vadd.f32 %v7014, %v7726
    %v7728 = vpop.f32.mrb[0].mxu0
    %7729 = vdwg.mxu0
    %v7731 = vsel %vm74, %v6369, 0
    %v7734 = vsel %vm74, %v6374, 0
    %v7737 = vsel %vm74, %v6379, 0
    %v7740 = vsel %vm74, %v6384, 0
    %7742 = vmatprep.subr.mxu0 0.0
    %7743 = vmatpush1.msra.mxu0 %v7018
    %7744 = vmatprep.subr.mxu0 0.0
    %7745 = vmatpush1.msra.mxu0 %v7019
    %7746 = vmatprep.subr.mxu0 0.0
    %7747 = vmatpush1.msra.mxu0 %v7020
    %7748 = vmatprep.subr.mxu0 0.0
    %7749 = vmatpush1.msra.mxu0 %v7021
    %7750 = vmatprep.subr.mxu0 0.0
    %7751 = vmatpush1.msra.mxu0 0.0
    %7752 = vmatprep.subr.mxu0 0.0
    %7753 = vmatpush1.msra.mxu0 0.0
    %7754 = vmatprep.subr.mxu0 0.0
    %7755 = vmatpush1.msra.mxu0 0.0
    %7756 = vmatprep.subr.mxu0 0.0
    %7757 = vmatpush1.msra.mxu0 0.0
    %7758 = vmatprep.subr.mxu0 0.0
    %7759 = vmatpush1.msra.mxu0 0.0
    %7760 = vmatprep.subr.mxu0 0.0
    %7761 = vmatpush1.msra.mxu0 0.0
    %7762 = vmatprep.subr.mxu0 0.0
    %7763 = vmatpush1.msra.mxu0 0.0
    %7764 = vmatprep.subr.mxu0 0.0
    %7765 = vmatpush1.msra.mxu0 0.0
    %7766 = vmatprep.subr.mxu0 0.0
    %7767 = vmatpush1.msra.mxu0 0.0
    %7768 = vmatprep.subr.mxu0 0.0
    %7769 = vmatpush1.msra.mxu0 0.0
    %7770 = vmatprep.subr.mxu0 0.0
    %7771 = vmatpush1.msra.mxu0 0.0
    %7772 = vmatprep.subr.mxu0 0.0
    %7773 = vmatpush1.msra.mxu0 0.0
    %7774 = vmatprep.subr.mxu0 0.0
    %7775 = vmatpush1.msra.mxu0 0.0
    %7776 = vmatprep.subr.mxu0 0.0
    %7777 = vmatpush1.msra.mxu0 0.0
    %7778 = vmatprep.subr.mxu0 0.0
    %7779 = vmatpush1.msra.mxu0 0.0
    %7780 = vmatprep.subr.mxu0 0.0
    %7781 = vmatpush1.msra.mxu0 0.0
    %7782 = vmatprep.subr.mxu0 0.0
    %7783 = vmatpush1.msra.mxu0 0.0
    %7784 = vmatprep.subr.mxu0 0.0
    %7785 = vmatpush1.msra.mxu0 0.0
    %7786 = vmatprep.subr.mxu0 0.0
    %7787 = vmatpush1.msra.mxu0 0.0
    %7788 = vmatprep.subr.mxu0 0.0
    %7789 = vmatpush1.msra.mxu0 0.0
    %7790 = vmatprep.subr.mxu0 0.0
    %7791 = vmatpush1.msra.mxu0 0.0
    %7792 = vmatprep.subr.mxu0 0.0
    %7793 = vmatpush1.msra.mxu0 0.0
    %7794 = vmatprep.subr.mxu0 0.0
    %7795 = vmatpush1.msra.mxu0 0.0
    %7796 = vmatprep.subr.mxu0 0.0
    %7797 = vmatpush1.msra.mxu0 0.0
    %7798 = vmatprep.subr.mxu0 0.0
    %7799 = vmatpush1.msra.mxu0 0.0
    %7800 = vmatprep.subr.mxu0 0.0
    %7801 = vmatpush1.msra.mxu0 0.0
    %7802 = vmatprep.subr.mxu0 0.0
    %7803 = vmatpush1.msra.mxu0 0.0
    %7804 = vmatprep.subr.mxu0 0.0
    %7805 = vmatpush1.msra.mxu0 0.0
    %7806 = vmatprep.mubr.f32.mxu0 0.0
    %7807 = vmatmul.mubr.f32.gmra.mrb[0].mxu0 %v7731
    %v7808 = vpop.f32.mrb[0].mxu0
    %v7809 = vadd.f32 %v7106, %v7808
    %v7810 = vpop.f32.mrb[0].mxu0
    %7811 = vmatprep.mubr.f32.mxu0 0.0
    %7812 = vmatmul.mubr.f32.gmra.mrb[0].mxu0 %v7734
    %v7813 = vpop.f32.mrb[0].mxu0
    %v7814 = vadd.f32 %v7111, %v7813
    %v7815 = vpop.f32.mrb[0].mxu0
    %7816 = vmatprep.mubr.f32.mxu0 0.0
    %7817 = vmatmul.mubr.f32.gmra.mrb[0].mxu0 %v7737
    %v7818 = vpop.f32.mrb[0].mxu0
    %v7819 = vadd.f32 %v7116, %v7818
    %v7820 = vpop.f32.mrb[0].mxu0
    %7821 = vmatprep.mubr.f32.mxu0 0.0
    %7822 = vmatmul.mubr.f32.gmra.mrb[0].mxu0 %v7740
    %v7823 = vpop.f32.mrb[0].mxu0
    %v7824 = vadd.f32 %v7121, %v7823
    %v7825 = vpop.f32.mrb[0].mxu0
    %7826 = vdwg.mxu0
    %v7828 = vsel %vm74, %v6409, 0
    %v7831 = vsel %vm74, %v6414, 0
    %v7834 = vsel %vm74, %v6419, 0
    %v7837 = vsel %vm74, %v6424, 0
    %7839 = vmatprep.subr.mxu0 0.0
    %7840 = vmatpush1.msra.mxu0 %v7125
    %7841 = vmatprep.subr.mxu0 0.0
    %7842 = vmatpush1.msra.mxu0 %v7126
    %7843 = vmatprep.subr.mxu0 0.0
    %7844 = vmatpush1.msra.mxu0 %v7127
    %7845 = vmatprep.subr.mxu0 0.0
    %7846 = vmatpush1.msra.mxu0 %v7128
    %7847 = vmatprep.subr.mxu0 0.0
    %7848 = vmatpush1.msra.mxu0 0.0
    %7849 = vmatprep.subr.mxu0 0.0
    %7850 = vmatpush1.msra.mxu0 0.0
    %7851 = vmatprep.subr.mxu0 0.0
    %7852 = vmatpush1.msra.mxu0 0.0
    %7853 = vmatprep.subr.mxu0 0.0
    %7854 = vmatpush1.msra.mxu0 0.0
    %7855 = vmatprep.subr.mxu0 0.0
    %7856 = vmatpush1.msra.mxu0 0.0
    %7857 = vmatprep.subr.mxu0 0.0
    %7858 = vmatpush1.msra.mxu0 0.0
    %7859 = vmatprep.subr.mxu0 0.0
    %7860 = vmatpush1.msra.mxu0 0.0
    %7861 = vmatprep.subr.mxu0 0.0
    %7862 = vmatpush1.msra.mxu0 0.0
    %7863 = vmatprep.subr.mxu0 0.0
    %7864 = vmatpush1.msra.mxu0 0.0
    %7865 = vmatprep.subr.mxu0 0.0
    %7866 = vmatpush1.msra.mxu0 0.0
    %7867 = vmatprep.subr.mxu0 0.0
    %7868 = vmatpush1.msra.mxu0 0.0
    %7869 = vmatprep.subr.mxu0 0.0
    %7870 = vmatpush1.msra.mxu0 0.0
    %7871 = vmatprep.subr.mxu0 0.0
    %7872 = vmatpush1.msra.mxu0 0.0
    %7873 = vmatprep.subr.mxu0 0.0
    %7874 = vmatpush1.msra.mxu0 0.0
    %7875 = vmatprep.subr.mxu0 0.0
    %7876 = vmatpush1.msra.mxu0 0.0
    %7877 = vmatprep.subr.mxu0 0.0
    %7878 = vmatpush1.msra.mxu0 0.0
    %7879 = vmatprep.subr.mxu0 0.0
    %7880 = vmatpush1.msra.mxu0 0.0
    %7881 = vmatprep.subr.mxu0 0.0
    %7882 = vmatpush1.msra.mxu0 0.0
    %7883 = vmatprep.subr.mxu0 0.0
    %7884 = vmatpush1.msra.mxu0 0.0
    %7885 = vmatprep.subr.mxu0 0.0
    %7886 = vmatpush1.msra.mxu0 0.0
    %7887 = vmatprep.subr.mxu0 0.0
    %7888 = vmatpush1.msra.mxu0 0.0
    %7889 = vmatprep.subr.mxu0 0.0
    %7890 = vmatpush1.msra.mxu0 0.0
    %7891 = vmatprep.subr.mxu0 0.0
    %7892 = vmatpush1.msra.mxu0 0.0
    %7893 = vmatprep.subr.mxu0 0.0
    %7894 = vmatpush1.msra.mxu0 0.0
    %7895 = vmatprep.subr.mxu0 0.0
    %7896 = vmatpush1.msra.mxu0 0.0
    %7897 = vmatprep.subr.mxu0 0.0
    %7898 = vmatpush1.msra.mxu0 0.0
    %7899 = vmatprep.subr.mxu0 0.0
    %7900 = vmatpush1.msra.mxu0 0.0
    %7901 = vmatprep.subr.mxu0 0.0
    %7902 = vmatpush1.msra.mxu0 0.0
    %7903 = vmatprep.mubr.f32.mxu0 0.0
    %7904 = vmatmul.mubr.f32.gmra.mrb[0].mxu0 %v7828
    %v7905 = vpop.f32.mrb[0].mxu0
    %v7906 = vadd.f32 %v7213, %v7905
    %v7907 = vpop.f32.mrb[0].mxu0
    %7908 = vmatprep.mubr.f32.mxu0 0.0
    %7909 = vmatmul.mubr.f32.gmra.mrb[0].mxu0 %v7831
    %v7910 = vpop.f32.mrb[0].mxu0
    %v7911 = vadd.f32 %v7218, %v7910
    %v7912 = vpop.f32.mrb[0].mxu0
    %7913 = vmatprep.mubr.f32.mxu0 0.0
    %7914 = vmatmul.mubr.f32.gmra.mrb[0].mxu0 %v7834
    %v7915 = vpop.f32.mrb[0].mxu0
    %v7916 = vadd.f32 %v7223, %v7915
    %v7917 = vpop.f32.mrb[0].mxu0
    %7918 = vmatprep.mubr.f32.mxu0 0.0
    %7919 = vmatmul.mubr.f32.gmra.mrb[0].mxu0 %v7837
    %v7920 = vpop.f32.mrb[0].mxu0
    %v7921 = vadd.f32 %v7228, %v7920
    %v7922 = vpop.f32.mrb[0].mxu0
    %7923 = vdwg.mxu0
    %v7925 = vsel %vm74, %v6449, 0
    %v7928 = vsel %vm74, %v6454, 0
    %v7931 = vsel %vm74, %v6459, 0
    %v7934 = vsel %vm74, %v6464, 0
    %7936 = vmatprep.subr.mxu0 0.0
    %7937 = vmatpush1.msra.mxu0 %v7232
    %7938 = vmatprep.subr.mxu0 0.0
    %7939 = vmatpush1.msra.mxu0 %v7233
    %7940 = vmatprep.subr.mxu0 0.0
    %7941 = vmatpush1.msra.mxu0 %v7234
    %7942 = vmatprep.subr.mxu0 0.0
    %7943 = vmatpush1.msra.mxu0 %v7235
    %7944 = vmatprep.subr.mxu0 0.0
    %7945 = vmatpush1.msra.mxu0 0.0
    %7946 = vmatprep.subr.mxu0 0.0
    %7947 = vmatpush1.msra.mxu0 0.0
    %7948 = vmatprep.subr.mxu0 0.0
    %7949 = vmatpush1.msra.mxu0 0.0
    %7950 = vmatprep.subr.mxu0 0.0
    %7951 = vmatpush1.msra.mxu0 0.0
    %7952 = vmatprep.subr.mxu0 0.0
    %7953 = vmatpush1.msra.mxu0 0.0
    %7954 = vmatprep.subr.mxu0 0.0
    %7955 = vmatpush1.msra.mxu0 0.0
    %7956 = vmatprep.subr.mxu0 0.0
    %7957 = vmatpush1.msra.mxu0 0.0
    %7958 = vmatprep.subr.mxu0 0.0
    %7959 = vmatpush1.msra.mxu0 0.0
    %7960 = vmatprep.subr.mxu0 0.0
    %7961 = vmatpush1.msra.mxu0 0.0
    %7962 = vmatprep.subr.mxu0 0.0
    %7963 = vmatpush1.msra.mxu0 0.0
    %7964 = vmatprep.subr.mxu0 0.0
    %7965 = vmatpush1.msra.mxu0 0.0
    %7966 = vmatprep.subr.mxu0 0.0
    %7967 = vmatpush1.msra.mxu0 0.0
    %7968 = vmatprep.subr.mxu0 0.0
    %7969 = vmatpush1.msra.mxu0 0.0
    %7970 = vmatprep.subr.mxu0 0.0
    %7971 = vmatpush1.msra.mxu0 0.0
    %7972 = vmatprep.subr.mxu0 0.0
    %7973 = vmatpush1.msra.mxu0 0.0
    %7974 = vmatprep.subr.mxu0 0.0
    %7975 = vmatpush1.msra.mxu0 0.0
    %7976 = vmatprep.subr.mxu0 0.0
    %7977 = vmatpush1.msra.mxu0 0.0
    %7978 = vmatprep.subr.mxu0 0.0
    %7979 = vmatpush1.msra.mxu0 0.0
    %7980 = vmatprep.subr.mxu0 0.0
    %7981 = vmatpush1.msra.mxu0 0.0
    %7982 = vmatprep.subr.mxu0 0.0
    %7983 = vmatpush1.msra.mxu0 0.0
    %7984 = vmatprep.subr.mxu0 0.0
    %7985 = vmatpush1.msra.mxu0 0.0
    %7986 = vmatprep.subr.mxu0 0.0
    %7987 = vmatpush1.msra.mxu0 0.0
    %7988 = vmatprep.subr.mxu0 0.0
    %7989 = vmatpush1.msra.mxu0 0.0
    %7990 = vmatprep.subr.mxu0 0.0
    %7991 = vmatpush1.msra.mxu0 0.0
    %7992 = vmatprep.subr.mxu0 0.0
    %7993 = vmatpush1.msra.mxu0 0.0
    %7994 = vmatprep.subr.mxu0 0.0
    %7995 = vmatpush1.msra.mxu0 0.0
    %7996 = vmatprep.subr.mxu0 0.0
    %7997 = vmatpush1.msra.mxu0 0.0
    %7998 = vmatprep.subr.mxu0 0.0
    %7999 = vmatpush1.msra.mxu0 0.0
    %8000 = vmatprep.mubr.f32.mxu0 0.0
    %8001 = vmatmul.mubr.f32.gmra.mrb[0].mxu0 %v7925
    %v8002 = vpop.f32.mrb[0].mxu0
    %v8003 = vadd.f32 %v7320, %v8002
    %v8004 = vpop.f32.mrb[0].mxu0
    %8005 = vmatprep.mubr.f32.mxu0 0.0
    %8006 = vmatmul.mubr.f32.gmra.mrb[0].mxu0 %v7928
    %v8007 = vpop.f32.mrb[0].mxu0
    %v8008 = vadd.f32 %v7325, %v8007
    %v8009 = vpop.f32.mrb[0].mxu0
    %8010 = vmatprep.mubr.f32.mxu0 0.0
    %8011 = vmatmul.mubr.f32.gmra.mrb[0].mxu0 %v7931
    %v8012 = vpop.f32.mrb[0].mxu0
    %v8013 = vadd.f32 %v7330, %v8012
    %v8014 = vpop.f32.mrb[0].mxu0
    %8015 = vmatprep.mubr.f32.mxu0 0.0
    %8016 = vmatmul.mubr.f32.gmra.mrb[0].mxu0 %v7934
    %v8017 = vpop.f32.mrb[0].mxu0
    %v8018 = vadd.f32 %v7335, %v8017
    %v8019 = vpop.f32.mrb[0].mxu0
    %8020 = vdwg.mxu0
    %v8021 = vadd.f32 %v7338, %v7421
    %v8022 = vadd.f32 %v7339, %v7426
    %v8023 = vadd.f32 %v7340, %v7431
    %v8024 = vadd.f32 %v7341, %v7436
    %v8025 = vadd.f32 %v7518, %v7615
    %v8026 = vadd.f32 %v7523, %v7620
    %v8027 = vadd.f32 %v7528, %v7625
    %v8028 = vadd.f32 %v7533, %v7630
    %v8029 = vadd.f32 %v7712, %v7809
    %v8030 = vadd.f32 %v7717, %v7814
    %v8031 = vadd.f32 %v7722, %v7819
    %v8032 = vadd.f32 %v7727, %v7824
    %v8033 = vadd.f32 %v7906, %v8003
    %v8034 = vadd.f32 %v7911, %v8008
    %v8035 = vadd.f32 %v7916, %v8013
    %v8036 = vadd.f32 %v7921, %v8018
    %v8037 = vadd.f32 %v8021, %v8025
    %v8038 = vadd.f32 %v8022, %v8026
    %v8039 = vadd.f32 %v8023, %v8027
    %v8040 = vadd.f32 %v8024, %v8028
    %v8041 = vadd.f32 %v8029, %v8033
    %v8042 = vadd.f32 %v8030, %v8034
    %v8043 = vadd.f32 %v8031, %v8035
    %v8044 = vadd.f32 %v8032, %v8036
    %v8045 = vadd.f32 %v8037, %v8041
    %v8046 = vadd.f32 %v8038, %v8042
    %v8047 = vadd.f32 %v8039, %v8043
    %v8048 = vadd.f32 %v8040, %v8044
    %v8049 = vadd.f32 %v4485, %v4555
    %v8050 = vadd.f32 %v4486, %v4556
    %v8051 = vadd.f32 %v4487, %v4557
    %v8052 = vadd.f32 %v4488, %v4558
    %v8053 = vadd.f32 %v8049, %v8045
    %v8054 = vadd.f32 %v8050, %v8046
    %v8055 = vadd.f32 %v8051, %v8047
    %v8056 = vadd.f32 %v8052, %v8048
    %v8057 = vsel %vm74, %v8053, 0.0
    %8058 = vadd.xlane.f32.xlu0 %v8057
    %v8059 = vpop.xlane.xlu0 %8058
    %v8060 = vsel %vm74, %v8054, 0.0
    %8061 = vadd.xlane.f32.xlu0 %v8060
    %v8062 = vpop.xlane.xlu0 %8061
    %v8063 = vsel %vm74, %v8055, 0.0
    %8064 = vadd.xlane.f32.xlu0 %v8063
    %v8065 = vpop.xlane.xlu0 %8064
    %v8066 = vsel %vm74, %v8056, 0.0
    %8067 = vadd.xlane.f32.xlu0 %v8066
    %v8068 = vpop.xlane.xlu0 %8067
    %v8069 = vmul.f32 %v8059, %v297
    %v8070 = vmul.f32 %v8062, %v297
    %v8071 = vmul.f32 %v8065, %v297
    %v8072 = vmul.f32 %v8068, %v297
    %v8073 = vsub.f32 %v8053, %v8069
    %v8074 = vsub.f32 %v8054, %v8070
    %v8075 = vsub.f32 %v8055, %v8071
    %v8076 = vsub.f32 %v8056, %v8072
    %v8077 = vmul.f32 %v8073, %v8073
    %v8078 = vmul.f32 %v8074, %v8074
    %v8079 = vmul.f32 %v8075, %v8075
    %v8080 = vmul.f32 %v8076, %v8076
    %v8081 = vsel %vm74, %v8077, 0.0
    %8082 = vadd.xlane.f32.xlu0 %v8081
    %v8083 = vpop.xlane.xlu0 %8082
    %v8084 = vsel %vm74, %v8078, 0.0
    %8085 = vadd.xlane.f32.xlu0 %v8084
    %v8086 = vpop.xlane.xlu0 %8085
    %v8087 = vsel %vm74, %v8079, 0.0
    %8088 = vadd.xlane.f32.xlu0 %v8087
    %v8089 = vpop.xlane.xlu0 %8088
    %v8090 = vsel %vm74, %v8080, 0.0
    %8091 = vadd.xlane.f32.xlu0 %v8090
    %v8092 = vpop.xlane.xlu0 %8091
    %v8093 = vmul.f32 %v8083, %v297
    %v8094 = vmul.f32 %v8086, %v297
    %v8095 = vmul.f32 %v8089, %v297
    %v8096 = vmul.f32 %v8092, %v297
    %v8097 = vadd.f32 %v8093, 1e-05
    %v8098 = vadd.f32 %v8094, 1e-05
    %v8099 = vadd.f32 %v8095, 1e-05
    %v8100 = vadd.f32 %v8096, 1e-05
    %v8101 = vrsqrt.pop %v8097
    %v8102 = vrsqrt.pop %v8098
    %v8103 = vrsqrt.pop %v8099
    %v8104 = vrsqrt.pop %v8100
    %v8105 = vmul.f32 %v8073, %v8101
    %v8106 = vmul.f32 %v8074, %v8102
    %v8107 = vmul.f32 %v8075, %v8103
    %v8108 = vmul.f32 %v8076, %v8104
    %v8109 = vlaneseq
    %v8110 = vshrl.u32 %v8109, 7
    %v8111 = vsub.s32 2, %v8110
    %v8112 = vrot.slane %v4490, %v8111
    %v8113 = vmul.f32 %v8105, %v8112
    %v8114 = vmul.f32 %v8106, %v8112
    %v8115 = vmul.f32 %v8107, %v8112
    %v8116 = vmul.f32 %v8108, %v8112
    %v8117 = vlaneseq
    %v8118 = vshrl.u32 %v8117, 7
    %v8119 = vsub.s32 3, %v8118
    %v8120 = vrot.slane %v4490, %v8119
    %v8121 = vadd.f32 %v8113, %v8120
    %v8122 = vadd.f32 %v8114, %v8120
    %v8123 = vadd.f32 %v8115, %v8120
    %v8124 = vadd.f32 %v8116, %v8120
    %s8125 = scalar_lea.vmem %s9, 32
    %v8126 = vld [vmem:[%s8125] sm:$0xff]
    %v8127 = vld [vmem:[%s8125 + $0x8] sm:$0xff]
    %v8128 = vld [vmem:[%s8125 + $0x10] sm:$0xff]
    %v8129 = vld [vmem:[%s8125 + $0x18] sm:$0xff]
    %v8131 = vsel %vm74, %v8121, 0
    %v8134 = vsel %vm74, %v8122, 0
    %v8137 = vsel %vm74, %v8123, 0
    %v8140 = vsel %vm74, %v8124, 0
    %8142 = vmatprep.subr.mxu0 0.0
    %8143 = vmatpush1.msra.mxu0 %v8126
    %8144 = vmatprep.subr.mxu0 0.0
    %8145 = vmatpush1.msra.mxu0 %v8127
    %8146 = vmatprep.subr.mxu0 0.0
    %8147 = vmatpush1.msra.mxu0 %v8128
    %8148 = vmatprep.subr.mxu0 0.0
    %8149 = vmatpush1.msra.mxu0 %v8129
    %8150 = vmatprep.subr.mxu0 0.0
    %8151 = vmatpush1.msra.mxu0 0.0
    %8152 = vmatprep.subr.mxu0 0.0
    %8153 = vmatpush1.msra.mxu0 0.0
    %8154 = vmatprep.subr.mxu0 0.0
    %8155 = vmatpush1.msra.mxu0 0.0
    %8156 = vmatprep.subr.mxu0 0.0
    %8157 = vmatpush1.msra.mxu0 0.0
    %8158 = vmatprep.subr.mxu0 0.0
    %8159 = vmatpush1.msra.mxu0 0.0
    %8160 = vmatprep.subr.mxu0 0.0
    %8161 = vmatpush1.msra.mxu0 0.0
    %8162 = vmatprep.subr.mxu0 0.0
    %8163 = vmatpush1.msra.mxu0 0.0
    %8164 = vmatprep.subr.mxu0 0.0
    %8165 = vmatpush1.msra.mxu0 0.0
    %8166 = vmatprep.subr.mxu0 0.0
    %8167 = vmatpush1.msra.mxu0 0.0
    %8168 = vmatprep.subr.mxu0 0.0
    %8169 = vmatpush1.msra.mxu0 0.0
    %8170 = vmatprep.subr.mxu0 0.0
    %8171 = vmatpush1.msra.mxu0 0.0
    %8172 = vmatprep.subr.mxu0 0.0
    %8173 = vmatpush1.msra.mxu0 0.0
    %8174 = vmatprep.subr.mxu0 0.0
    %8175 = vmatpush1.msra.mxu0 0.0
    %8176 = vmatprep.subr.mxu0 0.0
    %8177 = vmatpush1.msra.mxu0 0.0
    %8178 = vmatprep.subr.mxu0 0.0
    %8179 = vmatpush1.msra.mxu0 0.0
    %8180 = vmatprep.subr.mxu0 0.0
    %8181 = vmatpush1.msra.mxu0 0.0
    %8182 = vmatprep.subr.mxu0 0.0
    %8183 = vmatpush1.msra.mxu0 0.0
    %8184 = vmatprep.subr.mxu0 0.0
    %8185 = vmatpush1.msra.mxu0 0.0
    %8186 = vmatprep.subr.mxu0 0.0
    %8187 = vmatpush1.msra.mxu0 0.0
    %8188 = vmatprep.subr.mxu0 0.0
    %8189 = vmatpush1.msra.mxu0 0.0
    %8190 = vmatprep.subr.mxu0 0.0
    %8191 = vmatpush1.msra.mxu0 0.0
    %8192 = vmatprep.subr.mxu0 0.0
    %8193 = vmatpush1.msra.mxu0 0.0
    %8194 = vmatprep.subr.mxu0 0.0
    %8195 = vmatpush1.msra.mxu0 0.0
    %8196 = vmatprep.subr.mxu0 0.0
    %8197 = vmatpush1.msra.mxu0 0.0
    %8198 = vmatprep.subr.mxu0 0.0
    %8199 = vmatpush1.msra.mxu0 0.0
    %8200 = vmatprep.subr.mxu0 0.0
    %8201 = vmatpush1.msra.mxu0 0.0
    %8202 = vmatprep.subr.mxu0 0.0
    %8203 = vmatpush1.msra.mxu0 0.0
    %8204 = vmatprep.subr.mxu0 0.0
    %8205 = vmatpush1.msra.mxu0 0.0
    %8206 = vmatprep.mubr.f32.mxu0 0.0
    %8207 = vmatmul.mubr.f32.gmra.mrb[0].mxu0 %v8131
    %v8208 = vpop.f32.mrb[0].mxu0
    %v8209 = vadd.f32 0.0, %v8208
    %v8210 = vpop.f32.mrb[0].mxu0
    %8211 = vmatprep.mubr.f32.mxu0 0.0
    %8212 = vmatmul.mubr.f32.gmra.mrb[0].mxu0 %v8134
    %v8213 = vpop.f32.mrb[0].mxu0
    %v8214 = vadd.f32 0.0, %v8213
    %v8215 = vpop.f32.mrb[0].mxu0
    %8216 = vmatprep.mubr.f32.mxu0 0.0
    %8217 = vmatmul.mubr.f32.gmra.mrb[0].mxu0 %v8137
    %v8218 = vpop.f32.mrb[0].mxu0
    %v8219 = vadd.f32 0.0, %v8218
    %v8220 = vpop.f32.mrb[0].mxu0
    %8221 = vmatprep.mubr.f32.mxu0 0.0
    %8222 = vmatmul.mubr.f32.gmra.mrb[0].mxu0 %v8140
    %v8223 = vpop.f32.mrb[0].mxu0
    %v8224 = vadd.f32 0.0, %v8223
    %v8225 = vpop.f32.mrb[0].mxu0
    %8226 = vdwg.mxu0
    %v8227 = vxor.u32 %v8209, 2147483648
    %v8228 = vxor.u32 %v8214, 2147483648
    %v8229 = vxor.u32 %v8219, 2147483648
    %v8230 = vxor.u32 %v8224, 2147483648
    %v8231 = vmul.f32 %v8227, 1.442695
    %v8232 = vpow.pop %v8231
    %v8233 = vmul.f32 %v8228, 1.442695
    %v8234 = vpow.pop %v8233
    %v8235 = vmul.f32 %v8229, 1.442695
    %v8236 = vpow.pop %v8235
    %v8237 = vmul.f32 %v8230, 1.442695
    %v8238 = vpow.pop %v8237
    %v8239 = vadd.f32 %v8232, 1.0
    %v8240 = vadd.f32 %v8234, 1.0
    %v8241 = vadd.f32 %v8236, 1.0
    %v8242 = vadd.f32 %v8238, 1.0
    %v8243 = vrcp.pop %v8239
    %v8244 = vmul.f32 1.0, %v8243
    %v8245 = vrcp.pop %v8240
    %v8246 = vmul.f32 1.0, %v8245
    %v8247 = vrcp.pop %v8241
    %v8248 = vmul.f32 1.0, %v8247
    %v8249 = vrcp.pop %v8242
    %v8250 = vmul.f32 1.0, %v8249
    %v8251 = vmul.f32 %v8209, %v8244
    %v8252 = vmul.f32 %v8214, %v8246
    %v8253 = vmul.f32 %v8219, %v8248
    %v8254 = vmul.f32 %v8224, %v8250
    %8259 = vrot.lane.b32.xlu0 %v8209, 64
    %v8260 = vpop.permute.xlu0 %8259
    %8261 = vrot.lane.b32.xlu0 %v8214, 64
    %v8262 = vpop.permute.xlu0 %8261
    %8263 = vrot.lane.b32.xlu0 %v8219, 64
    %v8264 = vpop.permute.xlu0 %8263
    %8265 = vrot.lane.b32.xlu0 %v8224, 64
    %v8266 = vpop.permute.xlu0 %8265
    %v8271 = vmul.f32 %v8251, %v8260
    %v8272 = vmul.f32 %v8252, %v8262
    %v8273 = vmul.f32 %v8253, %v8264
    %v8274 = vmul.f32 %v8254, %v8266
    %s8275 = scalar_lea.vmem %s10, 64
    %v8276 = vld [vmem:[%s8275] sm:$0xff]
    %v8277 = vld [vmem:[%s8275 + $0x8] sm:$0xff]
    %v8278 = vld [vmem:[%s8275 + $0x10] sm:$0xff]
    %v8279 = vld [vmem:[%s8275 + $0x18] sm:$0xff]
    %v8280 = vld [vmem:[%s8275 + $0x20] sm:$0xff]
    %v8281 = vld [vmem:[%s8275 + $0x28] sm:$0xff]
    %v8282 = vld [vmem:[%s8275 + $0x30] sm:$0xff]
    %v8283 = vld [vmem:[%s8275 + $0x38] sm:$0xff]
    %v8285 = vsel %vm4387, %v8271, 0
    %v8288 = vsel %vm4387, %v8272, 0
    %v8291 = vsel %vm4387, %v8273, 0
    %v8294 = vsel %vm4387, %v8274, 0
    %8296 = vmatprep.subr.mxu0 0.0
    %8297 = vmatpush1.msra.mxu0 %v8276
    %8298 = vmatprep.subr.mxu0 0.0
    %8299 = vmatpush1.msra.mxu0 %v8277
    %8300 = vmatprep.subr.mxu0 0.0
    %8301 = vmatpush1.msra.mxu0 %v8278
    %8302 = vmatprep.subr.mxu0 0.0
    %8303 = vmatpush1.msra.mxu0 %v8279
    %8304 = vmatprep.subr.mxu0 0.0
    %8305 = vmatpush1.msra.mxu0 %v8280
    %8306 = vmatprep.subr.mxu0 0.0
    %8307 = vmatpush1.msra.mxu0 %v8281
    %8308 = vmatprep.subr.mxu0 0.0
    %8309 = vmatpush1.msra.mxu0 %v8282
    %8310 = vmatprep.subr.mxu0 0.0
    %8311 = vmatpush1.msra.mxu0 %v8283
    %8312 = vmatprep.subr.mxu0 0.0
    %8313 = vmatpush1.msra.mxu0 0.0
    %8314 = vmatprep.subr.mxu0 0.0
    %8315 = vmatpush1.msra.mxu0 0.0
    %8316 = vmatprep.subr.mxu0 0.0
    %8317 = vmatpush1.msra.mxu0 0.0
    %8318 = vmatprep.subr.mxu0 0.0
    %8319 = vmatpush1.msra.mxu0 0.0
    %8320 = vmatprep.subr.mxu0 0.0
    %8321 = vmatpush1.msra.mxu0 0.0
    %8322 = vmatprep.subr.mxu0 0.0
    %8323 = vmatpush1.msra.mxu0 0.0
    %8324 = vmatprep.subr.mxu0 0.0
    %8325 = vmatpush1.msra.mxu0 0.0
    %8326 = vmatprep.subr.mxu0 0.0
    %8327 = vmatpush1.msra.mxu0 0.0
    %8328 = vmatprep.subr.mxu0 0.0
    %8329 = vmatpush1.msra.mxu0 0.0
    %8330 = vmatprep.subr.mxu0 0.0
    %8331 = vmatpush1.msra.mxu0 0.0
    %8332 = vmatprep.subr.mxu0 0.0
    %8333 = vmatpush1.msra.mxu0 0.0
    %8334 = vmatprep.subr.mxu0 0.0
    %8335 = vmatpush1.msra.mxu0 0.0
    %8336 = vmatprep.subr.mxu0 0.0
    %8337 = vmatpush1.msra.mxu0 0.0
    %8338 = vmatprep.subr.mxu0 0.0
    %8339 = vmatpush1.msra.mxu0 0.0
    %8340 = vmatprep.subr.mxu0 0.0
    %8341 = vmatpush1.msra.mxu0 0.0
    %8342 = vmatprep.subr.mxu0 0.0
    %8343 = vmatpush1.msra.mxu0 0.0
    %8344 = vmatprep.subr.mxu0 0.0
    %8345 = vmatpush1.msra.mxu0 0.0
    %8346 = vmatprep.subr.mxu0 0.0
    %8347 = vmatpush1.msra.mxu0 0.0
    %8348 = vmatprep.subr.mxu0 0.0
    %8349 = vmatpush1.msra.mxu0 0.0
    %8350 = vmatprep.subr.mxu0 0.0
    %8351 = vmatpush1.msra.mxu0 0.0
    %8352 = vmatprep.subr.mxu0 0.0
    %8353 = vmatpush1.msra.mxu0 0.0
    %8354 = vmatprep.subr.mxu0 0.0
    %8355 = vmatpush1.msra.mxu0 0.0
    %8356 = vmatprep.subr.mxu0 0.0
    %8357 = vmatpush1.msra.mxu0 0.0
    %8358 = vmatprep.subr.mxu0 0.0
    %8359 = vmatpush1.msra.mxu0 0.0
    %8360 = vmatprep.mubr.f32.mxu0 0.0
    %8361 = vmatmul.mubr.f32.gmra.mrb[0].mxu0 %v8285
    %v8362 = vpop.f32.mrb[0].mxu0
    %v8363 = vadd.f32 0.0, %v8362
    %v8364 = vpop.f32.mrb[0].mxu0
    %8365 = vmatprep.mubr.f32.mxu0 0.0
    %8366 = vmatmul.mubr.f32.gmra.mrb[0].mxu0 %v8288
    %v8367 = vpop.f32.mrb[0].mxu0
    %v8368 = vadd.f32 0.0, %v8367
    %v8369 = vpop.f32.mrb[0].mxu0
    %8370 = vmatprep.mubr.f32.mxu0 0.0
    %8371 = vmatmul.mubr.f32.gmra.mrb[0].mxu0 %v8291
    %v8372 = vpop.f32.mrb[0].mxu0
    %v8373 = vadd.f32 0.0, %v8372
    %v8374 = vpop.f32.mrb[0].mxu0
    %8375 = vmatprep.mubr.f32.mxu0 0.0
    %8376 = vmatmul.mubr.f32.gmra.mrb[0].mxu0 %v8294
    %v8377 = vpop.f32.mrb[0].mxu0
    %v8378 = vadd.f32 0.0, %v8377
    %v8379 = vpop.f32.mrb[0].mxu0
    %8380 = vdwg.mxu0
    %v8381 = vadd.f32 %v8053, %v8363
    %v8382 = vadd.f32 %v8054, %v8368
    %v8383 = vadd.f32 %v8055, %v8373
    %v8384 = vadd.f32 %v8056, %v8378
    %v8385 = vld [vmem:[%s11] sm:$0x1]
    %v8386 = vld [vmem:[%s11 + $0x1] sm:$0x1]
    %v8387 = vsel %vm74, %v8381, 0.0
    %8388 = vadd.xlane.f32.xlu0 %v8387
    %v8389 = vpop.xlane.xlu0 %8388
    %v8390 = vsel %vm74, %v8382, 0.0
    %8391 = vadd.xlane.f32.xlu0 %v8390
    %v8392 = vpop.xlane.xlu0 %8391
    %v8393 = vsel %vm74, %v8383, 0.0
    %8394 = vadd.xlane.f32.xlu0 %v8393
    %v8395 = vpop.xlane.xlu0 %8394
    %v8396 = vsel %vm74, %v8384, 0.0
    %8397 = vadd.xlane.f32.xlu0 %v8396
    %v8398 = vpop.xlane.xlu0 %8397
    %v8399 = vmul.f32 %v8389, %v297
    %v8400 = vmul.f32 %v8392, %v297
    %v8401 = vmul.f32 %v8395, %v297
    %v8402 = vmul.f32 %v8398, %v297
    %v8403 = vsub.f32 %v8381, %v8399
    %v8404 = vsub.f32 %v8382, %v8400
    %v8405 = vsub.f32 %v8383, %v8401
    %v8406 = vsub.f32 %v8384, %v8402
    %v8407 = vmul.f32 %v8403, %v8403
    %v8408 = vmul.f32 %v8404, %v8404
    %v8409 = vmul.f32 %v8405, %v8405
    %v8410 = vmul.f32 %v8406, %v8406
    %v8411 = vsel %vm74, %v8407, 0.0
    %8412 = vadd.xlane.f32.xlu0 %v8411
    %v8413 = vpop.xlane.xlu0 %8412
    %v8414 = vsel %vm74, %v8408, 0.0
    %8415 = vadd.xlane.f32.xlu0 %v8414
    %v8416 = vpop.xlane.xlu0 %8415
    %v8417 = vsel %vm74, %v8409, 0.0
    %8418 = vadd.xlane.f32.xlu0 %v8417
    %v8419 = vpop.xlane.xlu0 %8418
    %v8420 = vsel %vm74, %v8410, 0.0
    %8421 = vadd.xlane.f32.xlu0 %v8420
    %v8422 = vpop.xlane.xlu0 %8421
    %v8423 = vmul.f32 %v8413, %v297
    %v8424 = vmul.f32 %v8416, %v297
    %v8425 = vmul.f32 %v8419, %v297
    %v8426 = vmul.f32 %v8422, %v297
    %v8427 = vadd.f32 %v8423, 1e-05
    %v8428 = vadd.f32 %v8424, 1e-05
    %v8429 = vadd.f32 %v8425, 1e-05
    %v8430 = vadd.f32 %v8426, 1e-05
    %v8431 = vrsqrt.pop %v8427
    %v8432 = vrsqrt.pop %v8428
    %v8433 = vrsqrt.pop %v8429
    %v8434 = vrsqrt.pop %v8430
    %v8435 = vmul.f32 %v8403, %v8431
    %v8436 = vmul.f32 %v8404, %v8432
    %v8437 = vmul.f32 %v8405, %v8433
    %v8438 = vmul.f32 %v8406, %v8434
    %v8439 = vlaneseq
    %v8440 = vshrl.u32 %v8439, 7
    %v8441 = vsub.s32 0, %v8440
    %v8442 = vrot.slane %v8385, %v8441
    %v8443 = vmul.f32 %v8435, %v8442
    %v8444 = vmul.f32 %v8436, %v8442
    %v8445 = vmul.f32 %v8437, %v8442
    %v8446 = vmul.f32 %v8438, %v8442
    %v8447 = vlaneseq
    %v8448 = vshrl.u32 %v8447, 7
    %v8449 = vsub.s32 0, %v8448
    %v8450 = vrot.slane %v8386, %v8449
    %v8451 = vadd.f32 %v8443, %v8450
    %v8452 = vadd.f32 %v8444, %v8450
    %v8453 = vadd.f32 %v8445, %v8450
    %v8454 = vadd.f32 %v8446, %v8450
    %v8455 = vld [vmem:[%s12] sm:$0xff]
    %v8456 = vld [vmem:[%s12 + $0x8] sm:$0xff]
    %v8457 = vld [vmem:[%s12 + $0x10] sm:$0xff]
    %v8458 = vld [vmem:[%s12 + $0x18] sm:$0xff]
    %v8460 = vsel %vm74, %v8451, 0
    %v8463 = vsel %vm74, %v8452, 0
    %v8466 = vsel %vm74, %v8453, 0
    %v8469 = vsel %vm74, %v8454, 0
    %8471 = vmatprep.subr.mxu0 0.0
    %8472 = vmatpush1.msra.mxu0 %v8455
    %8473 = vmatprep.subr.mxu0 0.0
    %8474 = vmatpush1.msra.mxu0 %v8456
    %8475 = vmatprep.subr.mxu0 0.0
    %8476 = vmatpush1.msra.mxu0 %v8457
    %8477 = vmatprep.subr.mxu0 0.0
    %8478 = vmatpush1.msra.mxu0 %v8458
    %8479 = vmatprep.subr.mxu0 0.0
    %8480 = vmatpush1.msra.mxu0 0.0
    %8481 = vmatprep.subr.mxu0 0.0
    %8482 = vmatpush1.msra.mxu0 0.0
    %8483 = vmatprep.subr.mxu0 0.0
    %8484 = vmatpush1.msra.mxu0 0.0
    %8485 = vmatprep.subr.mxu0 0.0
    %8486 = vmatpush1.msra.mxu0 0.0
    %8487 = vmatprep.subr.mxu0 0.0
    %8488 = vmatpush1.msra.mxu0 0.0
    %8489 = vmatprep.subr.mxu0 0.0
    %8490 = vmatpush1.msra.mxu0 0.0
    %8491 = vmatprep.subr.mxu0 0.0
    %8492 = vmatpush1.msra.mxu0 0.0
    %8493 = vmatprep.subr.mxu0 0.0
    %8494 = vmatpush1.msra.mxu0 0.0
    %8495 = vmatprep.subr.mxu0 0.0
    %8496 = vmatpush1.msra.mxu0 0.0
    %8497 = vmatprep.subr.mxu0 0.0
    %8498 = vmatpush1.msra.mxu0 0.0
    %8499 = vmatprep.subr.mxu0 0.0
    %8500 = vmatpush1.msra.mxu0 0.0
    %8501 = vmatprep.subr.mxu0 0.0
    %8502 = vmatpush1.msra.mxu0 0.0
    %8503 = vmatprep.subr.mxu0 0.0
    %8504 = vmatpush1.msra.mxu0 0.0
    %8505 = vmatprep.subr.mxu0 0.0
    %8506 = vmatpush1.msra.mxu0 0.0
    %8507 = vmatprep.subr.mxu0 0.0
    %8508 = vmatpush1.msra.mxu0 0.0
    %8509 = vmatprep.subr.mxu0 0.0
    %8510 = vmatpush1.msra.mxu0 0.0
    %8511 = vmatprep.subr.mxu0 0.0
    %8512 = vmatpush1.msra.mxu0 0.0
    %8513 = vmatprep.subr.mxu0 0.0
    %8514 = vmatpush1.msra.mxu0 0.0
    %8515 = vmatprep.subr.mxu0 0.0
    %8516 = vmatpush1.msra.mxu0 0.0
    %8517 = vmatprep.subr.mxu0 0.0
    %8518 = vmatpush1.msra.mxu0 0.0
    %8519 = vmatprep.subr.mxu0 0.0
    %8520 = vmatpush1.msra.mxu0 0.0
    %8521 = vmatprep.subr.mxu0 0.0
    %8522 = vmatpush1.msra.mxu0 0.0
    %8523 = vmatprep.subr.mxu0 0.0
    %8524 = vmatpush1.msra.mxu0 0.0
    %8525 = vmatprep.subr.mxu0 0.0
    %8526 = vmatpush1.msra.mxu0 0.0
    %8527 = vmatprep.subr.mxu0 0.0
    %8528 = vmatpush1.msra.mxu0 0.0
    %8529 = vmatprep.subr.mxu0 0.0
    %8530 = vmatpush1.msra.mxu0 0.0
    %8531 = vmatprep.subr.mxu0 0.0
    %8532 = vmatpush1.msra.mxu0 0.0
    %8533 = vmatprep.subr.mxu0 0.0
    %8534 = vmatpush1.msra.mxu0 0.0
    %8535 = vmatprep.mubr.f32.mxu0 0.0
    %8536 = vmatmul.mubr.f32.gmra.mrb[0].mxu0 %v8460
    %v8537 = vpop.f32.mrb[0].mxu0
    %v8538 = vadd.f32 0.0, %v8537
    %v8539 = vpop.f32.mrb[0].mxu0
    %8540 = vmatprep.mubr.f32.mxu0 0.0
    %8541 = vmatmul.mubr.f32.gmra.mrb[0].mxu0 %v8463
    %v8542 = vpop.f32.mrb[0].mxu0
    %v8543 = vadd.f32 0.0, %v8542
    %v8544 = vpop.f32.mrb[0].mxu0
    %8545 = vmatprep.mubr.f32.mxu0 0.0
    %8546 = vmatmul.mubr.f32.gmra.mrb[0].mxu0 %v8466
    %v8547 = vpop.f32.mrb[0].mxu0
    %v8548 = vadd.f32 0.0, %v8547
    %v8549 = vpop.f32.mrb[0].mxu0
    %8550 = vmatprep.mubr.f32.mxu0 0.0
    %8551 = vmatmul.mubr.f32.gmra.mrb[0].mxu0 %v8469
    %v8552 = vpop.f32.mrb[0].mxu0
    %v8553 = vadd.f32 0.0, %v8552
    %v8554 = vpop.f32.mrb[0].mxu0
    %8555 = vdwg.mxu0
    %8556 = vst.msk [vmem:[#allocation5] sm:$0xff] %vm74, %v8538
    %8557 = vst.msk [vmem:[#allocation5 + $0x8] sm:$0xff] %vm74, %v8543
    %8558 = vst.msk [vmem:[#allocation5 + $0x10] sm:$0xff] %vm74, %v8548
    %8559 = vst.msk [vmem:[#allocation5 + $0x18] sm:$0xff] %vm74, %v8553
    // Predicated region
    $region58: #{tpu_custom_call.1} parent=1 // pred_check
      _
    $region59: #{tpu_custom_call.1} parent=1 // pred_check_branch
      %8561 = sbr.rel (0) target = $region61
    $region60: #{tpu_custom_call.1} parent=1 // pred_region
      %s8563 = ssub.s32 512, 512
      %8564 = vsyncadd [#allocation4], %s8563
      %s8565 = sshll.u32 [#allocation5], 4
      %s8566 = int_to_ptr.vmem [resolvable:$true] %s8565
      %8571 = dma.vmem_to_hbm [thread:$0]  %s8566, 512, %s13, [#allocation4], 128, 128, 8
    $region61: #{tpu_custom_call.1} parent=1 // pred_fallthru
      _
    // Predicated region
    $region62: #{tpu_custom_call.1} parent=1 // pred_check
      _
    $region63: #{tpu_custom_call.1} parent=1 // pred_check_branch
      %8573 = sbr.rel (0) target = $region65
    $region64: #{tpu_custom_call.1} parent=1 // pred_region
      %8574 = dma.done [#allocation4], 512
    $region65: #{tpu_custom_call.1} parent=1 // pred_fallthru
      _
    %8575 = vsyncpa [#allocation3], 1
    %8576 = vsyncpa [#allocation4], 1

</llo_original>
